<compile_context>
chip_gen: v6e
topology: v6e:2x2x1
jax: 0.10.0
libtpu: 0.0.40
codegen_flags: <defaults>
</compile_context>

<pallas_src>
import math

import jax
import jax.numpy as jnp
from jax.experimental import pallas as pl
from jax.experimental.pallas import tpu as pltpu

_BN_EPS = 1e-5          # nn.BatchNorm1d default eps
_LRELU_SLOPE = 0.2      # nn.LeakyReLU(0.2)


def _lrelu(x):
    return jnp.where(x >= 0, x, _LRELU_SLOPE * x)


# ---------------------------------------------------------------------------
# Fused kernel: entire Discriminator forward for the whole batch.
# ---------------------------------------------------------------------------
def discriminator_kernel(
    adj_ref,                                   # (B, N, N)
    w1_ref, b1_ref,                            # (N,  C1), (1, C1)
    g1_ref, be1_ref, rm1_ref, rv1_ref,         # (1, C1) each (BatchNorm1)
    w2_ref, b2_ref,                            # (C1, C2), (1, C2)
    g2_ref, be2_ref, rm2_ref, rv2_ref,         # (1, C2) each (BatchNorm2)
    w3_ref, b3_ref,                            # (C2, C3), (1, C3)
    wl1_ref, bl1_ref,                          # (N, C3, H), (1, H)   Linear1
    wl2_ref, bl2_ref,                          # (1, H), (1, 1)       Linear2
    out_ref,                                   # (B, 1)
):
    B = out_ref.shape[0]
    N = adj_ref.shape[1]

    # Hoist parameter loads out of the batch loop.
    w1 = w1_ref[...]
    w2 = w2_ref[...]
    w3 = w3_ref[...]
    b1 = b1_ref[...]
    b2 = b2_ref[...]
    b3 = b3_ref[...]
    bl1 = bl1_ref[...]
    wl2 = wl2_ref[...]
    bl2 = bl2_ref[...]

    # Eval-mode BatchNorm1d folded to per-channel scale/shift (rsqrt -> EUP).
    s1 = g1_ref[...] * jax.lax.rsqrt(rv1_ref[...] + _BN_EPS)
    t1 = be1_ref[...] - rm1_ref[...] * s1
    s2 = g2_ref[...] * jax.lax.rsqrt(rv2_ref[...] + _BN_EPS)
    t2 = be2_ref[...] - rm2_ref[...] * s2

    # Whole batch handled in one grid step; B is tiny, so unroll in Python.
    for b in range(B):
        a = adj_ref[b]                                           # (N, N)

        # gc1: input is batch_eye => support == W1; out = adj @ W1 + b1
        h = jnp.dot(a, w1, preferred_element_type=jnp.float32) + b1
        h = _lrelu(h)
        h = h * s1 + t1                                          # BatchNorm1 (eval)

        # gc2: support = h @ W2 ; out = adj @ support + b2
        h = jnp.dot(a, jnp.dot(h, w2, preferred_element_type=jnp.float32),
                    preferred_element_type=jnp.float32) + b2
        h = _lrelu(h)
        h = h * s2 + t2                                          # BatchNorm2 (eval)

        # gc3
        h = jnp.dot(a, jnp.dot(h, w3, preferred_element_type=jnp.float32),
                    preferred_element_type=jnp.float32) + b3
        x3 = _lrelu(h)                                           # (N, C3)
        # TODO(synk): F.dropout is identity here (inference); training-mode
        # dropout would require pltpu.prng_seed / pltpu.prng_random_bits.

        # Linear1 over x.view(B, N*C3): computed as sum_n x3[n] @ Wl1[n]
        # (avoids an in-kernel (N, C3) -> (N*C3,) lane/sublane-merge reshape;
        #  Wl1 is pre-reshaped on the host to (N, C3, H) in row-major order).
        acc = jnp.zeros_like(bl1)                                # (1, H)
        for n in range(N):
            acc = acc + jnp.dot(x3[n:n + 1, :], wl1_ref[n],
                                preferred_element_type=jnp.float32)
        h4 = _lrelu(acc + bl1)                                   # (1, H)

        # Linear2 (H -> 1) as a lane reduction, then sigmoid.
        logit = jnp.sum(h4 * wl2, axis=-1, keepdims=True) + bl2  # (1, 1)
        out_ref[pl.ds(b, 1), :] = 1.0 / (1.0 + jnp.exp(-logit))


# ---------------------------------------------------------------------------
# Wrapper
# ---------------------------------------------------------------------------
def _full_block(shape):
    nd = len(shape)
    return pl.BlockSpec(shape, lambda i, _nd=nd: (0,) * _nd)


def discriminator_forward(adj, params):
    B = adj.shape[0]
    args = (
        adj,
        params["w1"], params["b1"],
        params["g1"], params["beta1"], params["rm1"], params["rv1"],
        params["w2"], params["b2"],
        params["g2"], params["beta2"], params["rm2"], params["rv2"],
        params["w3"], params["b3"],
        params["wl1"], params["bl1"],
        params["wl2"], params["bl2"],
    )
    out = pl.pallas_call(
        discriminator_kernel,
        out_shape=jax.ShapeDtypeStruct((B, 1), jnp.float32),
        grid=(1,),                                   # single fused grid step
        in_specs=[_full_block(a.shape) for a in args],
        out_specs=_full_block((B, 1)),
        compiler_params=pltpu.CompilerParams(dimension_semantics=("arbitrary",)),
    )(*args)
    return jnp.squeeze(out)                          # outputs.squeeze()


# ---------------------------------------------------------------------------
# Parameter construction (mirrors the PyTorch module's shapes; random values
# so every code path is numerically exercised).
# ---------------------------------------------------------------------------
def make_params(key, N, C1, C2, C3, H):
    ks = jax.random.split(key, 7)

    def gc_init(k, din, dout):
        stdv = 1.0 / math.sqrt(dout)                 # GraphConvolution.reset_parameters
        k1, k2 = jax.random.split(k)
        w = jax.random.uniform(k1, (din, dout), jnp.float32, -stdv, stdv)
        b = jax.random.uniform(k2, (1, dout), jnp.float32, -stdv, stdv)
        return w, b

    def bn_init(k, c):
        # PyTorch init would be gamma=1, beta=0, rm=0, rv=1; use non-trivial
        # values so the eval-mode BatchNorm math is actually tested.
        k1, k2, k3, k4 = jax.random.split(k, 4)
        g = jax.random.uniform(k1, (1, c), jnp.float32, 0.5, 1.5)
        be = jax.random.uniform(k2, (1, c), jnp.float32, -0.5, 0.5)
        rm = jax.random.uniform(k3, (1, c), jnp.float32, -0.5, 0.5)
        rv = jax.random.uniform(k4, (1, c), jnp.float32, 0.5, 1.5)
        return g, be, rm, rv

    def linear_init(k, din, dout):
        bound = 1.0 / math.sqrt(din)
        k1, k2 = jax.random.split(k)
        w = jax.random.uniform(k1, (din, dout), jnp.float32, -bound, bound)
        b = jax.random.uniform(k2, (1, dout), jnp.float32, -bound, bound)
        return w, b

    w1, b1 = gc_init(ks[0], N, C1)
    g1, beta1, rm1, rv1 = bn_init(ks[1], C1)
    w2, b2 = gc_init(ks[2], C1, C2)
    g2, beta2, rm2, rv2 = bn_init(ks[3], C2)
    w3, b3 = gc_init(ks[4], C2, C3)
    wl1_flat, bl1 = linear_init(ks[5], N * C3, H)
    wl2_flat, bl2 = linear_init(ks[6], H, 1)

    return {
        "w1": w1, "b1": b1, "g1": g1, "beta1": beta1, "rm1": rm1, "rv1": rv1,
        "w2": w2, "b2": b2, "g2": g2, "beta2": beta2, "rm2": rm2, "rv2": rv2,
        "w3": w3, "b3": b3,
        # Row-major reshape matches x.contiguous().view(B, -1) flatten order.
        "wl1": wl1_flat.reshape(N, C3, H),
        "bl1": bl1,
        "wl2": wl2_flat.reshape(1, H),               # (H,1) -> row vector
        "bl2": bl2,
    }


# ---------------------------------------------------------------------------
# Pure-JAX reference for validation.
# ---------------------------------------------------------------------------
def _ref_forward(adj, p):
    B, N, _ = adj.shape
    eye = jnp.broadcast_to(jnp.eye(N, dtype=jnp.float32), (B, N, N))

    def gc(x, w, b):
        support = jnp.matmul(x, w)
        return jnp.einsum("bij,bjd->bid", adj, support) + b[0]

    def bn(x, g, be, rm, rv):
        return (x - rm[0]) / jnp.sqrt(rv[0] + _BN_EPS) * g[0] + be[0]

    h = bn(_lrelu(gc(eye, p["w1"], p["b1"])),
           p["g1"], p["beta1"], p["rm1"], p["rv1"])
    h = bn(_lrelu(gc(h, p["w2"], p["b2"])),
           p["g2"], p["beta2"], p["rm2"], p["rv2"])
    h = _lrelu(gc(h, p["w3"], p["b3"]))              # (B, N, C3)

    C3 = p["w3"].shape[1]
    H = p["bl1"].shape[1]
    h = h.reshape(B, N * C3)
    h = _lrelu(h @ p["wl1"].reshape(N * C3, H) + p["bl1"][0])
    logits = jnp.sum(h * p["wl2"], axis=-1, keepdims=True) + p["bl2"][0]
    return jnp.squeeze(jax.nn.sigmoid(logits))


if __name__ == "__main__":
    B = 2
    N = 16                    # in_feature == number of graph nodes
    C1, C2, C3 = 32, 16, 8    # out1_feature, out2_feature, out3_feature
    H = 1024                  # Linear1 width (hard-coded in the module)

    key = jax.random.PRNGKey(0)
    k_adj, k_par = jax.random.split(key)
    adj = jax.random.normal(k_adj, (B, N, N), jnp.float32)
    params = make_params(k_par, N, C1, C2, C3, H)

    out = jax.block_until_ready(discriminator_forward(adj, params))
    ref = jax.block_until_ready(_ref_forward(adj, params))

    assert out.shape == (B,), out.shape
    assert jnp.allclose(out, ref, atol=1e-4, rtol=1e-4), float(
        jnp.max(jnp.abs(out - ref)))
    print("KERNEL_OK")
</pallas_src>

<mosaic_0001>
module attributes {stable_mosaic.version = 11 : i64} {
  func.func @discriminator_kernel(%arg0: i32, %arg1: memref<2x16x16xf32, #tpu.memory_space<vmem>>, %arg2: memref<16x32xf32, #tpu.memory_space<vmem>>, %arg3: memref<1x32xf32, #tpu.memory_space<vmem>>, %arg4: memref<1x32xf32, #tpu.memory_space<vmem>>, %arg5: memref<1x32xf32, #tpu.memory_space<vmem>>, %arg6: memref<1x32xf32, #tpu.memory_space<vmem>>, %arg7: memref<1x32xf32, #tpu.memory_space<vmem>>, %arg8: memref<32x16xf32, #tpu.memory_space<vmem>>, %arg9: memref<1x16xf32, #tpu.memory_space<vmem>>, %arg10: memref<1x16xf32, #tpu.memory_space<vmem>>, %arg11: memref<1x16xf32, #tpu.memory_space<vmem>>, %arg12: memref<1x16xf32, #tpu.memory_space<vmem>>, %arg13: memref<1x16xf32, #tpu.memory_space<vmem>>, %arg14: memref<16x8xf32, #tpu.memory_space<vmem>>, %arg15: memref<1x8xf32, #tpu.memory_space<vmem>>, %arg16: memref<16x8x1024xf32, #tpu.memory_space<vmem>>, %arg17: memref<1x1024xf32, #tpu.memory_space<vmem>>, %arg18: memref<1x1024xf32, #tpu.memory_space<vmem>>, %arg19: memref<1x1xf32, #tpu.memory_space<vmem>>, %arg20: memref<2x1xf32, #tpu.memory_space<vmem>>) attributes {dimension_semantics = [#tpu.dimension_semantics<arbitrary>], iteration_bounds = array<i64: 1>, scalar_prefetch = 0 : i64, scratch_operands = 0 : i64, tpu.core_type = #tpu.core_type<tc>, window_params = [{pipeline_mode = #tpu.pipeline_mode<synchronous>, transform_indices = @transform_0, window_bounds = array<i64: 2, 16, 16>}, {pipeline_mode = #tpu.pipeline_mode<synchronous>, transform_indices = @transform_1, window_bounds = array<i64: 16, 32>}, {pipeline_mode = #tpu.pipeline_mode<synchronous>, transform_indices = @transform_2, window_bounds = array<i64: 1, 32>}, {pipeline_mode = #tpu.pipeline_mode<synchronous>, transform_indices = @transform_3, window_bounds = array<i64: 1, 32>}, {pipeline_mode = #tpu.pipeline_mode<synchronous>, transform_indices = @transform_4, window_bounds = array<i64: 1, 32>}, {pipeline_mode = #tpu.pipeline_mode<synchronous>, transform_indices = @transform_5, window_bounds = array<i64: 1, 32>}, {pipeline_mode = #tpu.pipeline_mode<synchronous>, transform_indices = @transform_6, window_bounds = array<i64: 1, 32>}, {pipeline_mode = #tpu.pipeline_mode<synchronous>, transform_indices = @transform_7, window_bounds = array<i64: 32, 16>}, {pipeline_mode = #tpu.pipeline_mode<synchronous>, transform_indices = @transform_8, window_bounds = array<i64: 1, 16>}, {pipeline_mode = #tpu.pipeline_mode<synchronous>, transform_indices = @transform_9, window_bounds = array<i64: 1, 16>}, {pipeline_mode = #tpu.pipeline_mode<synchronous>, transform_indices = @transform_10, window_bounds = array<i64: 1, 16>}, {pipeline_mode = #tpu.pipeline_mode<synchronous>, transform_indices = @transform_11, window_bounds = array<i64: 1, 16>}, {pipeline_mode = #tpu.pipeline_mode<synchronous>, transform_indices = @transform_12, window_bounds = array<i64: 1, 16>}, {pipeline_mode = #tpu.pipeline_mode<synchronous>, transform_indices = @transform_13, window_bounds = array<i64: 16, 8>}, {pipeline_mode = #tpu.pipeline_mode<synchronous>, transform_indices = @transform_14, window_bounds = array<i64: 1, 8>}, {pipeline_mode = #tpu.pipeline_mode<synchronous>, transform_indices = @transform_15, window_bounds = array<i64: 16, 8, 1024>}, {pipeline_mode = #tpu.pipeline_mode<synchronous>, transform_indices = @transform_16, window_bounds = array<i64: 1, 1024>}, {pipeline_mode = #tpu.pipeline_mode<synchronous>, transform_indices = @transform_17, window_bounds = array<i64: 1, 1024>}, {pipeline_mode = #tpu.pipeline_mode<synchronous>, transform_indices = @transform_18, window_bounds = array<i64: 1, 1>}, {pipeline_mode = #tpu.pipeline_mode<synchronous>, transform_indices = @transform_19, window_bounds = array<i64: 2, 1>}]} {
    %c0 = arith.constant 0 : index
    %c0_0 = arith.constant 0 : index
    %0 = vector.load %arg2[%c0, %c0_0] : memref<16x32xf32, #tpu.memory_space<vmem>>, vector<16x32xf32>
    %c0_1 = arith.constant 0 : index
    %c0_2 = arith.constant 0 : index
    %1 = vector.load %arg8[%c0_1, %c0_2] : memref<32x16xf32, #tpu.memory_space<vmem>>, vector<32x16xf32>
    %c0_3 = arith.constant 0 : index
    %c0_4 = arith.constant 0 : index
    %2 = vector.load %arg14[%c0_3, %c0_4] : memref<16x8xf32, #tpu.memory_space<vmem>>, vector<16x8xf32>
    %c0_5 = arith.constant 0 : index
    %c0_6 = arith.constant 0 : index
    %3 = vector.load %arg3[%c0_5, %c0_6] : memref<1x32xf32, #tpu.memory_space<vmem>>, vector<1x32xf32>
    %c0_7 = arith.constant 0 : index
    %c0_8 = arith.constant 0 : index
    %4 = vector.load %arg9[%c0_7, %c0_8] : memref<1x16xf32, #tpu.memory_space<vmem>>, vector<1x16xf32>
    %c0_9 = arith.constant 0 : index
    %c0_10 = arith.constant 0 : index
    %5 = vector.load %arg15[%c0_9, %c0_10] : memref<1x8xf32, #tpu.memory_space<vmem>>, vector<1x8xf32>
    %c0_11 = arith.constant 0 : index
    %c0_12 = arith.constant 0 : index
    %6 = vector.load %arg17[%c0_11, %c0_12] : memref<1x1024xf32, #tpu.memory_space<vmem>>, vector<1x1024xf32>
    %c0_13 = arith.constant 0 : index
    %c0_14 = arith.constant 0 : index
    %7 = vector.load %arg18[%c0_13, %c0_14] : memref<1x1024xf32, #tpu.memory_space<vmem>>, vector<1x1024xf32>
    %c0_15 = arith.constant 0 : index
    %c0_16 = arith.constant 0 : index
    %8 = vector.load %arg19[%c0_15, %c0_16] : memref<1x1xf32, #tpu.memory_space<vmem>>, vector<1x1xf32>
    %c0_17 = arith.constant 0 : index
    %c0_18 = arith.constant 0 : index
    %9 = vector.load %arg4[%c0_17, %c0_18] : memref<1x32xf32, #tpu.memory_space<vmem>>, vector<1x32xf32>
    %c0_19 = arith.constant 0 : index
    %c0_20 = arith.constant 0 : index
    %10 = vector.load %arg7[%c0_19, %c0_20] : memref<1x32xf32, #tpu.memory_space<vmem>>, vector<1x32xf32>
    %cst = arith.constant 9.99999974E-6 : f32
    %11 = vector.broadcast %cst : f32 to vector<1x32xf32>
    %12 = arith.addf %10, %11 : vector<1x32xf32>
    %13 = math.rsqrt %12 : vector<1x32xf32>
    %14 = arith.mulf %9, %13 : vector<1x32xf32>
    %c0_21 = arith.constant 0 : index
    %c0_22 = arith.constant 0 : index
    %15 = vector.load %arg5[%c0_21, %c0_22] : memref<1x32xf32, #tpu.memory_space<vmem>>, vector<1x32xf32>
    %c0_23 = arith.constant 0 : index
    %c0_24 = arith.constant 0 : index
    %16 = vector.load %arg6[%c0_23, %c0_24] : memref<1x32xf32, #tpu.memory_space<vmem>>, vector<1x32xf32>
    %17 = arith.mulf %16, %14 : vector<1x32xf32>
    %18 = arith.subf %15, %17 : vector<1x32xf32>
    %c0_25 = arith.constant 0 : index
    %c0_26 = arith.constant 0 : index
    %19 = vector.load %arg10[%c0_25, %c0_26] : memref<1x16xf32, #tpu.memory_space<vmem>>, vector<1x16xf32>
    %c0_27 = arith.constant 0 : index
    %c0_28 = arith.constant 0 : index
    %20 = vector.load %arg13[%c0_27, %c0_28] : memref<1x16xf32, #tpu.memory_space<vmem>>, vector<1x16xf32>
    %cst_29 = arith.constant 9.99999974E-6 : f32
    %21 = vector.broadcast %cst_29 : f32 to vector<1x16xf32>
    %22 = arith.addf %20, %21 : vector<1x16xf32>
    %23 = math.rsqrt %22 : vector<1x16xf32>
    %24 = arith.mulf %19, %23 : vector<1x16xf32>
    %c0_30 = arith.constant 0 : index
    %c0_31 = arith.constant 0 : index
    %25 = vector.load %arg11[%c0_30, %c0_31] : memref<1x16xf32, #tpu.memory_space<vmem>>, vector<1x16xf32>
    %c0_32 = arith.constant 0 : index
    %c0_33 = arith.constant 0 : index
    %26 = vector.load %arg12[%c0_32, %c0_33] : memref<1x16xf32, #tpu.memory_space<vmem>>, vector<1x16xf32>
    %27 = arith.mulf %26, %24 : vector<1x16xf32>
    %28 = arith.subf %25, %27 : vector<1x16xf32>
    %c0_34 = arith.constant 0 : index
    %c0_35 = arith.constant 0 : index
    %c0_36 = arith.constant 0 : index
    %29 = vector.load %arg1[%c0_34, %c0_35, %c0_36] : memref<2x16x16xf32, #tpu.memory_space<vmem>>, vector<1x16x16xf32>
    %30 = vector.shape_cast %29 : vector<1x16x16xf32> to vector<16x16xf32>
    %cst_37 = arith.constant dense<0.000000e+00> : vector<16x32xf32>
    %31 = tpu.matmul %30, %0, %cst_37 {dimension_numbers = #tpu.dot_dimension_numbers<[1], [0], [0], [1], [0, 0, 1, 1], [], []>} : vector<16x16xf32>, vector<16x32xf32>, vector<16x32xf32> -> vector<16x32xf32>
    %32 = vector.broadcast %3 : vector<1x32xf32> to vector<16x32xf32>
    %33 = arith.addf %31, %32 : vector<16x32xf32>
    %cst_38 = arith.constant 0.000000e+00 : f32
    %34 = vector.broadcast %cst_38 : f32 to vector<16x32xf32>
    %35 = arith.cmpf oge, %33, %34 : vector<16x32xf32>
    %cst_39 = arith.constant 2.000000e-01 : f32
    %36 = vector.broadcast %cst_39 : f32 to vector<16x32xf32>
    %37 = arith.mulf %36, %33 : vector<16x32xf32>
    %38 = arith.select %35, %33, %37 : vector<16x32xi1>, vector<16x32xf32>
    %39 = vector.broadcast %14 : vector<1x32xf32> to vector<16x32xf32>
    %40 = arith.mulf %38, %39 : vector<16x32xf32>
    %41 = vector.broadcast %18 : vector<1x32xf32> to vector<16x32xf32>
    %42 = arith.addf %40, %41 : vector<16x32xf32>
    %cst_40 = arith.constant dense<0.000000e+00> : vector<16x16xf32>
    %43 = tpu.matmul %42, %1, %cst_40 {dimension_numbers = #tpu.dot_dimension_numbers<[1], [0], [0], [1], [0, 0, 1, 1], [], []>} : vector<16x32xf32>, vector<32x16xf32>, vector<16x16xf32> -> vector<16x16xf32>
    %cst_41 = arith.constant dense<0.000000e+00> : vector<16x16xf32>
    %44 = tpu.matmul %30, %43, %cst_41 {dimension_numbers = #tpu.dot_dimension_numbers<[1], [0], [0], [1], [0, 0, 1, 1], [], []>} : vector<16x16xf32>, vector<16x16xf32>, vector<16x16xf32> -> vector<16x16xf32>
    %45 = vector.broadcast %4 : vector<1x16xf32> to vector<16x16xf32>
    %46 = arith.addf %44, %45 : vector<16x16xf32>
    %cst_42 = arith.constant 0.000000e+00 : f32
    %47 = vector.broadcast %cst_42 : f32 to vector<16x16xf32>
    %48 = arith.cmpf oge, %46, %47 : vector<16x16xf32>
    %cst_43 = arith.constant 2.000000e-01 : f32
    %49 = vector.broadcast %cst_43 : f32 to vector<16x16xf32>
    %50 = arith.mulf %49, %46 : vector<16x16xf32>
    %51 = arith.select %48, %46, %50 : vector<16x16xi1>, vector<16x16xf32>
    %52 = vector.broadcast %24 : vector<1x16xf32> to vector<16x16xf32>
    %53 = arith.mulf %51, %52 : vector<16x16xf32>
    %54 = vector.broadcast %28 : vector<1x16xf32> to vector<16x16xf32>
    %55 = arith.addf %53, %54 : vector<16x16xf32>
    %cst_44 = arith.constant dense<0.000000e+00> : vector<16x8xf32>
    %56 = tpu.matmul %55, %2, %cst_44 {dimension_numbers = #tpu.dot_dimension_numbers<[1], [0], [0], [1], [0, 0, 1, 1], [], []>} : vector<16x16xf32>, vector<16x8xf32>, vector<16x8xf32> -> vector<16x8xf32>
    %cst_45 = arith.constant dense<0.000000e+00> : vector<16x8xf32>
    %57 = tpu.matmul %30, %56, %cst_45 {dimension_numbers = #tpu.dot_dimension_numbers<[1], [0], [0], [1], [0, 0, 1, 1], [], []>} : vector<16x16xf32>, vector<16x8xf32>, vector<16x8xf32> -> vector<16x8xf32>
    %58 = vector.broadcast %5 : vector<1x8xf32> to vector<16x8xf32>
    %59 = arith.addf %57, %58 : vector<16x8xf32>
    %cst_46 = arith.constant 0.000000e+00 : f32
    %60 = vector.broadcast %cst_46 : f32 to vector<16x8xf32>
    %61 = arith.cmpf oge, %59, %60 : vector<16x8xf32>
    %cst_47 = arith.constant 2.000000e-01 : f32
    %62 = vector.broadcast %cst_47 : f32 to vector<16x8xf32>
    %63 = arith.mulf %62, %59 : vector<16x8xf32>
    %64 = arith.select %61, %59, %63 : vector<16x8xi1>, vector<16x8xf32>
    %cst_48 = arith.constant 0.000000e+00 : f32
    %65 = vector.broadcast %cst_48 : f32 to vector<1x1024xf32>
    %66 = vector.extract_strided_slice %64 {offsets = [0, 0], sizes = [1, 8], strides = [1, 1]} : vector<16x8xf32> to vector<1x8xf32>
    %c0_49 = arith.constant 0 : index
    %c0_50 = arith.constant 0 : index
    %c0_51 = arith.constant 0 : index
    %67 = vector.load %arg16[%c0_49, %c0_50, %c0_51] : memref<16x8x1024xf32, #tpu.memory_space<vmem>>, vector<1x8x1024xf32>
    %68 = vector.shape_cast %67 : vector<1x8x1024xf32> to vector<8x1024xf32>
    %cst_52 = arith.constant dense<0.000000e+00> : vector<1x1024xf32>
    %69 = tpu.matmul %66, %68, %cst_52 {dimension_numbers = #tpu.dot_dimension_numbers<[1], [0], [0], [1], [0, 0, 1, 1], [], []>} : vector<1x8xf32>, vector<8x1024xf32>, vector<1x1024xf32> -> vector<1x1024xf32>
    %70 = arith.addf %65, %69 : vector<1x1024xf32>
    %71 = vector.extract_strided_slice %64 {offsets = [1, 0], sizes = [1, 8], strides = [1, 1]} : vector<16x8xf32> to vector<1x8xf32>
    %c1 = arith.constant 1 : index
    %c0_53 = arith.constant 0 : index
    %c0_54 = arith.constant 0 : index
    %72 = vector.load %arg16[%c1, %c0_53, %c0_54] : memref<16x8x1024xf32, #tpu.memory_space<vmem>>, vector<1x8x1024xf32>
    %73 = vector.shape_cast %72 : vector<1x8x1024xf32> to vector<8x1024xf32>
    %cst_55 = arith.constant dense<0.000000e+00> : vector<1x1024xf32>
    %74 = tpu.matmul %71, %73, %cst_55 {dimension_numbers = #tpu.dot_dimension_numbers<[1], [0], [0], [1], [0, 0, 1, 1], [], []>} : vector<1x8xf32>, vector<8x1024xf32>, vector<1x1024xf32> -> vector<1x1024xf32>
    %75 = arith.addf %70, %74 : vector<1x1024xf32>
    %76 = vector.extract_strided_slice %64 {offsets = [2, 0], sizes = [1, 8], strides = [1, 1]} : vector<16x8xf32> to vector<1x8xf32>
    %c2 = arith.constant 2 : index
    %c0_56 = arith.constant 0 : index
    %c0_57 = arith.constant 0 : index
    %77 = vector.load %arg16[%c2, %c0_56, %c0_57] : memref<16x8x1024xf32, #tpu.memory_space<vmem>>, vector<1x8x1024xf32>
    %78 = vector.shape_cast %77 : vector<1x8x1024xf32> to vector<8x1024xf32>
    %cst_58 = arith.constant dense<0.000000e+00> : vector<1x1024xf32>
    %79 = tpu.matmul %76, %78, %cst_58 {dimension_numbers = #tpu.dot_dimension_numbers<[1], [0], [0], [1], [0, 0, 1, 1], [], []>} : vector<1x8xf32>, vector<8x1024xf32>, vector<1x1024xf32> -> vector<1x1024xf32>
    %80 = arith.addf %75, %79 : vector<1x1024xf32>
    %81 = vector.extract_strided_slice %64 {offsets = [3, 0], sizes = [1, 8], strides = [1, 1]} : vector<16x8xf32> to vector<1x8xf32>
    %c3 = arith.constant 3 : index
    %c0_59 = arith.constant 0 : index
    %c0_60 = arith.constant 0 : index
    %82 = vector.load %arg16[%c3, %c0_59, %c0_60] : memref<16x8x1024xf32, #tpu.memory_space<vmem>>, vector<1x8x1024xf32>
    %83 = vector.shape_cast %82 : vector<1x8x1024xf32> to vector<8x1024xf32>
    %cst_61 = arith.constant dense<0.000000e+00> : vector<1x1024xf32>
    %84 = tpu.matmul %81, %83, %cst_61 {dimension_numbers = #tpu.dot_dimension_numbers<[1], [0], [0], [1], [0, 0, 1, 1], [], []>} : vector<1x8xf32>, vector<8x1024xf32>, vector<1x1024xf32> -> vector<1x1024xf32>
    %85 = arith.addf %80, %84 : vector<1x1024xf32>
    %86 = vector.extract_strided_slice %64 {offsets = [4, 0], sizes = [1, 8], strides = [1, 1]} : vector<16x8xf32> to vector<1x8xf32>
    %c4 = arith.constant 4 : index
    %c0_62 = arith.constant 0 : index
    %c0_63 = arith.constant 0 : index
    %87 = vector.load %arg16[%c4, %c0_62, %c0_63] : memref<16x8x1024xf32, #tpu.memory_space<vmem>>, vector<1x8x1024xf32>
    %88 = vector.shape_cast %87 : vector<1x8x1024xf32> to vector<8x1024xf32>
    %cst_64 = arith.constant dense<0.000000e+00> : vector<1x1024xf32>
    %89 = tpu.matmul %86, %88, %cst_64 {dimension_numbers = #tpu.dot_dimension_numbers<[1], [0], [0], [1], [0, 0, 1, 1], [], []>} : vector<1x8xf32>, vector<8x1024xf32>, vector<1x1024xf32> -> vector<1x1024xf32>
    %90 = arith.addf %85, %89 : vector<1x1024xf32>
    %91 = vector.extract_strided_slice %64 {offsets = [5, 0], sizes = [1, 8], strides = [1, 1]} : vector<16x8xf32> to vector<1x8xf32>
    %c5 = arith.constant 5 : index
    %c0_65 = arith.constant 0 : index
    %c0_66 = arith.constant 0 : index
    %92 = vector.load %arg16[%c5, %c0_65, %c0_66] : memref<16x8x1024xf32, #tpu.memory_space<vmem>>, vector<1x8x1024xf32>
    %93 = vector.shape_cast %92 : vector<1x8x1024xf32> to vector<8x1024xf32>
    %cst_67 = arith.constant dense<0.000000e+00> : vector<1x1024xf32>
    %94 = tpu.matmul %91, %93, %cst_67 {dimension_numbers = #tpu.dot_dimension_numbers<[1], [0], [0], [1], [0, 0, 1, 1], [], []>} : vector<1x8xf32>, vector<8x1024xf32>, vector<1x1024xf32> -> vector<1x1024xf32>
    %95 = arith.addf %90, %94 : vector<1x1024xf32>
    %96 = vector.extract_strided_slice %64 {offsets = [6, 0], sizes = [1, 8], strides = [1, 1]} : vector<16x8xf32> to vector<1x8xf32>
    %c6 = arith.constant 6 : index
    %c0_68 = arith.constant 0 : index
    %c0_69 = arith.constant 0 : index
    %97 = vector.load %arg16[%c6, %c0_68, %c0_69] : memref<16x8x1024xf32, #tpu.memory_space<vmem>>, vector<1x8x1024xf32>
    %98 = vector.shape_cast %97 : vector<1x8x1024xf32> to vector<8x1024xf32>
    %cst_70 = arith.constant dense<0.000000e+00> : vector<1x1024xf32>
    %99 = tpu.matmul %96, %98, %cst_70 {dimension_numbers = #tpu.dot_dimension_numbers<[1], [0], [0], [1], [0, 0, 1, 1], [], []>} : vector<1x8xf32>, vector<8x1024xf32>, vector<1x1024xf32> -> vector<1x1024xf32>
    %100 = arith.addf %95, %99 : vector<1x1024xf32>
    %101 = vector.extract_strided_slice %64 {offsets = [7, 0], sizes = [1, 8], strides = [1, 1]} : vector<16x8xf32> to vector<1x8xf32>
    %c7 = arith.constant 7 : index
    %c0_71 = arith.constant 0 : index
    %c0_72 = arith.constant 0 : index
    %102 = vector.load %arg16[%c7, %c0_71, %c0_72] : memref<16x8x1024xf32, #tpu.memory_space<vmem>>, vector<1x8x1024xf32>
    %103 = vector.shape_cast %102 : vector<1x8x1024xf32> to vector<8x1024xf32>
    %cst_73 = arith.constant dense<0.000000e+00> : vector<1x1024xf32>
    %104 = tpu.matmul %101, %103, %cst_73 {dimension_numbers = #tpu.dot_dimension_numbers<[1], [0], [0], [1], [0, 0, 1, 1], [], []>} : vector<1x8xf32>, vector<8x1024xf32>, vector<1x1024xf32> -> vector<1x1024xf32>
    %105 = arith.addf %100, %104 : vector<1x1024xf32>
    %106 = vector.extract_strided_slice %64 {offsets = [8, 0], sizes = [1, 8], strides = [1, 1]} : vector<16x8xf32> to vector<1x8xf32>
    %c8 = arith.constant 8 : index
    %c0_74 = arith.constant 0 : index
    %c0_75 = arith.constant 0 : index
    %107 = vector.load %arg16[%c8, %c0_74, %c0_75] : memref<16x8x1024xf32, #tpu.memory_space<vmem>>, vector<1x8x1024xf32>
    %108 = vector.shape_cast %107 : vector<1x8x1024xf32> to vector<8x1024xf32>
    %cst_76 = arith.constant dense<0.000000e+00> : vector<1x1024xf32>
    %109 = tpu.matmul %106, %108, %cst_76 {dimension_numbers = #tpu.dot_dimension_numbers<[1], [0], [0], [1], [0, 0, 1, 1], [], []>} : vector<1x8xf32>, vector<8x1024xf32>, vector<1x1024xf32> -> vector<1x1024xf32>
    %110 = arith.addf %105, %109 : vector<1x1024xf32>
    %111 = vector.extract_strided_slice %64 {offsets = [9, 0], sizes = [1, 8], strides = [1, 1]} : vector<16x8xf32> to vector<1x8xf32>
    %c9 = arith.constant 9 : index
    %c0_77 = arith.constant 0 : index
    %c0_78 = arith.constant 0 : index
    %112 = vector.load %arg16[%c9, %c0_77, %c0_78] : memref<16x8x1024xf32, #tpu.memory_space<vmem>>, vector<1x8x1024xf32>
    %113 = vector.shape_cast %112 : vector<1x8x1024xf32> to vector<8x1024xf32>
    %cst_79 = arith.constant dense<0.000000e+00> : vector<1x1024xf32>
    %114 = tpu.matmul %111, %113, %cst_79 {dimension_numbers = #tpu.dot_dimension_numbers<[1], [0], [0], [1], [0, 0, 1, 1], [], []>} : vector<1x8xf32>, vector<8x1024xf32>, vector<1x1024xf32> -> vector<1x1024xf32>
    %115 = arith.addf %110, %114 : vector<1x1024xf32>
    %116 = vector.extract_strided_slice %64 {offsets = [10, 0], sizes = [1, 8], strides = [1, 1]} : vector<16x8xf32> to vector<1x8xf32>
    %c10 = arith.constant 10 : index
    %c0_80 = arith.constant 0 : index
    %c0_81 = arith.constant 0 : index
    %117 = vector.load %arg16[%c10, %c0_80, %c0_81] : memref<16x8x1024xf32, #tpu.memory_space<vmem>>, vector<1x8x1024xf32>
    %118 = vector.shape_cast %117 : vector<1x8x1024xf32> to vector<8x1024xf32>
    %cst_82 = arith.constant dense<0.000000e+00> : vector<1x1024xf32>
    %119 = tpu.matmul %116, %118, %cst_82 {dimension_numbers = #tpu.dot_dimension_numbers<[1], [0], [0], [1], [0, 0, 1, 1], [], []>} : vector<1x8xf32>, vector<8x1024xf32>, vector<1x1024xf32> -> vector<1x1024xf32>
    %120 = arith.addf %115, %119 : vector<1x1024xf32>
    %121 = vector.extract_strided_slice %64 {offsets = [11, 0], sizes = [1, 8], strides = [1, 1]} : vector<16x8xf32> to vector<1x8xf32>
    %c11 = arith.constant 11 : index
    %c0_83 = arith.constant 0 : index
    %c0_84 = arith.constant 0 : index
    %122 = vector.load %arg16[%c11, %c0_83, %c0_84] : memref<16x8x1024xf32, #tpu.memory_space<vmem>>, vector<1x8x1024xf32>
    %123 = vector.shape_cast %122 : vector<1x8x1024xf32> to vector<8x1024xf32>
    %cst_85 = arith.constant dense<0.000000e+00> : vector<1x1024xf32>
    %124 = tpu.matmul %121, %123, %cst_85 {dimension_numbers = #tpu.dot_dimension_numbers<[1], [0], [0], [1], [0, 0, 1, 1], [], []>} : vector<1x8xf32>, vector<8x1024xf32>, vector<1x1024xf32> -> vector<1x1024xf32>
    %125 = arith.addf %120, %124 : vector<1x1024xf32>
    %126 = vector.extract_strided_slice %64 {offsets = [12, 0], sizes = [1, 8], strides = [1, 1]} : vector<16x8xf32> to vector<1x8xf32>
    %c12 = arith.constant 12 : index
    %c0_86 = arith.constant 0 : index
    %c0_87 = arith.constant 0 : index
    %127 = vector.load %arg16[%c12, %c0_86, %c0_87] : memref<16x8x1024xf32, #tpu.memory_space<vmem>>, vector<1x8x1024xf32>
    %128 = vector.shape_cast %127 : vector<1x8x1024xf32> to vector<8x1024xf32>
    %cst_88 = arith.constant dense<0.000000e+00> : vector<1x1024xf32>
    %129 = tpu.matmul %126, %128, %cst_88 {dimension_numbers = #tpu.dot_dimension_numbers<[1], [0], [0], [1], [0, 0, 1, 1], [], []>} : vector<1x8xf32>, vector<8x1024xf32>, vector<1x1024xf32> -> vector<1x1024xf32>
    %130 = arith.addf %125, %129 : vector<1x1024xf32>
    %131 = vector.extract_strided_slice %64 {offsets = [13, 0], sizes = [1, 8], strides = [1, 1]} : vector<16x8xf32> to vector<1x8xf32>
    %c13 = arith.constant 13 : index
    %c0_89 = arith.constant 0 : index
    %c0_90 = arith.constant 0 : index
    %132 = vector.load %arg16[%c13, %c0_89, %c0_90] : memref<16x8x1024xf32, #tpu.memory_space<vmem>>, vector<1x8x1024xf32>
    %133 = vector.shape_cast %132 : vector<1x8x1024xf32> to vector<8x1024xf32>
    %cst_91 = arith.constant dense<0.000000e+00> : vector<1x1024xf32>
    %134 = tpu.matmul %131, %133, %cst_91 {dimension_numbers = #tpu.dot_dimension_numbers<[1], [0], [0], [1], [0, 0, 1, 1], [], []>} : vector<1x8xf32>, vector<8x1024xf32>, vector<1x1024xf32> -> vector<1x1024xf32>
    %135 = arith.addf %130, %134 : vector<1x1024xf32>
    %136 = vector.extract_strided_slice %64 {offsets = [14, 0], sizes = [1, 8], strides = [1, 1]} : vector<16x8xf32> to vector<1x8xf32>
    %c14 = arith.constant 14 : index
    %c0_92 = arith.constant 0 : index
    %c0_93 = arith.constant 0 : index
    %137 = vector.load %arg16[%c14, %c0_92, %c0_93] : memref<16x8x1024xf32, #tpu.memory_space<vmem>>, vector<1x8x1024xf32>
    %138 = vector.shape_cast %137 : vector<1x8x1024xf32> to vector<8x1024xf32>
    %cst_94 = arith.constant dense<0.000000e+00> : vector<1x1024xf32>
    %139 = tpu.matmul %136, %138, %cst_94 {dimension_numbers = #tpu.dot_dimension_numbers<[1], [0], [0], [1], [0, 0, 1, 1], [], []>} : vector<1x8xf32>, vector<8x1024xf32>, vector<1x1024xf32> -> vector<1x1024xf32>
    %140 = arith.addf %135, %139 : vector<1x1024xf32>
    %141 = vector.extract_strided_slice %64 {offsets = [15, 0], sizes = [1, 8], strides = [1, 1]} : vector<16x8xf32> to vector<1x8xf32>
    %c15 = arith.constant 15 : index
    %c0_95 = arith.constant 0 : index
    %c0_96 = arith.constant 0 : index
    %142 = vector.load %arg16[%c15, %c0_95, %c0_96] : memref<16x8x1024xf32, #tpu.memory_space<vmem>>, vector<1x8x1024xf32>
    %143 = vector.shape_cast %142 : vector<1x8x1024xf32> to vector<8x1024xf32>
    %cst_97 = arith.constant dense<0.000000e+00> : vector<1x1024xf32>
    %144 = tpu.matmul %141, %143, %cst_97 {dimension_numbers = #tpu.dot_dimension_numbers<[1], [0], [0], [1], [0, 0, 1, 1], [], []>} : vector<1x8xf32>, vector<8x1024xf32>, vector<1x1024xf32> -> vector<1x1024xf32>
    %145 = arith.addf %140, %144 : vector<1x1024xf32>
    %146 = arith.addf %145, %6 : vector<1x1024xf32>
    %cst_98 = arith.constant 0.000000e+00 : f32
    %147 = vector.broadcast %cst_98 : f32 to vector<1x1024xf32>
    %148 = arith.cmpf oge, %146, %147 : vector<1x1024xf32>
    %cst_99 = arith.constant 2.000000e-01 : f32
    %149 = vector.broadcast %cst_99 : f32 to vector<1x1024xf32>
    %150 = arith.mulf %149, %146 : vector<1x1024xf32>
    %151 = arith.select %148, %146, %150 : vector<1x1024xi1>, vector<1x1024xf32>
    %152 = arith.mulf %151, %7 : vector<1x1024xf32>
    %cst_100 = arith.constant dense<0.000000e+00> : vector<1xf32>
    %153 = vector.multi_reduction <add>, %152, %cst_100 [1] : vector<1x1024xf32> to vector<1xf32>
    %154 = vector.shape_cast %153 : vector<1xf32> to vector<1x1xf32>
    %155 = arith.addf %154, %8 : vector<1x1xf32>
    %cst_101 = arith.constant 0.000000e+00 : f32
    %156 = vector.broadcast %cst_101 : f32 to vector<1x1xf32>
    %157 = arith.subf %156, %155 : vector<1x1xf32>
    %158 = math.exp %157 : vector<1x1xf32>
    %cst_102 = arith.constant 1.000000e+00 : f32
    %159 = vector.broadcast %cst_102 : f32 to vector<1x1xf32>
    %160 = arith.addf %159, %158 : vector<1x1xf32>
    %cst_103 = arith.constant 1.000000e+00 : f32
    %161 = vector.broadcast %cst_103 : f32 to vector<1x1xf32>
    %162 = arith.divf %161, %160 : vector<1x1xf32>
    %c0_104 = arith.constant 0 : index
    %c0_105 = arith.constant 0 : index
    %163 = vector.load %arg20[%c0_104, %c0_105] : memref<2x1xf32, #tpu.memory_space<vmem>>, vector<1x1xf32>
    tpu.vector_store %arg20[%c0_104, %c0_105], %162 {strides = array<i32>} : memref<2x1xf32, #tpu.memory_space<vmem>>, vector<1x1xf32>,
    %c1_106 = arith.constant 1 : index
    %c0_107 = arith.constant 0 : index
    %c0_108 = arith.constant 0 : index
    %164 = vector.load %arg1[%c1_106, %c0_107, %c0_108] : memref<2x16x16xf32, #tpu.memory_space<vmem>>, vector<1x16x16xf32>
    %165 = vector.shape_cast %164 : vector<1x16x16xf32> to vector<16x16xf32>
    %cst_109 = arith.constant dense<0.000000e+00> : vector<16x32xf32>
    %166 = tpu.matmul %165, %0, %cst_109 {dimension_numbers = #tpu.dot_dimension_numbers<[1], [0], [0], [1], [0, 0, 1, 1], [], []>} : vector<16x16xf32>, vector<16x32xf32>, vector<16x32xf32> -> vector<16x32xf32>
    %167 = vector.broadcast %3 : vector<1x32xf32> to vector<16x32xf32>
    %168 = arith.addf %166, %167 : vector<16x32xf32>
    %cst_110 = arith.constant 0.000000e+00 : f32
    %169 = vector.broadcast %cst_110 : f32 to vector<16x32xf32>
    %170 = arith.cmpf oge, %168, %169 : vector<16x32xf32>
    %cst_111 = arith.constant 2.000000e-01 : f32
    %171 = vector.broadcast %cst_111 : f32 to vector<16x32xf32>
    %172 = arith.mulf %171, %168 : vector<16x32xf32>
    %173 = arith.select %170, %168, %172 : vector<16x32xi1>, vector<16x32xf32>
    %174 = vector.broadcast %14 : vector<1x32xf32> to vector<16x32xf32>
    %175 = arith.mulf %173, %174 : vector<16x32xf32>
    %176 = vector.broadcast %18 : vector<1x32xf32> to vector<16x32xf32>
    %177 = arith.addf %175, %176 : vector<16x32xf32>
    %cst_112 = arith.constant dense<0.000000e+00> : vector<16x16xf32>
    %178 = tpu.matmul %177, %1, %cst_112 {dimension_numbers = #tpu.dot_dimension_numbers<[1], [0], [0], [1], [0, 0, 1, 1], [], []>} : vector<16x32xf32>, vector<32x16xf32>, vector<16x16xf32> -> vector<16x16xf32>
    %cst_113 = arith.constant dense<0.000000e+00> : vector<16x16xf32>
    %179 = tpu.matmul %165, %178, %cst_113 {dimension_numbers = #tpu.dot_dimension_numbers<[1], [0], [0], [1], [0, 0, 1, 1], [], []>} : vector<16x16xf32>, vector<16x16xf32>, vector<16x16xf32> -> vector<16x16xf32>
    %180 = vector.broadcast %4 : vector<1x16xf32> to vector<16x16xf32>
    %181 = arith.addf %179, %180 : vector<16x16xf32>
    %cst_114 = arith.constant 0.000000e+00 : f32
    %182 = vector.broadcast %cst_114 : f32 to vector<16x16xf32>
    %183 = arith.cmpf oge, %181, %182 : vector<16x16xf32>
    %cst_115 = arith.constant 2.000000e-01 : f32
    %184 = vector.broadcast %cst_115 : f32 to vector<16x16xf32>
    %185 = arith.mulf %184, %181 : vector<16x16xf32>
    %186 = arith.select %183, %181, %185 : vector<16x16xi1>, vector<16x16xf32>
    %187 = vector.broadcast %24 : vector<1x16xf32> to vector<16x16xf32>
    %188 = arith.mulf %186, %187 : vector<16x16xf32>
    %189 = vector.broadcast %28 : vector<1x16xf32> to vector<16x16xf32>
    %190 = arith.addf %188, %189 : vector<16x16xf32>
    %cst_116 = arith.constant dense<0.000000e+00> : vector<16x8xf32>
    %191 = tpu.matmul %190, %2, %cst_116 {dimension_numbers = #tpu.dot_dimension_numbers<[1], [0], [0], [1], [0, 0, 1, 1], [], []>} : vector<16x16xf32>, vector<16x8xf32>, vector<16x8xf32> -> vector<16x8xf32>
    %cst_117 = arith.constant dense<0.000000e+00> : vector<16x8xf32>
    %192 = tpu.matmul %165, %191, %cst_117 {dimension_numbers = #tpu.dot_dimension_numbers<[1], [0], [0], [1], [0, 0, 1, 1], [], []>} : vector<16x16xf32>, vector<16x8xf32>, vector<16x8xf32> -> vector<16x8xf32>
    %193 = vector.broadcast %5 : vector<1x8xf32> to vector<16x8xf32>
    %194 = arith.addf %192, %193 : vector<16x8xf32>
    %cst_118 = arith.constant 0.000000e+00 : f32
    %195 = vector.broadcast %cst_118 : f32 to vector<16x8xf32>
    %196 = arith.cmpf oge, %194, %195 : vector<16x8xf32>
    %cst_119 = arith.constant 2.000000e-01 : f32
    %197 = vector.broadcast %cst_119 : f32 to vector<16x8xf32>
    %198 = arith.mulf %197, %194 : vector<16x8xf32>
    %199 = arith.select %196, %194, %198 : vector<16x8xi1>, vector<16x8xf32>
    %cst_120 = arith.constant 0.000000e+00 : f32
    %200 = vector.broadcast %cst_120 : f32 to vector<1x1024xf32>
    %201 = vector.extract_strided_slice %199 {offsets = [0, 0], sizes = [1, 8], strides = [1, 1]} : vector<16x8xf32> to vector<1x8xf32>
    %c0_121 = arith.constant 0 : index
    %c0_122 = arith.constant 0 : index
    %c0_123 = arith.constant 0 : index
    %202 = vector.load %arg16[%c0_121, %c0_122, %c0_123] : memref<16x8x1024xf32, #tpu.memory_space<vmem>>, vector<1x8x1024xf32>
    %203 = vector.shape_cast %202 : vector<1x8x1024xf32> to vector<8x1024xf32>
    %cst_124 = arith.constant dense<0.000000e+00> : vector<1x1024xf32>
    %204 = tpu.matmul %201, %203, %cst_124 {dimension_numbers = #tpu.dot_dimension_numbers<[1], [0], [0], [1], [0, 0, 1, 1], [], []>} : vector<1x8xf32>, vector<8x1024xf32>, vector<1x1024xf32> -> vector<1x1024xf32>
    %205 = arith.addf %200, %204 : vector<1x1024xf32>
    %206 = vector.extract_strided_slice %199 {offsets = [1, 0], sizes = [1, 8], strides = [1, 1]} : vector<16x8xf32> to vector<1x8xf32>
    %c1_125 = arith.constant 1 : index
    %c0_126 = arith.constant 0 : index
    %c0_127 = arith.constant 0 : index
    %207 = vector.load %arg16[%c1_125, %c0_126, %c0_127] : memref<16x8x1024xf32, #tpu.memory_space<vmem>>, vector<1x8x1024xf32>
    %208 = vector.shape_cast %207 : vector<1x8x1024xf32> to vector<8x1024xf32>
    %cst_128 = arith.constant dense<0.000000e+00> : vector<1x1024xf32>
    %209 = tpu.matmul %206, %208, %cst_128 {dimension_numbers = #tpu.dot_dimension_numbers<[1], [0], [0], [1], [0, 0, 1, 1], [], []>} : vector<1x8xf32>, vector<8x1024xf32>, vector<1x1024xf32> -> vector<1x1024xf32>
    %210 = arith.addf %205, %209 : vector<1x1024xf32>
    %211 = vector.extract_strided_slice %199 {offsets = [2, 0], sizes = [1, 8], strides = [1, 1]} : vector<16x8xf32> to vector<1x8xf32>
    %c2_129 = arith.constant 2 : index
    %c0_130 = arith.constant 0 : index
    %c0_131 = arith.constant 0 : index
    %212 = vector.load %arg16[%c2_129, %c0_130, %c0_131] : memref<16x8x1024xf32, #tpu.memory_space<vmem>>, vector<1x8x1024xf32>
    %213 = vector.shape_cast %212 : vector<1x8x1024xf32> to vector<8x1024xf32>
    %cst_132 = arith.constant dense<0.000000e+00> : vector<1x1024xf32>
    %214 = tpu.matmul %211, %213, %cst_132 {dimension_numbers = #tpu.dot_dimension_numbers<[1], [0], [0], [1], [0, 0, 1, 1], [], []>} : vector<1x8xf32>, vector<8x1024xf32>, vector<1x1024xf32> -> vector<1x1024xf32>
    %215 = arith.addf %210, %214 : vector<1x1024xf32>
    %216 = vector.extract_strided_slice %199 {offsets = [3, 0], sizes = [1, 8], strides = [1, 1]} : vector<16x8xf32> to vector<1x8xf32>
    %c3_133 = arith.constant 3 : index
    %c0_134 = arith.constant 0 : index
    %c0_135 = arith.constant 0 : index
    %217 = vector.load %arg16[%c3_133, %c0_134, %c0_135] : memref<16x8x1024xf32, #tpu.memory_space<vmem>>, vector<1x8x1024xf32>
    %218 = vector.shape_cast %217 : vector<1x8x1024xf32> to vector<8x1024xf32>
    %cst_136 = arith.constant dense<0.000000e+00> : vector<1x1024xf32>
    %219 = tpu.matmul %216, %218, %cst_136 {dimension_numbers = #tpu.dot_dimension_numbers<[1], [0], [0], [1], [0, 0, 1, 1], [], []>} : vector<1x8xf32>, vector<8x1024xf32>, vector<1x1024xf32> -> vector<1x1024xf32>
    %220 = arith.addf %215, %219 : vector<1x1024xf32>
    %221 = vector.extract_strided_slice %199 {offsets = [4, 0], sizes = [1, 8], strides = [1, 1]} : vector<16x8xf32> to vector<1x8xf32>
    %c4_137 = arith.constant 4 : index
    %c0_138 = arith.constant 0 : index
    %c0_139 = arith.constant 0 : index
    %222 = vector.load %arg16[%c4_137, %c0_138, %c0_139] : memref<16x8x1024xf32, #tpu.memory_space<vmem>>, vector<1x8x1024xf32>
    %223 = vector.shape_cast %222 : vector<1x8x1024xf32> to vector<8x1024xf32>
    %cst_140 = arith.constant dense<0.000000e+00> : vector<1x1024xf32>
    %224 = tpu.matmul %221, %223, %cst_140 {dimension_numbers = #tpu.dot_dimension_numbers<[1], [0], [0], [1], [0, 0, 1, 1], [], []>} : vector<1x8xf32>, vector<8x1024xf32>, vector<1x1024xf32> -> vector<1x1024xf32>
    %225 = arith.addf %220, %224 : vector<1x1024xf32>
    %226 = vector.extract_strided_slice %199 {offsets = [5, 0], sizes = [1, 8], strides = [1, 1]} : vector<16x8xf32> to vector<1x8xf32>
    %c5_141 = arith.constant 5 : index
    %c0_142 = arith.constant 0 : index
    %c0_143 = arith.constant 0 : index
    %227 = vector.load %arg16[%c5_141, %c0_142, %c0_143] : memref<16x8x1024xf32, #tpu.memory_space<vmem>>, vector<1x8x1024xf32>
    %228 = vector.shape_cast %227 : vector<1x8x1024xf32> to vector<8x1024xf32>
    %cst_144 = arith.constant dense<0.000000e+00> : vector<1x1024xf32>
    %229 = tpu.matmul %226, %228, %cst_144 {dimension_numbers = #tpu.dot_dimension_numbers<[1], [0], [0], [1], [0, 0, 1, 1], [], []>} : vector<1x8xf32>, vector<8x1024xf32>, vector<1x1024xf32> -> vector<1x1024xf32>
    %230 = arith.addf %225, %229 : vector<1x1024xf32>
    %231 = vector.extract_strided_slice %199 {offsets = [6, 0], sizes = [1, 8], strides = [1, 1]} : vector<16x8xf32> to vector<1x8xf32>
    %c6_145 = arith.constant 6 : index
    %c0_146 = arith.constant 0 : index
    %c0_147 = arith.constant 0 : index
    %232 = vector.load %arg16[%c6_145, %c0_146, %c0_147] : memref<16x8x1024xf32, #tpu.memory_space<vmem>>, vector<1x8x1024xf32>
    %233 = vector.shape_cast %232 : vector<1x8x1024xf32> to vector<8x1024xf32>
    %cst_148 = arith.constant dense<0.000000e+00> : vector<1x1024xf32>
    %234 = tpu.matmul %231, %233, %cst_148 {dimension_numbers = #tpu.dot_dimension_numbers<[1], [0], [0], [1], [0, 0, 1, 1], [], []>} : vector<1x8xf32>, vector<8x1024xf32>, vector<1x1024xf32> -> vector<1x1024xf32>
    %235 = arith.addf %230, %234 : vector<1x1024xf32>
    %236 = vector.extract_strided_slice %199 {offsets = [7, 0], sizes = [1, 8], strides = [1, 1]} : vector<16x8xf32> to vector<1x8xf32>
    %c7_149 = arith.constant 7 : index
    %c0_150 = arith.constant 0 : index
    %c0_151 = arith.constant 0 : index
    %237 = vector.load %arg16[%c7_149, %c0_150, %c0_151] : memref<16x8x1024xf32, #tpu.memory_space<vmem>>, vector<1x8x1024xf32>
    %238 = vector.shape_cast %237 : vector<1x8x1024xf32> to vector<8x1024xf32>
    %cst_152 = arith.constant dense<0.000000e+00> : vector<1x1024xf32>
    %239 = tpu.matmul %236, %238, %cst_152 {dimension_numbers = #tpu.dot_dimension_numbers<[1], [0], [0], [1], [0, 0, 1, 1], [], []>} : vector<1x8xf32>, vector<8x1024xf32>, vector<1x1024xf32> -> vector<1x1024xf32>
    %240 = arith.addf %235, %239 : vector<1x1024xf32>
    %241 = vector.extract_strided_slice %199 {offsets = [8, 0], sizes = [1, 8], strides = [1, 1]} : vector<16x8xf32> to vector<1x8xf32>
    %c8_153 = arith.constant 8 : index
    %c0_154 = arith.constant 0 : index
    %c0_155 = arith.constant 0 : index
    %242 = vector.load %arg16[%c8_153, %c0_154, %c0_155] : memref<16x8x1024xf32, #tpu.memory_space<vmem>>, vector<1x8x1024xf32>
    %243 = vector.shape_cast %242 : vector<1x8x1024xf32> to vector<8x1024xf32>
    %cst_156 = arith.constant dense<0.000000e+00> : vector<1x1024xf32>
    %244 = tpu.matmul %241, %243, %cst_156 {dimension_numbers = #tpu.dot_dimension_numbers<[1], [0], [0], [1], [0, 0, 1, 1], [], []>} : vector<1x8xf32>, vector<8x1024xf32>, vector<1x1024xf32> -> vector<1x1024xf32>
    %245 = arith.addf %240, %244 : vector<1x1024xf32>
    %246 = vector.extract_strided_slice %199 {offsets = [9, 0], sizes = [1, 8], strides = [1, 1]} : vector<16x8xf32> to vector<1x8xf32>
    %c9_157 = arith.constant 9 : index
    %c0_158 = arith.constant 0 : index
    %c0_159 = arith.constant 0 : index
    %247 = vector.load %arg16[%c9_157, %c0_158, %c0_159] : memref<16x8x1024xf32, #tpu.memory_space<vmem>>, vector<1x8x1024xf32>
    %248 = vector.shape_cast %247 : vector<1x8x1024xf32> to vector<8x1024xf32>
    %cst_160 = arith.constant dense<0.000000e+00> : vector<1x1024xf32>
    %249 = tpu.matmul %246, %248, %cst_160 {dimension_numbers = #tpu.dot_dimension_numbers<[1], [0], [0], [1], [0, 0, 1, 1], [], []>} : vector<1x8xf32>, vector<8x1024xf32>, vector<1x1024xf32> -> vector<1x1024xf32>
    %250 = arith.addf %245, %249 : vector<1x1024xf32>
    %251 = vector.extract_strided_slice %199 {offsets = [10, 0], sizes = [1, 8], strides = [1, 1]} : vector<16x8xf32> to vector<1x8xf32>
    %c10_161 = arith.constant 10 : index
    %c0_162 = arith.constant 0 : index
    %c0_163 = arith.constant 0 : index
    %252 = vector.load %arg16[%c10_161, %c0_162, %c0_163] : memref<16x8x1024xf32, #tpu.memory_space<vmem>>, vector<1x8x1024xf32>
    %253 = vector.shape_cast %252 : vector<1x8x1024xf32> to vector<8x1024xf32>
    %cst_164 = arith.constant dense<0.000000e+00> : vector<1x1024xf32>
    %254 = tpu.matmul %251, %253, %cst_164 {dimension_numbers = #tpu.dot_dimension_numbers<[1], [0], [0], [1], [0, 0, 1, 1], [], []>} : vector<1x8xf32>, vector<8x1024xf32>, vector<1x1024xf32> -> vector<1x1024xf32>
    %255 = arith.addf %250, %254 : vector<1x1024xf32>
    %256 = vector.extract_strided_slice %199 {offsets = [11, 0], sizes = [1, 8], strides = [1, 1]} : vector<16x8xf32> to vector<1x8xf32>
    %c11_165 = arith.constant 11 : index
    %c0_166 = arith.constant 0 : index
    %c0_167 = arith.constant 0 : index
    %257 = vector.load %arg16[%c11_165, %c0_166, %c0_167] : memref<16x8x1024xf32, #tpu.memory_space<vmem>>, vector<1x8x1024xf32>
    %258 = vector.shape_cast %257 : vector<1x8x1024xf32> to vector<8x1024xf32>
    %cst_168 = arith.constant dense<0.000000e+00> : vector<1x1024xf32>
    %259 = tpu.matmul %256, %258, %cst_168 {dimension_numbers = #tpu.dot_dimension_numbers<[1], [0], [0], [1], [0, 0, 1, 1], [], []>} : vector<1x8xf32>, vector<8x1024xf32>, vector<1x1024xf32> -> vector<1x1024xf32>
    %260 = arith.addf %255, %259 : vector<1x1024xf32>
    %261 = vector.extract_strided_slice %199 {offsets = [12, 0], sizes = [1, 8], strides = [1, 1]} : vector<16x8xf32> to vector<1x8xf32>
    %c12_169 = arith.constant 12 : index
    %c0_170 = arith.constant 0 : index
    %c0_171 = arith.constant 0 : index
    %262 = vector.load %arg16[%c12_169, %c0_170, %c0_171] : memref<16x8x1024xf32, #tpu.memory_space<vmem>>, vector<1x8x1024xf32>
    %263 = vector.shape_cast %262 : vector<1x8x1024xf32> to vector<8x1024xf32>
    %cst_172 = arith.constant dense<0.000000e+00> : vector<1x1024xf32>
    %264 = tpu.matmul %261, %263, %cst_172 {dimension_numbers = #tpu.dot_dimension_numbers<[1], [0], [0], [1], [0, 0, 1, 1], [], []>} : vector<1x8xf32>, vector<8x1024xf32>, vector<1x1024xf32> -> vector<1x1024xf32>
    %265 = arith.addf %260, %264 : vector<1x1024xf32>
    %266 = vector.extract_strided_slice %199 {offsets = [13, 0], sizes = [1, 8], strides = [1, 1]} : vector<16x8xf32> to vector<1x8xf32>
    %c13_173 = arith.constant 13 : index
    %c0_174 = arith.constant 0 : index
    %c0_175 = arith.constant 0 : index
    %267 = vector.load %arg16[%c13_173, %c0_174, %c0_175] : memref<16x8x1024xf32, #tpu.memory_space<vmem>>, vector<1x8x1024xf32>
    %268 = vector.shape_cast %267 : vector<1x8x1024xf32> to vector<8x1024xf32>
    %cst_176 = arith.constant dense<0.000000e+00> : vector<1x1024xf32>
    %269 = tpu.matmul %266, %268, %cst_176 {dimension_numbers = #tpu.dot_dimension_numbers<[1], [0], [0], [1], [0, 0, 1, 1], [], []>} : vector<1x8xf32>, vector<8x1024xf32>, vector<1x1024xf32> -> vector<1x1024xf32>
    %270 = arith.addf %265, %269 : vector<1x1024xf32>
    %271 = vector.extract_strided_slice %199 {offsets = [14, 0], sizes = [1, 8], strides = [1, 1]} : vector<16x8xf32> to vector<1x8xf32>
    %c14_177 = arith.constant 14 : index
    %c0_178 = arith.constant 0 : index
    %c0_179 = arith.constant 0 : index
    %272 = vector.load %arg16[%c14_177, %c0_178, %c0_179] : memref<16x8x1024xf32, #tpu.memory_space<vmem>>, vector<1x8x1024xf32>
    %273 = vector.shape_cast %272 : vector<1x8x1024xf32> to vector<8x1024xf32>
    %cst_180 = arith.constant dense<0.000000e+00> : vector<1x1024xf32>
    %274 = tpu.matmul %271, %273, %cst_180 {dimension_numbers = #tpu.dot_dimension_numbers<[1], [0], [0], [1], [0, 0, 1, 1], [], []>} : vector<1x8xf32>, vector<8x1024xf32>, vector<1x1024xf32> -> vector<1x1024xf32>
    %275 = arith.addf %270, %274 : vector<1x1024xf32>
    %276 = vector.extract_strided_slice %199 {offsets = [15, 0], sizes = [1, 8], strides = [1, 1]} : vector<16x8xf32> to vector<1x8xf32>
    %c15_181 = arith.constant 15 : index
    %c0_182 = arith.constant 0 : index
    %c0_183 = arith.constant 0 : index
    %277 = vector.load %arg16[%c15_181, %c0_182, %c0_183] : memref<16x8x1024xf32, #tpu.memory_space<vmem>>, vector<1x8x1024xf32>
    %278 = vector.shape_cast %277 : vector<1x8x1024xf32> to vector<8x1024xf32>
    %cst_184 = arith.constant dense<0.000000e+00> : vector<1x1024xf32>
    %279 = tpu.matmul %276, %278, %cst_184 {dimension_numbers = #tpu.dot_dimension_numbers<[1], [0], [0], [1], [0, 0, 1, 1], [], []>} : vector<1x8xf32>, vector<8x1024xf32>, vector<1x1024xf32> -> vector<1x1024xf32>
    %280 = arith.addf %275, %279 : vector<1x1024xf32>
    %281 = arith.addf %280, %6 : vector<1x1024xf32>
    %cst_185 = arith.constant 0.000000e+00 : f32
    %282 = vector.broadcast %cst_185 : f32 to vector<1x1024xf32>
    %283 = arith.cmpf oge, %281, %282 : vector<1x1024xf32>
    %cst_186 = arith.constant 2.000000e-01 : f32
    %284 = vector.broadcast %cst_186 : f32 to vector<1x1024xf32>
    %285 = arith.mulf %284, %281 : vector<1x1024xf32>
    %286 = arith.select %283, %281, %285 : vector<1x1024xi1>, vector<1x1024xf32>
    %287 = arith.mulf %286, %7 : vector<1x1024xf32>
    %cst_187 = arith.constant dense<0.000000e+00> : vector<1xf32>
    %288 = vector.multi_reduction <add>, %287, %cst_187 [1] : vector<1x1024xf32> to vector<1xf32>
    %289 = vector.shape_cast %288 : vector<1xf32> to vector<1x1xf32>
    %290 = arith.addf %289, %8 : vector<1x1xf32>
    %cst_188 = arith.constant 0.000000e+00 : f32
    %291 = vector.broadcast %cst_188 : f32 to vector<1x1xf32>
    %292 = arith.subf %291, %290 : vector<1x1xf32>
    %293 = math.exp %292 : vector<1x1xf32>
    %cst_189 = arith.constant 1.000000e+00 : f32
    %294 = vector.broadcast %cst_189 : f32 to vector<1x1xf32>
    %295 = arith.addf %294, %293 : vector<1x1xf32>
    %cst_190 = arith.constant 1.000000e+00 : f32
    %296 = vector.broadcast %cst_190 : f32 to vector<1x1xf32>
    %297 = arith.divf %296, %295 : vector<1x1xf32>
    %c1_191 = arith.constant 1 : index
    %c0_192 = arith.constant 0 : index
    %298 = vector.load %arg20[%c1_191, %c0_192] : memref<2x1xf32, #tpu.memory_space<vmem>>, vector<1x1xf32>
    tpu.vector_store %arg20[%c1_191, %c0_192], %297 {strides = array<i32>} : memref<2x1xf32, #tpu.memory_space<vmem>>, vector<1x1xf32>,
    return
  }
  func.func @transform_0(%arg0: i32) -> (i32, i32, i32) {
    %c0_i32 = arith.constant 0 : i32
    %c0_i32_0 = arith.constant 0 : i32
    %c0_i32_1 = arith.constant 0 : i32
    %c0_i32_2 = arith.constant 0 : i32
    return %c0_i32, %c0_i32_0, %c0_i32_1 : i32, i32, i32
  }
  func.func @transform_1(%arg0: i32) -> (i32, i32) {
    %c0_i32 = arith.constant 0 : i32
    %c0_i32_0 = arith.constant 0 : i32
    %c0_i32_1 = arith.constant 0 : i32
    return %c0_i32, %c0_i32_0 : i32, i32
  }
  func.func @transform_2(%arg0: i32) -> (i32, i32) {
    %c0_i32 = arith.constant 0 : i32
    %c0_i32_0 = arith.constant 0 : i32
    %c0_i32_1 = arith.constant 0 : i32
    return %c0_i32, %c0_i32_0 : i32, i32
  }
  func.func @transform_3(%arg0: i32) -> (i32, i32) {
    %c0_i32 = arith.constant 0 : i32
    %c0_i32_0 = arith.constant 0 : i32
    %c0_i32_1 = arith.constant 0 : i32
    return %c0_i32, %c0_i32_0 : i32, i32
  }
  func.func @transform_4(%arg0: i32) -> (i32, i32) {
    %c0_i32 = arith.constant 0 : i32
    %c0_i32_0 = arith.constant 0 : i32
    %c0_i32_1 = arith.constant 0 : i32
    return %c0_i32, %c0_i32_0 : i32, i32
  }
  func.func @transform_5(%arg0: i32) -> (i32, i32) {
    %c0_i32 = arith.constant 0 : i32
    %c0_i32_0 = arith.constant 0 : i32
    %c0_i32_1 = arith.constant 0 : i32
    return %c0_i32, %c0_i32_0 : i32, i32
  }
  func.func @transform_6(%arg0: i32) -> (i32, i32) {
    %c0_i32 = arith.constant 0 : i32
    %c0_i32_0 = arith.constant 0 : i32
    %c0_i32_1 = arith.constant 0 : i32
    return %c0_i32, %c0_i32_0 : i32, i32
  }
  func.func @transform_7(%arg0: i32) -> (i32, i32) {
    %c0_i32 = arith.constant 0 : i32
    %c0_i32_0 = arith.constant 0 : i32
    %c0_i32_1 = arith.constant 0 : i32
    return %c0_i32, %c0_i32_0 : i32, i32
  }
  func.func @transform_8(%arg0: i32) -> (i32, i32) {
    %c0_i32 = arith.constant 0 : i32
    %c0_i32_0 = arith.constant 0 : i32
    %c0_i32_1 = arith.constant 0 : i32
    return %c0_i32, %c0_i32_0 : i32, i32
  }
  func.func @transform_9(%arg0: i32) -> (i32, i32) {
    %c0_i32 = arith.constant 0 : i32
    %c0_i32_0 = arith.constant 0 : i32
    %c0_i32_1 = arith.constant 0 : i32
    return %c0_i32, %c0_i32_0 : i32, i32
  }
  func.func @transform_10(%arg0: i32) -> (i32, i32) {
    %c0_i32 = arith.constant 0 : i32
    %c0_i32_0 = arith.constant 0 : i32
    %c0_i32_1 = arith.constant 0 : i32
    return %c0_i32, %c0_i32_0 : i32, i32
  }
  func.func @transform_11(%arg0: i32) -> (i32, i32) {
    %c0_i32 = arith.constant 0 : i32
    %c0_i32_0 = arith.constant 0 : i32
    %c0_i32_1 = arith.constant 0 : i32
    return %c0_i32, %c0_i32_0 : i32, i32
  }
  func.func @transform_12(%arg0: i32) -> (i32, i32) {
    %c0_i32 = arith.constant 0 : i32
    %c0_i32_0 = arith.constant 0 : i32
    %c0_i32_1 = arith.constant 0 : i32
    return %c0_i32, %c0_i32_0 : i32, i32
  }
  func.func @transform_13(%arg0: i32) -> (i32, i32) {
    %c0_i32 = arith.constant 0 : i32
    %c0_i32_0 = arith.constant 0 : i32
    %c0_i32_1 = arith.constant 0 : i32
    return %c0_i32, %c0_i32_0 : i32, i32
  }
  func.func @transform_14(%arg0: i32) -> (i32, i32) {
    %c0_i32 = arith.constant 0 : i32
    %c0_i32_0 = arith.constant 0 : i32
    %c0_i32_1 = arith.constant 0 : i32
    return %c0_i32, %c0_i32_0 : i32, i32
  }
  func.func @transform_15(%arg0: i32) -> (i32, i32, i32) {
    %c0_i32 = arith.constant 0 : i32
    %c0_i32_0 = arith.constant 0 : i32
    %c0_i32_1 = arith.constant 0 : i32
    %c0_i32_2 = arith.constant 0 : i32
    return %c0_i32, %c0_i32_0, %c0_i32_1 : i32, i32, i32
  }
  func.func @transform_16(%arg0: i32) -> (i32, i32) {
    %c0_i32 = arith.constant 0 : i32
    %c0_i32_0 = arith.constant 0 : i32
    %c0_i32_1 = arith.constant 0 : i32
    return %c0_i32, %c0_i32_0 : i32, i32
  }
  func.func @transform_17(%arg0: i32) -> (i32, i32) {
    %c0_i32 = arith.constant 0 : i32
    %c0_i32_0 = arith.constant 0 : i32
    %c0_i32_1 = arith.constant 0 : i32
    return %c0_i32, %c0_i32_0 : i32, i32
  }
  func.func @transform_18(%arg0: i32) -> (i32, i32) {
    %c0_i32 = arith.constant 0 : i32
    %c0_i32_0 = arith.constant 0 : i32
    %c0_i32_1 = arith.constant 0 : i32
    return %c0_i32, %c0_i32_0 : i32, i32
  }
  func.func @transform_19(%arg0: i32) -> (i32, i32) {
    %c0_i32 = arith.constant 0 : i32
    %c0_i32_0 = arith.constant 0 : i32
    %c0_i32_1 = arith.constant 0 : i32
    return %c0_i32, %c0_i32_0 : i32, i32
  }
}

</mosaic_0001>

<llo_original>
// kernel: tpu_custom_call.1
$region0: #{tpu_custom_call.1}
  #allocation0 [shape = 'u32[]', space=smem, size = 0x4, offset = 0x4, fixed_abs, tag = 'smem constant byte address 0x4 - core index']
  #allocation1 [shape = 'u32[144,128]{1,0:T(1,128)}', space=vmem, size = 0x12000, scoped, tag = 'internal scratch']
  #allocation2 [shape = 'f32[1,1]{1,0:T(1,128)S(1)}', space=vmem, size = 0x200, scoped, tag = 'scoped memory for tpu_custom_call.1']
  %s0 = inlined_call_operand.vmem [shape: f32[2,16,16], index: 0, kind: input, shape index: {}]
  %s1 = inlined_call_operand.vmem [shape: f32[16,32], index: 1, kind: input, shape index: {}]
  %s2 = inlined_call_operand.hbm [shape: f32[1,32], index: 2, kind: input, shape index: {}]
  %s3 = inlined_call_operand.hbm [shape: f32[1,32], index: 3, kind: input, shape index: {}]
  %s4 = inlined_call_operand.hbm [shape: f32[1,32], index: 4, kind: input, shape index: {}]
  %s5 = inlined_call_operand.hbm [shape: f32[1,32], index: 5, kind: input, shape index: {}]
  %s6 = inlined_call_operand.hbm [shape: f32[1,32], index: 6, kind: input, shape index: {}]
  %s7 = inlined_call_operand.vmem [shape: f32[32,16], index: 7, kind: input, shape index: {}]
  %s8 = inlined_call_operand.hbm [shape: f32[1,16], index: 8, kind: input, shape index: {}]
  %s9 = inlined_call_operand.vmem [shape: f32[1,16], index: 9, kind: input, shape index: {}]
  %s10 = inlined_call_operand.vmem [shape: f32[1,16], index: 10, kind: input, shape index: {}]
  %s11 = inlined_call_operand.vmem [shape: f32[1,16], index: 11, kind: input, shape index: {}]
  %s12 = inlined_call_operand.vmem [shape: f32[1,16], index: 12, kind: input, shape index: {}]
  %s13 = inlined_call_operand.vmem [shape: f32[16,8], index: 13, kind: input, shape index: {}]
  %s14 = inlined_call_operand.vmem [shape: f32[1,8], index: 14, kind: input, shape index: {}]
  %s15 = inlined_call_operand.hbm [shape: f32[16,8,1024], index: 15, kind: input, shape index: {}]
  %s16 = inlined_call_operand.vmem [shape: f32[1,1024], index: 16, kind: input, shape index: {}]
  %s17 = inlined_call_operand.vmem [shape: f32[1,1024], index: 17, kind: input, shape index: {}]
  %s18 = inlined_call_operand.<no memory space> [shape: f32[1,1], index: 18, kind: input, shape index: {}]
  %s19 = inlined_call_operand.vmem [shape: f32[2,1], index: 19, kind: output, shape index: {}]
  %s20 = sld [smem:[#allocation0]]
  $region114: #{tpu_custom_call.1} parent=0
    _
  %s22 = ssub.s32 1, %s20
  %s23 = scalar_select 0, %s22, %s20
  %v24 = vstv %s18
  %25 = vst [vmem:[#allocation2] sm:$0x1] %v24
  $region1: #{tpu_custom_call.1} parent=0
    #allocation3 [shape = 'u8[512]{0}', space=vmem, size = 0x400, scoped, tag = 'input window, operand 2, single buffered']
    #allocation4 [shape = 's32[1]{0}', space=sflag, size = 0x4, scoped, tag = 'scoped memory for tpu_custom_call.1']
    #allocation5 [shape = 'u8[512]{0}', space=vmem, size = 0x400, scoped, tag = 'input window, operand 3, single buffered']
    #allocation6 [shape = 's32[1]{0}', space=sflag, size = 0x4, scoped, tag = 'scoped memory for tpu_custom_call.1']
    #allocation7 [shape = 'u8[512]{0}', space=vmem, size = 0x400, scoped, tag = 'input window, operand 4, single buffered']
    #allocation8 [shape = 'u8[512]{0}', space=vmem, size = 0x400, scoped, tag = 'input window, operand 5, single buffered']
    #allocation9 [shape = 's32[1]{0}', space=sflag, size = 0x4, scoped, tag = 'scoped memory for tpu_custom_call.1']
    #allocation10 [shape = 'u8[512]{0}', space=vmem, size = 0x400, scoped, tag = 'input window, operand 6, single buffered']
    #allocation11 [shape = 'u8[512]{0}', space=vmem, size = 0x400, scoped, tag = 'input window, operand 8, single buffered']
    #allocation12 [shape = 's32[1]{0}', space=sflag, size = 0x4, scoped, tag = 'scoped memory for tpu_custom_call.1']
    #allocation13 [shape = 'u8[524288]{0}', space=vmem, size = 0x80000, scoped, tag = 'input window, operand 15, single buffered']
    %26 = vsyncpa [#allocation4], 0
    %27 = vsyncpa [#allocation6], 0
    %28 = vsyncpa [#allocation9], 0
    %29 = vsyncpa [#allocation12], 0
    // Predicated region
    $region2: #{tpu_custom_call.1} parent=1 // pred_check
      _
    $region3: #{tpu_custom_call.1} parent=1 // pred_check_branch
      %31 = sbr.rel (0) target = $region5
    $region4: #{tpu_custom_call.1} parent=1 // pred_region
      _
    $region5: #{tpu_custom_call.1} parent=1 // pred_fallthru
      _
    // Predicated region
    $region6: #{tpu_custom_call.1} parent=1 // pred_check
      _
    $region7: #{tpu_custom_call.1} parent=1 // pred_check_branch
      %33 = sbr.rel (0) target = $region9
    $region8: #{tpu_custom_call.1} parent=1 // pred_region
      _
    $region9: #{tpu_custom_call.1} parent=1 // pred_fallthru
      _
    // Predicated region
    $region10: #{tpu_custom_call.1} parent=1 // pred_check
      _
    $region11: #{tpu_custom_call.1} parent=1 // pred_check_branch
      %35 = sbr.rel (0) target = $region13
    $region12: #{tpu_custom_call.1} parent=1 // pred_region
      %s37 = ssub.s32 16, 16
      %38 = vsyncadd [#allocation4], %s37
      %s40 = sshll.u32 [#allocation3], 4
      %s41 = int_to_ptr.vmem [resolvable:$true] %s40
      %43 = dma.hbm_to_vmem [thread:$0]  %s2, 16, %s41, [#allocation4]
    $region13: #{tpu_custom_call.1} parent=1 // pred_fallthru
      _
    // Predicated region
    $region14: #{tpu_custom_call.1} parent=1 // pred_check
      _
    $region15: #{tpu_custom_call.1} parent=1 // pred_check_branch
      %45 = sbr.rel (0) target = $region17
    $region16: #{tpu_custom_call.1} parent=1 // pred_region
      %s47 = ssub.s32 16, 16
      %48 = vsyncadd [#allocation6], %s47
      %s50 = sshll.u32 [#allocation5], 4
      %s51 = int_to_ptr.vmem [resolvable:$true] %s50
      %53 = dma.hbm_to_vmem [thread:$0]  %s3, 16, %s51, [#allocation6]
    $region17: #{tpu_custom_call.1} parent=1 // pred_fallthru
      _
    // Predicated region
    $region18: #{tpu_custom_call.1} parent=1 // pred_check
      _
    $region19: #{tpu_custom_call.1} parent=1 // pred_check_branch
      %55 = sbr.rel (0) target = $region21
    $region20: #{tpu_custom_call.1} parent=1 // pred_region
      %s57 = ssub.s32 16, 16
      %58 = vsyncadd [#allocation6], %s57
      %s60 = sshll.u32 [#allocation7], 4
      %s61 = int_to_ptr.vmem [resolvable:$true] %s60
      %63 = dma.hbm_to_vmem [thread:$0]  %s4, 16, %s61, [#allocation6]
    $region21: #{tpu_custom_call.1} parent=1 // pred_fallthru
      _
    // Predicated region
    $region22: #{tpu_custom_call.1} parent=1 // pred_check
      _
    $region23: #{tpu_custom_call.1} parent=1 // pred_check_branch
      %65 = sbr.rel (0) target = $region25
    $region24: #{tpu_custom_call.1} parent=1 // pred_region
      %s67 = ssub.s32 16, 16
      %68 = vsyncadd [#allocation9], %s67
      %s70 = sshll.u32 [#allocation8], 4
      %s71 = int_to_ptr.vmem [resolvable:$true] %s70
      %73 = dma.hbm_to_vmem [thread:$0]  %s5, 16, %s71, [#allocation9]
    $region25: #{tpu_custom_call.1} parent=1 // pred_fallthru
      _
    // Predicated region
    $region26: #{tpu_custom_call.1} parent=1 // pred_check
      _
    $region27: #{tpu_custom_call.1} parent=1 // pred_check_branch
      %75 = sbr.rel (0) target = $region29
    $region28: #{tpu_custom_call.1} parent=1 // pred_region
      %s77 = ssub.s32 16, 16
      %78 = vsyncadd [#allocation9], %s77
      %s80 = sshll.u32 [#allocation10], 4
      %s81 = int_to_ptr.vmem [resolvable:$true] %s80
      %83 = dma.hbm_to_vmem [thread:$0]  %s6, 16, %s81, [#allocation9]
    $region29: #{tpu_custom_call.1} parent=1 // pred_fallthru
      _
    // Predicated region
    $region30: #{tpu_custom_call.1} parent=1 // pred_check
      _
    $region31: #{tpu_custom_call.1} parent=1 // pred_check_branch
      %85 = sbr.rel (0) target = $region33
    $region32: #{tpu_custom_call.1} parent=1 // pred_region
      _
    $region33: #{tpu_custom_call.1} parent=1 // pred_fallthru
      _
    // Predicated region
    $region34: #{tpu_custom_call.1} parent=1 // pred_check
      _
    $region35: #{tpu_custom_call.1} parent=1 // pred_check_branch
      %87 = sbr.rel (0) target = $region37
    $region36: #{tpu_custom_call.1} parent=1 // pred_region
      %s89 = ssub.s32 16, 16
      %90 = vsyncadd [#allocation12], %s89
      %s92 = sshll.u32 [#allocation11], 4
      %s93 = int_to_ptr.vmem [resolvable:$true] %s92
      %95 = dma.hbm_to_vmem [thread:$0]  %s8, 16, %s93, [#allocation12]
    $region37: #{tpu_custom_call.1} parent=1 // pred_fallthru
      _
    // Predicated region
    $region38: #{tpu_custom_call.1} parent=1 // pred_check
      _
    $region39: #{tpu_custom_call.1} parent=1 // pred_check_branch
      %97 = sbr.rel (0) target = $region41
    $region40: #{tpu_custom_call.1} parent=1 // pred_region
      _
    $region41: #{tpu_custom_call.1} parent=1 // pred_fallthru
      _
    // Predicated region
    $region42: #{tpu_custom_call.1} parent=1 // pred_check
      _
    $region43: #{tpu_custom_call.1} parent=1 // pred_check_branch
      %99 = sbr.rel (0) target = $region45
    $region44: #{tpu_custom_call.1} parent=1 // pred_region
      _
    $region45: #{tpu_custom_call.1} parent=1 // pred_fallthru
      _
    // Predicated region
    $region46: #{tpu_custom_call.1} parent=1 // pred_check
      _
    $region47: #{tpu_custom_call.1} parent=1 // pred_check_branch
      %101 = sbr.rel (0) target = $region49
    $region48: #{tpu_custom_call.1} parent=1 // pred_region
      _
    $region49: #{tpu_custom_call.1} parent=1 // pred_fallthru
      _
    // Predicated region
    $region50: #{tpu_custom_call.1} parent=1 // pred_check
      _
    $region51: #{tpu_custom_call.1} parent=1 // pred_check_branch
      %103 = sbr.rel (0) target = $region53
    $region52: #{tpu_custom_call.1} parent=1 // pred_region
      _
    $region53: #{tpu_custom_call.1} parent=1 // pred_fallthru
      _
    // Predicated region
    $region54: #{tpu_custom_call.1} parent=1 // pred_check
      _
    $region55: #{tpu_custom_call.1} parent=1 // pred_check_branch
      %105 = sbr.rel (0) target = $region57
    $region56: #{tpu_custom_call.1} parent=1 // pred_region
      _
    $region57: #{tpu_custom_call.1} parent=1 // pred_fallthru
      _
    // Predicated region
    $region58: #{tpu_custom_call.1} parent=1 // pred_check
      _
    $region59: #{tpu_custom_call.1} parent=1 // pred_check_branch
      %107 = sbr.rel (0) target = $region61
    $region60: #{tpu_custom_call.1} parent=1 // pred_region
      _
    $region61: #{tpu_custom_call.1} parent=1 // pred_fallthru
      _
    // Predicated region
    $region62: #{tpu_custom_call.1} parent=1 // pred_check
      _
    $region63: #{tpu_custom_call.1} parent=1 // pred_check_branch
      %109 = sbr.rel (0) target = $region65
    $region64: #{tpu_custom_call.1} parent=1 // pred_region
      %s111 = ssub.s32 16384, 16384
      %112 = vsyncadd [#allocation12], %s111
      %s113 = sshll.u32 [#allocation13], 4
      %s114 = int_to_ptr.vmem [resolvable:$true] %s113
      %119 = dma.hbm_to_vmem [thread:$0]  %s15, 16384, %s114, [#allocation12], 1024, 1024, 64
    $region65: #{tpu_custom_call.1} parent=1 // pred_fallthru
      _
    // Predicated region
    $region66: #{tpu_custom_call.1} parent=1 // pred_check
      _
    $region67: #{tpu_custom_call.1} parent=1 // pred_check_branch
      %121 = sbr.rel (0) target = $region69
    $region68: #{tpu_custom_call.1} parent=1 // pred_region
      _
    $region69: #{tpu_custom_call.1} parent=1 // pred_fallthru
      _
    // Predicated region
    $region70: #{tpu_custom_call.1} parent=1 // pred_check
      _
    $region71: #{tpu_custom_call.1} parent=1 // pred_check_branch
      %123 = sbr.rel (0) target = $region73
    $region72: #{tpu_custom_call.1} parent=1 // pred_region
      _
    $region73: #{tpu_custom_call.1} parent=1 // pred_fallthru
      _
    // Predicated region
    $region74: #{tpu_custom_call.1} parent=1 // pred_check
      _
    $region75: #{tpu_custom_call.1} parent=1 // pred_check_branch
      %125 = sbr.rel (0) target = $region77
    $region76: #{tpu_custom_call.1} parent=1 // pred_region
      _
    $region77: #{tpu_custom_call.1} parent=1 // pred_fallthru
      _
    // Predicated region
    $region78: #{tpu_custom_call.1} parent=1 // pred_check
      _
    $region79: #{tpu_custom_call.1} parent=1 // pred_check_branch
      %127 = sbr.rel (0) target = $region81
    $region80: #{tpu_custom_call.1} parent=1 // pred_region
      %128 = dma.done [#allocation4], 16
    $region81: #{tpu_custom_call.1} parent=1 // pred_fallthru
      _
    // Predicated region
    $region82: #{tpu_custom_call.1} parent=1 // pred_check
      _
    $region83: #{tpu_custom_call.1} parent=1 // pred_check_branch
      %130 = sbr.rel (0) target = $region85
    $region84: #{tpu_custom_call.1} parent=1 // pred_region
      %131 = dma.done [#allocation6], 16
    $region85: #{tpu_custom_call.1} parent=1 // pred_fallthru
      _
    // Predicated region
    $region86: #{tpu_custom_call.1} parent=1 // pred_check
      _
    $region87: #{tpu_custom_call.1} parent=1 // pred_check_branch
      %133 = sbr.rel (0) target = $region89
    $region88: #{tpu_custom_call.1} parent=1 // pred_region
      %134 = dma.done [#allocation6], 16
    $region89: #{tpu_custom_call.1} parent=1 // pred_fallthru
      _
    // Predicated region
    $region90: #{tpu_custom_call.1} parent=1 // pred_check
      _
    $region91: #{tpu_custom_call.1} parent=1 // pred_check_branch
      %136 = sbr.rel (0) target = $region93
    $region92: #{tpu_custom_call.1} parent=1 // pred_region
      %137 = dma.done [#allocation9], 16
    $region93: #{tpu_custom_call.1} parent=1 // pred_fallthru
      _
    // Predicated region
    $region94: #{tpu_custom_call.1} parent=1 // pred_check
      _
    $region95: #{tpu_custom_call.1} parent=1 // pred_check_branch
      %139 = sbr.rel (0) target = $region97
    $region96: #{tpu_custom_call.1} parent=1 // pred_region
      %140 = dma.done [#allocation9], 16
    $region97: #{tpu_custom_call.1} parent=1 // pred_fallthru
      _
    // Predicated region
    $region98: #{tpu_custom_call.1} parent=1 // pred_check
      _
    $region99: #{tpu_custom_call.1} parent=1 // pred_check_branch
      %142 = sbr.rel (0) target = $region101
    $region100: #{tpu_custom_call.1} parent=1 // pred_region
      %143 = dma.done [#allocation12], 16
    $region101: #{tpu_custom_call.1} parent=1 // pred_fallthru
      _
    // Predicated region
    $region102: #{tpu_custom_call.1} parent=1 // pred_check
      _
    $region103: #{tpu_custom_call.1} parent=1 // pred_check_branch
      %145 = sbr.rel (0) target = $region105
    $region104: #{tpu_custom_call.1} parent=1 // pred_region
      %146 = dma.done [#allocation12], 16384
    $region105: #{tpu_custom_call.1} parent=1 // pred_fallthru
      _
    %v147 = vld [vmem:[%s1] sm:$0xff]
    %v148 = vld [vmem:[%s1 + $0x8] sm:$0xff]
    %v149 = vld [vmem:[%s7] sm:$0xff]
    %v150 = vld [vmem:[%s7 + $0x8] sm:$0xff]
    %v151 = vld [vmem:[%s7 + $0x10] sm:$0xff]
    %v152 = vld [vmem:[%s7 + $0x18] sm:$0xff]
    %v153 = vld [vmem:[%s13] sm:$0xff]
    %v154 = vld [vmem:[%s13 + $0x8] sm:$0xff]
    %v155 = vld [vmem:[#allocation3] sm:$0x1]
    %v156 = vld [vmem:[#allocation11] sm:$0x1]
    %v157 = vld [vmem:[%s14] sm:$0x1]
    %v158 = vld [vmem:[%s16] sm:$0xff]
    %v159 = vld [vmem:[%s17] sm:$0xff]
    %v160 = vld [vmem:[#allocation2] sm:$0x1]
    %v161 = vld [vmem:[#allocation5] sm:$0x1]
    %v162 = vld [vmem:[#allocation10] sm:$0x1]
    %v163 = vadd.f32 %v162, 1e-05
    %v164 = vrsqrt.pop %v163
    %v165 = vmul.f32 %v161, %v164
    %v166 = vld [vmem:[#allocation7] sm:$0x1]
    %v167 = vld [vmem:[#allocation8] sm:$0x1]
    %v168 = vmul.f32 %v167, %v165
    %v169 = vsub.f32 %v166, %v168
    %v170 = vld [vmem:[%s9] sm:$0x1]
    %v171 = vld [vmem:[%s12] sm:$0x1]
    %v172 = vadd.f32 %v171, 1e-05
    %v173 = vrsqrt.pop %v172
    %v174 = vmul.f32 %v170, %v173
    %v175 = vld [vmem:[%s10] sm:$0x1]
    %v176 = vld [vmem:[%s11] sm:$0x1]
    %v177 = vmul.f32 %v176, %v174
    %v178 = vsub.f32 %v175, %v177
    %v179 = vld [vmem:[%s0] sm:$0xff]
    %v180 = vld [vmem:[%s0 + $0x8] sm:$0xff]
    %v182 = vlaneseq
    %v183 = vshrl.u32 %v182, 7
    %v184 = vsub.s32 0, %v183
    %v185 = vrot.slane %v155, %v184
    %vm187 = vcmask 130048
    %v189 = vsel %vm187, %v179, 0
    %v192 = vsel %vm187, %v180, 0
    %194 = vmatprep.subr.mxu0 0.0
    %195 = vmatpush1.msra.mxu0 0.0
    %196 = vmatprep.subr.mxu0 0.0
    %197 = vmatpush1.msra.mxu0 0.0
    %198 = vmatprep.subr.mxu0 0.0
    %199 = vmatpush1.msra.mxu0 0.0
    %200 = vmatprep.subr.mxu0 0.0
    %201 = vmatpush1.msra.mxu0 0.0
    %202 = vmatprep.subr.mxu0 0.0
    %203 = vmatpush1.msra.mxu0 0.0
    %204 = vmatprep.subr.mxu0 0.0
    %205 = vmatpush1.msra.mxu0 0.0
    %206 = vmatprep.subr.mxu0 0.0
    %207 = vmatpush1.msra.mxu0 0.0
    %208 = vmatprep.subr.mxu0 0.0
    %209 = vmatpush1.msra.mxu0 0.0
    %210 = vmatprep.subr.mxu0 0.0
    %211 = vmatpush1.msra.mxu0 0.0
    %212 = vmatprep.subr.mxu0 0.0
    %213 = vmatpush1.msra.mxu0 0.0
    %214 = vmatprep.subr.mxu0 0.0
    %215 = vmatpush1.msra.mxu0 0.0
    %216 = vmatprep.subr.mxu0 0.0
    %217 = vmatpush1.msra.mxu0 0.0
    %218 = vmatprep.subr.mxu0 0.0
    %219 = vmatpush1.msra.mxu0 0.0
    %220 = vmatprep.subr.mxu0 0.0
    %221 = vmatpush1.msra.mxu0 0.0
    %222 = vmatprep.subr.mxu0 0.0
    %223 = vmatpush1.msra.mxu0 %v148
    %224 = vmatprep.subr.mxu0 0.0
    %225 = vmatpush1.msra.mxu0 %v147
    %226 = vmatprep.subr.mxu0 0.0
    %227 = vmatpush2.msra.mxu0 0.0
    %228 = vmatprep.subr.mxu0 0.0
    %229 = vmatpush2.msra.mxu0 0.0
    %230 = vmatprep.subr.mxu0 0.0
    %231 = vmatpush2.msra.mxu0 0.0
    %232 = vmatprep.subr.mxu0 0.0
    %233 = vmatpush2.msra.mxu0 0.0
    %234 = vmatprep.subr.mxu0 0.0
    %235 = vmatpush2.msra.mxu0 0.0
    %236 = vmatprep.subr.mxu0 0.0
    %237 = vmatpush2.msra.mxu0 0.0
    %238 = vmatprep.subr.mxu0 0.0
    %239 = vmatpush2.msra.mxu0 0.0
    %240 = vmatprep.subr.mxu0 0.0
    %241 = vmatpush2.msra.mxu0 0.0
    %242 = vmatprep.subr.mxu0 0.0
    %243 = vmatpush2.msra.mxu0 0.0
    %244 = vmatprep.subr.mxu0 0.0
    %245 = vmatpush2.msra.mxu0 0.0
    %246 = vmatprep.subr.mxu0 0.0
    %247 = vmatpush2.msra.mxu0 0.0
    %248 = vmatprep.subr.mxu0 0.0
    %249 = vmatpush2.msra.mxu0 0.0
    %250 = vmatprep.subr.mxu0 0.0
    %251 = vmatpush2.msra.mxu0 0.0
    %252 = vmatprep.subr.mxu0 0.0
    %253 = vmatpush2.msra.mxu0 0.0
    %254 = vmatprep.subr.mxu0 0.0
    %255 = vmatpush2.msra.mxu0 0.0
    %256 = vmatprep.subr.mxu0 0.0
    %257 = vmatpush2.msra.mxu0 0.0
    %258 = vmatprep.mubr.f32.mxu0 0.0
    %259 = vmatmul.mubr.f32.gmra.mxu0 %v189
    %v260 = vpop.f32.mrf.mxu0
    %v261 = vadd.f32 %v185, %v260
    %v262 = vpop.f32.mrf.mxu0
    %263 = vmatprep.mubr.f32.mxu0 0.0
    %264 = vmatmul.mubr.f32.gmra.mxu0 %v192
    %v265 = vpop.f32.mrf.mxu0
    %v266 = vadd.f32 %v185, %v265
    %v267 = vpop.f32.mrf.mxu0
    %268 = vdwg.mxu0
    %vm269 = vcmp.ge.f32.partialorder %v261, 0.0
    %vm270 = vcmp.ge.f32.partialorder %v266, 0.0
    %v271 = vmul.f32 %v261, 0.2
    %v272 = vmul.f32 %v266, 0.2
    %v273 = vsel %vm269, %v261, %v271
    %v274 = vsel %vm270, %v266, %v272
    %v276 = vlaneseq
    %v277 = vshrl.u32 %v276, 7
    %v278 = vsub.s32 0, %v277
    %v279 = vrot.slane %v165, %v278
    %v281 = vmul.f32 %v273, %v279
    %v282 = vmul.f32 %v274, %v279
    %v284 = vlaneseq
    %v285 = vshrl.u32 %v284, 7
    %v286 = vsub.s32 0, %v285
    %v287 = vrot.slane %v169, %v286
    %v289 = vadd.f32 %v281, %v287
    %v290 = vadd.f32 %v282, %v287
    %vm291 = vcmask 261120
    %v293 = vsel %vm291, %v289, 0
    %v296 = vsel %vm291, %v290, 0
    %298 = vmatprep.subr.mxu0 0.0
    %299 = vmatpush1.msra.mxu0 0.0
    %300 = vmatprep.subr.mxu0 0.0
    %301 = vmatpush1.msra.mxu0 0.0
    %302 = vmatprep.subr.mxu0 0.0
    %303 = vmatpush1.msra.mxu0 0.0
    %304 = vmatprep.subr.mxu0 0.0
    %305 = vmatpush1.msra.mxu0 0.0
    %306 = vmatprep.subr.mxu0 0.0
    %307 = vmatpush1.msra.mxu0 0.0
    %308 = vmatprep.subr.mxu0 0.0
    %309 = vmatpush1.msra.mxu0 0.0
    %310 = vmatprep.subr.mxu0 0.0
    %311 = vmatpush1.msra.mxu0 0.0
    %312 = vmatprep.subr.mxu0 0.0
    %313 = vmatpush1.msra.mxu0 0.0
    %314 = vmatprep.subr.mxu0 0.0
    %315 = vmatpush1.msra.mxu0 0.0
    %316 = vmatprep.subr.mxu0 0.0
    %317 = vmatpush1.msra.mxu0 0.0
    %318 = vmatprep.subr.mxu0 0.0
    %319 = vmatpush1.msra.mxu0 0.0
    %320 = vmatprep.subr.mxu0 0.0
    %321 = vmatpush1.msra.mxu0 0.0
    %322 = vmatprep.subr.mxu0 0.0
    %323 = vmatpush1.msra.mxu0 %v152
    %324 = vmatprep.subr.mxu0 0.0
    %325 = vmatpush1.msra.mxu0 %v151
    %326 = vmatprep.subr.mxu0 0.0
    %327 = vmatpush1.msra.mxu0 %v150
    %328 = vmatprep.subr.mxu0 0.0
    %329 = vmatpush1.msra.mxu0 %v149
    %330 = vmatprep.subr.mxu0 0.0
    %331 = vmatpush2.msra.mxu0 0.0
    %332 = vmatprep.subr.mxu0 0.0
    %333 = vmatpush2.msra.mxu0 0.0
    %334 = vmatprep.subr.mxu0 0.0
    %335 = vmatpush2.msra.mxu0 0.0
    %336 = vmatprep.subr.mxu0 0.0
    %337 = vmatpush2.msra.mxu0 0.0
    %338 = vmatprep.subr.mxu0 0.0
    %339 = vmatpush2.msra.mxu0 0.0
    %340 = vmatprep.subr.mxu0 0.0
    %341 = vmatpush2.msra.mxu0 0.0
    %342 = vmatprep.subr.mxu0 0.0
    %343 = vmatpush2.msra.mxu0 0.0
    %344 = vmatprep.subr.mxu0 0.0
    %345 = vmatpush2.msra.mxu0 0.0
    %346 = vmatprep.subr.mxu0 0.0
    %347 = vmatpush2.msra.mxu0 0.0
    %348 = vmatprep.subr.mxu0 0.0
    %349 = vmatpush2.msra.mxu0 0.0
    %350 = vmatprep.subr.mxu0 0.0
    %351 = vmatpush2.msra.mxu0 0.0
    %352 = vmatprep.subr.mxu0 0.0
    %353 = vmatpush2.msra.mxu0 0.0
    %354 = vmatprep.subr.mxu0 0.0
    %355 = vmatpush2.msra.mxu0 0.0
    %356 = vmatprep.subr.mxu0 0.0
    %357 = vmatpush2.msra.mxu0 0.0
    %358 = vmatprep.subr.mxu0 0.0
    %359 = vmatpush2.msra.mxu0 0.0
    %360 = vmatprep.subr.mxu0 0.0
    %361 = vmatpush2.msra.mxu0 0.0
    %362 = vmatprep.mubr.f32.mxu0 0.0
    %363 = vmatmul.mubr.f32.gmra.mxu0 %v293
    %v364 = vpop.f32.mrf.mxu0
    %v365 = vadd.f32 0.0, %v364
    %v366 = vpop.f32.mrf.mxu0
    %367 = vmatprep.mubr.f32.mxu0 0.0
    %368 = vmatmul.mubr.f32.gmra.mxu0 %v296
    %v369 = vpop.f32.mrf.mxu0
    %v370 = vadd.f32 0.0, %v369
    %v371 = vpop.f32.mrf.mxu0
    %372 = vdwg.mxu0
    %v374 = vlaneseq
    %v375 = vshrl.u32 %v374, 7
    %v376 = vsub.s32 0, %v375
    %v377 = vrot.slane %v156, %v376
    %379 = vmatprep.subr.mxu0 0.0
    %380 = vmatpush1.msra.mxu0 0.0
    %381 = vmatprep.subr.mxu0 0.0
    %382 = vmatpush1.msra.mxu0 0.0
    %383 = vmatprep.subr.mxu0 0.0
    %384 = vmatpush1.msra.mxu0 0.0
    %385 = vmatprep.subr.mxu0 0.0
    %386 = vmatpush1.msra.mxu0 0.0
    %387 = vmatprep.subr.mxu0 0.0
    %388 = vmatpush1.msra.mxu0 0.0
    %389 = vmatprep.subr.mxu0 0.0
    %390 = vmatpush1.msra.mxu0 0.0
    %391 = vmatprep.subr.mxu0 0.0
    %392 = vmatpush1.msra.mxu0 0.0
    %393 = vmatprep.subr.mxu0 0.0
    %394 = vmatpush1.msra.mxu0 0.0
    %395 = vmatprep.subr.mxu0 0.0
    %396 = vmatpush1.msra.mxu0 0.0
    %397 = vmatprep.subr.mxu0 0.0
    %398 = vmatpush1.msra.mxu0 0.0
    %399 = vmatprep.subr.mxu0 0.0
    %400 = vmatpush1.msra.mxu0 0.0
    %401 = vmatprep.subr.mxu0 0.0
    %402 = vmatpush1.msra.mxu0 0.0
    %403 = vmatprep.subr.mxu0 0.0
    %404 = vmatpush1.msra.mxu0 0.0
    %405 = vmatprep.subr.mxu0 0.0
    %406 = vmatpush1.msra.mxu0 0.0
    %407 = vmatprep.subr.mxu0 0.0
    %408 = vmatpush1.msra.mxu0 %v370
    %409 = vmatprep.subr.mxu0 0.0
    %410 = vmatpush1.msra.mxu0 %v365
    %411 = vmatprep.subr.mxu0 0.0
    %412 = vmatpush2.msra.mxu0 0.0
    %413 = vmatprep.subr.mxu0 0.0
    %414 = vmatpush2.msra.mxu0 0.0
    %415 = vmatprep.subr.mxu0 0.0
    %416 = vmatpush2.msra.mxu0 0.0
    %417 = vmatprep.subr.mxu0 0.0
    %418 = vmatpush2.msra.mxu0 0.0
    %419 = vmatprep.subr.mxu0 0.0
    %420 = vmatpush2.msra.mxu0 0.0
    %421 = vmatprep.subr.mxu0 0.0
    %422 = vmatpush2.msra.mxu0 0.0
    %423 = vmatprep.subr.mxu0 0.0
    %424 = vmatpush2.msra.mxu0 0.0
    %425 = vmatprep.subr.mxu0 0.0
    %426 = vmatpush2.msra.mxu0 0.0
    %427 = vmatprep.subr.mxu0 0.0
    %428 = vmatpush2.msra.mxu0 0.0
    %429 = vmatprep.subr.mxu0 0.0
    %430 = vmatpush2.msra.mxu0 0.0
    %431 = vmatprep.subr.mxu0 0.0
    %432 = vmatpush2.msra.mxu0 0.0
    %433 = vmatprep.subr.mxu0 0.0
    %434 = vmatpush2.msra.mxu0 0.0
    %435 = vmatprep.subr.mxu0 0.0
    %436 = vmatpush2.msra.mxu0 0.0
    %437 = vmatprep.subr.mxu0 0.0
    %438 = vmatpush2.msra.mxu0 0.0
    %439 = vmatprep.subr.mxu0 0.0
    %440 = vmatpush2.msra.mxu0 0.0
    %441 = vmatprep.subr.mxu0 0.0
    %442 = vmatpush2.msra.mxu0 0.0
    %443 = vmatprep.mubr.f32.mxu0 0.0
    %444 = vmatmul.mubr.f32.gmra.mxu0 %v189
    %v445 = vpop.f32.mrf.mxu0
    %v446 = vadd.f32 %v377, %v445
    %v447 = vpop.f32.mrf.mxu0
    %448 = vmatprep.mubr.f32.mxu0 0.0
    %449 = vmatmul.mubr.f32.gmra.mxu0 %v192
    %v450 = vpop.f32.mrf.mxu0
    %v451 = vadd.f32 %v377, %v450
    %v452 = vpop.f32.mrf.mxu0
    %453 = vdwg.mxu0
    %vm454 = vcmp.ge.f32.partialorder %v446, 0.0
    %vm455 = vcmp.ge.f32.partialorder %v451, 0.0
    %v456 = vmul.f32 %v446, 0.2
    %v457 = vmul.f32 %v451, 0.2
    %v458 = vsel %vm454, %v446, %v456
    %v459 = vsel %vm455, %v451, %v457
    %v461 = vlaneseq
    %v462 = vshrl.u32 %v461, 7
    %v463 = vsub.s32 0, %v462
    %v464 = vrot.slane %v174, %v463
    %v466 = vmul.f32 %v458, %v464
    %v467 = vmul.f32 %v459, %v464
    %v469 = vlaneseq
    %v470 = vshrl.u32 %v469, 7
    %v471 = vsub.s32 0, %v470
    %v472 = vrot.slane %v178, %v471
    %v474 = vadd.f32 %v466, %v472
    %v475 = vadd.f32 %v467, %v472
    %v477 = vsel %vm187, %v474, 0
    %v480 = vsel %vm187, %v475, 0
    %482 = vmatprep.subr.mxu0 0.0
    %483 = vmatpush1.msra.mxu0 0.0
    %484 = vmatprep.subr.mxu0 0.0
    %485 = vmatpush1.msra.mxu0 0.0
    %486 = vmatprep.subr.mxu0 0.0
    %487 = vmatpush1.msra.mxu0 0.0
    %488 = vmatprep.subr.mxu0 0.0
    %489 = vmatpush1.msra.mxu0 0.0
    %490 = vmatprep.subr.mxu0 0.0
    %491 = vmatpush1.msra.mxu0 0.0
    %492 = vmatprep.subr.mxu0 0.0
    %493 = vmatpush1.msra.mxu0 0.0
    %494 = vmatprep.subr.mxu0 0.0
    %495 = vmatpush1.msra.mxu0 0.0
    %496 = vmatprep.subr.mxu0 0.0
    %497 = vmatpush1.msra.mxu0 0.0
    %498 = vmatprep.subr.mxu0 0.0
    %499 = vmatpush1.msra.mxu0 0.0
    %500 = vmatprep.subr.mxu0 0.0
    %501 = vmatpush1.msra.mxu0 0.0
    %502 = vmatprep.subr.mxu0 0.0
    %503 = vmatpush1.msra.mxu0 0.0
    %504 = vmatprep.subr.mxu0 0.0
    %505 = vmatpush1.msra.mxu0 0.0
    %506 = vmatprep.subr.mxu0 0.0
    %507 = vmatpush1.msra.mxu0 0.0
    %508 = vmatprep.subr.mxu0 0.0
    %509 = vmatpush1.msra.mxu0 0.0
    %510 = vmatprep.subr.mxu0 0.0
    %511 = vmatpush1.msra.mxu0 %v154
    %512 = vmatprep.subr.mxu0 0.0
    %513 = vmatpush1.msra.mxu0 %v153
    %514 = vmatprep.subr.mxu0 0.0
    %515 = vmatpush2.msra.mxu0 0.0
    %516 = vmatprep.subr.mxu0 0.0
    %517 = vmatpush2.msra.mxu0 0.0
    %518 = vmatprep.subr.mxu0 0.0
    %519 = vmatpush2.msra.mxu0 0.0
    %520 = vmatprep.subr.mxu0 0.0
    %521 = vmatpush2.msra.mxu0 0.0
    %522 = vmatprep.subr.mxu0 0.0
    %523 = vmatpush2.msra.mxu0 0.0
    %524 = vmatprep.subr.mxu0 0.0
    %525 = vmatpush2.msra.mxu0 0.0
    %526 = vmatprep.subr.mxu0 0.0
    %527 = vmatpush2.msra.mxu0 0.0
    %528 = vmatprep.subr.mxu0 0.0
    %529 = vmatpush2.msra.mxu0 0.0
    %530 = vmatprep.subr.mxu0 0.0
    %531 = vmatpush2.msra.mxu0 0.0
    %532 = vmatprep.subr.mxu0 0.0
    %533 = vmatpush2.msra.mxu0 0.0
    %534 = vmatprep.subr.mxu0 0.0
    %535 = vmatpush2.msra.mxu0 0.0
    %536 = vmatprep.subr.mxu0 0.0
    %537 = vmatpush2.msra.mxu0 0.0
    %538 = vmatprep.subr.mxu0 0.0
    %539 = vmatpush2.msra.mxu0 0.0
    %540 = vmatprep.subr.mxu0 0.0
    %541 = vmatpush2.msra.mxu0 0.0
    %542 = vmatprep.subr.mxu0 0.0
    %543 = vmatpush2.msra.mxu0 0.0
    %544 = vmatprep.subr.mxu0 0.0
    %545 = vmatpush2.msra.mxu0 0.0
    %546 = vmatprep.mubr.f32.mxu0 0.0
    %547 = vmatmul.mubr.f32.gmra.mxu0 %v477
    %v548 = vpop.f32.mrf.mxu0
    %v549 = vadd.f32 0.0, %v548
    %v550 = vpop.f32.mrf.mxu0
    %551 = vmatprep.mubr.f32.mxu0 0.0
    %552 = vmatmul.mubr.f32.gmra.mxu0 %v480
    %v553 = vpop.f32.mrf.mxu0
    %v554 = vadd.f32 0.0, %v553
    %v555 = vpop.f32.mrf.mxu0
    %556 = vdwg.mxu0
    %v558 = vlaneseq
    %v559 = vshrl.u32 %v558, 7
    %v560 = vsub.s32 0, %v559
    %v561 = vrot.slane %v157, %v560
    %563 = vmatprep.subr.mxu0 0.0
    %564 = vmatpush1.msra.mxu0 0.0
    %565 = vmatprep.subr.mxu0 0.0
    %566 = vmatpush1.msra.mxu0 0.0
    %567 = vmatprep.subr.mxu0 0.0
    %568 = vmatpush1.msra.mxu0 0.0
    %569 = vmatprep.subr.mxu0 0.0
    %570 = vmatpush1.msra.mxu0 0.0
    %571 = vmatprep.subr.mxu0 0.0
    %572 = vmatpush1.msra.mxu0 0.0
    %573 = vmatprep.subr.mxu0 0.0
    %574 = vmatpush1.msra.mxu0 0.0
    %575 = vmatprep.subr.mxu0 0.0
    %576 = vmatpush1.msra.mxu0 0.0
    %577 = vmatprep.subr.mxu0 0.0
    %578 = vmatpush1.msra.mxu0 0.0
    %579 = vmatprep.subr.mxu0 0.0
    %580 = vmatpush1.msra.mxu0 0.0
    %581 = vmatprep.subr.mxu0 0.0
    %582 = vmatpush1.msra.mxu0 0.0
    %583 = vmatprep.subr.mxu0 0.0
    %584 = vmatpush1.msra.mxu0 0.0
    %585 = vmatprep.subr.mxu0 0.0
    %586 = vmatpush1.msra.mxu0 0.0
    %587 = vmatprep.subr.mxu0 0.0
    %588 = vmatpush1.msra.mxu0 0.0
    %589 = vmatprep.subr.mxu0 0.0
    %590 = vmatpush1.msra.mxu0 0.0
    %591 = vmatprep.subr.mxu0 0.0
    %592 = vmatpush1.msra.mxu0 %v554
    %593 = vmatprep.subr.mxu0 0.0
    %594 = vmatpush1.msra.mxu0 %v549
    %595 = vmatprep.subr.mxu0 0.0
    %596 = vmatpush2.msra.mxu0 0.0
    %597 = vmatprep.subr.mxu0 0.0
    %598 = vmatpush2.msra.mxu0 0.0
    %599 = vmatprep.subr.mxu0 0.0
    %600 = vmatpush2.msra.mxu0 0.0
    %601 = vmatprep.subr.mxu0 0.0
    %602 = vmatpush2.msra.mxu0 0.0
    %603 = vmatprep.subr.mxu0 0.0
    %604 = vmatpush2.msra.mxu0 0.0
    %605 = vmatprep.subr.mxu0 0.0
    %606 = vmatpush2.msra.mxu0 0.0
    %607 = vmatprep.subr.mxu0 0.0
    %608 = vmatpush2.msra.mxu0 0.0
    %609 = vmatprep.subr.mxu0 0.0
    %610 = vmatpush2.msra.mxu0 0.0
    %611 = vmatprep.subr.mxu0 0.0
    %612 = vmatpush2.msra.mxu0 0.0
    %613 = vmatprep.subr.mxu0 0.0
    %614 = vmatpush2.msra.mxu0 0.0
    %615 = vmatprep.subr.mxu0 0.0
    %616 = vmatpush2.msra.mxu0 0.0
    %617 = vmatprep.subr.mxu0 0.0
    %618 = vmatpush2.msra.mxu0 0.0
    %619 = vmatprep.subr.mxu0 0.0
    %620 = vmatpush2.msra.mxu0 0.0
    %621 = vmatprep.subr.mxu0 0.0
    %622 = vmatpush2.msra.mxu0 0.0
    %623 = vmatprep.subr.mxu0 0.0
    %624 = vmatpush2.msra.mxu0 0.0
    %625 = vmatprep.subr.mxu0 0.0
    %626 = vmatpush2.msra.mxu0 0.0
    %627 = vmatprep.mubr.f32.mxu0 0.0
    %628 = vmatmul.mubr.f32.gmra.mxu0 %v189
    %v629 = vpop.f32.mrf.mxu0
    %v630 = vadd.f32 %v561, %v629
    %v631 = vpop.f32.mrf.mxu0
    %632 = vmatprep.mubr.f32.mxu0 0.0
    %633 = vmatmul.mubr.f32.gmra.mxu0 %v192
    %v634 = vpop.f32.mrf.mxu0
    %v635 = vadd.f32 %v561, %v634
    %v636 = vpop.f32.mrf.mxu0
    %637 = vdwg.mxu0
    %vm638 = vcmp.ge.f32.partialorder %v630, 0.0
    %vm639 = vcmp.ge.f32.partialorder %v635, 0.0
    %v640 = vmul.f32 %v630, 0.2
    %v641 = vmul.f32 %v635, 0.2
    %v642 = vsel %vm638, %v630, %v640
    %v643 = vsel %vm639, %v635, %v641
    %v644 = vld [vmem:[#allocation13] sm:$0xff]
    %v645 = vld [vmem:[#allocation13 + $0x8] sm:$0xff]
    %v646 = vld [vmem:[#allocation13 + $0x10] sm:$0xff]
    %v647 = vld [vmem:[#allocation13 + $0x18] sm:$0xff]
    %v648 = vld [vmem:[#allocation13 + $0x20] sm:$0xff]
    %v649 = vld [vmem:[#allocation13 + $0x28] sm:$0xff]
    %v650 = vld [vmem:[#allocation13 + $0x30] sm:$0xff]
    %v651 = vld [vmem:[#allocation13 + $0x38] sm:$0xff]
    %s652 = scalar_lea.vmem [#allocation13], 64
    %v653 = vld [vmem:[%s652] sm:$0xff]
    %v654 = vld [vmem:[%s652 + $0x8] sm:$0xff]
    %v655 = vld [vmem:[%s652 + $0x10] sm:$0xff]
    %v656 = vld [vmem:[%s652 + $0x18] sm:$0xff]
    %v657 = vld [vmem:[%s652 + $0x20] sm:$0xff]
    %v658 = vld [vmem:[%s652 + $0x28] sm:$0xff]
    %v659 = vld [vmem:[%s652 + $0x30] sm:$0xff]
    %v660 = vld [vmem:[%s652 + $0x38] sm:$0xff]
    %v662 = vrot.slane %v642, 1
    %vm663 = vcmask 64512
    %v664 = vsel %vm663, %v662, 0
    %666 = vmatprep.subr.mxu0 0.0
    %667 = vmatpush1.msra.mxu0 0.0
    %668 = vmatprep.subr.mxu0 0.0
    %669 = vmatpush1.msra.mxu0 0.0
    %670 = vmatprep.subr.mxu0 0.0
    %671 = vmatpush1.msra.mxu0 0.0
    %672 = vmatprep.subr.mxu0 0.0
    %673 = vmatpush1.msra.mxu0 0.0
    %674 = vmatprep.subr.mxu0 0.0
    %675 = vmatpush1.msra.mxu0 0.0
    %676 = vmatprep.subr.mxu0 0.0
    %677 = vmatpush1.msra.mxu0 0.0
    %678 = vmatprep.subr.mxu0 0.0
    %679 = vmatpush1.msra.mxu0 0.0
    %680 = vmatprep.subr.mxu0 0.0
    %681 = vmatpush1.msra.mxu0 0.0
    %682 = vmatprep.subr.mxu0 0.0
    %683 = vmatpush1.msra.mxu0 0.0
    %684 = vmatprep.subr.mxu0 0.0
    %685 = vmatpush1.msra.mxu0 0.0
    %686 = vmatprep.subr.mxu0 0.0
    %687 = vmatpush1.msra.mxu0 0.0
    %688 = vmatprep.subr.mxu0 0.0
    %689 = vmatpush1.msra.mxu0 0.0
    %690 = vmatprep.subr.mxu0 0.0
    %691 = vmatpush1.msra.mxu0 0.0
    %692 = vmatprep.subr.mxu0 0.0
    %693 = vmatpush1.msra.mxu0 0.0
    %694 = vmatprep.subr.mxu0 0.0
    %695 = vmatpush1.msra.mxu0 0.0
    %696 = vmatprep.subr.mxu0 %v654
    %697 = vmatpush1.msra.mxu0 %v653
    %698 = vmatprep.subr.mxu0 0.0
    %699 = vmatpush2.msra.mxu0 0.0
    %700 = vmatprep.subr.mxu0 0.0
    %701 = vmatpush2.msra.mxu0 0.0
    %702 = vmatprep.subr.mxu0 0.0
    %703 = vmatpush2.msra.mxu0 0.0
    %704 = vmatprep.subr.mxu0 0.0
    %705 = vmatpush2.msra.mxu0 0.0
    %706 = vmatprep.subr.mxu0 0.0
    %707 = vmatpush2.msra.mxu0 0.0
    %708 = vmatprep.subr.mxu0 0.0
    %709 = vmatpush2.msra.mxu0 0.0
    %710 = vmatprep.subr.mxu0 0.0
    %711 = vmatpush2.msra.mxu0 0.0
    %712 = vmatprep.subr.mxu0 0.0
    %713 = vmatpush2.msra.mxu0 0.0
    %714 = vmatprep.subr.mxu0 0.0
    %715 = vmatpush2.msra.mxu0 0.0
    %716 = vmatprep.subr.mxu0 0.0
    %717 = vmatpush2.msra.mxu0 0.0
    %718 = vmatprep.subr.mxu0 0.0
    %719 = vmatpush2.msra.mxu0 0.0
    %720 = vmatprep.subr.mxu0 0.0
    %721 = vmatpush2.msra.mxu0 0.0
    %722 = vmatprep.subr.mxu0 0.0
    %723 = vmatpush2.msra.mxu0 0.0
    %724 = vmatprep.subr.mxu0 0.0
    %725 = vmatpush2.msra.mxu0 0.0
    %726 = vmatprep.subr.mxu0 0.0
    %727 = vmatpush2.msra.mxu0 0.0
    %728 = vmatprep.subr.mxu0 0.0
    %729 = vmatpush2.msra.mxu0 0.0
    %730 = vmatprep.mubr.f32.mxu0 0.0
    %731 = vmatmul.mubr.f32.gmra.mxu0 %v664
    %v732 = vpop.f32.mrf.mxu0
    %v733 = vadd.f32 0.0, %v732
    %v734 = vpop.f32.mrf.mxu0
    %v735 = vadd.f32 0.0, %v734
    %736 = vdwg.mxu0
    %737 = vmatprep.subr.mxu0 0.0
    %738 = vmatpush1.msra.mxu0 0.0
    %739 = vmatprep.subr.mxu0 0.0
    %740 = vmatpush1.msra.mxu0 0.0
    %741 = vmatprep.subr.mxu0 0.0
    %742 = vmatpush1.msra.mxu0 0.0
    %743 = vmatprep.subr.mxu0 0.0
    %744 = vmatpush1.msra.mxu0 0.0
    %745 = vmatprep.subr.mxu0 0.0
    %746 = vmatpush1.msra.mxu0 0.0
    %747 = vmatprep.subr.mxu0 0.0
    %748 = vmatpush1.msra.mxu0 0.0
    %749 = vmatprep.subr.mxu0 0.0
    %750 = vmatpush1.msra.mxu0 0.0
    %751 = vmatprep.subr.mxu0 0.0
    %752 = vmatpush1.msra.mxu0 0.0
    %753 = vmatprep.subr.mxu0 0.0
    %754 = vmatpush1.msra.mxu0 0.0
    %755 = vmatprep.subr.mxu0 0.0
    %756 = vmatpush1.msra.mxu0 0.0
    %757 = vmatprep.subr.mxu0 0.0
    %758 = vmatpush1.msra.mxu0 0.0
    %759 = vmatprep.subr.mxu0 0.0
    %760 = vmatpush1.msra.mxu0 0.0
    %761 = vmatprep.subr.mxu0 0.0
    %762 = vmatpush1.msra.mxu0 0.0
    %763 = vmatprep.subr.mxu0 0.0
    %764 = vmatpush1.msra.mxu0 0.0
    %765 = vmatprep.subr.mxu0 0.0
    %766 = vmatpush1.msra.mxu0 0.0
    %767 = vmatprep.subr.mxu0 %v656
    %768 = vmatpush1.msra.mxu0 %v655
    %769 = vmatprep.subr.mxu0 0.0
    %770 = vmatpush2.msra.mxu0 0.0
    %771 = vmatprep.subr.mxu0 0.0
    %772 = vmatpush2.msra.mxu0 0.0
    %773 = vmatprep.subr.mxu0 0.0
    %774 = vmatpush2.msra.mxu0 0.0
    %775 = vmatprep.subr.mxu0 0.0
    %776 = vmatpush2.msra.mxu0 0.0
    %777 = vmatprep.subr.mxu0 0.0
    %778 = vmatpush2.msra.mxu0 0.0
    %779 = vmatprep.subr.mxu0 0.0
    %780 = vmatpush2.msra.mxu0 0.0
    %781 = vmatprep.subr.mxu0 0.0
    %782 = vmatpush2.msra.mxu0 0.0
    %783 = vmatprep.subr.mxu0 0.0
    %784 = vmatpush2.msra.mxu0 0.0
    %785 = vmatprep.subr.mxu0 0.0
    %786 = vmatpush2.msra.mxu0 0.0
    %787 = vmatprep.subr.mxu0 0.0
    %788 = vmatpush2.msra.mxu0 0.0
    %789 = vmatprep.subr.mxu0 0.0
    %790 = vmatpush2.msra.mxu0 0.0
    %791 = vmatprep.subr.mxu0 0.0
    %792 = vmatpush2.msra.mxu0 0.0
    %793 = vmatprep.subr.mxu0 0.0
    %794 = vmatpush2.msra.mxu0 0.0
    %795 = vmatprep.subr.mxu0 0.0
    %796 = vmatpush2.msra.mxu0 0.0
    %797 = vmatprep.subr.mxu0 0.0
    %798 = vmatpush2.msra.mxu0 0.0
    %799 = vmatprep.subr.mxu0 0.0
    %800 = vmatpush2.msra.mxu0 0.0
    %801 = vmatprep.mubr.f32.mxu0 0.0
    %802 = vmatmul.mubr.f32.gmra.mxu0 %v664
    %v803 = vpop.f32.mrf.mxu0
    %v804 = vadd.f32 0.0, %v803
    %v805 = vpop.f32.mrf.mxu0
    %v806 = vadd.f32 0.0, %v805
    %807 = vdwg.mxu0
    %808 = vmatprep.subr.mxu0 0.0
    %809 = vmatpush1.msra.mxu0 0.0
    %810 = vmatprep.subr.mxu0 0.0
    %811 = vmatpush1.msra.mxu0 0.0
    %812 = vmatprep.subr.mxu0 0.0
    %813 = vmatpush1.msra.mxu0 0.0
    %814 = vmatprep.subr.mxu0 0.0
    %815 = vmatpush1.msra.mxu0 0.0
    %816 = vmatprep.subr.mxu0 0.0
    %817 = vmatpush1.msra.mxu0 0.0
    %818 = vmatprep.subr.mxu0 0.0
    %819 = vmatpush1.msra.mxu0 0.0
    %820 = vmatprep.subr.mxu0 0.0
    %821 = vmatpush1.msra.mxu0 0.0
    %822 = vmatprep.subr.mxu0 0.0
    %823 = vmatpush1.msra.mxu0 0.0
    %824 = vmatprep.subr.mxu0 0.0
    %825 = vmatpush1.msra.mxu0 0.0
    %826 = vmatprep.subr.mxu0 0.0
    %827 = vmatpush1.msra.mxu0 0.0
    %828 = vmatprep.subr.mxu0 0.0
    %829 = vmatpush1.msra.mxu0 0.0
    %830 = vmatprep.subr.mxu0 0.0
    %831 = vmatpush1.msra.mxu0 0.0
    %832 = vmatprep.subr.mxu0 0.0
    %833 = vmatpush1.msra.mxu0 0.0
    %834 = vmatprep.subr.mxu0 0.0
    %835 = vmatpush1.msra.mxu0 0.0
    %836 = vmatprep.subr.mxu0 0.0
    %837 = vmatpush1.msra.mxu0 0.0
    %838 = vmatprep.subr.mxu0 %v658
    %839 = vmatpush1.msra.mxu0 %v657
    %840 = vmatprep.subr.mxu0 0.0
    %841 = vmatpush2.msra.mxu0 0.0
    %842 = vmatprep.subr.mxu0 0.0
    %843 = vmatpush2.msra.mxu0 0.0
    %844 = vmatprep.subr.mxu0 0.0
    %845 = vmatpush2.msra.mxu0 0.0
    %846 = vmatprep.subr.mxu0 0.0
    %847 = vmatpush2.msra.mxu0 0.0
    %848 = vmatprep.subr.mxu0 0.0
    %849 = vmatpush2.msra.mxu0 0.0
    %850 = vmatprep.subr.mxu0 0.0
    %851 = vmatpush2.msra.mxu0 0.0
    %852 = vmatprep.subr.mxu0 0.0
    %853 = vmatpush2.msra.mxu0 0.0
    %854 = vmatprep.subr.mxu0 0.0
    %855 = vmatpush2.msra.mxu0 0.0
    %856 = vmatprep.subr.mxu0 0.0
    %857 = vmatpush2.msra.mxu0 0.0
    %858 = vmatprep.subr.mxu0 0.0
    %859 = vmatpush2.msra.mxu0 0.0
    %860 = vmatprep.subr.mxu0 0.0
    %861 = vmatpush2.msra.mxu0 0.0
    %862 = vmatprep.subr.mxu0 0.0
    %863 = vmatpush2.msra.mxu0 0.0
    %864 = vmatprep.subr.mxu0 0.0
    %865 = vmatpush2.msra.mxu0 0.0
    %866 = vmatprep.subr.mxu0 0.0
    %867 = vmatpush2.msra.mxu0 0.0
    %868 = vmatprep.subr.mxu0 0.0
    %869 = vmatpush2.msra.mxu0 0.0
    %870 = vmatprep.subr.mxu0 0.0
    %871 = vmatpush2.msra.mxu0 0.0
    %872 = vmatprep.mubr.f32.mxu0 0.0
    %873 = vmatmul.mubr.f32.gmra.mxu0 %v664
    %v874 = vpop.f32.mrf.mxu0
    %v875 = vadd.f32 0.0, %v874
    %v876 = vpop.f32.mrf.mxu0
    %v877 = vadd.f32 0.0, %v876
    %878 = vdwg.mxu0
    %879 = vmatprep.subr.mxu0 0.0
    %880 = vmatpush1.msra.mxu0 0.0
    %881 = vmatprep.subr.mxu0 0.0
    %882 = vmatpush1.msra.mxu0 0.0
    %883 = vmatprep.subr.mxu0 0.0
    %884 = vmatpush1.msra.mxu0 0.0
    %885 = vmatprep.subr.mxu0 0.0
    %886 = vmatpush1.msra.mxu0 0.0
    %887 = vmatprep.subr.mxu0 0.0
    %888 = vmatpush1.msra.mxu0 0.0
    %889 = vmatprep.subr.mxu0 0.0
    %890 = vmatpush1.msra.mxu0 0.0
    %891 = vmatprep.subr.mxu0 0.0
    %892 = vmatpush1.msra.mxu0 0.0
    %893 = vmatprep.subr.mxu0 0.0
    %894 = vmatpush1.msra.mxu0 0.0
    %895 = vmatprep.subr.mxu0 0.0
    %896 = vmatpush1.msra.mxu0 0.0
    %897 = vmatprep.subr.mxu0 0.0
    %898 = vmatpush1.msra.mxu0 0.0
    %899 = vmatprep.subr.mxu0 0.0
    %900 = vmatpush1.msra.mxu0 0.0
    %901 = vmatprep.subr.mxu0 0.0
    %902 = vmatpush1.msra.mxu0 0.0
    %903 = vmatprep.subr.mxu0 0.0
    %904 = vmatpush1.msra.mxu0 0.0
    %905 = vmatprep.subr.mxu0 0.0
    %906 = vmatpush1.msra.mxu0 0.0
    %907 = vmatprep.subr.mxu0 0.0
    %908 = vmatpush1.msra.mxu0 0.0
    %909 = vmatprep.subr.mxu0 %v660
    %910 = vmatpush1.msra.mxu0 %v659
    %911 = vmatprep.subr.mxu0 0.0
    %912 = vmatpush2.msra.mxu0 0.0
    %913 = vmatprep.subr.mxu0 0.0
    %914 = vmatpush2.msra.mxu0 0.0
    %915 = vmatprep.subr.mxu0 0.0
    %916 = vmatpush2.msra.mxu0 0.0
    %917 = vmatprep.subr.mxu0 0.0
    %918 = vmatpush2.msra.mxu0 0.0
    %919 = vmatprep.subr.mxu0 0.0
    %920 = vmatpush2.msra.mxu0 0.0
    %921 = vmatprep.subr.mxu0 0.0
    %922 = vmatpush2.msra.mxu0 0.0
    %923 = vmatprep.subr.mxu0 0.0
    %924 = vmatpush2.msra.mxu0 0.0
    %925 = vmatprep.subr.mxu0 0.0
    %926 = vmatpush2.msra.mxu0 0.0
    %927 = vmatprep.subr.mxu0 0.0
    %928 = vmatpush2.msra.mxu0 0.0
    %929 = vmatprep.subr.mxu0 0.0
    %930 = vmatpush2.msra.mxu0 0.0
    %931 = vmatprep.subr.mxu0 0.0
    %932 = vmatpush2.msra.mxu0 0.0
    %933 = vmatprep.subr.mxu0 0.0
    %934 = vmatpush2.msra.mxu0 0.0
    %935 = vmatprep.subr.mxu0 0.0
    %936 = vmatpush2.msra.mxu0 0.0
    %937 = vmatprep.subr.mxu0 0.0
    %938 = vmatpush2.msra.mxu0 0.0
    %939 = vmatprep.subr.mxu0 0.0
    %940 = vmatpush2.msra.mxu0 0.0
    %941 = vmatprep.subr.mxu0 0.0
    %942 = vmatpush2.msra.mxu0 0.0
    %943 = vmatprep.mubr.f32.mxu0 0.0
    %944 = vmatmul.mubr.f32.gmra.mxu0 %v664
    %v945 = vpop.f32.mrf.mxu0
    %v946 = vadd.f32 0.0, %v945
    %v947 = vpop.f32.mrf.mxu0
    %v948 = vadd.f32 0.0, %v947
    %949 = vdwg.mxu0
    %v950 = vsel %vm663, %v642, 0
    %952 = vmatprep.subr.mxu0 0.0
    %953 = vmatpush1.msra.mxu0 0.0
    %954 = vmatprep.subr.mxu0 0.0
    %955 = vmatpush1.msra.mxu0 0.0
    %956 = vmatprep.subr.mxu0 0.0
    %957 = vmatpush1.msra.mxu0 0.0
    %958 = vmatprep.subr.mxu0 0.0
    %959 = vmatpush1.msra.mxu0 0.0
    %960 = vmatprep.subr.mxu0 0.0
    %961 = vmatpush1.msra.mxu0 0.0
    %962 = vmatprep.subr.mxu0 0.0
    %963 = vmatpush1.msra.mxu0 0.0
    %964 = vmatprep.subr.mxu0 0.0
    %965 = vmatpush1.msra.mxu0 0.0
    %966 = vmatprep.subr.mxu0 0.0
    %967 = vmatpush1.msra.mxu0 0.0
    %968 = vmatprep.subr.mxu0 0.0
    %969 = vmatpush1.msra.mxu0 0.0
    %970 = vmatprep.subr.mxu0 0.0
    %971 = vmatpush1.msra.mxu0 0.0
    %972 = vmatprep.subr.mxu0 0.0
    %973 = vmatpush1.msra.mxu0 0.0
    %974 = vmatprep.subr.mxu0 0.0
    %975 = vmatpush1.msra.mxu0 0.0
    %976 = vmatprep.subr.mxu0 0.0
    %977 = vmatpush1.msra.mxu0 0.0
    %978 = vmatprep.subr.mxu0 0.0
    %979 = vmatpush1.msra.mxu0 0.0
    %980 = vmatprep.subr.mxu0 0.0
    %981 = vmatpush1.msra.mxu0 0.0
    %982 = vmatprep.subr.mxu0 %v645
    %983 = vmatpush1.msra.mxu0 %v644
    %984 = vmatprep.subr.mxu0 0.0
    %985 = vmatpush2.msra.mxu0 0.0
    %986 = vmatprep.subr.mxu0 0.0
    %987 = vmatpush2.msra.mxu0 0.0
    %988 = vmatprep.subr.mxu0 0.0
    %989 = vmatpush2.msra.mxu0 0.0
    %990 = vmatprep.subr.mxu0 0.0
    %991 = vmatpush2.msra.mxu0 0.0
    %992 = vmatprep.subr.mxu0 0.0
    %993 = vmatpush2.msra.mxu0 0.0
    %994 = vmatprep.subr.mxu0 0.0
    %995 = vmatpush2.msra.mxu0 0.0
    %996 = vmatprep.subr.mxu0 0.0
    %997 = vmatpush2.msra.mxu0 0.0
    %998 = vmatprep.subr.mxu0 0.0
    %999 = vmatpush2.msra.mxu0 0.0
    %1000 = vmatprep.subr.mxu0 0.0
    %1001 = vmatpush2.msra.mxu0 0.0
    %1002 = vmatprep.subr.mxu0 0.0
    %1003 = vmatpush2.msra.mxu0 0.0
    %1004 = vmatprep.subr.mxu0 0.0
    %1005 = vmatpush2.msra.mxu0 0.0
    %1006 = vmatprep.subr.mxu0 0.0
    %1007 = vmatpush2.msra.mxu0 0.0
    %1008 = vmatprep.subr.mxu0 0.0
    %1009 = vmatpush2.msra.mxu0 0.0
    %1010 = vmatprep.subr.mxu0 0.0
    %1011 = vmatpush2.msra.mxu0 0.0
    %1012 = vmatprep.subr.mxu0 0.0
    %1013 = vmatpush2.msra.mxu0 0.0
    %1014 = vmatprep.subr.mxu0 0.0
    %1015 = vmatpush2.msra.mxu0 0.0
    %1016 = vmatprep.mubr.f32.mxu0 0.0
    %1017 = vmatmul.mubr.f32.gmra.mxu0 %v950
    %v1018 = vpop.f32.mrf.mxu0
    %v1019 = vadd.f32 %v733, %v1018
    %v1020 = vpop.f32.mrf.mxu0
    %v1021 = vadd.f32 %v735, %v1020
    %1022 = vdwg.mxu0
    %1023 = vmatprep.subr.mxu0 0.0
    %1024 = vmatpush1.msra.mxu0 0.0
    %1025 = vmatprep.subr.mxu0 0.0
    %1026 = vmatpush1.msra.mxu0 0.0
    %1027 = vmatprep.subr.mxu0 0.0
    %1028 = vmatpush1.msra.mxu0 0.0
    %1029 = vmatprep.subr.mxu0 0.0
    %1030 = vmatpush1.msra.mxu0 0.0
    %1031 = vmatprep.subr.mxu0 0.0
    %1032 = vmatpush1.msra.mxu0 0.0
    %1033 = vmatprep.subr.mxu0 0.0
    %1034 = vmatpush1.msra.mxu0 0.0
    %1035 = vmatprep.subr.mxu0 0.0
    %1036 = vmatpush1.msra.mxu0 0.0
    %1037 = vmatprep.subr.mxu0 0.0
    %1038 = vmatpush1.msra.mxu0 0.0
    %1039 = vmatprep.subr.mxu0 0.0
    %1040 = vmatpush1.msra.mxu0 0.0
    %1041 = vmatprep.subr.mxu0 0.0
    %1042 = vmatpush1.msra.mxu0 0.0
    %1043 = vmatprep.subr.mxu0 0.0
    %1044 = vmatpush1.msra.mxu0 0.0
    %1045 = vmatprep.subr.mxu0 0.0
    %1046 = vmatpush1.msra.mxu0 0.0
    %1047 = vmatprep.subr.mxu0 0.0
    %1048 = vmatpush1.msra.mxu0 0.0
    %1049 = vmatprep.subr.mxu0 0.0
    %1050 = vmatpush1.msra.mxu0 0.0
    %1051 = vmatprep.subr.mxu0 0.0
    %1052 = vmatpush1.msra.mxu0 0.0
    %1053 = vmatprep.subr.mxu0 %v647
    %1054 = vmatpush1.msra.mxu0 %v646
    %1055 = vmatprep.subr.mxu0 0.0
    %1056 = vmatpush2.msra.mxu0 0.0
    %1057 = vmatprep.subr.mxu0 0.0
    %1058 = vmatpush2.msra.mxu0 0.0
    %1059 = vmatprep.subr.mxu0 0.0
    %1060 = vmatpush2.msra.mxu0 0.0
    %1061 = vmatprep.subr.mxu0 0.0
    %1062 = vmatpush2.msra.mxu0 0.0
    %1063 = vmatprep.subr.mxu0 0.0
    %1064 = vmatpush2.msra.mxu0 0.0
    %1065 = vmatprep.subr.mxu0 0.0
    %1066 = vmatpush2.msra.mxu0 0.0
    %1067 = vmatprep.subr.mxu0 0.0
    %1068 = vmatpush2.msra.mxu0 0.0
    %1069 = vmatprep.subr.mxu0 0.0
    %1070 = vmatpush2.msra.mxu0 0.0
    %1071 = vmatprep.subr.mxu0 0.0
    %1072 = vmatpush2.msra.mxu0 0.0
    %1073 = vmatprep.subr.mxu0 0.0
    %1074 = vmatpush2.msra.mxu0 0.0
    %1075 = vmatprep.subr.mxu0 0.0
    %1076 = vmatpush2.msra.mxu0 0.0
    %1077 = vmatprep.subr.mxu0 0.0
    %1078 = vmatpush2.msra.mxu0 0.0
    %1079 = vmatprep.subr.mxu0 0.0
    %1080 = vmatpush2.msra.mxu0 0.0
    %1081 = vmatprep.subr.mxu0 0.0
    %1082 = vmatpush2.msra.mxu0 0.0
    %1083 = vmatprep.subr.mxu0 0.0
    %1084 = vmatpush2.msra.mxu0 0.0
    %1085 = vmatprep.subr.mxu0 0.0
    %1086 = vmatpush2.msra.mxu0 0.0
    %1087 = vmatprep.mubr.f32.mxu0 0.0
    %1088 = vmatmul.mubr.f32.gmra.mxu0 %v950
    %v1089 = vpop.f32.mrf.mxu0
    %v1090 = vadd.f32 %v804, %v1089
    %v1091 = vpop.f32.mrf.mxu0
    %v1092 = vadd.f32 %v806, %v1091
    %1093 = vdwg.mxu0
    %1094 = vmatprep.subr.mxu0 0.0
    %1095 = vmatpush1.msra.mxu0 0.0
    %1096 = vmatprep.subr.mxu0 0.0
    %1097 = vmatpush1.msra.mxu0 0.0
    %1098 = vmatprep.subr.mxu0 0.0
    %1099 = vmatpush1.msra.mxu0 0.0
    %1100 = vmatprep.subr.mxu0 0.0
    %1101 = vmatpush1.msra.mxu0 0.0
    %1102 = vmatprep.subr.mxu0 0.0
    %1103 = vmatpush1.msra.mxu0 0.0
    %1104 = vmatprep.subr.mxu0 0.0
    %1105 = vmatpush1.msra.mxu0 0.0
    %1106 = vmatprep.subr.mxu0 0.0
    %1107 = vmatpush1.msra.mxu0 0.0
    %1108 = vmatprep.subr.mxu0 0.0
    %1109 = vmatpush1.msra.mxu0 0.0
    %1110 = vmatprep.subr.mxu0 0.0
    %1111 = vmatpush1.msra.mxu0 0.0
    %1112 = vmatprep.subr.mxu0 0.0
    %1113 = vmatpush1.msra.mxu0 0.0
    %1114 = vmatprep.subr.mxu0 0.0
    %1115 = vmatpush1.msra.mxu0 0.0
    %1116 = vmatprep.subr.mxu0 0.0
    %1117 = vmatpush1.msra.mxu0 0.0
    %1118 = vmatprep.subr.mxu0 0.0
    %1119 = vmatpush1.msra.mxu0 0.0
    %1120 = vmatprep.subr.mxu0 0.0
    %1121 = vmatpush1.msra.mxu0 0.0
    %1122 = vmatprep.subr.mxu0 0.0
    %1123 = vmatpush1.msra.mxu0 0.0
    %1124 = vmatprep.subr.mxu0 %v649
    %1125 = vmatpush1.msra.mxu0 %v648
    %1126 = vmatprep.subr.mxu0 0.0
    %1127 = vmatpush2.msra.mxu0 0.0
    %1128 = vmatprep.subr.mxu0 0.0
    %1129 = vmatpush2.msra.mxu0 0.0
    %1130 = vmatprep.subr.mxu0 0.0
    %1131 = vmatpush2.msra.mxu0 0.0
    %1132 = vmatprep.subr.mxu0 0.0
    %1133 = vmatpush2.msra.mxu0 0.0
    %1134 = vmatprep.subr.mxu0 0.0
    %1135 = vmatpush2.msra.mxu0 0.0
    %1136 = vmatprep.subr.mxu0 0.0
    %1137 = vmatpush2.msra.mxu0 0.0
    %1138 = vmatprep.subr.mxu0 0.0
    %1139 = vmatpush2.msra.mxu0 0.0
    %1140 = vmatprep.subr.mxu0 0.0
    %1141 = vmatpush2.msra.mxu0 0.0
    %1142 = vmatprep.subr.mxu0 0.0
    %1143 = vmatpush2.msra.mxu0 0.0
    %1144 = vmatprep.subr.mxu0 0.0
    %1145 = vmatpush2.msra.mxu0 0.0
    %1146 = vmatprep.subr.mxu0 0.0
    %1147 = vmatpush2.msra.mxu0 0.0
    %1148 = vmatprep.subr.mxu0 0.0
    %1149 = vmatpush2.msra.mxu0 0.0
    %1150 = vmatprep.subr.mxu0 0.0
    %1151 = vmatpush2.msra.mxu0 0.0
    %1152 = vmatprep.subr.mxu0 0.0
    %1153 = vmatpush2.msra.mxu0 0.0
    %1154 = vmatprep.subr.mxu0 0.0
    %1155 = vmatpush2.msra.mxu0 0.0
    %1156 = vmatprep.subr.mxu0 0.0
    %1157 = vmatpush2.msra.mxu0 0.0
    %1158 = vmatprep.mubr.f32.mxu0 0.0
    %1159 = vmatmul.mubr.f32.gmra.mxu0 %v950
    %v1160 = vpop.f32.mrf.mxu0
    %v1161 = vadd.f32 %v875, %v1160
    %v1162 = vpop.f32.mrf.mxu0
    %v1163 = vadd.f32 %v877, %v1162
    %1164 = vdwg.mxu0
    %1165 = vmatprep.subr.mxu0 0.0
    %1166 = vmatpush1.msra.mxu0 0.0
    %1167 = vmatprep.subr.mxu0 0.0
    %1168 = vmatpush1.msra.mxu0 0.0
    %1169 = vmatprep.subr.mxu0 0.0
    %1170 = vmatpush1.msra.mxu0 0.0
    %1171 = vmatprep.subr.mxu0 0.0
    %1172 = vmatpush1.msra.mxu0 0.0
    %1173 = vmatprep.subr.mxu0 0.0
    %1174 = vmatpush1.msra.mxu0 0.0
    %1175 = vmatprep.subr.mxu0 0.0
    %1176 = vmatpush1.msra.mxu0 0.0
    %1177 = vmatprep.subr.mxu0 0.0
    %1178 = vmatpush1.msra.mxu0 0.0
    %1179 = vmatprep.subr.mxu0 0.0
    %1180 = vmatpush1.msra.mxu0 0.0
    %1181 = vmatprep.subr.mxu0 0.0
    %1182 = vmatpush1.msra.mxu0 0.0
    %1183 = vmatprep.subr.mxu0 0.0
    %1184 = vmatpush1.msra.mxu0 0.0
    %1185 = vmatprep.subr.mxu0 0.0
    %1186 = vmatpush1.msra.mxu0 0.0
    %1187 = vmatprep.subr.mxu0 0.0
    %1188 = vmatpush1.msra.mxu0 0.0
    %1189 = vmatprep.subr.mxu0 0.0
    %1190 = vmatpush1.msra.mxu0 0.0
    %1191 = vmatprep.subr.mxu0 0.0
    %1192 = vmatpush1.msra.mxu0 0.0
    %1193 = vmatprep.subr.mxu0 0.0
    %1194 = vmatpush1.msra.mxu0 0.0
    %1195 = vmatprep.subr.mxu0 %v651
    %1196 = vmatpush1.msra.mxu0 %v650
    %1197 = vmatprep.subr.mxu0 0.0
    %1198 = vmatpush2.msra.mxu0 0.0
    %1199 = vmatprep.subr.mxu0 0.0
    %1200 = vmatpush2.msra.mxu0 0.0
    %1201 = vmatprep.subr.mxu0 0.0
    %1202 = vmatpush2.msra.mxu0 0.0
    %1203 = vmatprep.subr.mxu0 0.0
    %1204 = vmatpush2.msra.mxu0 0.0
    %1205 = vmatprep.subr.mxu0 0.0
    %1206 = vmatpush2.msra.mxu0 0.0
    %1207 = vmatprep.subr.mxu0 0.0
    %1208 = vmatpush2.msra.mxu0 0.0
    %1209 = vmatprep.subr.mxu0 0.0
    %1210 = vmatpush2.msra.mxu0 0.0
    %1211 = vmatprep.subr.mxu0 0.0
    %1212 = vmatpush2.msra.mxu0 0.0
    %1213 = vmatprep.subr.mxu0 0.0
    %1214 = vmatpush2.msra.mxu0 0.0
    %1215 = vmatprep.subr.mxu0 0.0
    %1216 = vmatpush2.msra.mxu0 0.0
    %1217 = vmatprep.subr.mxu0 0.0
    %1218 = vmatpush2.msra.mxu0 0.0
    %1219 = vmatprep.subr.mxu0 0.0
    %1220 = vmatpush2.msra.mxu0 0.0
    %1221 = vmatprep.subr.mxu0 0.0
    %1222 = vmatpush2.msra.mxu0 0.0
    %1223 = vmatprep.subr.mxu0 0.0
    %1224 = vmatpush2.msra.mxu0 0.0
    %1225 = vmatprep.subr.mxu0 0.0
    %1226 = vmatpush2.msra.mxu0 0.0
    %1227 = vmatprep.subr.mxu0 0.0
    %1228 = vmatpush2.msra.mxu0 0.0
    %1229 = vmatprep.mubr.f32.mxu0 0.0
    %1230 = vmatmul.mubr.f32.gmra.mxu0 %v950
    %v1231 = vpop.f32.mrf.mxu0
    %v1232 = vadd.f32 %v946, %v1231
    %v1233 = vpop.f32.mrf.mxu0
    %v1234 = vadd.f32 %v948, %v1233
    %1235 = vdwg.mxu0
    %s1236 = scalar_lea.vmem [#allocation13], 128
    %v1237 = vld [vmem:[%s1236] sm:$0xff]
    %v1238 = vld [vmem:[%s1236 + $0x8] sm:$0xff]
    %v1239 = vld [vmem:[%s1236 + $0x10] sm:$0xff]
    %v1240 = vld [vmem:[%s1236 + $0x18] sm:$0xff]
    %v1241 = vld [vmem:[%s1236 + $0x20] sm:$0xff]
    %v1242 = vld [vmem:[%s1236 + $0x28] sm:$0xff]
    %v1243 = vld [vmem:[%s1236 + $0x30] sm:$0xff]
    %v1244 = vld [vmem:[%s1236 + $0x38] sm:$0xff]
    %v1245 = vrot.slane %v642, 2
    %v1246 = vsel %vm663, %v1245, 0
    %1248 = vmatprep.subr.mxu0 0.0
    %1249 = vmatpush1.msra.mxu0 0.0
    %1250 = vmatprep.subr.mxu0 0.0
    %1251 = vmatpush1.msra.mxu0 0.0
    %1252 = vmatprep.subr.mxu0 0.0
    %1253 = vmatpush1.msra.mxu0 0.0
    %1254 = vmatprep.subr.mxu0 0.0
    %1255 = vmatpush1.msra.mxu0 0.0
    %1256 = vmatprep.subr.mxu0 0.0
    %1257 = vmatpush1.msra.mxu0 0.0
    %1258 = vmatprep.subr.mxu0 0.0
    %1259 = vmatpush1.msra.mxu0 0.0
    %1260 = vmatprep.subr.mxu0 0.0
    %1261 = vmatpush1.msra.mxu0 0.0
    %1262 = vmatprep.subr.mxu0 0.0
    %1263 = vmatpush1.msra.mxu0 0.0
    %1264 = vmatprep.subr.mxu0 0.0
    %1265 = vmatpush1.msra.mxu0 0.0
    %1266 = vmatprep.subr.mxu0 0.0
    %1267 = vmatpush1.msra.mxu0 0.0
    %1268 = vmatprep.subr.mxu0 0.0
    %1269 = vmatpush1.msra.mxu0 0.0
    %1270 = vmatprep.subr.mxu0 0.0
    %1271 = vmatpush1.msra.mxu0 0.0
    %1272 = vmatprep.subr.mxu0 0.0
    %1273 = vmatpush1.msra.mxu0 0.0
    %1274 = vmatprep.subr.mxu0 0.0
    %1275 = vmatpush1.msra.mxu0 0.0
    %1276 = vmatprep.subr.mxu0 0.0
    %1277 = vmatpush1.msra.mxu0 0.0
    %1278 = vmatprep.subr.mxu0 %v1238
    %1279 = vmatpush1.msra.mxu0 %v1237
    %1280 = vmatprep.subr.mxu0 0.0
    %1281 = vmatpush2.msra.mxu0 0.0
    %1282 = vmatprep.subr.mxu0 0.0
    %1283 = vmatpush2.msra.mxu0 0.0
    %1284 = vmatprep.subr.mxu0 0.0
    %1285 = vmatpush2.msra.mxu0 0.0
    %1286 = vmatprep.subr.mxu0 0.0
    %1287 = vmatpush2.msra.mxu0 0.0
    %1288 = vmatprep.subr.mxu0 0.0
    %1289 = vmatpush2.msra.mxu0 0.0
    %1290 = vmatprep.subr.mxu0 0.0
    %1291 = vmatpush2.msra.mxu0 0.0
    %1292 = vmatprep.subr.mxu0 0.0
    %1293 = vmatpush2.msra.mxu0 0.0
    %1294 = vmatprep.subr.mxu0 0.0
    %1295 = vmatpush2.msra.mxu0 0.0
    %1296 = vmatprep.subr.mxu0 0.0
    %1297 = vmatpush2.msra.mxu0 0.0
    %1298 = vmatprep.subr.mxu0 0.0
    %1299 = vmatpush2.msra.mxu0 0.0
    %1300 = vmatprep.subr.mxu0 0.0
    %1301 = vmatpush2.msra.mxu0 0.0
    %1302 = vmatprep.subr.mxu0 0.0
    %1303 = vmatpush2.msra.mxu0 0.0
    %1304 = vmatprep.subr.mxu0 0.0
    %1305 = vmatpush2.msra.mxu0 0.0
    %1306 = vmatprep.subr.mxu0 0.0
    %1307 = vmatpush2.msra.mxu0 0.0
    %1308 = vmatprep.subr.mxu0 0.0
    %1309 = vmatpush2.msra.mxu0 0.0
    %1310 = vmatprep.subr.mxu0 0.0
    %1311 = vmatpush2.msra.mxu0 0.0
    %1312 = vmatprep.mubr.f32.mxu0 0.0
    %1313 = vmatmul.mubr.f32.gmra.mxu0 %v1246
    %v1314 = vpop.f32.mrf.mxu0
    %v1315 = vadd.f32 0.0, %v1314
    %v1316 = vpop.f32.mrf.mxu0
    %v1317 = vadd.f32 0.0, %v1316
    %1318 = vdwg.mxu0
    %1319 = vmatprep.subr.mxu0 0.0
    %1320 = vmatpush1.msra.mxu0 0.0
    %1321 = vmatprep.subr.mxu0 0.0
    %1322 = vmatpush1.msra.mxu0 0.0
    %1323 = vmatprep.subr.mxu0 0.0
    %1324 = vmatpush1.msra.mxu0 0.0
    %1325 = vmatprep.subr.mxu0 0.0
    %1326 = vmatpush1.msra.mxu0 0.0
    %1327 = vmatprep.subr.mxu0 0.0
    %1328 = vmatpush1.msra.mxu0 0.0
    %1329 = vmatprep.subr.mxu0 0.0
    %1330 = vmatpush1.msra.mxu0 0.0
    %1331 = vmatprep.subr.mxu0 0.0
    %1332 = vmatpush1.msra.mxu0 0.0
    %1333 = vmatprep.subr.mxu0 0.0
    %1334 = vmatpush1.msra.mxu0 0.0
    %1335 = vmatprep.subr.mxu0 0.0
    %1336 = vmatpush1.msra.mxu0 0.0
    %1337 = vmatprep.subr.mxu0 0.0
    %1338 = vmatpush1.msra.mxu0 0.0
    %1339 = vmatprep.subr.mxu0 0.0
    %1340 = vmatpush1.msra.mxu0 0.0
    %1341 = vmatprep.subr.mxu0 0.0
    %1342 = vmatpush1.msra.mxu0 0.0
    %1343 = vmatprep.subr.mxu0 0.0
    %1344 = vmatpush1.msra.mxu0 0.0
    %1345 = vmatprep.subr.mxu0 0.0
    %1346 = vmatpush1.msra.mxu0 0.0
    %1347 = vmatprep.subr.mxu0 0.0
    %1348 = vmatpush1.msra.mxu0 0.0
    %1349 = vmatprep.subr.mxu0 %v1240
    %1350 = vmatpush1.msra.mxu0 %v1239
    %1351 = vmatprep.subr.mxu0 0.0
    %1352 = vmatpush2.msra.mxu0 0.0
    %1353 = vmatprep.subr.mxu0 0.0
    %1354 = vmatpush2.msra.mxu0 0.0
    %1355 = vmatprep.subr.mxu0 0.0
    %1356 = vmatpush2.msra.mxu0 0.0
    %1357 = vmatprep.subr.mxu0 0.0
    %1358 = vmatpush2.msra.mxu0 0.0
    %1359 = vmatprep.subr.mxu0 0.0
    %1360 = vmatpush2.msra.mxu0 0.0
    %1361 = vmatprep.subr.mxu0 0.0
    %1362 = vmatpush2.msra.mxu0 0.0
    %1363 = vmatprep.subr.mxu0 0.0
    %1364 = vmatpush2.msra.mxu0 0.0
    %1365 = vmatprep.subr.mxu0 0.0
    %1366 = vmatpush2.msra.mxu0 0.0
    %1367 = vmatprep.subr.mxu0 0.0
    %1368 = vmatpush2.msra.mxu0 0.0
    %1369 = vmatprep.subr.mxu0 0.0
    %1370 = vmatpush2.msra.mxu0 0.0
    %1371 = vmatprep.subr.mxu0 0.0
    %1372 = vmatpush2.msra.mxu0 0.0
    %1373 = vmatprep.subr.mxu0 0.0
    %1374 = vmatpush2.msra.mxu0 0.0
    %1375 = vmatprep.subr.mxu0 0.0
    %1376 = vmatpush2.msra.mxu0 0.0
    %1377 = vmatprep.subr.mxu0 0.0
    %1378 = vmatpush2.msra.mxu0 0.0
    %1379 = vmatprep.subr.mxu0 0.0
    %1380 = vmatpush2.msra.mxu0 0.0
    %1381 = vmatprep.subr.mxu0 0.0
    %1382 = vmatpush2.msra.mxu0 0.0
    %1383 = vmatprep.mubr.f32.mxu0 0.0
    %1384 = vmatmul.mubr.f32.gmra.mxu0 %v1246
    %v1385 = vpop.f32.mrf.mxu0
    %v1386 = vadd.f32 0.0, %v1385
    %v1387 = vpop.f32.mrf.mxu0
    %v1388 = vadd.f32 0.0, %v1387
    %1389 = vdwg.mxu0
    %1390 = vmatprep.subr.mxu0 0.0
    %1391 = vmatpush1.msra.mxu0 0.0
    %1392 = vmatprep.subr.mxu0 0.0
    %1393 = vmatpush1.msra.mxu0 0.0
    %1394 = vmatprep.subr.mxu0 0.0
    %1395 = vmatpush1.msra.mxu0 0.0
    %1396 = vmatprep.subr.mxu0 0.0
    %1397 = vmatpush1.msra.mxu0 0.0
    %1398 = vmatprep.subr.mxu0 0.0
    %1399 = vmatpush1.msra.mxu0 0.0
    %1400 = vmatprep.subr.mxu0 0.0
    %1401 = vmatpush1.msra.mxu0 0.0
    %1402 = vmatprep.subr.mxu0 0.0
    %1403 = vmatpush1.msra.mxu0 0.0
    %1404 = vmatprep.subr.mxu0 0.0
    %1405 = vmatpush1.msra.mxu0 0.0
    %1406 = vmatprep.subr.mxu0 0.0
    %1407 = vmatpush1.msra.mxu0 0.0
    %1408 = vmatprep.subr.mxu0 0.0
    %1409 = vmatpush1.msra.mxu0 0.0
    %1410 = vmatprep.subr.mxu0 0.0
    %1411 = vmatpush1.msra.mxu0 0.0
    %1412 = vmatprep.subr.mxu0 0.0
    %1413 = vmatpush1.msra.mxu0 0.0
    %1414 = vmatprep.subr.mxu0 0.0
    %1415 = vmatpush1.msra.mxu0 0.0
    %1416 = vmatprep.subr.mxu0 0.0
    %1417 = vmatpush1.msra.mxu0 0.0
    %1418 = vmatprep.subr.mxu0 0.0
    %1419 = vmatpush1.msra.mxu0 0.0
    %1420 = vmatprep.subr.mxu0 %v1242
    %1421 = vmatpush1.msra.mxu0 %v1241
    %1422 = vmatprep.subr.mxu0 0.0
    %1423 = vmatpush2.msra.mxu0 0.0
    %1424 = vmatprep.subr.mxu0 0.0
    %1425 = vmatpush2.msra.mxu0 0.0
    %1426 = vmatprep.subr.mxu0 0.0
    %1427 = vmatpush2.msra.mxu0 0.0
    %1428 = vmatprep.subr.mxu0 0.0
    %1429 = vmatpush2.msra.mxu0 0.0
    %1430 = vmatprep.subr.mxu0 0.0
    %1431 = vmatpush2.msra.mxu0 0.0
    %1432 = vmatprep.subr.mxu0 0.0
    %1433 = vmatpush2.msra.mxu0 0.0
    %1434 = vmatprep.subr.mxu0 0.0
    %1435 = vmatpush2.msra.mxu0 0.0
    %1436 = vmatprep.subr.mxu0 0.0
    %1437 = vmatpush2.msra.mxu0 0.0
    %1438 = vmatprep.subr.mxu0 0.0
    %1439 = vmatpush2.msra.mxu0 0.0
    %1440 = vmatprep.subr.mxu0 0.0
    %1441 = vmatpush2.msra.mxu0 0.0
    %1442 = vmatprep.subr.mxu0 0.0
    %1443 = vmatpush2.msra.mxu0 0.0
    %1444 = vmatprep.subr.mxu0 0.0
    %1445 = vmatpush2.msra.mxu0 0.0
    %1446 = vmatprep.subr.mxu0 0.0
    %1447 = vmatpush2.msra.mxu0 0.0
    %1448 = vmatprep.subr.mxu0 0.0
    %1449 = vmatpush2.msra.mxu0 0.0
    %1450 = vmatprep.subr.mxu0 0.0
    %1451 = vmatpush2.msra.mxu0 0.0
    %1452 = vmatprep.subr.mxu0 0.0
    %1453 = vmatpush2.msra.mxu0 0.0
    %1454 = vmatprep.mubr.f32.mxu0 0.0
    %1455 = vmatmul.mubr.f32.gmra.mxu0 %v1246
    %v1456 = vpop.f32.mrf.mxu0
    %v1457 = vadd.f32 0.0, %v1456
    %v1458 = vpop.f32.mrf.mxu0
    %v1459 = vadd.f32 0.0, %v1458
    %1460 = vdwg.mxu0
    %1461 = vmatprep.subr.mxu0 0.0
    %1462 = vmatpush1.msra.mxu0 0.0
    %1463 = vmatprep.subr.mxu0 0.0
    %1464 = vmatpush1.msra.mxu0 0.0
    %1465 = vmatprep.subr.mxu0 0.0
    %1466 = vmatpush1.msra.mxu0 0.0
    %1467 = vmatprep.subr.mxu0 0.0
    %1468 = vmatpush1.msra.mxu0 0.0
    %1469 = vmatprep.subr.mxu0 0.0
    %1470 = vmatpush1.msra.mxu0 0.0
    %1471 = vmatprep.subr.mxu0 0.0
    %1472 = vmatpush1.msra.mxu0 0.0
    %1473 = vmatprep.subr.mxu0 0.0
    %1474 = vmatpush1.msra.mxu0 0.0
    %1475 = vmatprep.subr.mxu0 0.0
    %1476 = vmatpush1.msra.mxu0 0.0
    %1477 = vmatprep.subr.mxu0 0.0
    %1478 = vmatpush1.msra.mxu0 0.0
    %1479 = vmatprep.subr.mxu0 0.0
    %1480 = vmatpush1.msra.mxu0 0.0
    %1481 = vmatprep.subr.mxu0 0.0
    %1482 = vmatpush1.msra.mxu0 0.0
    %1483 = vmatprep.subr.mxu0 0.0
    %1484 = vmatpush1.msra.mxu0 0.0
    %1485 = vmatprep.subr.mxu0 0.0
    %1486 = vmatpush1.msra.mxu0 0.0
    %1487 = vmatprep.subr.mxu0 0.0
    %1488 = vmatpush1.msra.mxu0 0.0
    %1489 = vmatprep.subr.mxu0 0.0
    %1490 = vmatpush1.msra.mxu0 0.0
    %1491 = vmatprep.subr.mxu0 %v1244
    %1492 = vmatpush1.msra.mxu0 %v1243
    %1493 = vmatprep.subr.mxu0 0.0
    %1494 = vmatpush2.msra.mxu0 0.0
    %1495 = vmatprep.subr.mxu0 0.0
    %1496 = vmatpush2.msra.mxu0 0.0
    %1497 = vmatprep.subr.mxu0 0.0
    %1498 = vmatpush2.msra.mxu0 0.0
    %1499 = vmatprep.subr.mxu0 0.0
    %1500 = vmatpush2.msra.mxu0 0.0
    %1501 = vmatprep.subr.mxu0 0.0
    %1502 = vmatpush2.msra.mxu0 0.0
    %1503 = vmatprep.subr.mxu0 0.0
    %1504 = vmatpush2.msra.mxu0 0.0
    %1505 = vmatprep.subr.mxu0 0.0
    %1506 = vmatpush2.msra.mxu0 0.0
    %1507 = vmatprep.subr.mxu0 0.0
    %1508 = vmatpush2.msra.mxu0 0.0
    %1509 = vmatprep.subr.mxu0 0.0
    %1510 = vmatpush2.msra.mxu0 0.0
    %1511 = vmatprep.subr.mxu0 0.0
    %1512 = vmatpush2.msra.mxu0 0.0
    %1513 = vmatprep.subr.mxu0 0.0
    %1514 = vmatpush2.msra.mxu0 0.0
    %1515 = vmatprep.subr.mxu0 0.0
    %1516 = vmatpush2.msra.mxu0 0.0
    %1517 = vmatprep.subr.mxu0 0.0
    %1518 = vmatpush2.msra.mxu0 0.0
    %1519 = vmatprep.subr.mxu0 0.0
    %1520 = vmatpush2.msra.mxu0 0.0
    %1521 = vmatprep.subr.mxu0 0.0
    %1522 = vmatpush2.msra.mxu0 0.0
    %1523 = vmatprep.subr.mxu0 0.0
    %1524 = vmatpush2.msra.mxu0 0.0
    %1525 = vmatprep.mubr.f32.mxu0 0.0
    %1526 = vmatmul.mubr.f32.gmra.mxu0 %v1246
    %v1527 = vpop.f32.mrf.mxu0
    %v1528 = vadd.f32 0.0, %v1527
    %v1529 = vpop.f32.mrf.mxu0
    %v1530 = vadd.f32 0.0, %v1529
    %1531 = vdwg.mxu0
    %v1532 = vadd.f32 %v1019, %v1315
    %v1533 = vadd.f32 %v1021, %v1317
    %v1534 = vadd.f32 %v1090, %v1386
    %v1535 = vadd.f32 %v1092, %v1388
    %v1536 = vadd.f32 %v1161, %v1457
    %v1537 = vadd.f32 %v1163, %v1459
    %v1538 = vadd.f32 %v1232, %v1528
    %v1539 = vadd.f32 %v1234, %v1530
    %s1540 = scalar_lea.vmem [#allocation13], 192
    %v1541 = vld [vmem:[%s1540] sm:$0xff]
    %v1542 = vld [vmem:[%s1540 + $0x8] sm:$0xff]
    %v1543 = vld [vmem:[%s1540 + $0x10] sm:$0xff]
    %v1544 = vld [vmem:[%s1540 + $0x18] sm:$0xff]
    %v1545 = vld [vmem:[%s1540 + $0x20] sm:$0xff]
    %v1546 = vld [vmem:[%s1540 + $0x28] sm:$0xff]
    %v1547 = vld [vmem:[%s1540 + $0x30] sm:$0xff]
    %v1548 = vld [vmem:[%s1540 + $0x38] sm:$0xff]
    %v1549 = vrot.slane %v642, 3
    %v1550 = vsel %vm663, %v1549, 0
    %1552 = vmatprep.subr.mxu0 0.0
    %1553 = vmatpush1.msra.mxu0 0.0
    %1554 = vmatprep.subr.mxu0 0.0
    %1555 = vmatpush1.msra.mxu0 0.0
    %1556 = vmatprep.subr.mxu0 0.0
    %1557 = vmatpush1.msra.mxu0 0.0
    %1558 = vmatprep.subr.mxu0 0.0
    %1559 = vmatpush1.msra.mxu0 0.0
    %1560 = vmatprep.subr.mxu0 0.0
    %1561 = vmatpush1.msra.mxu0 0.0
    %1562 = vmatprep.subr.mxu0 0.0
    %1563 = vmatpush1.msra.mxu0 0.0
    %1564 = vmatprep.subr.mxu0 0.0
    %1565 = vmatpush1.msra.mxu0 0.0
    %1566 = vmatprep.subr.mxu0 0.0
    %1567 = vmatpush1.msra.mxu0 0.0
    %1568 = vmatprep.subr.mxu0 0.0
    %1569 = vmatpush1.msra.mxu0 0.0
    %1570 = vmatprep.subr.mxu0 0.0
    %1571 = vmatpush1.msra.mxu0 0.0
    %1572 = vmatprep.subr.mxu0 0.0
    %1573 = vmatpush1.msra.mxu0 0.0
    %1574 = vmatprep.subr.mxu0 0.0
    %1575 = vmatpush1.msra.mxu0 0.0
    %1576 = vmatprep.subr.mxu0 0.0
    %1577 = vmatpush1.msra.mxu0 0.0
    %1578 = vmatprep.subr.mxu0 0.0
    %1579 = vmatpush1.msra.mxu0 0.0
    %1580 = vmatprep.subr.mxu0 0.0
    %1581 = vmatpush1.msra.mxu0 0.0
    %1582 = vmatprep.subr.mxu0 %v1542
    %1583 = vmatpush1.msra.mxu0 %v1541
    %1584 = vmatprep.subr.mxu0 0.0
    %1585 = vmatpush2.msra.mxu0 0.0
    %1586 = vmatprep.subr.mxu0 0.0
    %1587 = vmatpush2.msra.mxu0 0.0
    %1588 = vmatprep.subr.mxu0 0.0
    %1589 = vmatpush2.msra.mxu0 0.0
    %1590 = vmatprep.subr.mxu0 0.0
    %1591 = vmatpush2.msra.mxu0 0.0
    %1592 = vmatprep.subr.mxu0 0.0
    %1593 = vmatpush2.msra.mxu0 0.0
    %1594 = vmatprep.subr.mxu0 0.0
    %1595 = vmatpush2.msra.mxu0 0.0
    %1596 = vmatprep.subr.mxu0 0.0
    %1597 = vmatpush2.msra.mxu0 0.0
    %1598 = vmatprep.subr.mxu0 0.0
    %1599 = vmatpush2.msra.mxu0 0.0
    %1600 = vmatprep.subr.mxu0 0.0
    %1601 = vmatpush2.msra.mxu0 0.0
    %1602 = vmatprep.subr.mxu0 0.0
    %1603 = vmatpush2.msra.mxu0 0.0
    %1604 = vmatprep.subr.mxu0 0.0
    %1605 = vmatpush2.msra.mxu0 0.0
    %1606 = vmatprep.subr.mxu0 0.0
    %1607 = vmatpush2.msra.mxu0 0.0
    %1608 = vmatprep.subr.mxu0 0.0
    %1609 = vmatpush2.msra.mxu0 0.0
    %1610 = vmatprep.subr.mxu0 0.0
    %1611 = vmatpush2.msra.mxu0 0.0
    %1612 = vmatprep.subr.mxu0 0.0
    %1613 = vmatpush2.msra.mxu0 0.0
    %1614 = vmatprep.subr.mxu0 0.0
    %1615 = vmatpush2.msra.mxu0 0.0
    %1616 = vmatprep.mubr.f32.mxu0 0.0
    %1617 = vmatmul.mubr.f32.gmra.mxu0 %v1550
    %v1618 = vpop.f32.mrf.mxu0
    %v1619 = vadd.f32 0.0, %v1618
    %v1620 = vpop.f32.mrf.mxu0
    %v1621 = vadd.f32 0.0, %v1620
    %1622 = vdwg.mxu0
    %1623 = vmatprep.subr.mxu0 0.0
    %1624 = vmatpush1.msra.mxu0 0.0
    %1625 = vmatprep.subr.mxu0 0.0
    %1626 = vmatpush1.msra.mxu0 0.0
    %1627 = vmatprep.subr.mxu0 0.0
    %1628 = vmatpush1.msra.mxu0 0.0
    %1629 = vmatprep.subr.mxu0 0.0
    %1630 = vmatpush1.msra.mxu0 0.0
    %1631 = vmatprep.subr.mxu0 0.0
    %1632 = vmatpush1.msra.mxu0 0.0
    %1633 = vmatprep.subr.mxu0 0.0
    %1634 = vmatpush1.msra.mxu0 0.0
    %1635 = vmatprep.subr.mxu0 0.0
    %1636 = vmatpush1.msra.mxu0 0.0
    %1637 = vmatprep.subr.mxu0 0.0
    %1638 = vmatpush1.msra.mxu0 0.0
    %1639 = vmatprep.subr.mxu0 0.0
    %1640 = vmatpush1.msra.mxu0 0.0
    %1641 = vmatprep.subr.mxu0 0.0
    %1642 = vmatpush1.msra.mxu0 0.0
    %1643 = vmatprep.subr.mxu0 0.0
    %1644 = vmatpush1.msra.mxu0 0.0
    %1645 = vmatprep.subr.mxu0 0.0
    %1646 = vmatpush1.msra.mxu0 0.0
    %1647 = vmatprep.subr.mxu0 0.0
    %1648 = vmatpush1.msra.mxu0 0.0
    %1649 = vmatprep.subr.mxu0 0.0
    %1650 = vmatpush1.msra.mxu0 0.0
    %1651 = vmatprep.subr.mxu0 0.0
    %1652 = vmatpush1.msra.mxu0 0.0
    %1653 = vmatprep.subr.mxu0 %v1544
    %1654 = vmatpush1.msra.mxu0 %v1543
    %1655 = vmatprep.subr.mxu0 0.0
    %1656 = vmatpush2.msra.mxu0 0.0
    %1657 = vmatprep.subr.mxu0 0.0
    %1658 = vmatpush2.msra.mxu0 0.0
    %1659 = vmatprep.subr.mxu0 0.0
    %1660 = vmatpush2.msra.mxu0 0.0
    %1661 = vmatprep.subr.mxu0 0.0
    %1662 = vmatpush2.msra.mxu0 0.0
    %1663 = vmatprep.subr.mxu0 0.0
    %1664 = vmatpush2.msra.mxu0 0.0
    %1665 = vmatprep.subr.mxu0 0.0
    %1666 = vmatpush2.msra.mxu0 0.0
    %1667 = vmatprep.subr.mxu0 0.0
    %1668 = vmatpush2.msra.mxu0 0.0
    %1669 = vmatprep.subr.mxu0 0.0
    %1670 = vmatpush2.msra.mxu0 0.0
    %1671 = vmatprep.subr.mxu0 0.0
    %1672 = vmatpush2.msra.mxu0 0.0
    %1673 = vmatprep.subr.mxu0 0.0
    %1674 = vmatpush2.msra.mxu0 0.0
    %1675 = vmatprep.subr.mxu0 0.0
    %1676 = vmatpush2.msra.mxu0 0.0
    %1677 = vmatprep.subr.mxu0 0.0
    %1678 = vmatpush2.msra.mxu0 0.0
    %1679 = vmatprep.subr.mxu0 0.0
    %1680 = vmatpush2.msra.mxu0 0.0
    %1681 = vmatprep.subr.mxu0 0.0
    %1682 = vmatpush2.msra.mxu0 0.0
    %1683 = vmatprep.subr.mxu0 0.0
    %1684 = vmatpush2.msra.mxu0 0.0
    %1685 = vmatprep.subr.mxu0 0.0
    %1686 = vmatpush2.msra.mxu0 0.0
    %1687 = vmatprep.mubr.f32.mxu0 0.0
    %1688 = vmatmul.mubr.f32.gmra.mxu0 %v1550
    %v1689 = vpop.f32.mrf.mxu0
    %v1690 = vadd.f32 0.0, %v1689
    %v1691 = vpop.f32.mrf.mxu0
    %v1692 = vadd.f32 0.0, %v1691
    %1693 = vdwg.mxu0
    %1694 = vmatprep.subr.mxu0 0.0
    %1695 = vmatpush1.msra.mxu0 0.0
    %1696 = vmatprep.subr.mxu0 0.0
    %1697 = vmatpush1.msra.mxu0 0.0
    %1698 = vmatprep.subr.mxu0 0.0
    %1699 = vmatpush1.msra.mxu0 0.0
    %1700 = vmatprep.subr.mxu0 0.0
    %1701 = vmatpush1.msra.mxu0 0.0
    %1702 = vmatprep.subr.mxu0 0.0
    %1703 = vmatpush1.msra.mxu0 0.0
    %1704 = vmatprep.subr.mxu0 0.0
    %1705 = vmatpush1.msra.mxu0 0.0
    %1706 = vmatprep.subr.mxu0 0.0
    %1707 = vmatpush1.msra.mxu0 0.0
    %1708 = vmatprep.subr.mxu0 0.0
    %1709 = vmatpush1.msra.mxu0 0.0
    %1710 = vmatprep.subr.mxu0 0.0
    %1711 = vmatpush1.msra.mxu0 0.0
    %1712 = vmatprep.subr.mxu0 0.0
    %1713 = vmatpush1.msra.mxu0 0.0
    %1714 = vmatprep.subr.mxu0 0.0
    %1715 = vmatpush1.msra.mxu0 0.0
    %1716 = vmatprep.subr.mxu0 0.0
    %1717 = vmatpush1.msra.mxu0 0.0
    %1718 = vmatprep.subr.mxu0 0.0
    %1719 = vmatpush1.msra.mxu0 0.0
    %1720 = vmatprep.subr.mxu0 0.0
    %1721 = vmatpush1.msra.mxu0 0.0
    %1722 = vmatprep.subr.mxu0 0.0
    %1723 = vmatpush1.msra.mxu0 0.0
    %1724 = vmatprep.subr.mxu0 %v1546
    %1725 = vmatpush1.msra.mxu0 %v1545
    %1726 = vmatprep.subr.mxu0 0.0
    %1727 = vmatpush2.msra.mxu0 0.0
    %1728 = vmatprep.subr.mxu0 0.0
    %1729 = vmatpush2.msra.mxu0 0.0
    %1730 = vmatprep.subr.mxu0 0.0
    %1731 = vmatpush2.msra.mxu0 0.0
    %1732 = vmatprep.subr.mxu0 0.0
    %1733 = vmatpush2.msra.mxu0 0.0
    %1734 = vmatprep.subr.mxu0 0.0
    %1735 = vmatpush2.msra.mxu0 0.0
    %1736 = vmatprep.subr.mxu0 0.0
    %1737 = vmatpush2.msra.mxu0 0.0
    %1738 = vmatprep.subr.mxu0 0.0
    %1739 = vmatpush2.msra.mxu0 0.0
    %1740 = vmatprep.subr.mxu0 0.0
    %1741 = vmatpush2.msra.mxu0 0.0
    %1742 = vmatprep.subr.mxu0 0.0
    %1743 = vmatpush2.msra.mxu0 0.0
    %1744 = vmatprep.subr.mxu0 0.0
    %1745 = vmatpush2.msra.mxu0 0.0
    %1746 = vmatprep.subr.mxu0 0.0
    %1747 = vmatpush2.msra.mxu0 0.0
    %1748 = vmatprep.subr.mxu0 0.0
    %1749 = vmatpush2.msra.mxu0 0.0
    %1750 = vmatprep.subr.mxu0 0.0
    %1751 = vmatpush2.msra.mxu0 0.0
    %1752 = vmatprep.subr.mxu0 0.0
    %1753 = vmatpush2.msra.mxu0 0.0
    %1754 = vmatprep.subr.mxu0 0.0
    %1755 = vmatpush2.msra.mxu0 0.0
    %1756 = vmatprep.subr.mxu0 0.0
    %1757 = vmatpush2.msra.mxu0 0.0
    %1758 = vmatprep.mubr.f32.mxu0 0.0
    %1759 = vmatmul.mubr.f32.gmra.mxu0 %v1550
    %v1760 = vpop.f32.mrf.mxu0
    %v1761 = vadd.f32 0.0, %v1760
    %v1762 = vpop.f32.mrf.mxu0
    %v1763 = vadd.f32 0.0, %v1762
    %1764 = vdwg.mxu0
    %1765 = vmatprep.subr.mxu0 0.0
    %1766 = vmatpush1.msra.mxu0 0.0
    %1767 = vmatprep.subr.mxu0 0.0
    %1768 = vmatpush1.msra.mxu0 0.0
    %1769 = vmatprep.subr.mxu0 0.0
    %1770 = vmatpush1.msra.mxu0 0.0
    %1771 = vmatprep.subr.mxu0 0.0
    %1772 = vmatpush1.msra.mxu0 0.0
    %1773 = vmatprep.subr.mxu0 0.0
    %1774 = vmatpush1.msra.mxu0 0.0
    %1775 = vmatprep.subr.mxu0 0.0
    %1776 = vmatpush1.msra.mxu0 0.0
    %1777 = vmatprep.subr.mxu0 0.0
    %1778 = vmatpush1.msra.mxu0 0.0
    %1779 = vmatprep.subr.mxu0 0.0
    %1780 = vmatpush1.msra.mxu0 0.0
    %1781 = vmatprep.subr.mxu0 0.0
    %1782 = vmatpush1.msra.mxu0 0.0
    %1783 = vmatprep.subr.mxu0 0.0
    %1784 = vmatpush1.msra.mxu0 0.0
    %1785 = vmatprep.subr.mxu0 0.0
    %1786 = vmatpush1.msra.mxu0 0.0
    %1787 = vmatprep.subr.mxu0 0.0
    %1788 = vmatpush1.msra.mxu0 0.0
    %1789 = vmatprep.subr.mxu0 0.0
    %1790 = vmatpush1.msra.mxu0 0.0
    %1791 = vmatprep.subr.mxu0 0.0
    %1792 = vmatpush1.msra.mxu0 0.0
    %1793 = vmatprep.subr.mxu0 0.0
    %1794 = vmatpush1.msra.mxu0 0.0
    %1795 = vmatprep.subr.mxu0 %v1548
    %1796 = vmatpush1.msra.mxu0 %v1547
    %1797 = vmatprep.subr.mxu0 0.0
    %1798 = vmatpush2.msra.mxu0 0.0
    %1799 = vmatprep.subr.mxu0 0.0
    %1800 = vmatpush2.msra.mxu0 0.0
    %1801 = vmatprep.subr.mxu0 0.0
    %1802 = vmatpush2.msra.mxu0 0.0
    %1803 = vmatprep.subr.mxu0 0.0
    %1804 = vmatpush2.msra.mxu0 0.0
    %1805 = vmatprep.subr.mxu0 0.0
    %1806 = vmatpush2.msra.mxu0 0.0
    %1807 = vmatprep.subr.mxu0 0.0
    %1808 = vmatpush2.msra.mxu0 0.0
    %1809 = vmatprep.subr.mxu0 0.0
    %1810 = vmatpush2.msra.mxu0 0.0
    %1811 = vmatprep.subr.mxu0 0.0
    %1812 = vmatpush2.msra.mxu0 0.0
    %1813 = vmatprep.subr.mxu0 0.0
    %1814 = vmatpush2.msra.mxu0 0.0
    %1815 = vmatprep.subr.mxu0 0.0
    %1816 = vmatpush2.msra.mxu0 0.0
    %1817 = vmatprep.subr.mxu0 0.0
    %1818 = vmatpush2.msra.mxu0 0.0
    %1819 = vmatprep.subr.mxu0 0.0
    %1820 = vmatpush2.msra.mxu0 0.0
    %1821 = vmatprep.subr.mxu0 0.0
    %1822 = vmatpush2.msra.mxu0 0.0
    %1823 = vmatprep.subr.mxu0 0.0
    %1824 = vmatpush2.msra.mxu0 0.0
    %1825 = vmatprep.subr.mxu0 0.0
    %1826 = vmatpush2.msra.mxu0 0.0
    %1827 = vmatprep.subr.mxu0 0.0
    %1828 = vmatpush2.msra.mxu0 0.0
    %1829 = vmatprep.mubr.f32.mxu0 0.0
    %1830 = vmatmul.mubr.f32.gmra.mxu0 %v1550
    %v1831 = vpop.f32.mrf.mxu0
    %v1832 = vadd.f32 0.0, %v1831
    %v1833 = vpop.f32.mrf.mxu0
    %v1834 = vadd.f32 0.0, %v1833
    %1835 = vdwg.mxu0
    %v1836 = vadd.f32 %v1532, %v1619
    %v1837 = vadd.f32 %v1533, %v1621
    %v1838 = vadd.f32 %v1534, %v1690
    %v1839 = vadd.f32 %v1535, %v1692
    %v1840 = vadd.f32 %v1536, %v1761
    %v1841 = vadd.f32 %v1537, %v1763
    %v1842 = vadd.f32 %v1538, %v1832
    %v1843 = vadd.f32 %v1539, %v1834
    %s1844 = scalar_lea.vmem [#allocation13], 256
    %v1845 = vld [vmem:[%s1844] sm:$0xff]
    %v1846 = vld [vmem:[%s1844 + $0x8] sm:$0xff]
    %v1847 = vld [vmem:[%s1844 + $0x10] sm:$0xff]
    %v1848 = vld [vmem:[%s1844 + $0x18] sm:$0xff]
    %v1849 = vld [vmem:[%s1844 + $0x20] sm:$0xff]
    %v1850 = vld [vmem:[%s1844 + $0x28] sm:$0xff]
    %v1851 = vld [vmem:[%s1844 + $0x30] sm:$0xff]
    %v1852 = vld [vmem:[%s1844 + $0x38] sm:$0xff]
    %v1853 = vrot.slane %v642, 4
    %v1854 = vsel %vm663, %v1853, 0
    %1856 = vmatprep.subr.mxu0 0.0
    %1857 = vmatpush1.msra.mxu0 0.0
    %1858 = vmatprep.subr.mxu0 0.0
    %1859 = vmatpush1.msra.mxu0 0.0
    %1860 = vmatprep.subr.mxu0 0.0
    %1861 = vmatpush1.msra.mxu0 0.0
    %1862 = vmatprep.subr.mxu0 0.0
    %1863 = vmatpush1.msra.mxu0 0.0
    %1864 = vmatprep.subr.mxu0 0.0
    %1865 = vmatpush1.msra.mxu0 0.0
    %1866 = vmatprep.subr.mxu0 0.0
    %1867 = vmatpush1.msra.mxu0 0.0
    %1868 = vmatprep.subr.mxu0 0.0
    %1869 = vmatpush1.msra.mxu0 0.0
    %1870 = vmatprep.subr.mxu0 0.0
    %1871 = vmatpush1.msra.mxu0 0.0
    %1872 = vmatprep.subr.mxu0 0.0
    %1873 = vmatpush1.msra.mxu0 0.0
    %1874 = vmatprep.subr.mxu0 0.0
    %1875 = vmatpush1.msra.mxu0 0.0
    %1876 = vmatprep.subr.mxu0 0.0
    %1877 = vmatpush1.msra.mxu0 0.0
    %1878 = vmatprep.subr.mxu0 0.0
    %1879 = vmatpush1.msra.mxu0 0.0
    %1880 = vmatprep.subr.mxu0 0.0
    %1881 = vmatpush1.msra.mxu0 0.0
    %1882 = vmatprep.subr.mxu0 0.0
    %1883 = vmatpush1.msra.mxu0 0.0
    %1884 = vmatprep.subr.mxu0 0.0
    %1885 = vmatpush1.msra.mxu0 0.0
    %1886 = vmatprep.subr.mxu0 %v1846
    %1887 = vmatpush1.msra.mxu0 %v1845
    %1888 = vmatprep.subr.mxu0 0.0
    %1889 = vmatpush2.msra.mxu0 0.0
    %1890 = vmatprep.subr.mxu0 0.0
    %1891 = vmatpush2.msra.mxu0 0.0
    %1892 = vmatprep.subr.mxu0 0.0
    %1893 = vmatpush2.msra.mxu0 0.0
    %1894 = vmatprep.subr.mxu0 0.0
    %1895 = vmatpush2.msra.mxu0 0.0
    %1896 = vmatprep.subr.mxu0 0.0
    %1897 = vmatpush2.msra.mxu0 0.0
    %1898 = vmatprep.subr.mxu0 0.0
    %1899 = vmatpush2.msra.mxu0 0.0
    %1900 = vmatprep.subr.mxu0 0.0
    %1901 = vmatpush2.msra.mxu0 0.0
    %1902 = vmatprep.subr.mxu0 0.0
    %1903 = vmatpush2.msra.mxu0 0.0
    %1904 = vmatprep.subr.mxu0 0.0
    %1905 = vmatpush2.msra.mxu0 0.0
    %1906 = vmatprep.subr.mxu0 0.0
    %1907 = vmatpush2.msra.mxu0 0.0
    %1908 = vmatprep.subr.mxu0 0.0
    %1909 = vmatpush2.msra.mxu0 0.0
    %1910 = vmatprep.subr.mxu0 0.0
    %1911 = vmatpush2.msra.mxu0 0.0
    %1912 = vmatprep.subr.mxu0 0.0
    %1913 = vmatpush2.msra.mxu0 0.0
    %1914 = vmatprep.subr.mxu0 0.0
    %1915 = vmatpush2.msra.mxu0 0.0
    %1916 = vmatprep.subr.mxu0 0.0
    %1917 = vmatpush2.msra.mxu0 0.0
    %1918 = vmatprep.subr.mxu0 0.0
    %1919 = vmatpush2.msra.mxu0 0.0
    %1920 = vmatprep.mubr.f32.mxu0 0.0
    %1921 = vmatmul.mubr.f32.gmra.mxu0 %v1854
    %v1922 = vpop.f32.mrf.mxu0
    %v1923 = vadd.f32 0.0, %v1922
    %v1924 = vpop.f32.mrf.mxu0
    %v1925 = vadd.f32 0.0, %v1924
    %1926 = vdwg.mxu0
    %1927 = vmatprep.subr.mxu0 0.0
    %1928 = vmatpush1.msra.mxu0 0.0
    %1929 = vmatprep.subr.mxu0 0.0
    %1930 = vmatpush1.msra.mxu0 0.0
    %1931 = vmatprep.subr.mxu0 0.0
    %1932 = vmatpush1.msra.mxu0 0.0
    %1933 = vmatprep.subr.mxu0 0.0
    %1934 = vmatpush1.msra.mxu0 0.0
    %1935 = vmatprep.subr.mxu0 0.0
    %1936 = vmatpush1.msra.mxu0 0.0
    %1937 = vmatprep.subr.mxu0 0.0
    %1938 = vmatpush1.msra.mxu0 0.0
    %1939 = vmatprep.subr.mxu0 0.0
    %1940 = vmatpush1.msra.mxu0 0.0
    %1941 = vmatprep.subr.mxu0 0.0
    %1942 = vmatpush1.msra.mxu0 0.0
    %1943 = vmatprep.subr.mxu0 0.0
    %1944 = vmatpush1.msra.mxu0 0.0
    %1945 = vmatprep.subr.mxu0 0.0
    %1946 = vmatpush1.msra.mxu0 0.0
    %1947 = vmatprep.subr.mxu0 0.0
    %1948 = vmatpush1.msra.mxu0 0.0
    %1949 = vmatprep.subr.mxu0 0.0
    %1950 = vmatpush1.msra.mxu0 0.0
    %1951 = vmatprep.subr.mxu0 0.0
    %1952 = vmatpush1.msra.mxu0 0.0
    %1953 = vmatprep.subr.mxu0 0.0
    %1954 = vmatpush1.msra.mxu0 0.0
    %1955 = vmatprep.subr.mxu0 0.0
    %1956 = vmatpush1.msra.mxu0 0.0
    %1957 = vmatprep.subr.mxu0 %v1848
    %1958 = vmatpush1.msra.mxu0 %v1847
    %1959 = vmatprep.subr.mxu0 0.0
    %1960 = vmatpush2.msra.mxu0 0.0
    %1961 = vmatprep.subr.mxu0 0.0
    %1962 = vmatpush2.msra.mxu0 0.0
    %1963 = vmatprep.subr.mxu0 0.0
    %1964 = vmatpush2.msra.mxu0 0.0
    %1965 = vmatprep.subr.mxu0 0.0
    %1966 = vmatpush2.msra.mxu0 0.0
    %1967 = vmatprep.subr.mxu0 0.0
    %1968 = vmatpush2.msra.mxu0 0.0
    %1969 = vmatprep.subr.mxu0 0.0
    %1970 = vmatpush2.msra.mxu0 0.0
    %1971 = vmatprep.subr.mxu0 0.0
    %1972 = vmatpush2.msra.mxu0 0.0
    %1973 = vmatprep.subr.mxu0 0.0
    %1974 = vmatpush2.msra.mxu0 0.0
    %1975 = vmatprep.subr.mxu0 0.0
    %1976 = vmatpush2.msra.mxu0 0.0
    %1977 = vmatprep.subr.mxu0 0.0
    %1978 = vmatpush2.msra.mxu0 0.0
    %1979 = vmatprep.subr.mxu0 0.0
    %1980 = vmatpush2.msra.mxu0 0.0
    %1981 = vmatprep.subr.mxu0 0.0
    %1982 = vmatpush2.msra.mxu0 0.0
    %1983 = vmatprep.subr.mxu0 0.0
    %1984 = vmatpush2.msra.mxu0 0.0
    %1985 = vmatprep.subr.mxu0 0.0
    %1986 = vmatpush2.msra.mxu0 0.0
    %1987 = vmatprep.subr.mxu0 0.0
    %1988 = vmatpush2.msra.mxu0 0.0
    %1989 = vmatprep.subr.mxu0 0.0
    %1990 = vmatpush2.msra.mxu0 0.0
    %1991 = vmatprep.mubr.f32.mxu0 0.0
    %1992 = vmatmul.mubr.f32.gmra.mxu0 %v1854
    %v1993 = vpop.f32.mrf.mxu0
    %v1994 = vadd.f32 0.0, %v1993
    %v1995 = vpop.f32.mrf.mxu0
    %v1996 = vadd.f32 0.0, %v1995
    %1997 = vdwg.mxu0
    %1998 = vmatprep.subr.mxu0 0.0
    %1999 = vmatpush1.msra.mxu0 0.0
    %2000 = vmatprep.subr.mxu0 0.0
    %2001 = vmatpush1.msra.mxu0 0.0
    %2002 = vmatprep.subr.mxu0 0.0
    %2003 = vmatpush1.msra.mxu0 0.0
    %2004 = vmatprep.subr.mxu0 0.0
    %2005 = vmatpush1.msra.mxu0 0.0
    %2006 = vmatprep.subr.mxu0 0.0
    %2007 = vmatpush1.msra.mxu0 0.0
    %2008 = vmatprep.subr.mxu0 0.0
    %2009 = vmatpush1.msra.mxu0 0.0
    %2010 = vmatprep.subr.mxu0 0.0
    %2011 = vmatpush1.msra.mxu0 0.0
    %2012 = vmatprep.subr.mxu0 0.0
    %2013 = vmatpush1.msra.mxu0 0.0
    %2014 = vmatprep.subr.mxu0 0.0
    %2015 = vmatpush1.msra.mxu0 0.0
    %2016 = vmatprep.subr.mxu0 0.0
    %2017 = vmatpush1.msra.mxu0 0.0
    %2018 = vmatprep.subr.mxu0 0.0
    %2019 = vmatpush1.msra.mxu0 0.0
    %2020 = vmatprep.subr.mxu0 0.0
    %2021 = vmatpush1.msra.mxu0 0.0
    %2022 = vmatprep.subr.mxu0 0.0
    %2023 = vmatpush1.msra.mxu0 0.0
    %2024 = vmatprep.subr.mxu0 0.0
    %2025 = vmatpush1.msra.mxu0 0.0
    %2026 = vmatprep.subr.mxu0 0.0
    %2027 = vmatpush1.msra.mxu0 0.0
    %2028 = vmatprep.subr.mxu0 %v1850
    %2029 = vmatpush1.msra.mxu0 %v1849
    %2030 = vmatprep.subr.mxu0 0.0
    %2031 = vmatpush2.msra.mxu0 0.0
    %2032 = vmatprep.subr.mxu0 0.0
    %2033 = vmatpush2.msra.mxu0 0.0
    %2034 = vmatprep.subr.mxu0 0.0
    %2035 = vmatpush2.msra.mxu0 0.0
    %2036 = vmatprep.subr.mxu0 0.0
    %2037 = vmatpush2.msra.mxu0 0.0
    %2038 = vmatprep.subr.mxu0 0.0
    %2039 = vmatpush2.msra.mxu0 0.0
    %2040 = vmatprep.subr.mxu0 0.0
    %2041 = vmatpush2.msra.mxu0 0.0
    %2042 = vmatprep.subr.mxu0 0.0
    %2043 = vmatpush2.msra.mxu0 0.0
    %2044 = vmatprep.subr.mxu0 0.0
    %2045 = vmatpush2.msra.mxu0 0.0
    %2046 = vmatprep.subr.mxu0 0.0
    %2047 = vmatpush2.msra.mxu0 0.0
    %2048 = vmatprep.subr.mxu0 0.0
    %2049 = vmatpush2.msra.mxu0 0.0
    %2050 = vmatprep.subr.mxu0 0.0
    %2051 = vmatpush2.msra.mxu0 0.0
    %2052 = vmatprep.subr.mxu0 0.0
    %2053 = vmatpush2.msra.mxu0 0.0
    %2054 = vmatprep.subr.mxu0 0.0
    %2055 = vmatpush2.msra.mxu0 0.0
    %2056 = vmatprep.subr.mxu0 0.0
    %2057 = vmatpush2.msra.mxu0 0.0
    %2058 = vmatprep.subr.mxu0 0.0
    %2059 = vmatpush2.msra.mxu0 0.0
    %2060 = vmatprep.subr.mxu0 0.0
    %2061 = vmatpush2.msra.mxu0 0.0
    %2062 = vmatprep.mubr.f32.mxu0 0.0
    %2063 = vmatmul.mubr.f32.gmra.mxu0 %v1854
    %v2064 = vpop.f32.mrf.mxu0
    %v2065 = vadd.f32 0.0, %v2064
    %v2066 = vpop.f32.mrf.mxu0
    %v2067 = vadd.f32 0.0, %v2066
    %2068 = vdwg.mxu0
    %2069 = vmatprep.subr.mxu0 0.0
    %2070 = vmatpush1.msra.mxu0 0.0
    %2071 = vmatprep.subr.mxu0 0.0
    %2072 = vmatpush1.msra.mxu0 0.0
    %2073 = vmatprep.subr.mxu0 0.0
    %2074 = vmatpush1.msra.mxu0 0.0
    %2075 = vmatprep.subr.mxu0 0.0
    %2076 = vmatpush1.msra.mxu0 0.0
    %2077 = vmatprep.subr.mxu0 0.0
    %2078 = vmatpush1.msra.mxu0 0.0
    %2079 = vmatprep.subr.mxu0 0.0
    %2080 = vmatpush1.msra.mxu0 0.0
    %2081 = vmatprep.subr.mxu0 0.0
    %2082 = vmatpush1.msra.mxu0 0.0
    %2083 = vmatprep.subr.mxu0 0.0
    %2084 = vmatpush1.msra.mxu0 0.0
    %2085 = vmatprep.subr.mxu0 0.0
    %2086 = vmatpush1.msra.mxu0 0.0
    %2087 = vmatprep.subr.mxu0 0.0
    %2088 = vmatpush1.msra.mxu0 0.0
    %2089 = vmatprep.subr.mxu0 0.0
    %2090 = vmatpush1.msra.mxu0 0.0
    %2091 = vmatprep.subr.mxu0 0.0
    %2092 = vmatpush1.msra.mxu0 0.0
    %2093 = vmatprep.subr.mxu0 0.0
    %2094 = vmatpush1.msra.mxu0 0.0
    %2095 = vmatprep.subr.mxu0 0.0
    %2096 = vmatpush1.msra.mxu0 0.0
    %2097 = vmatprep.subr.mxu0 0.0
    %2098 = vmatpush1.msra.mxu0 0.0
    %2099 = vmatprep.subr.mxu0 %v1852
    %2100 = vmatpush1.msra.mxu0 %v1851
    %2101 = vmatprep.subr.mxu0 0.0
    %2102 = vmatpush2.msra.mxu0 0.0
    %2103 = vmatprep.subr.mxu0 0.0
    %2104 = vmatpush2.msra.mxu0 0.0
    %2105 = vmatprep.subr.mxu0 0.0
    %2106 = vmatpush2.msra.mxu0 0.0
    %2107 = vmatprep.subr.mxu0 0.0
    %2108 = vmatpush2.msra.mxu0 0.0
    %2109 = vmatprep.subr.mxu0 0.0
    %2110 = vmatpush2.msra.mxu0 0.0
    %2111 = vmatprep.subr.mxu0 0.0
    %2112 = vmatpush2.msra.mxu0 0.0
    %2113 = vmatprep.subr.mxu0 0.0
    %2114 = vmatpush2.msra.mxu0 0.0
    %2115 = vmatprep.subr.mxu0 0.0
    %2116 = vmatpush2.msra.mxu0 0.0
    %2117 = vmatprep.subr.mxu0 0.0
    %2118 = vmatpush2.msra.mxu0 0.0
    %2119 = vmatprep.subr.mxu0 0.0
    %2120 = vmatpush2.msra.mxu0 0.0
    %2121 = vmatprep.subr.mxu0 0.0
    %2122 = vmatpush2.msra.mxu0 0.0
    %2123 = vmatprep.subr.mxu0 0.0
    %2124 = vmatpush2.msra.mxu0 0.0
    %2125 = vmatprep.subr.mxu0 0.0
    %2126 = vmatpush2.msra.mxu0 0.0
    %2127 = vmatprep.subr.mxu0 0.0
    %2128 = vmatpush2.msra.mxu0 0.0
    %2129 = vmatprep.subr.mxu0 0.0
    %2130 = vmatpush2.msra.mxu0 0.0
    %2131 = vmatprep.subr.mxu0 0.0
    %2132 = vmatpush2.msra.mxu0 0.0
    %2133 = vmatprep.mubr.f32.mxu0 0.0
    %2134 = vmatmul.mubr.f32.gmra.mxu0 %v1854
    %v2135 = vpop.f32.mrf.mxu0
    %v2136 = vadd.f32 0.0, %v2135
    %v2137 = vpop.f32.mrf.mxu0
    %v2138 = vadd.f32 0.0, %v2137
    %2139 = vdwg.mxu0
    %v2140 = vadd.f32 %v1836, %v1923
    %v2141 = vadd.f32 %v1837, %v1925
    %v2142 = vadd.f32 %v1838, %v1994
    %v2143 = vadd.f32 %v1839, %v1996
    %v2144 = vadd.f32 %v1840, %v2065
    %v2145 = vadd.f32 %v1841, %v2067
    %v2146 = vadd.f32 %v1842, %v2136
    %v2147 = vadd.f32 %v1843, %v2138
    %s2148 = scalar_lea.vmem [#allocation13], 320
    %v2149 = vld [vmem:[%s2148] sm:$0xff]
    %v2150 = vld [vmem:[%s2148 + $0x8] sm:$0xff]
    %v2151 = vld [vmem:[%s2148 + $0x10] sm:$0xff]
    %v2152 = vld [vmem:[%s2148 + $0x18] sm:$0xff]
    %v2153 = vld [vmem:[%s2148 + $0x20] sm:$0xff]
    %v2154 = vld [vmem:[%s2148 + $0x28] sm:$0xff]
    %v2155 = vld [vmem:[%s2148 + $0x30] sm:$0xff]
    %v2156 = vld [vmem:[%s2148 + $0x38] sm:$0xff]
    %v2157 = vrot.slane %v642, 5
    %v2158 = vsel %vm663, %v2157, 0
    %2160 = vmatprep.subr.mxu0 0.0
    %2161 = vmatpush1.msra.mxu0 0.0
    %2162 = vmatprep.subr.mxu0 0.0
    %2163 = vmatpush1.msra.mxu0 0.0
    %2164 = vmatprep.subr.mxu0 0.0
    %2165 = vmatpush1.msra.mxu0 0.0
    %2166 = vmatprep.subr.mxu0 0.0
    %2167 = vmatpush1.msra.mxu0 0.0
    %2168 = vmatprep.subr.mxu0 0.0
    %2169 = vmatpush1.msra.mxu0 0.0
    %2170 = vmatprep.subr.mxu0 0.0
    %2171 = vmatpush1.msra.mxu0 0.0
    %2172 = vmatprep.subr.mxu0 0.0
    %2173 = vmatpush1.msra.mxu0 0.0
    %2174 = vmatprep.subr.mxu0 0.0
    %2175 = vmatpush1.msra.mxu0 0.0
    %2176 = vmatprep.subr.mxu0 0.0
    %2177 = vmatpush1.msra.mxu0 0.0
    %2178 = vmatprep.subr.mxu0 0.0
    %2179 = vmatpush1.msra.mxu0 0.0
    %2180 = vmatprep.subr.mxu0 0.0
    %2181 = vmatpush1.msra.mxu0 0.0
    %2182 = vmatprep.subr.mxu0 0.0
    %2183 = vmatpush1.msra.mxu0 0.0
    %2184 = vmatprep.subr.mxu0 0.0
    %2185 = vmatpush1.msra.mxu0 0.0
    %2186 = vmatprep.subr.mxu0 0.0
    %2187 = vmatpush1.msra.mxu0 0.0
    %2188 = vmatprep.subr.mxu0 0.0
    %2189 = vmatpush1.msra.mxu0 0.0
    %2190 = vmatprep.subr.mxu0 %v2150
    %2191 = vmatpush1.msra.mxu0 %v2149
    %2192 = vmatprep.subr.mxu0 0.0
    %2193 = vmatpush2.msra.mxu0 0.0
    %2194 = vmatprep.subr.mxu0 0.0
    %2195 = vmatpush2.msra.mxu0 0.0
    %2196 = vmatprep.subr.mxu0 0.0
    %2197 = vmatpush2.msra.mxu0 0.0
    %2198 = vmatprep.subr.mxu0 0.0
    %2199 = vmatpush2.msra.mxu0 0.0
    %2200 = vmatprep.subr.mxu0 0.0
    %2201 = vmatpush2.msra.mxu0 0.0
    %2202 = vmatprep.subr.mxu0 0.0
    %2203 = vmatpush2.msra.mxu0 0.0
    %2204 = vmatprep.subr.mxu0 0.0
    %2205 = vmatpush2.msra.mxu0 0.0
    %2206 = vmatprep.subr.mxu0 0.0
    %2207 = vmatpush2.msra.mxu0 0.0
    %2208 = vmatprep.subr.mxu0 0.0
    %2209 = vmatpush2.msra.mxu0 0.0
    %2210 = vmatprep.subr.mxu0 0.0
    %2211 = vmatpush2.msra.mxu0 0.0
    %2212 = vmatprep.subr.mxu0 0.0
    %2213 = vmatpush2.msra.mxu0 0.0
    %2214 = vmatprep.subr.mxu0 0.0
    %2215 = vmatpush2.msra.mxu0 0.0
    %2216 = vmatprep.subr.mxu0 0.0
    %2217 = vmatpush2.msra.mxu0 0.0
    %2218 = vmatprep.subr.mxu0 0.0
    %2219 = vmatpush2.msra.mxu0 0.0
    %2220 = vmatprep.subr.mxu0 0.0
    %2221 = vmatpush2.msra.mxu0 0.0
    %2222 = vmatprep.subr.mxu0 0.0
    %2223 = vmatpush2.msra.mxu0 0.0
    %2224 = vmatprep.mubr.f32.mxu0 0.0
    %2225 = vmatmul.mubr.f32.gmra.mxu0 %v2158
    %v2226 = vpop.f32.mrf.mxu0
    %v2227 = vadd.f32 0.0, %v2226
    %v2228 = vpop.f32.mrf.mxu0
    %v2229 = vadd.f32 0.0, %v2228
    %2230 = vdwg.mxu0
    %2231 = vmatprep.subr.mxu0 0.0
    %2232 = vmatpush1.msra.mxu0 0.0
    %2233 = vmatprep.subr.mxu0 0.0
    %2234 = vmatpush1.msra.mxu0 0.0
    %2235 = vmatprep.subr.mxu0 0.0
    %2236 = vmatpush1.msra.mxu0 0.0
    %2237 = vmatprep.subr.mxu0 0.0
    %2238 = vmatpush1.msra.mxu0 0.0
    %2239 = vmatprep.subr.mxu0 0.0
    %2240 = vmatpush1.msra.mxu0 0.0
    %2241 = vmatprep.subr.mxu0 0.0
    %2242 = vmatpush1.msra.mxu0 0.0
    %2243 = vmatprep.subr.mxu0 0.0
    %2244 = vmatpush1.msra.mxu0 0.0
    %2245 = vmatprep.subr.mxu0 0.0
    %2246 = vmatpush1.msra.mxu0 0.0
    %2247 = vmatprep.subr.mxu0 0.0
    %2248 = vmatpush1.msra.mxu0 0.0
    %2249 = vmatprep.subr.mxu0 0.0
    %2250 = vmatpush1.msra.mxu0 0.0
    %2251 = vmatprep.subr.mxu0 0.0
    %2252 = vmatpush1.msra.mxu0 0.0
    %2253 = vmatprep.subr.mxu0 0.0
    %2254 = vmatpush1.msra.mxu0 0.0
    %2255 = vmatprep.subr.mxu0 0.0
    %2256 = vmatpush1.msra.mxu0 0.0
    %2257 = vmatprep.subr.mxu0 0.0
    %2258 = vmatpush1.msra.mxu0 0.0
    %2259 = vmatprep.subr.mxu0 0.0
    %2260 = vmatpush1.msra.mxu0 0.0
    %2261 = vmatprep.subr.mxu0 %v2152
    %2262 = vmatpush1.msra.mxu0 %v2151
    %2263 = vmatprep.subr.mxu0 0.0
    %2264 = vmatpush2.msra.mxu0 0.0
    %2265 = vmatprep.subr.mxu0 0.0
    %2266 = vmatpush2.msra.mxu0 0.0
    %2267 = vmatprep.subr.mxu0 0.0
    %2268 = vmatpush2.msra.mxu0 0.0
    %2269 = vmatprep.subr.mxu0 0.0
    %2270 = vmatpush2.msra.mxu0 0.0
    %2271 = vmatprep.subr.mxu0 0.0
    %2272 = vmatpush2.msra.mxu0 0.0
    %2273 = vmatprep.subr.mxu0 0.0
    %2274 = vmatpush2.msra.mxu0 0.0
    %2275 = vmatprep.subr.mxu0 0.0
    %2276 = vmatpush2.msra.mxu0 0.0
    %2277 = vmatprep.subr.mxu0 0.0
    %2278 = vmatpush2.msra.mxu0 0.0
    %2279 = vmatprep.subr.mxu0 0.0
    %2280 = vmatpush2.msra.mxu0 0.0
    %2281 = vmatprep.subr.mxu0 0.0
    %2282 = vmatpush2.msra.mxu0 0.0
    %2283 = vmatprep.subr.mxu0 0.0
    %2284 = vmatpush2.msra.mxu0 0.0
    %2285 = vmatprep.subr.mxu0 0.0
    %2286 = vmatpush2.msra.mxu0 0.0
    %2287 = vmatprep.subr.mxu0 0.0
    %2288 = vmatpush2.msra.mxu0 0.0
    %2289 = vmatprep.subr.mxu0 0.0
    %2290 = vmatpush2.msra.mxu0 0.0
    %2291 = vmatprep.subr.mxu0 0.0
    %2292 = vmatpush2.msra.mxu0 0.0
    %2293 = vmatprep.subr.mxu0 0.0
    %2294 = vmatpush2.msra.mxu0 0.0
    %2295 = vmatprep.mubr.f32.mxu0 0.0
    %2296 = vmatmul.mubr.f32.gmra.mxu0 %v2158
    %v2297 = vpop.f32.mrf.mxu0
    %v2298 = vadd.f32 0.0, %v2297
    %v2299 = vpop.f32.mrf.mxu0
    %v2300 = vadd.f32 0.0, %v2299
    %2301 = vdwg.mxu0
    %2302 = vmatprep.subr.mxu0 0.0
    %2303 = vmatpush1.msra.mxu0 0.0
    %2304 = vmatprep.subr.mxu0 0.0
    %2305 = vmatpush1.msra.mxu0 0.0
    %2306 = vmatprep.subr.mxu0 0.0
    %2307 = vmatpush1.msra.mxu0 0.0
    %2308 = vmatprep.subr.mxu0 0.0
    %2309 = vmatpush1.msra.mxu0 0.0
    %2310 = vmatprep.subr.mxu0 0.0
    %2311 = vmatpush1.msra.mxu0 0.0
    %2312 = vmatprep.subr.mxu0 0.0
    %2313 = vmatpush1.msra.mxu0 0.0
    %2314 = vmatprep.subr.mxu0 0.0
    %2315 = vmatpush1.msra.mxu0 0.0
    %2316 = vmatprep.subr.mxu0 0.0
    %2317 = vmatpush1.msra.mxu0 0.0
    %2318 = vmatprep.subr.mxu0 0.0
    %2319 = vmatpush1.msra.mxu0 0.0
    %2320 = vmatprep.subr.mxu0 0.0
    %2321 = vmatpush1.msra.mxu0 0.0
    %2322 = vmatprep.subr.mxu0 0.0
    %2323 = vmatpush1.msra.mxu0 0.0
    %2324 = vmatprep.subr.mxu0 0.0
    %2325 = vmatpush1.msra.mxu0 0.0
    %2326 = vmatprep.subr.mxu0 0.0
    %2327 = vmatpush1.msra.mxu0 0.0
    %2328 = vmatprep.subr.mxu0 0.0
    %2329 = vmatpush1.msra.mxu0 0.0
    %2330 = vmatprep.subr.mxu0 0.0
    %2331 = vmatpush1.msra.mxu0 0.0
    %2332 = vmatprep.subr.mxu0 %v2154
    %2333 = vmatpush1.msra.mxu0 %v2153
    %2334 = vmatprep.subr.mxu0 0.0
    %2335 = vmatpush2.msra.mxu0 0.0
    %2336 = vmatprep.subr.mxu0 0.0
    %2337 = vmatpush2.msra.mxu0 0.0
    %2338 = vmatprep.subr.mxu0 0.0
    %2339 = vmatpush2.msra.mxu0 0.0
    %2340 = vmatprep.subr.mxu0 0.0
    %2341 = vmatpush2.msra.mxu0 0.0
    %2342 = vmatprep.subr.mxu0 0.0
    %2343 = vmatpush2.msra.mxu0 0.0
    %2344 = vmatprep.subr.mxu0 0.0
    %2345 = vmatpush2.msra.mxu0 0.0
    %2346 = vmatprep.subr.mxu0 0.0
    %2347 = vmatpush2.msra.mxu0 0.0
    %2348 = vmatprep.subr.mxu0 0.0
    %2349 = vmatpush2.msra.mxu0 0.0
    %2350 = vmatprep.subr.mxu0 0.0
    %2351 = vmatpush2.msra.mxu0 0.0
    %2352 = vmatprep.subr.mxu0 0.0
    %2353 = vmatpush2.msra.mxu0 0.0
    %2354 = vmatprep.subr.mxu0 0.0
    %2355 = vmatpush2.msra.mxu0 0.0
    %2356 = vmatprep.subr.mxu0 0.0
    %2357 = vmatpush2.msra.mxu0 0.0
    %2358 = vmatprep.subr.mxu0 0.0
    %2359 = vmatpush2.msra.mxu0 0.0
    %2360 = vmatprep.subr.mxu0 0.0
    %2361 = vmatpush2.msra.mxu0 0.0
    %2362 = vmatprep.subr.mxu0 0.0
    %2363 = vmatpush2.msra.mxu0 0.0
    %2364 = vmatprep.subr.mxu0 0.0
    %2365 = vmatpush2.msra.mxu0 0.0
    %2366 = vmatprep.mubr.f32.mxu0 0.0
    %2367 = vmatmul.mubr.f32.gmra.mxu0 %v2158
    %v2368 = vpop.f32.mrf.mxu0
    %v2369 = vadd.f32 0.0, %v2368
    %v2370 = vpop.f32.mrf.mxu0
    %v2371 = vadd.f32 0.0, %v2370
    %2372 = vdwg.mxu0
    %2373 = vmatprep.subr.mxu0 0.0
    %2374 = vmatpush1.msra.mxu0 0.0
    %2375 = vmatprep.subr.mxu0 0.0
    %2376 = vmatpush1.msra.mxu0 0.0
    %2377 = vmatprep.subr.mxu0 0.0
    %2378 = vmatpush1.msra.mxu0 0.0
    %2379 = vmatprep.subr.mxu0 0.0
    %2380 = vmatpush1.msra.mxu0 0.0
    %2381 = vmatprep.subr.mxu0 0.0
    %2382 = vmatpush1.msra.mxu0 0.0
    %2383 = vmatprep.subr.mxu0 0.0
    %2384 = vmatpush1.msra.mxu0 0.0
    %2385 = vmatprep.subr.mxu0 0.0
    %2386 = vmatpush1.msra.mxu0 0.0
    %2387 = vmatprep.subr.mxu0 0.0
    %2388 = vmatpush1.msra.mxu0 0.0
    %2389 = vmatprep.subr.mxu0 0.0
    %2390 = vmatpush1.msra.mxu0 0.0
    %2391 = vmatprep.subr.mxu0 0.0
    %2392 = vmatpush1.msra.mxu0 0.0
    %2393 = vmatprep.subr.mxu0 0.0
    %2394 = vmatpush1.msra.mxu0 0.0
    %2395 = vmatprep.subr.mxu0 0.0
    %2396 = vmatpush1.msra.mxu0 0.0
    %2397 = vmatprep.subr.mxu0 0.0
    %2398 = vmatpush1.msra.mxu0 0.0
    %2399 = vmatprep.subr.mxu0 0.0
    %2400 = vmatpush1.msra.mxu0 0.0
    %2401 = vmatprep.subr.mxu0 0.0
    %2402 = vmatpush1.msra.mxu0 0.0
    %2403 = vmatprep.subr.mxu0 %v2156
    %2404 = vmatpush1.msra.mxu0 %v2155
    %2405 = vmatprep.subr.mxu0 0.0
    %2406 = vmatpush2.msra.mxu0 0.0
    %2407 = vmatprep.subr.mxu0 0.0
    %2408 = vmatpush2.msra.mxu0 0.0
    %2409 = vmatprep.subr.mxu0 0.0
    %2410 = vmatpush2.msra.mxu0 0.0
    %2411 = vmatprep.subr.mxu0 0.0
    %2412 = vmatpush2.msra.mxu0 0.0
    %2413 = vmatprep.subr.mxu0 0.0
    %2414 = vmatpush2.msra.mxu0 0.0
    %2415 = vmatprep.subr.mxu0 0.0
    %2416 = vmatpush2.msra.mxu0 0.0
    %2417 = vmatprep.subr.mxu0 0.0
    %2418 = vmatpush2.msra.mxu0 0.0
    %2419 = vmatprep.subr.mxu0 0.0
    %2420 = vmatpush2.msra.mxu0 0.0
    %2421 = vmatprep.subr.mxu0 0.0
    %2422 = vmatpush2.msra.mxu0 0.0
    %2423 = vmatprep.subr.mxu0 0.0
    %2424 = vmatpush2.msra.mxu0 0.0
    %2425 = vmatprep.subr.mxu0 0.0
    %2426 = vmatpush2.msra.mxu0 0.0
    %2427 = vmatprep.subr.mxu0 0.0
    %2428 = vmatpush2.msra.mxu0 0.0
    %2429 = vmatprep.subr.mxu0 0.0
    %2430 = vmatpush2.msra.mxu0 0.0
    %2431 = vmatprep.subr.mxu0 0.0
    %2432 = vmatpush2.msra.mxu0 0.0
    %2433 = vmatprep.subr.mxu0 0.0
    %2434 = vmatpush2.msra.mxu0 0.0
    %2435 = vmatprep.subr.mxu0 0.0
    %2436 = vmatpush2.msra.mxu0 0.0
    %2437 = vmatprep.mubr.f32.mxu0 0.0
    %2438 = vmatmul.mubr.f32.gmra.mxu0 %v2158
    %v2439 = vpop.f32.mrf.mxu0
    %v2440 = vadd.f32 0.0, %v2439
    %v2441 = vpop.f32.mrf.mxu0
    %v2442 = vadd.f32 0.0, %v2441
    %2443 = vdwg.mxu0
    %v2444 = vadd.f32 %v2140, %v2227
    %v2445 = vadd.f32 %v2141, %v2229
    %v2446 = vadd.f32 %v2142, %v2298
    %v2447 = vadd.f32 %v2143, %v2300
    %v2448 = vadd.f32 %v2144, %v2369
    %v2449 = vadd.f32 %v2145, %v2371
    %v2450 = vadd.f32 %v2146, %v2440
    %v2451 = vadd.f32 %v2147, %v2442
    %s2452 = scalar_lea.vmem [#allocation13], 384
    %v2453 = vld [vmem:[%s2452] sm:$0xff]
    %v2454 = vld [vmem:[%s2452 + $0x8] sm:$0xff]
    %v2455 = vld [vmem:[%s2452 + $0x10] sm:$0xff]
    %v2456 = vld [vmem:[%s2452 + $0x18] sm:$0xff]
    %v2457 = vld [vmem:[%s2452 + $0x20] sm:$0xff]
    %v2458 = vld [vmem:[%s2452 + $0x28] sm:$0xff]
    %v2459 = vld [vmem:[%s2452 + $0x30] sm:$0xff]
    %v2460 = vld [vmem:[%s2452 + $0x38] sm:$0xff]
    %v2461 = vrot.slane %v642, 6
    %v2462 = vsel %vm663, %v2461, 0
    %2464 = vmatprep.subr.mxu0 0.0
    %2465 = vmatpush1.msra.mxu0 0.0
    %2466 = vmatprep.subr.mxu0 0.0
    %2467 = vmatpush1.msra.mxu0 0.0
    %2468 = vmatprep.subr.mxu0 0.0
    %2469 = vmatpush1.msra.mxu0 0.0
    %2470 = vmatprep.subr.mxu0 0.0
    %2471 = vmatpush1.msra.mxu0 0.0
    %2472 = vmatprep.subr.mxu0 0.0
    %2473 = vmatpush1.msra.mxu0 0.0
    %2474 = vmatprep.subr.mxu0 0.0
    %2475 = vmatpush1.msra.mxu0 0.0
    %2476 = vmatprep.subr.mxu0 0.0
    %2477 = vmatpush1.msra.mxu0 0.0
    %2478 = vmatprep.subr.mxu0 0.0
    %2479 = vmatpush1.msra.mxu0 0.0
    %2480 = vmatprep.subr.mxu0 0.0
    %2481 = vmatpush1.msra.mxu0 0.0
    %2482 = vmatprep.subr.mxu0 0.0
    %2483 = vmatpush1.msra.mxu0 0.0
    %2484 = vmatprep.subr.mxu0 0.0
    %2485 = vmatpush1.msra.mxu0 0.0
    %2486 = vmatprep.subr.mxu0 0.0
    %2487 = vmatpush1.msra.mxu0 0.0
    %2488 = vmatprep.subr.mxu0 0.0
    %2489 = vmatpush1.msra.mxu0 0.0
    %2490 = vmatprep.subr.mxu0 0.0
    %2491 = vmatpush1.msra.mxu0 0.0
    %2492 = vmatprep.subr.mxu0 0.0
    %2493 = vmatpush1.msra.mxu0 0.0
    %2494 = vmatprep.subr.mxu0 %v2454
    %2495 = vmatpush1.msra.mxu0 %v2453
    %2496 = vmatprep.subr.mxu0 0.0
    %2497 = vmatpush2.msra.mxu0 0.0
    %2498 = vmatprep.subr.mxu0 0.0
    %2499 = vmatpush2.msra.mxu0 0.0
    %2500 = vmatprep.subr.mxu0 0.0
    %2501 = vmatpush2.msra.mxu0 0.0
    %2502 = vmatprep.subr.mxu0 0.0
    %2503 = vmatpush2.msra.mxu0 0.0
    %2504 = vmatprep.subr.mxu0 0.0
    %2505 = vmatpush2.msra.mxu0 0.0
    %2506 = vmatprep.subr.mxu0 0.0
    %2507 = vmatpush2.msra.mxu0 0.0
    %2508 = vmatprep.subr.mxu0 0.0
    %2509 = vmatpush2.msra.mxu0 0.0
    %2510 = vmatprep.subr.mxu0 0.0
    %2511 = vmatpush2.msra.mxu0 0.0
    %2512 = vmatprep.subr.mxu0 0.0
    %2513 = vmatpush2.msra.mxu0 0.0
    %2514 = vmatprep.subr.mxu0 0.0
    %2515 = vmatpush2.msra.mxu0 0.0
    %2516 = vmatprep.subr.mxu0 0.0
    %2517 = vmatpush2.msra.mxu0 0.0
    %2518 = vmatprep.subr.mxu0 0.0
    %2519 = vmatpush2.msra.mxu0 0.0
    %2520 = vmatprep.subr.mxu0 0.0
    %2521 = vmatpush2.msra.mxu0 0.0
    %2522 = vmatprep.subr.mxu0 0.0
    %2523 = vmatpush2.msra.mxu0 0.0
    %2524 = vmatprep.subr.mxu0 0.0
    %2525 = vmatpush2.msra.mxu0 0.0
    %2526 = vmatprep.subr.mxu0 0.0
    %2527 = vmatpush2.msra.mxu0 0.0
    %2528 = vmatprep.mubr.f32.mxu0 0.0
    %2529 = vmatmul.mubr.f32.gmra.mxu0 %v2462
    %v2530 = vpop.f32.mrf.mxu0
    %v2531 = vadd.f32 0.0, %v2530
    %v2532 = vpop.f32.mrf.mxu0
    %v2533 = vadd.f32 0.0, %v2532
    %2534 = vdwg.mxu0
    %2535 = vmatprep.subr.mxu0 0.0
    %2536 = vmatpush1.msra.mxu0 0.0
    %2537 = vmatprep.subr.mxu0 0.0
    %2538 = vmatpush1.msra.mxu0 0.0
    %2539 = vmatprep.subr.mxu0 0.0
    %2540 = vmatpush1.msra.mxu0 0.0
    %2541 = vmatprep.subr.mxu0 0.0
    %2542 = vmatpush1.msra.mxu0 0.0
    %2543 = vmatprep.subr.mxu0 0.0
    %2544 = vmatpush1.msra.mxu0 0.0
    %2545 = vmatprep.subr.mxu0 0.0
    %2546 = vmatpush1.msra.mxu0 0.0
    %2547 = vmatprep.subr.mxu0 0.0
    %2548 = vmatpush1.msra.mxu0 0.0
    %2549 = vmatprep.subr.mxu0 0.0
    %2550 = vmatpush1.msra.mxu0 0.0
    %2551 = vmatprep.subr.mxu0 0.0
    %2552 = vmatpush1.msra.mxu0 0.0
    %2553 = vmatprep.subr.mxu0 0.0
    %2554 = vmatpush1.msra.mxu0 0.0
    %2555 = vmatprep.subr.mxu0 0.0
    %2556 = vmatpush1.msra.mxu0 0.0
    %2557 = vmatprep.subr.mxu0 0.0
    %2558 = vmatpush1.msra.mxu0 0.0
    %2559 = vmatprep.subr.mxu0 0.0
    %2560 = vmatpush1.msra.mxu0 0.0
    %2561 = vmatprep.subr.mxu0 0.0
    %2562 = vmatpush1.msra.mxu0 0.0
    %2563 = vmatprep.subr.mxu0 0.0
    %2564 = vmatpush1.msra.mxu0 0.0
    %2565 = vmatprep.subr.mxu0 %v2456
    %2566 = vmatpush1.msra.mxu0 %v2455
    %2567 = vmatprep.subr.mxu0 0.0
    %2568 = vmatpush2.msra.mxu0 0.0
    %2569 = vmatprep.subr.mxu0 0.0
    %2570 = vmatpush2.msra.mxu0 0.0
    %2571 = vmatprep.subr.mxu0 0.0
    %2572 = vmatpush2.msra.mxu0 0.0
    %2573 = vmatprep.subr.mxu0 0.0
    %2574 = vmatpush2.msra.mxu0 0.0
    %2575 = vmatprep.subr.mxu0 0.0
    %2576 = vmatpush2.msra.mxu0 0.0
    %2577 = vmatprep.subr.mxu0 0.0
    %2578 = vmatpush2.msra.mxu0 0.0
    %2579 = vmatprep.subr.mxu0 0.0
    %2580 = vmatpush2.msra.mxu0 0.0
    %2581 = vmatprep.subr.mxu0 0.0
    %2582 = vmatpush2.msra.mxu0 0.0
    %2583 = vmatprep.subr.mxu0 0.0
    %2584 = vmatpush2.msra.mxu0 0.0
    %2585 = vmatprep.subr.mxu0 0.0
    %2586 = vmatpush2.msra.mxu0 0.0
    %2587 = vmatprep.subr.mxu0 0.0
    %2588 = vmatpush2.msra.mxu0 0.0
    %2589 = vmatprep.subr.mxu0 0.0
    %2590 = vmatpush2.msra.mxu0 0.0
    %2591 = vmatprep.subr.mxu0 0.0
    %2592 = vmatpush2.msra.mxu0 0.0
    %2593 = vmatprep.subr.mxu0 0.0
    %2594 = vmatpush2.msra.mxu0 0.0
    %2595 = vmatprep.subr.mxu0 0.0
    %2596 = vmatpush2.msra.mxu0 0.0
    %2597 = vmatprep.subr.mxu0 0.0
    %2598 = vmatpush2.msra.mxu0 0.0
    %2599 = vmatprep.mubr.f32.mxu0 0.0
    %2600 = vmatmul.mubr.f32.gmra.mxu0 %v2462
    %v2601 = vpop.f32.mrf.mxu0
    %v2602 = vadd.f32 0.0, %v2601
    %v2603 = vpop.f32.mrf.mxu0
    %v2604 = vadd.f32 0.0, %v2603
    %2605 = vdwg.mxu0
    %2606 = vmatprep.subr.mxu0 0.0
    %2607 = vmatpush1.msra.mxu0 0.0
    %2608 = vmatprep.subr.mxu0 0.0
    %2609 = vmatpush1.msra.mxu0 0.0
    %2610 = vmatprep.subr.mxu0 0.0
    %2611 = vmatpush1.msra.mxu0 0.0
    %2612 = vmatprep.subr.mxu0 0.0
    %2613 = vmatpush1.msra.mxu0 0.0
    %2614 = vmatprep.subr.mxu0 0.0
    %2615 = vmatpush1.msra.mxu0 0.0
    %2616 = vmatprep.subr.mxu0 0.0
    %2617 = vmatpush1.msra.mxu0 0.0
    %2618 = vmatprep.subr.mxu0 0.0
    %2619 = vmatpush1.msra.mxu0 0.0
    %2620 = vmatprep.subr.mxu0 0.0
    %2621 = vmatpush1.msra.mxu0 0.0
    %2622 = vmatprep.subr.mxu0 0.0
    %2623 = vmatpush1.msra.mxu0 0.0
    %2624 = vmatprep.subr.mxu0 0.0
    %2625 = vmatpush1.msra.mxu0 0.0
    %2626 = vmatprep.subr.mxu0 0.0
    %2627 = vmatpush1.msra.mxu0 0.0
    %2628 = vmatprep.subr.mxu0 0.0
    %2629 = vmatpush1.msra.mxu0 0.0
    %2630 = vmatprep.subr.mxu0 0.0
    %2631 = vmatpush1.msra.mxu0 0.0
    %2632 = vmatprep.subr.mxu0 0.0
    %2633 = vmatpush1.msra.mxu0 0.0
    %2634 = vmatprep.subr.mxu0 0.0
    %2635 = vmatpush1.msra.mxu0 0.0
    %2636 = vmatprep.subr.mxu0 %v2458
    %2637 = vmatpush1.msra.mxu0 %v2457
    %2638 = vmatprep.subr.mxu0 0.0
    %2639 = vmatpush2.msra.mxu0 0.0
    %2640 = vmatprep.subr.mxu0 0.0
    %2641 = vmatpush2.msra.mxu0 0.0
    %2642 = vmatprep.subr.mxu0 0.0
    %2643 = vmatpush2.msra.mxu0 0.0
    %2644 = vmatprep.subr.mxu0 0.0
    %2645 = vmatpush2.msra.mxu0 0.0
    %2646 = vmatprep.subr.mxu0 0.0
    %2647 = vmatpush2.msra.mxu0 0.0
    %2648 = vmatprep.subr.mxu0 0.0
    %2649 = vmatpush2.msra.mxu0 0.0
    %2650 = vmatprep.subr.mxu0 0.0
    %2651 = vmatpush2.msra.mxu0 0.0
    %2652 = vmatprep.subr.mxu0 0.0
    %2653 = vmatpush2.msra.mxu0 0.0
    %2654 = vmatprep.subr.mxu0 0.0
    %2655 = vmatpush2.msra.mxu0 0.0
    %2656 = vmatprep.subr.mxu0 0.0
    %2657 = vmatpush2.msra.mxu0 0.0
    %2658 = vmatprep.subr.mxu0 0.0
    %2659 = vmatpush2.msra.mxu0 0.0
    %2660 = vmatprep.subr.mxu0 0.0
    %2661 = vmatpush2.msra.mxu0 0.0
    %2662 = vmatprep.subr.mxu0 0.0
    %2663 = vmatpush2.msra.mxu0 0.0
    %2664 = vmatprep.subr.mxu0 0.0
    %2665 = vmatpush2.msra.mxu0 0.0
    %2666 = vmatprep.subr.mxu0 0.0
    %2667 = vmatpush2.msra.mxu0 0.0
    %2668 = vmatprep.subr.mxu0 0.0
    %2669 = vmatpush2.msra.mxu0 0.0
    %2670 = vmatprep.mubr.f32.mxu0 0.0
    %2671 = vmatmul.mubr.f32.gmra.mxu0 %v2462
    %v2672 = vpop.f32.mrf.mxu0
    %v2673 = vadd.f32 0.0, %v2672
    %v2674 = vpop.f32.mrf.mxu0
    %v2675 = vadd.f32 0.0, %v2674
    %2676 = vdwg.mxu0
    %2677 = vmatprep.subr.mxu0 0.0
    %2678 = vmatpush1.msra.mxu0 0.0
    %2679 = vmatprep.subr.mxu0 0.0
    %2680 = vmatpush1.msra.mxu0 0.0
    %2681 = vmatprep.subr.mxu0 0.0
    %2682 = vmatpush1.msra.mxu0 0.0
    %2683 = vmatprep.subr.mxu0 0.0
    %2684 = vmatpush1.msra.mxu0 0.0
    %2685 = vmatprep.subr.mxu0 0.0
    %2686 = vmatpush1.msra.mxu0 0.0
    %2687 = vmatprep.subr.mxu0 0.0
    %2688 = vmatpush1.msra.mxu0 0.0
    %2689 = vmatprep.subr.mxu0 0.0
    %2690 = vmatpush1.msra.mxu0 0.0
    %2691 = vmatprep.subr.mxu0 0.0
    %2692 = vmatpush1.msra.mxu0 0.0
    %2693 = vmatprep.subr.mxu0 0.0
    %2694 = vmatpush1.msra.mxu0 0.0
    %2695 = vmatprep.subr.mxu0 0.0
    %2696 = vmatpush1.msra.mxu0 0.0
    %2697 = vmatprep.subr.mxu0 0.0
    %2698 = vmatpush1.msra.mxu0 0.0
    %2699 = vmatprep.subr.mxu0 0.0
    %2700 = vmatpush1.msra.mxu0 0.0
    %2701 = vmatprep.subr.mxu0 0.0
    %2702 = vmatpush1.msra.mxu0 0.0
    %2703 = vmatprep.subr.mxu0 0.0
    %2704 = vmatpush1.msra.mxu0 0.0
    %2705 = vmatprep.subr.mxu0 0.0
    %2706 = vmatpush1.msra.mxu0 0.0
    %2707 = vmatprep.subr.mxu0 %v2460
    %2708 = vmatpush1.msra.mxu0 %v2459
    %2709 = vmatprep.subr.mxu0 0.0
    %2710 = vmatpush2.msra.mxu0 0.0
    %2711 = vmatprep.subr.mxu0 0.0
    %2712 = vmatpush2.msra.mxu0 0.0
    %2713 = vmatprep.subr.mxu0 0.0
    %2714 = vmatpush2.msra.mxu0 0.0
    %2715 = vmatprep.subr.mxu0 0.0
    %2716 = vmatpush2.msra.mxu0 0.0
    %2717 = vmatprep.subr.mxu0 0.0
    %2718 = vmatpush2.msra.mxu0 0.0
    %2719 = vmatprep.subr.mxu0 0.0
    %2720 = vmatpush2.msra.mxu0 0.0
    %2721 = vmatprep.subr.mxu0 0.0
    %2722 = vmatpush2.msra.mxu0 0.0
    %2723 = vmatprep.subr.mxu0 0.0
    %2724 = vmatpush2.msra.mxu0 0.0
    %2725 = vmatprep.subr.mxu0 0.0
    %2726 = vmatpush2.msra.mxu0 0.0
    %2727 = vmatprep.subr.mxu0 0.0
    %2728 = vmatpush2.msra.mxu0 0.0
    %2729 = vmatprep.subr.mxu0 0.0
    %2730 = vmatpush2.msra.mxu0 0.0
    %2731 = vmatprep.subr.mxu0 0.0
    %2732 = vmatpush2.msra.mxu0 0.0
    %2733 = vmatprep.subr.mxu0 0.0
    %2734 = vmatpush2.msra.mxu0 0.0
    %2735 = vmatprep.subr.mxu0 0.0
    %2736 = vmatpush2.msra.mxu0 0.0
    %2737 = vmatprep.subr.mxu0 0.0
    %2738 = vmatpush2.msra.mxu0 0.0
    %2739 = vmatprep.subr.mxu0 0.0
    %2740 = vmatpush2.msra.mxu0 0.0
    %2741 = vmatprep.mubr.f32.mxu0 0.0
    %2742 = vmatmul.mubr.f32.gmra.mxu0 %v2462
    %v2743 = vpop.f32.mrf.mxu0
    %v2744 = vadd.f32 0.0, %v2743
    %v2745 = vpop.f32.mrf.mxu0
    %v2746 = vadd.f32 0.0, %v2745
    %2747 = vdwg.mxu0
    %v2748 = vadd.f32 %v2444, %v2531
    %v2749 = vadd.f32 %v2445, %v2533
    %v2750 = vadd.f32 %v2446, %v2602
    %v2751 = vadd.f32 %v2447, %v2604
    %v2752 = vadd.f32 %v2448, %v2673
    %v2753 = vadd.f32 %v2449, %v2675
    %v2754 = vadd.f32 %v2450, %v2744
    %v2755 = vadd.f32 %v2451, %v2746
    %s2756 = scalar_lea.vmem [#allocation13], 448
    %v2757 = vld [vmem:[%s2756] sm:$0xff]
    %v2758 = vld [vmem:[%s2756 + $0x8] sm:$0xff]
    %v2759 = vld [vmem:[%s2756 + $0x10] sm:$0xff]
    %v2760 = vld [vmem:[%s2756 + $0x18] sm:$0xff]
    %v2761 = vld [vmem:[%s2756 + $0x20] sm:$0xff]
    %v2762 = vld [vmem:[%s2756 + $0x28] sm:$0xff]
    %v2763 = vld [vmem:[%s2756 + $0x30] sm:$0xff]
    %v2764 = vld [vmem:[%s2756 + $0x38] sm:$0xff]
    %v2765 = vrot.slane %v642, 7
    %v2766 = vsel %vm663, %v2765, 0
    %2768 = vmatprep.subr.mxu0 0.0
    %2769 = vmatpush1.msra.mxu0 0.0
    %2770 = vmatprep.subr.mxu0 0.0
    %2771 = vmatpush1.msra.mxu0 0.0
    %2772 = vmatprep.subr.mxu0 0.0
    %2773 = vmatpush1.msra.mxu0 0.0
    %2774 = vmatprep.subr.mxu0 0.0
    %2775 = vmatpush1.msra.mxu0 0.0
    %2776 = vmatprep.subr.mxu0 0.0
    %2777 = vmatpush1.msra.mxu0 0.0
    %2778 = vmatprep.subr.mxu0 0.0
    %2779 = vmatpush1.msra.mxu0 0.0
    %2780 = vmatprep.subr.mxu0 0.0
    %2781 = vmatpush1.msra.mxu0 0.0
    %2782 = vmatprep.subr.mxu0 0.0
    %2783 = vmatpush1.msra.mxu0 0.0
    %2784 = vmatprep.subr.mxu0 0.0
    %2785 = vmatpush1.msra.mxu0 0.0
    %2786 = vmatprep.subr.mxu0 0.0
    %2787 = vmatpush1.msra.mxu0 0.0
    %2788 = vmatprep.subr.mxu0 0.0
    %2789 = vmatpush1.msra.mxu0 0.0
    %2790 = vmatprep.subr.mxu0 0.0
    %2791 = vmatpush1.msra.mxu0 0.0
    %2792 = vmatprep.subr.mxu0 0.0
    %2793 = vmatpush1.msra.mxu0 0.0
    %2794 = vmatprep.subr.mxu0 0.0
    %2795 = vmatpush1.msra.mxu0 0.0
    %2796 = vmatprep.subr.mxu0 0.0
    %2797 = vmatpush1.msra.mxu0 0.0
    %2798 = vmatprep.subr.mxu0 %v2758
    %2799 = vmatpush1.msra.mxu0 %v2757
    %2800 = vmatprep.subr.mxu0 0.0
    %2801 = vmatpush2.msra.mxu0 0.0
    %2802 = vmatprep.subr.mxu0 0.0
    %2803 = vmatpush2.msra.mxu0 0.0
    %2804 = vmatprep.subr.mxu0 0.0
    %2805 = vmatpush2.msra.mxu0 0.0
    %2806 = vmatprep.subr.mxu0 0.0
    %2807 = vmatpush2.msra.mxu0 0.0
    %2808 = vmatprep.subr.mxu0 0.0
    %2809 = vmatpush2.msra.mxu0 0.0
    %2810 = vmatprep.subr.mxu0 0.0
    %2811 = vmatpush2.msra.mxu0 0.0
    %2812 = vmatprep.subr.mxu0 0.0
    %2813 = vmatpush2.msra.mxu0 0.0
    %2814 = vmatprep.subr.mxu0 0.0
    %2815 = vmatpush2.msra.mxu0 0.0
    %2816 = vmatprep.subr.mxu0 0.0
    %2817 = vmatpush2.msra.mxu0 0.0
    %2818 = vmatprep.subr.mxu0 0.0
    %2819 = vmatpush2.msra.mxu0 0.0
    %2820 = vmatprep.subr.mxu0 0.0
    %2821 = vmatpush2.msra.mxu0 0.0
    %2822 = vmatprep.subr.mxu0 0.0
    %2823 = vmatpush2.msra.mxu0 0.0
    %2824 = vmatprep.subr.mxu0 0.0
    %2825 = vmatpush2.msra.mxu0 0.0
    %2826 = vmatprep.subr.mxu0 0.0
    %2827 = vmatpush2.msra.mxu0 0.0
    %2828 = vmatprep.subr.mxu0 0.0
    %2829 = vmatpush2.msra.mxu0 0.0
    %2830 = vmatprep.subr.mxu0 0.0
    %2831 = vmatpush2.msra.mxu0 0.0
    %2832 = vmatprep.mubr.f32.mxu0 0.0
    %2833 = vmatmul.mubr.f32.gmra.mxu0 %v2766
    %v2834 = vpop.f32.mrf.mxu0
    %v2835 = vadd.f32 0.0, %v2834
    %v2836 = vpop.f32.mrf.mxu0
    %v2837 = vadd.f32 0.0, %v2836
    %2838 = vdwg.mxu0
    %2839 = vmatprep.subr.mxu0 0.0
    %2840 = vmatpush1.msra.mxu0 0.0
    %2841 = vmatprep.subr.mxu0 0.0
    %2842 = vmatpush1.msra.mxu0 0.0
    %2843 = vmatprep.subr.mxu0 0.0
    %2844 = vmatpush1.msra.mxu0 0.0
    %2845 = vmatprep.subr.mxu0 0.0
    %2846 = vmatpush1.msra.mxu0 0.0
    %2847 = vmatprep.subr.mxu0 0.0
    %2848 = vmatpush1.msra.mxu0 0.0
    %2849 = vmatprep.subr.mxu0 0.0
    %2850 = vmatpush1.msra.mxu0 0.0
    %2851 = vmatprep.subr.mxu0 0.0
    %2852 = vmatpush1.msra.mxu0 0.0
    %2853 = vmatprep.subr.mxu0 0.0
    %2854 = vmatpush1.msra.mxu0 0.0
    %2855 = vmatprep.subr.mxu0 0.0
    %2856 = vmatpush1.msra.mxu0 0.0
    %2857 = vmatprep.subr.mxu0 0.0
    %2858 = vmatpush1.msra.mxu0 0.0
    %2859 = vmatprep.subr.mxu0 0.0
    %2860 = vmatpush1.msra.mxu0 0.0
    %2861 = vmatprep.subr.mxu0 0.0
    %2862 = vmatpush1.msra.mxu0 0.0
    %2863 = vmatprep.subr.mxu0 0.0
    %2864 = vmatpush1.msra.mxu0 0.0
    %2865 = vmatprep.subr.mxu0 0.0
    %2866 = vmatpush1.msra.mxu0 0.0
    %2867 = vmatprep.subr.mxu0 0.0
    %2868 = vmatpush1.msra.mxu0 0.0
    %2869 = vmatprep.subr.mxu0 %v2760
    %2870 = vmatpush1.msra.mxu0 %v2759
    %2871 = vmatprep.subr.mxu0 0.0
    %2872 = vmatpush2.msra.mxu0 0.0
    %2873 = vmatprep.subr.mxu0 0.0
    %2874 = vmatpush2.msra.mxu0 0.0
    %2875 = vmatprep.subr.mxu0 0.0
    %2876 = vmatpush2.msra.mxu0 0.0
    %2877 = vmatprep.subr.mxu0 0.0
    %2878 = vmatpush2.msra.mxu0 0.0
    %2879 = vmatprep.subr.mxu0 0.0
    %2880 = vmatpush2.msra.mxu0 0.0
    %2881 = vmatprep.subr.mxu0 0.0
    %2882 = vmatpush2.msra.mxu0 0.0
    %2883 = vmatprep.subr.mxu0 0.0
    %2884 = vmatpush2.msra.mxu0 0.0
    %2885 = vmatprep.subr.mxu0 0.0
    %2886 = vmatpush2.msra.mxu0 0.0
    %2887 = vmatprep.subr.mxu0 0.0
    %2888 = vmatpush2.msra.mxu0 0.0
    %2889 = vmatprep.subr.mxu0 0.0
    %2890 = vmatpush2.msra.mxu0 0.0
    %2891 = vmatprep.subr.mxu0 0.0
    %2892 = vmatpush2.msra.mxu0 0.0
    %2893 = vmatprep.subr.mxu0 0.0
    %2894 = vmatpush2.msra.mxu0 0.0
    %2895 = vmatprep.subr.mxu0 0.0
    %2896 = vmatpush2.msra.mxu0 0.0
    %2897 = vmatprep.subr.mxu0 0.0
    %2898 = vmatpush2.msra.mxu0 0.0
    %2899 = vmatprep.subr.mxu0 0.0
    %2900 = vmatpush2.msra.mxu0 0.0
    %2901 = vmatprep.subr.mxu0 0.0
    %2902 = vmatpush2.msra.mxu0 0.0
    %2903 = vmatprep.mubr.f32.mxu0 0.0
    %2904 = vmatmul.mubr.f32.gmra.mxu0 %v2766
    %v2905 = vpop.f32.mrf.mxu0
    %v2906 = vadd.f32 0.0, %v2905
    %v2907 = vpop.f32.mrf.mxu0
    %v2908 = vadd.f32 0.0, %v2907
    %2909 = vdwg.mxu0
    %2910 = vmatprep.subr.mxu0 0.0
    %2911 = vmatpush1.msra.mxu0 0.0
    %2912 = vmatprep.subr.mxu0 0.0
    %2913 = vmatpush1.msra.mxu0 0.0
    %2914 = vmatprep.subr.mxu0 0.0
    %2915 = vmatpush1.msra.mxu0 0.0
    %2916 = vmatprep.subr.mxu0 0.0
    %2917 = vmatpush1.msra.mxu0 0.0
    %2918 = vmatprep.subr.mxu0 0.0
    %2919 = vmatpush1.msra.mxu0 0.0
    %2920 = vmatprep.subr.mxu0 0.0
    %2921 = vmatpush1.msra.mxu0 0.0
    %2922 = vmatprep.subr.mxu0 0.0
    %2923 = vmatpush1.msra.mxu0 0.0
    %2924 = vmatprep.subr.mxu0 0.0
    %2925 = vmatpush1.msra.mxu0 0.0
    %2926 = vmatprep.subr.mxu0 0.0
    %2927 = vmatpush1.msra.mxu0 0.0
    %2928 = vmatprep.subr.mxu0 0.0
    %2929 = vmatpush1.msra.mxu0 0.0
    %2930 = vmatprep.subr.mxu0 0.0
    %2931 = vmatpush1.msra.mxu0 0.0
    %2932 = vmatprep.subr.mxu0 0.0
    %2933 = vmatpush1.msra.mxu0 0.0
    %2934 = vmatprep.subr.mxu0 0.0
    %2935 = vmatpush1.msra.mxu0 0.0
    %2936 = vmatprep.subr.mxu0 0.0
    %2937 = vmatpush1.msra.mxu0 0.0
    %2938 = vmatprep.subr.mxu0 0.0
    %2939 = vmatpush1.msra.mxu0 0.0
    %2940 = vmatprep.subr.mxu0 %v2762
    %2941 = vmatpush1.msra.mxu0 %v2761
    %2942 = vmatprep.subr.mxu0 0.0
    %2943 = vmatpush2.msra.mxu0 0.0
    %2944 = vmatprep.subr.mxu0 0.0
    %2945 = vmatpush2.msra.mxu0 0.0
    %2946 = vmatprep.subr.mxu0 0.0
    %2947 = vmatpush2.msra.mxu0 0.0
    %2948 = vmatprep.subr.mxu0 0.0
    %2949 = vmatpush2.msra.mxu0 0.0
    %2950 = vmatprep.subr.mxu0 0.0
    %2951 = vmatpush2.msra.mxu0 0.0
    %2952 = vmatprep.subr.mxu0 0.0
    %2953 = vmatpush2.msra.mxu0 0.0
    %2954 = vmatprep.subr.mxu0 0.0
    %2955 = vmatpush2.msra.mxu0 0.0
    %2956 = vmatprep.subr.mxu0 0.0
    %2957 = vmatpush2.msra.mxu0 0.0
    %2958 = vmatprep.subr.mxu0 0.0
    %2959 = vmatpush2.msra.mxu0 0.0
    %2960 = vmatprep.subr.mxu0 0.0
    %2961 = vmatpush2.msra.mxu0 0.0
    %2962 = vmatprep.subr.mxu0 0.0
    %2963 = vmatpush2.msra.mxu0 0.0
    %2964 = vmatprep.subr.mxu0 0.0
    %2965 = vmatpush2.msra.mxu0 0.0
    %2966 = vmatprep.subr.mxu0 0.0
    %2967 = vmatpush2.msra.mxu0 0.0
    %2968 = vmatprep.subr.mxu0 0.0
    %2969 = vmatpush2.msra.mxu0 0.0
    %2970 = vmatprep.subr.mxu0 0.0
    %2971 = vmatpush2.msra.mxu0 0.0
    %2972 = vmatprep.subr.mxu0 0.0
    %2973 = vmatpush2.msra.mxu0 0.0
    %2974 = vmatprep.mubr.f32.mxu0 0.0
    %2975 = vmatmul.mubr.f32.gmra.mxu0 %v2766
    %v2976 = vpop.f32.mrf.mxu0
    %v2977 = vadd.f32 0.0, %v2976
    %v2978 = vpop.f32.mrf.mxu0
    %v2979 = vadd.f32 0.0, %v2978
    %2980 = vdwg.mxu0
    %2981 = vmatprep.subr.mxu0 0.0
    %2982 = vmatpush1.msra.mxu0 0.0
    %2983 = vmatprep.subr.mxu0 0.0
    %2984 = vmatpush1.msra.mxu0 0.0
    %2985 = vmatprep.subr.mxu0 0.0
    %2986 = vmatpush1.msra.mxu0 0.0
    %2987 = vmatprep.subr.mxu0 0.0
    %2988 = vmatpush1.msra.mxu0 0.0
    %2989 = vmatprep.subr.mxu0 0.0
    %2990 = vmatpush1.msra.mxu0 0.0
    %2991 = vmatprep.subr.mxu0 0.0
    %2992 = vmatpush1.msra.mxu0 0.0
    %2993 = vmatprep.subr.mxu0 0.0
    %2994 = vmatpush1.msra.mxu0 0.0
    %2995 = vmatprep.subr.mxu0 0.0
    %2996 = vmatpush1.msra.mxu0 0.0
    %2997 = vmatprep.subr.mxu0 0.0
    %2998 = vmatpush1.msra.mxu0 0.0
    %2999 = vmatprep.subr.mxu0 0.0
    %3000 = vmatpush1.msra.mxu0 0.0
    %3001 = vmatprep.subr.mxu0 0.0
    %3002 = vmatpush1.msra.mxu0 0.0
    %3003 = vmatprep.subr.mxu0 0.0
    %3004 = vmatpush1.msra.mxu0 0.0
    %3005 = vmatprep.subr.mxu0 0.0
    %3006 = vmatpush1.msra.mxu0 0.0
    %3007 = vmatprep.subr.mxu0 0.0
    %3008 = vmatpush1.msra.mxu0 0.0
    %3009 = vmatprep.subr.mxu0 0.0
    %3010 = vmatpush1.msra.mxu0 0.0
    %3011 = vmatprep.subr.mxu0 %v2764
    %3012 = vmatpush1.msra.mxu0 %v2763
    %3013 = vmatprep.subr.mxu0 0.0
    %3014 = vmatpush2.msra.mxu0 0.0
    %3015 = vmatprep.subr.mxu0 0.0
    %3016 = vmatpush2.msra.mxu0 0.0
    %3017 = vmatprep.subr.mxu0 0.0
    %3018 = vmatpush2.msra.mxu0 0.0
    %3019 = vmatprep.subr.mxu0 0.0
    %3020 = vmatpush2.msra.mxu0 0.0
    %3021 = vmatprep.subr.mxu0 0.0
    %3022 = vmatpush2.msra.mxu0 0.0
    %3023 = vmatprep.subr.mxu0 0.0
    %3024 = vmatpush2.msra.mxu0 0.0
    %3025 = vmatprep.subr.mxu0 0.0
    %3026 = vmatpush2.msra.mxu0 0.0
    %3027 = vmatprep.subr.mxu0 0.0
    %3028 = vmatpush2.msra.mxu0 0.0
    %3029 = vmatprep.subr.mxu0 0.0
    %3030 = vmatpush2.msra.mxu0 0.0
    %3031 = vmatprep.subr.mxu0 0.0
    %3032 = vmatpush2.msra.mxu0 0.0
    %3033 = vmatprep.subr.mxu0 0.0
    %3034 = vmatpush2.msra.mxu0 0.0
    %3035 = vmatprep.subr.mxu0 0.0
    %3036 = vmatpush2.msra.mxu0 0.0
    %3037 = vmatprep.subr.mxu0 0.0
    %3038 = vmatpush2.msra.mxu0 0.0
    %3039 = vmatprep.subr.mxu0 0.0
    %3040 = vmatpush2.msra.mxu0 0.0
    %3041 = vmatprep.subr.mxu0 0.0
    %3042 = vmatpush2.msra.mxu0 0.0
    %3043 = vmatprep.subr.mxu0 0.0
    %3044 = vmatpush2.msra.mxu0 0.0
    %3045 = vmatprep.mubr.f32.mxu0 0.0
    %3046 = vmatmul.mubr.f32.gmra.mxu0 %v2766
    %v3047 = vpop.f32.mrf.mxu0
    %v3048 = vadd.f32 0.0, %v3047
    %v3049 = vpop.f32.mrf.mxu0
    %v3050 = vadd.f32 0.0, %v3049
    %3051 = vdwg.mxu0
    %v3052 = vadd.f32 %v2748, %v2835
    %v3053 = vadd.f32 %v2749, %v2837
    %v3054 = vadd.f32 %v2750, %v2906
    %v3055 = vadd.f32 %v2751, %v2908
    %v3056 = vadd.f32 %v2752, %v2977
    %v3057 = vadd.f32 %v2753, %v2979
    %v3058 = vadd.f32 %v2754, %v3048
    %v3059 = vadd.f32 %v2755, %v3050
    %s3060 = scalar_lea.vmem [#allocation13], 512
    %v3061 = vld [vmem:[%s3060] sm:$0xff]
    %v3062 = vld [vmem:[%s3060 + $0x8] sm:$0xff]
    %v3063 = vld [vmem:[%s3060 + $0x10] sm:$0xff]
    %v3064 = vld [vmem:[%s3060 + $0x18] sm:$0xff]
    %v3065 = vld [vmem:[%s3060 + $0x20] sm:$0xff]
    %v3066 = vld [vmem:[%s3060 + $0x28] sm:$0xff]
    %v3067 = vld [vmem:[%s3060 + $0x30] sm:$0xff]
    %v3068 = vld [vmem:[%s3060 + $0x38] sm:$0xff]
    %v3070 = vsel %vm663, %v643, 0
    %3072 = vmatprep.subr.mxu0 0.0
    %3073 = vmatpush1.msra.mxu0 0.0
    %3074 = vmatprep.subr.mxu0 0.0
    %3075 = vmatpush1.msra.mxu0 0.0
    %3076 = vmatprep.subr.mxu0 0.0
    %3077 = vmatpush1.msra.mxu0 0.0
    %3078 = vmatprep.subr.mxu0 0.0
    %3079 = vmatpush1.msra.mxu0 0.0
    %3080 = vmatprep.subr.mxu0 0.0
    %3081 = vmatpush1.msra.mxu0 0.0
    %3082 = vmatprep.subr.mxu0 0.0
    %3083 = vmatpush1.msra.mxu0 0.0
    %3084 = vmatprep.subr.mxu0 0.0
    %3085 = vmatpush1.msra.mxu0 0.0
    %3086 = vmatprep.subr.mxu0 0.0
    %3087 = vmatpush1.msra.mxu0 0.0
    %3088 = vmatprep.subr.mxu0 0.0
    %3089 = vmatpush1.msra.mxu0 0.0
    %3090 = vmatprep.subr.mxu0 0.0
    %3091 = vmatpush1.msra.mxu0 0.0
    %3092 = vmatprep.subr.mxu0 0.0
    %3093 = vmatpush1.msra.mxu0 0.0
    %3094 = vmatprep.subr.mxu0 0.0
    %3095 = vmatpush1.msra.mxu0 0.0
    %3096 = vmatprep.subr.mxu0 0.0
    %3097 = vmatpush1.msra.mxu0 0.0
    %3098 = vmatprep.subr.mxu0 0.0
    %3099 = vmatpush1.msra.mxu0 0.0
    %3100 = vmatprep.subr.mxu0 0.0
    %3101 = vmatpush1.msra.mxu0 0.0
    %3102 = vmatprep.subr.mxu0 %v3062
    %3103 = vmatpush1.msra.mxu0 %v3061
    %3104 = vmatprep.subr.mxu0 0.0
    %3105 = vmatpush2.msra.mxu0 0.0
    %3106 = vmatprep.subr.mxu0 0.0
    %3107 = vmatpush2.msra.mxu0 0.0
    %3108 = vmatprep.subr.mxu0 0.0
    %3109 = vmatpush2.msra.mxu0 0.0
    %3110 = vmatprep.subr.mxu0 0.0
    %3111 = vmatpush2.msra.mxu0 0.0
    %3112 = vmatprep.subr.mxu0 0.0
    %3113 = vmatpush2.msra.mxu0 0.0
    %3114 = vmatprep.subr.mxu0 0.0
    %3115 = vmatpush2.msra.mxu0 0.0
    %3116 = vmatprep.subr.mxu0 0.0
    %3117 = vmatpush2.msra.mxu0 0.0
    %3118 = vmatprep.subr.mxu0 0.0
    %3119 = vmatpush2.msra.mxu0 0.0
    %3120 = vmatprep.subr.mxu0 0.0
    %3121 = vmatpush2.msra.mxu0 0.0
    %3122 = vmatprep.subr.mxu0 0.0
    %3123 = vmatpush2.msra.mxu0 0.0
    %3124 = vmatprep.subr.mxu0 0.0
    %3125 = vmatpush2.msra.mxu0 0.0
    %3126 = vmatprep.subr.mxu0 0.0
    %3127 = vmatpush2.msra.mxu0 0.0
    %3128 = vmatprep.subr.mxu0 0.0
    %3129 = vmatpush2.msra.mxu0 0.0
    %3130 = vmatprep.subr.mxu0 0.0
    %3131 = vmatpush2.msra.mxu0 0.0
    %3132 = vmatprep.subr.mxu0 0.0
    %3133 = vmatpush2.msra.mxu0 0.0
    %3134 = vmatprep.subr.mxu0 0.0
    %3135 = vmatpush2.msra.mxu0 0.0
    %3136 = vmatprep.mubr.f32.mxu0 0.0
    %3137 = vmatmul.mubr.f32.gmra.mxu0 %v3070
    %v3138 = vpop.f32.mrf.mxu0
    %v3139 = vadd.f32 0.0, %v3138
    %v3140 = vpop.f32.mrf.mxu0
    %v3141 = vadd.f32 0.0, %v3140
    %3142 = vdwg.mxu0
    %3143 = vmatprep.subr.mxu0 0.0
    %3144 = vmatpush1.msra.mxu0 0.0
    %3145 = vmatprep.subr.mxu0 0.0
    %3146 = vmatpush1.msra.mxu0 0.0
    %3147 = vmatprep.subr.mxu0 0.0
    %3148 = vmatpush1.msra.mxu0 0.0
    %3149 = vmatprep.subr.mxu0 0.0
    %3150 = vmatpush1.msra.mxu0 0.0
    %3151 = vmatprep.subr.mxu0 0.0
    %3152 = vmatpush1.msra.mxu0 0.0
    %3153 = vmatprep.subr.mxu0 0.0
    %3154 = vmatpush1.msra.mxu0 0.0
    %3155 = vmatprep.subr.mxu0 0.0
    %3156 = vmatpush1.msra.mxu0 0.0
    %3157 = vmatprep.subr.mxu0 0.0
    %3158 = vmatpush1.msra.mxu0 0.0
    %3159 = vmatprep.subr.mxu0 0.0
    %3160 = vmatpush1.msra.mxu0 0.0
    %3161 = vmatprep.subr.mxu0 0.0
    %3162 = vmatpush1.msra.mxu0 0.0
    %3163 = vmatprep.subr.mxu0 0.0
    %3164 = vmatpush1.msra.mxu0 0.0
    %3165 = vmatprep.subr.mxu0 0.0
    %3166 = vmatpush1.msra.mxu0 0.0
    %3167 = vmatprep.subr.mxu0 0.0
    %3168 = vmatpush1.msra.mxu0 0.0
    %3169 = vmatprep.subr.mxu0 0.0
    %3170 = vmatpush1.msra.mxu0 0.0
    %3171 = vmatprep.subr.mxu0 0.0
    %3172 = vmatpush1.msra.mxu0 0.0
    %3173 = vmatprep.subr.mxu0 %v3064
    %3174 = vmatpush1.msra.mxu0 %v3063
    %3175 = vmatprep.subr.mxu0 0.0
    %3176 = vmatpush2.msra.mxu0 0.0
    %3177 = vmatprep.subr.mxu0 0.0
    %3178 = vmatpush2.msra.mxu0 0.0
    %3179 = vmatprep.subr.mxu0 0.0
    %3180 = vmatpush2.msra.mxu0 0.0
    %3181 = vmatprep.subr.mxu0 0.0
    %3182 = vmatpush2.msra.mxu0 0.0
    %3183 = vmatprep.subr.mxu0 0.0
    %3184 = vmatpush2.msra.mxu0 0.0
    %3185 = vmatprep.subr.mxu0 0.0
    %3186 = vmatpush2.msra.mxu0 0.0
    %3187 = vmatprep.subr.mxu0 0.0
    %3188 = vmatpush2.msra.mxu0 0.0
    %3189 = vmatprep.subr.mxu0 0.0
    %3190 = vmatpush2.msra.mxu0 0.0
    %3191 = vmatprep.subr.mxu0 0.0
    %3192 = vmatpush2.msra.mxu0 0.0
    %3193 = vmatprep.subr.mxu0 0.0
    %3194 = vmatpush2.msra.mxu0 0.0
    %3195 = vmatprep.subr.mxu0 0.0
    %3196 = vmatpush2.msra.mxu0 0.0
    %3197 = vmatprep.subr.mxu0 0.0
    %3198 = vmatpush2.msra.mxu0 0.0
    %3199 = vmatprep.subr.mxu0 0.0
    %3200 = vmatpush2.msra.mxu0 0.0
    %3201 = vmatprep.subr.mxu0 0.0
    %3202 = vmatpush2.msra.mxu0 0.0
    %3203 = vmatprep.subr.mxu0 0.0
    %3204 = vmatpush2.msra.mxu0 0.0
    %3205 = vmatprep.subr.mxu0 0.0
    %3206 = vmatpush2.msra.mxu0 0.0
    %3207 = vmatprep.mubr.f32.mxu0 0.0
    %3208 = vmatmul.mubr.f32.gmra.mxu0 %v3070
    %v3209 = vpop.f32.mrf.mxu0
    %v3210 = vadd.f32 0.0, %v3209
    %v3211 = vpop.f32.mrf.mxu0
    %v3212 = vadd.f32 0.0, %v3211
    %3213 = vdwg.mxu0
    %3214 = vmatprep.subr.mxu0 0.0
    %3215 = vmatpush1.msra.mxu0 0.0
    %3216 = vmatprep.subr.mxu0 0.0
    %3217 = vmatpush1.msra.mxu0 0.0
    %3218 = vmatprep.subr.mxu0 0.0
    %3219 = vmatpush1.msra.mxu0 0.0
    %3220 = vmatprep.subr.mxu0 0.0
    %3221 = vmatpush1.msra.mxu0 0.0
    %3222 = vmatprep.subr.mxu0 0.0
    %3223 = vmatpush1.msra.mxu0 0.0
    %3224 = vmatprep.subr.mxu0 0.0
    %3225 = vmatpush1.msra.mxu0 0.0
    %3226 = vmatprep.subr.mxu0 0.0
    %3227 = vmatpush1.msra.mxu0 0.0
    %3228 = vmatprep.subr.mxu0 0.0
    %3229 = vmatpush1.msra.mxu0 0.0
    %3230 = vmatprep.subr.mxu0 0.0
    %3231 = vmatpush1.msra.mxu0 0.0
    %3232 = vmatprep.subr.mxu0 0.0
    %3233 = vmatpush1.msra.mxu0 0.0
    %3234 = vmatprep.subr.mxu0 0.0
    %3235 = vmatpush1.msra.mxu0 0.0
    %3236 = vmatprep.subr.mxu0 0.0
    %3237 = vmatpush1.msra.mxu0 0.0
    %3238 = vmatprep.subr.mxu0 0.0
    %3239 = vmatpush1.msra.mxu0 0.0
    %3240 = vmatprep.subr.mxu0 0.0
    %3241 = vmatpush1.msra.mxu0 0.0
    %3242 = vmatprep.subr.mxu0 0.0
    %3243 = vmatpush1.msra.mxu0 0.0
    %3244 = vmatprep.subr.mxu0 %v3066
    %3245 = vmatpush1.msra.mxu0 %v3065
    %3246 = vmatprep.subr.mxu0 0.0
    %3247 = vmatpush2.msra.mxu0 0.0
    %3248 = vmatprep.subr.mxu0 0.0
    %3249 = vmatpush2.msra.mxu0 0.0
    %3250 = vmatprep.subr.mxu0 0.0
    %3251 = vmatpush2.msra.mxu0 0.0
    %3252 = vmatprep.subr.mxu0 0.0
    %3253 = vmatpush2.msra.mxu0 0.0
    %3254 = vmatprep.subr.mxu0 0.0
    %3255 = vmatpush2.msra.mxu0 0.0
    %3256 = vmatprep.subr.mxu0 0.0
    %3257 = vmatpush2.msra.mxu0 0.0
    %3258 = vmatprep.subr.mxu0 0.0
    %3259 = vmatpush2.msra.mxu0 0.0
    %3260 = vmatprep.subr.mxu0 0.0
    %3261 = vmatpush2.msra.mxu0 0.0
    %3262 = vmatprep.subr.mxu0 0.0
    %3263 = vmatpush2.msra.mxu0 0.0
    %3264 = vmatprep.subr.mxu0 0.0
    %3265 = vmatpush2.msra.mxu0 0.0
    %3266 = vmatprep.subr.mxu0 0.0
    %3267 = vmatpush2.msra.mxu0 0.0
    %3268 = vmatprep.subr.mxu0 0.0
    %3269 = vmatpush2.msra.mxu0 0.0
    %3270 = vmatprep.subr.mxu0 0.0
    %3271 = vmatpush2.msra.mxu0 0.0
    %3272 = vmatprep.subr.mxu0 0.0
    %3273 = vmatpush2.msra.mxu0 0.0
    %3274 = vmatprep.subr.mxu0 0.0
    %3275 = vmatpush2.msra.mxu0 0.0
    %3276 = vmatprep.subr.mxu0 0.0
    %3277 = vmatpush2.msra.mxu0 0.0
    %3278 = vmatprep.mubr.f32.mxu0 0.0
    %3279 = vmatmul.mubr.f32.gmra.mxu0 %v3070
    %v3280 = vpop.f32.mrf.mxu0
    %v3281 = vadd.f32 0.0, %v3280
    %v3282 = vpop.f32.mrf.mxu0
    %v3283 = vadd.f32 0.0, %v3282
    %3284 = vdwg.mxu0
    %3285 = vmatprep.subr.mxu0 0.0
    %3286 = vmatpush1.msra.mxu0 0.0
    %3287 = vmatprep.subr.mxu0 0.0
    %3288 = vmatpush1.msra.mxu0 0.0
    %3289 = vmatprep.subr.mxu0 0.0
    %3290 = vmatpush1.msra.mxu0 0.0
    %3291 = vmatprep.subr.mxu0 0.0
    %3292 = vmatpush1.msra.mxu0 0.0
    %3293 = vmatprep.subr.mxu0 0.0
    %3294 = vmatpush1.msra.mxu0 0.0
    %3295 = vmatprep.subr.mxu0 0.0
    %3296 = vmatpush1.msra.mxu0 0.0
    %3297 = vmatprep.subr.mxu0 0.0
    %3298 = vmatpush1.msra.mxu0 0.0
    %3299 = vmatprep.subr.mxu0 0.0
    %3300 = vmatpush1.msra.mxu0 0.0
    %3301 = vmatprep.subr.mxu0 0.0
    %3302 = vmatpush1.msra.mxu0 0.0
    %3303 = vmatprep.subr.mxu0 0.0
    %3304 = vmatpush1.msra.mxu0 0.0
    %3305 = vmatprep.subr.mxu0 0.0
    %3306 = vmatpush1.msra.mxu0 0.0
    %3307 = vmatprep.subr.mxu0 0.0
    %3308 = vmatpush1.msra.mxu0 0.0
    %3309 = vmatprep.subr.mxu0 0.0
    %3310 = vmatpush1.msra.mxu0 0.0
    %3311 = vmatprep.subr.mxu0 0.0
    %3312 = vmatpush1.msra.mxu0 0.0
    %3313 = vmatprep.subr.mxu0 0.0
    %3314 = vmatpush1.msra.mxu0 0.0
    %3315 = vmatprep.subr.mxu0 %v3068
    %3316 = vmatpush1.msra.mxu0 %v3067
    %3317 = vmatprep.subr.mxu0 0.0
    %3318 = vmatpush2.msra.mxu0 0.0
    %3319 = vmatprep.subr.mxu0 0.0
    %3320 = vmatpush2.msra.mxu0 0.0
    %3321 = vmatprep.subr.mxu0 0.0
    %3322 = vmatpush2.msra.mxu0 0.0
    %3323 = vmatprep.subr.mxu0 0.0
    %3324 = vmatpush2.msra.mxu0 0.0
    %3325 = vmatprep.subr.mxu0 0.0
    %3326 = vmatpush2.msra.mxu0 0.0
    %3327 = vmatprep.subr.mxu0 0.0
    %3328 = vmatpush2.msra.mxu0 0.0
    %3329 = vmatprep.subr.mxu0 0.0
    %3330 = vmatpush2.msra.mxu0 0.0
    %3331 = vmatprep.subr.mxu0 0.0
    %3332 = vmatpush2.msra.mxu0 0.0
    %3333 = vmatprep.subr.mxu0 0.0
    %3334 = vmatpush2.msra.mxu0 0.0
    %3335 = vmatprep.subr.mxu0 0.0
    %3336 = vmatpush2.msra.mxu0 0.0
    %3337 = vmatprep.subr.mxu0 0.0
    %3338 = vmatpush2.msra.mxu0 0.0
    %3339 = vmatprep.subr.mxu0 0.0
    %3340 = vmatpush2.msra.mxu0 0.0
    %3341 = vmatprep.subr.mxu0 0.0
    %3342 = vmatpush2.msra.mxu0 0.0
    %3343 = vmatprep.subr.mxu0 0.0
    %3344 = vmatpush2.msra.mxu0 0.0
    %3345 = vmatprep.subr.mxu0 0.0
    %3346 = vmatpush2.msra.mxu0 0.0
    %3347 = vmatprep.subr.mxu0 0.0
    %3348 = vmatpush2.msra.mxu0 0.0
    %3349 = vmatprep.mubr.f32.mxu0 0.0
    %3350 = vmatmul.mubr.f32.gmra.mxu0 %v3070
    %v3351 = vpop.f32.mrf.mxu0
    %v3352 = vadd.f32 0.0, %v3351
    %v3353 = vpop.f32.mrf.mxu0
    %v3354 = vadd.f32 0.0, %v3353
    %3355 = vdwg.mxu0
    %v3356 = vadd.f32 %v3052, %v3139
    %v3357 = vadd.f32 %v3053, %v3141
    %v3358 = vadd.f32 %v3054, %v3210
    %v3359 = vadd.f32 %v3055, %v3212
    %v3360 = vadd.f32 %v3056, %v3281
    %v3361 = vadd.f32 %v3057, %v3283
    %v3362 = vadd.f32 %v3058, %v3352
    %v3363 = vadd.f32 %v3059, %v3354
    %s3364 = scalar_lea.vmem [#allocation13], 576
    %v3365 = vld [vmem:[%s3364] sm:$0xff]
    %v3366 = vld [vmem:[%s3364 + $0x8] sm:$0xff]
    %v3367 = vld [vmem:[%s3364 + $0x10] sm:$0xff]
    %v3368 = vld [vmem:[%s3364 + $0x18] sm:$0xff]
    %v3369 = vld [vmem:[%s3364 + $0x20] sm:$0xff]
    %v3370 = vld [vmem:[%s3364 + $0x28] sm:$0xff]
    %v3371 = vld [vmem:[%s3364 + $0x30] sm:$0xff]
    %v3372 = vld [vmem:[%s3364 + $0x38] sm:$0xff]
    %v3373 = vrot.slane %v643, 1
    %v3374 = vsel %vm663, %v3373, 0
    %3376 = vmatprep.subr.mxu0 0.0
    %3377 = vmatpush1.msra.mxu0 0.0
    %3378 = vmatprep.subr.mxu0 0.0
    %3379 = vmatpush1.msra.mxu0 0.0
    %3380 = vmatprep.subr.mxu0 0.0
    %3381 = vmatpush1.msra.mxu0 0.0
    %3382 = vmatprep.subr.mxu0 0.0
    %3383 = vmatpush1.msra.mxu0 0.0
    %3384 = vmatprep.subr.mxu0 0.0
    %3385 = vmatpush1.msra.mxu0 0.0
    %3386 = vmatprep.subr.mxu0 0.0
    %3387 = vmatpush1.msra.mxu0 0.0
    %3388 = vmatprep.subr.mxu0 0.0
    %3389 = vmatpush1.msra.mxu0 0.0
    %3390 = vmatprep.subr.mxu0 0.0
    %3391 = vmatpush1.msra.mxu0 0.0
    %3392 = vmatprep.subr.mxu0 0.0
    %3393 = vmatpush1.msra.mxu0 0.0
    %3394 = vmatprep.subr.mxu0 0.0
    %3395 = vmatpush1.msra.mxu0 0.0
    %3396 = vmatprep.subr.mxu0 0.0
    %3397 = vmatpush1.msra.mxu0 0.0
    %3398 = vmatprep.subr.mxu0 0.0
    %3399 = vmatpush1.msra.mxu0 0.0
    %3400 = vmatprep.subr.mxu0 0.0
    %3401 = vmatpush1.msra.mxu0 0.0
    %3402 = vmatprep.subr.mxu0 0.0
    %3403 = vmatpush1.msra.mxu0 0.0
    %3404 = vmatprep.subr.mxu0 0.0
    %3405 = vmatpush1.msra.mxu0 0.0
    %3406 = vmatprep.subr.mxu0 %v3366
    %3407 = vmatpush1.msra.mxu0 %v3365
    %3408 = vmatprep.subr.mxu0 0.0
    %3409 = vmatpush2.msra.mxu0 0.0
    %3410 = vmatprep.subr.mxu0 0.0
    %3411 = vmatpush2.msra.mxu0 0.0
    %3412 = vmatprep.subr.mxu0 0.0
    %3413 = vmatpush2.msra.mxu0 0.0
    %3414 = vmatprep.subr.mxu0 0.0
    %3415 = vmatpush2.msra.mxu0 0.0
    %3416 = vmatprep.subr.mxu0 0.0
    %3417 = vmatpush2.msra.mxu0 0.0
    %3418 = vmatprep.subr.mxu0 0.0
    %3419 = vmatpush2.msra.mxu0 0.0
    %3420 = vmatprep.subr.mxu0 0.0
    %3421 = vmatpush2.msra.mxu0 0.0
    %3422 = vmatprep.subr.mxu0 0.0
    %3423 = vmatpush2.msra.mxu0 0.0
    %3424 = vmatprep.subr.mxu0 0.0
    %3425 = vmatpush2.msra.mxu0 0.0
    %3426 = vmatprep.subr.mxu0 0.0
    %3427 = vmatpush2.msra.mxu0 0.0
    %3428 = vmatprep.subr.mxu0 0.0
    %3429 = vmatpush2.msra.mxu0 0.0
    %3430 = vmatprep.subr.mxu0 0.0
    %3431 = vmatpush2.msra.mxu0 0.0
    %3432 = vmatprep.subr.mxu0 0.0
    %3433 = vmatpush2.msra.mxu0 0.0
    %3434 = vmatprep.subr.mxu0 0.0
    %3435 = vmatpush2.msra.mxu0 0.0
    %3436 = vmatprep.subr.mxu0 0.0
    %3437 = vmatpush2.msra.mxu0 0.0
    %3438 = vmatprep.subr.mxu0 0.0
    %3439 = vmatpush2.msra.mxu0 0.0
    %3440 = vmatprep.mubr.f32.mxu0 0.0
    %3441 = vmatmul.mubr.f32.gmra.mxu0 %v3374
    %v3442 = vpop.f32.mrf.mxu0
    %v3443 = vadd.f32 0.0, %v3442
    %v3444 = vpop.f32.mrf.mxu0
    %v3445 = vadd.f32 0.0, %v3444
    %3446 = vdwg.mxu0
    %3447 = vmatprep.subr.mxu0 0.0
    %3448 = vmatpush1.msra.mxu0 0.0
    %3449 = vmatprep.subr.mxu0 0.0
    %3450 = vmatpush1.msra.mxu0 0.0
    %3451 = vmatprep.subr.mxu0 0.0
    %3452 = vmatpush1.msra.mxu0 0.0
    %3453 = vmatprep.subr.mxu0 0.0
    %3454 = vmatpush1.msra.mxu0 0.0
    %3455 = vmatprep.subr.mxu0 0.0
    %3456 = vmatpush1.msra.mxu0 0.0
    %3457 = vmatprep.subr.mxu0 0.0
    %3458 = vmatpush1.msra.mxu0 0.0
    %3459 = vmatprep.subr.mxu0 0.0
    %3460 = vmatpush1.msra.mxu0 0.0
    %3461 = vmatprep.subr.mxu0 0.0
    %3462 = vmatpush1.msra.mxu0 0.0
    %3463 = vmatprep.subr.mxu0 0.0
    %3464 = vmatpush1.msra.mxu0 0.0
    %3465 = vmatprep.subr.mxu0 0.0
    %3466 = vmatpush1.msra.mxu0 0.0
    %3467 = vmatprep.subr.mxu0 0.0
    %3468 = vmatpush1.msra.mxu0 0.0
    %3469 = vmatprep.subr.mxu0 0.0
    %3470 = vmatpush1.msra.mxu0 0.0
    %3471 = vmatprep.subr.mxu0 0.0
    %3472 = vmatpush1.msra.mxu0 0.0
    %3473 = vmatprep.subr.mxu0 0.0
    %3474 = vmatpush1.msra.mxu0 0.0
    %3475 = vmatprep.subr.mxu0 0.0
    %3476 = vmatpush1.msra.mxu0 0.0
    %3477 = vmatprep.subr.mxu0 %v3368
    %3478 = vmatpush1.msra.mxu0 %v3367
    %3479 = vmatprep.subr.mxu0 0.0
    %3480 = vmatpush2.msra.mxu0 0.0
    %3481 = vmatprep.subr.mxu0 0.0
    %3482 = vmatpush2.msra.mxu0 0.0
    %3483 = vmatprep.subr.mxu0 0.0
    %3484 = vmatpush2.msra.mxu0 0.0
    %3485 = vmatprep.subr.mxu0 0.0
    %3486 = vmatpush2.msra.mxu0 0.0
    %3487 = vmatprep.subr.mxu0 0.0
    %3488 = vmatpush2.msra.mxu0 0.0
    %3489 = vmatprep.subr.mxu0 0.0
    %3490 = vmatpush2.msra.mxu0 0.0
    %3491 = vmatprep.subr.mxu0 0.0
    %3492 = vmatpush2.msra.mxu0 0.0
    %3493 = vmatprep.subr.mxu0 0.0
    %3494 = vmatpush2.msra.mxu0 0.0
    %3495 = vmatprep.subr.mxu0 0.0
    %3496 = vmatpush2.msra.mxu0 0.0
    %3497 = vmatprep.subr.mxu0 0.0
    %3498 = vmatpush2.msra.mxu0 0.0
    %3499 = vmatprep.subr.mxu0 0.0
    %3500 = vmatpush2.msra.mxu0 0.0
    %3501 = vmatprep.subr.mxu0 0.0
    %3502 = vmatpush2.msra.mxu0 0.0
    %3503 = vmatprep.subr.mxu0 0.0
    %3504 = vmatpush2.msra.mxu0 0.0
    %3505 = vmatprep.subr.mxu0 0.0
    %3506 = vmatpush2.msra.mxu0 0.0
    %3507 = vmatprep.subr.mxu0 0.0
    %3508 = vmatpush2.msra.mxu0 0.0
    %3509 = vmatprep.subr.mxu0 0.0
    %3510 = vmatpush2.msra.mxu0 0.0
    %3511 = vmatprep.mubr.f32.mxu0 0.0
    %3512 = vmatmul.mubr.f32.gmra.mxu0 %v3374
    %v3513 = vpop.f32.mrf.mxu0
    %v3514 = vadd.f32 0.0, %v3513
    %v3515 = vpop.f32.mrf.mxu0
    %v3516 = vadd.f32 0.0, %v3515
    %3517 = vdwg.mxu0
    %3518 = vmatprep.subr.mxu0 0.0
    %3519 = vmatpush1.msra.mxu0 0.0
    %3520 = vmatprep.subr.mxu0 0.0
    %3521 = vmatpush1.msra.mxu0 0.0
    %3522 = vmatprep.subr.mxu0 0.0
    %3523 = vmatpush1.msra.mxu0 0.0
    %3524 = vmatprep.subr.mxu0 0.0
    %3525 = vmatpush1.msra.mxu0 0.0
    %3526 = vmatprep.subr.mxu0 0.0
    %3527 = vmatpush1.msra.mxu0 0.0
    %3528 = vmatprep.subr.mxu0 0.0
    %3529 = vmatpush1.msra.mxu0 0.0
    %3530 = vmatprep.subr.mxu0 0.0
    %3531 = vmatpush1.msra.mxu0 0.0
    %3532 = vmatprep.subr.mxu0 0.0
    %3533 = vmatpush1.msra.mxu0 0.0
    %3534 = vmatprep.subr.mxu0 0.0
    %3535 = vmatpush1.msra.mxu0 0.0
    %3536 = vmatprep.subr.mxu0 0.0
    %3537 = vmatpush1.msra.mxu0 0.0
    %3538 = vmatprep.subr.mxu0 0.0
    %3539 = vmatpush1.msra.mxu0 0.0
    %3540 = vmatprep.subr.mxu0 0.0
    %3541 = vmatpush1.msra.mxu0 0.0
    %3542 = vmatprep.subr.mxu0 0.0
    %3543 = vmatpush1.msra.mxu0 0.0
    %3544 = vmatprep.subr.mxu0 0.0
    %3545 = vmatpush1.msra.mxu0 0.0
    %3546 = vmatprep.subr.mxu0 0.0
    %3547 = vmatpush1.msra.mxu0 0.0
    %3548 = vmatprep.subr.mxu0 %v3370
    %3549 = vmatpush1.msra.mxu0 %v3369
    %3550 = vmatprep.subr.mxu0 0.0
    %3551 = vmatpush2.msra.mxu0 0.0
    %3552 = vmatprep.subr.mxu0 0.0
    %3553 = vmatpush2.msra.mxu0 0.0
    %3554 = vmatprep.subr.mxu0 0.0
    %3555 = vmatpush2.msra.mxu0 0.0
    %3556 = vmatprep.subr.mxu0 0.0
    %3557 = vmatpush2.msra.mxu0 0.0
    %3558 = vmatprep.subr.mxu0 0.0
    %3559 = vmatpush2.msra.mxu0 0.0
    %3560 = vmatprep.subr.mxu0 0.0
    %3561 = vmatpush2.msra.mxu0 0.0
    %3562 = vmatprep.subr.mxu0 0.0
    %3563 = vmatpush2.msra.mxu0 0.0
    %3564 = vmatprep.subr.mxu0 0.0
    %3565 = vmatpush2.msra.mxu0 0.0
    %3566 = vmatprep.subr.mxu0 0.0
    %3567 = vmatpush2.msra.mxu0 0.0
    %3568 = vmatprep.subr.mxu0 0.0
    %3569 = vmatpush2.msra.mxu0 0.0
    %3570 = vmatprep.subr.mxu0 0.0
    %3571 = vmatpush2.msra.mxu0 0.0
    %3572 = vmatprep.subr.mxu0 0.0
    %3573 = vmatpush2.msra.mxu0 0.0
    %3574 = vmatprep.subr.mxu0 0.0
    %3575 = vmatpush2.msra.mxu0 0.0
    %3576 = vmatprep.subr.mxu0 0.0
    %3577 = vmatpush2.msra.mxu0 0.0
    %3578 = vmatprep.subr.mxu0 0.0
    %3579 = vmatpush2.msra.mxu0 0.0
    %3580 = vmatprep.subr.mxu0 0.0
    %3581 = vmatpush2.msra.mxu0 0.0
    %3582 = vmatprep.mubr.f32.mxu0 0.0
    %3583 = vmatmul.mubr.f32.gmra.mxu0 %v3374
    %v3584 = vpop.f32.mrf.mxu0
    %v3585 = vadd.f32 0.0, %v3584
    %v3586 = vpop.f32.mrf.mxu0
    %v3587 = vadd.f32 0.0, %v3586
    %3588 = vdwg.mxu0
    %3589 = vmatprep.subr.mxu0 0.0
    %3590 = vmatpush1.msra.mxu0 0.0
    %3591 = vmatprep.subr.mxu0 0.0
    %3592 = vmatpush1.msra.mxu0 0.0
    %3593 = vmatprep.subr.mxu0 0.0
    %3594 = vmatpush1.msra.mxu0 0.0
    %3595 = vmatprep.subr.mxu0 0.0
    %3596 = vmatpush1.msra.mxu0 0.0
    %3597 = vmatprep.subr.mxu0 0.0
    %3598 = vmatpush1.msra.mxu0 0.0
    %3599 = vmatprep.subr.mxu0 0.0
    %3600 = vmatpush1.msra.mxu0 0.0
    %3601 = vmatprep.subr.mxu0 0.0
    %3602 = vmatpush1.msra.mxu0 0.0
    %3603 = vmatprep.subr.mxu0 0.0
    %3604 = vmatpush1.msra.mxu0 0.0
    %3605 = vmatprep.subr.mxu0 0.0
    %3606 = vmatpush1.msra.mxu0 0.0
    %3607 = vmatprep.subr.mxu0 0.0
    %3608 = vmatpush1.msra.mxu0 0.0
    %3609 = vmatprep.subr.mxu0 0.0
    %3610 = vmatpush1.msra.mxu0 0.0
    %3611 = vmatprep.subr.mxu0 0.0
    %3612 = vmatpush1.msra.mxu0 0.0
    %3613 = vmatprep.subr.mxu0 0.0
    %3614 = vmatpush1.msra.mxu0 0.0
    %3615 = vmatprep.subr.mxu0 0.0
    %3616 = vmatpush1.msra.mxu0 0.0
    %3617 = vmatprep.subr.mxu0 0.0
    %3618 = vmatpush1.msra.mxu0 0.0
    %3619 = vmatprep.subr.mxu0 %v3372
    %3620 = vmatpush1.msra.mxu0 %v3371
    %3621 = vmatprep.subr.mxu0 0.0
    %3622 = vmatpush2.msra.mxu0 0.0
    %3623 = vmatprep.subr.mxu0 0.0
    %3624 = vmatpush2.msra.mxu0 0.0
    %3625 = vmatprep.subr.mxu0 0.0
    %3626 = vmatpush2.msra.mxu0 0.0
    %3627 = vmatprep.subr.mxu0 0.0
    %3628 = vmatpush2.msra.mxu0 0.0
    %3629 = vmatprep.subr.mxu0 0.0
    %3630 = vmatpush2.msra.mxu0 0.0
    %3631 = vmatprep.subr.mxu0 0.0
    %3632 = vmatpush2.msra.mxu0 0.0
    %3633 = vmatprep.subr.mxu0 0.0
    %3634 = vmatpush2.msra.mxu0 0.0
    %3635 = vmatprep.subr.mxu0 0.0
    %3636 = vmatpush2.msra.mxu0 0.0
    %3637 = vmatprep.subr.mxu0 0.0
    %3638 = vmatpush2.msra.mxu0 0.0
    %3639 = vmatprep.subr.mxu0 0.0
    %3640 = vmatpush2.msra.mxu0 0.0
    %3641 = vmatprep.subr.mxu0 0.0
    %3642 = vmatpush2.msra.mxu0 0.0
    %3643 = vmatprep.subr.mxu0 0.0
    %3644 = vmatpush2.msra.mxu0 0.0
    %3645 = vmatprep.subr.mxu0 0.0
    %3646 = vmatpush2.msra.mxu0 0.0
    %3647 = vmatprep.subr.mxu0 0.0
    %3648 = vmatpush2.msra.mxu0 0.0
    %3649 = vmatprep.subr.mxu0 0.0
    %3650 = vmatpush2.msra.mxu0 0.0
    %3651 = vmatprep.subr.mxu0 0.0
    %3652 = vmatpush2.msra.mxu0 0.0
    %3653 = vmatprep.mubr.f32.mxu0 0.0
    %3654 = vmatmul.mubr.f32.gmra.mxu0 %v3374
    %v3655 = vpop.f32.mrf.mxu0
    %v3656 = vadd.f32 0.0, %v3655
    %v3657 = vpop.f32.mrf.mxu0
    %v3658 = vadd.f32 0.0, %v3657
    %3659 = vdwg.mxu0
    %v3660 = vadd.f32 %v3356, %v3443
    %v3661 = vadd.f32 %v3357, %v3445
    %v3662 = vadd.f32 %v3358, %v3514
    %v3663 = vadd.f32 %v3359, %v3516
    %v3664 = vadd.f32 %v3360, %v3585
    %v3665 = vadd.f32 %v3361, %v3587
    %v3666 = vadd.f32 %v3362, %v3656
    %v3667 = vadd.f32 %v3363, %v3658
    %s3668 = scalar_lea.vmem [#allocation13], 640
    %v3669 = vld [vmem:[%s3668] sm:$0xff]
    %v3670 = vld [vmem:[%s3668 + $0x8] sm:$0xff]
    %v3671 = vld [vmem:[%s3668 + $0x10] sm:$0xff]
    %v3672 = vld [vmem:[%s3668 + $0x18] sm:$0xff]
    %v3673 = vld [vmem:[%s3668 + $0x20] sm:$0xff]
    %v3674 = vld [vmem:[%s3668 + $0x28] sm:$0xff]
    %v3675 = vld [vmem:[%s3668 + $0x30] sm:$0xff]
    %v3676 = vld [vmem:[%s3668 + $0x38] sm:$0xff]
    %v3677 = vrot.slane %v643, 2
    %v3678 = vsel %vm663, %v3677, 0
    %3680 = vmatprep.subr.mxu0 0.0
    %3681 = vmatpush1.msra.mxu0 0.0
    %3682 = vmatprep.subr.mxu0 0.0
    %3683 = vmatpush1.msra.mxu0 0.0
    %3684 = vmatprep.subr.mxu0 0.0
    %3685 = vmatpush1.msra.mxu0 0.0
    %3686 = vmatprep.subr.mxu0 0.0
    %3687 = vmatpush1.msra.mxu0 0.0
    %3688 = vmatprep.subr.mxu0 0.0
    %3689 = vmatpush1.msra.mxu0 0.0
    %3690 = vmatprep.subr.mxu0 0.0
    %3691 = vmatpush1.msra.mxu0 0.0
    %3692 = vmatprep.subr.mxu0 0.0
    %3693 = vmatpush1.msra.mxu0 0.0
    %3694 = vmatprep.subr.mxu0 0.0
    %3695 = vmatpush1.msra.mxu0 0.0
    %3696 = vmatprep.subr.mxu0 0.0
    %3697 = vmatpush1.msra.mxu0 0.0
    %3698 = vmatprep.subr.mxu0 0.0
    %3699 = vmatpush1.msra.mxu0 0.0
    %3700 = vmatprep.subr.mxu0 0.0
    %3701 = vmatpush1.msra.mxu0 0.0
    %3702 = vmatprep.subr.mxu0 0.0
    %3703 = vmatpush1.msra.mxu0 0.0
    %3704 = vmatprep.subr.mxu0 0.0
    %3705 = vmatpush1.msra.mxu0 0.0
    %3706 = vmatprep.subr.mxu0 0.0
    %3707 = vmatpush1.msra.mxu0 0.0
    %3708 = vmatprep.subr.mxu0 0.0
    %3709 = vmatpush1.msra.mxu0 0.0
    %3710 = vmatprep.subr.mxu0 %v3670
    %3711 = vmatpush1.msra.mxu0 %v3669
    %3712 = vmatprep.subr.mxu0 0.0
    %3713 = vmatpush2.msra.mxu0 0.0
    %3714 = vmatprep.subr.mxu0 0.0
    %3715 = vmatpush2.msra.mxu0 0.0
    %3716 = vmatprep.subr.mxu0 0.0
    %3717 = vmatpush2.msra.mxu0 0.0
    %3718 = vmatprep.subr.mxu0 0.0
    %3719 = vmatpush2.msra.mxu0 0.0
    %3720 = vmatprep.subr.mxu0 0.0
    %3721 = vmatpush2.msra.mxu0 0.0
    %3722 = vmatprep.subr.mxu0 0.0
    %3723 = vmatpush2.msra.mxu0 0.0
    %3724 = vmatprep.subr.mxu0 0.0
    %3725 = vmatpush2.msra.mxu0 0.0
    %3726 = vmatprep.subr.mxu0 0.0
    %3727 = vmatpush2.msra.mxu0 0.0
    %3728 = vmatprep.subr.mxu0 0.0
    %3729 = vmatpush2.msra.mxu0 0.0
    %3730 = vmatprep.subr.mxu0 0.0
    %3731 = vmatpush2.msra.mxu0 0.0
    %3732 = vmatprep.subr.mxu0 0.0
    %3733 = vmatpush2.msra.mxu0 0.0
    %3734 = vmatprep.subr.mxu0 0.0
    %3735 = vmatpush2.msra.mxu0 0.0
    %3736 = vmatprep.subr.mxu0 0.0
    %3737 = vmatpush2.msra.mxu0 0.0
    %3738 = vmatprep.subr.mxu0 0.0
    %3739 = vmatpush2.msra.mxu0 0.0
    %3740 = vmatprep.subr.mxu0 0.0
    %3741 = vmatpush2.msra.mxu0 0.0
    %3742 = vmatprep.subr.mxu0 0.0
    %3743 = vmatpush2.msra.mxu0 0.0
    %3744 = vmatprep.mubr.f32.mxu0 0.0
    %3745 = vmatmul.mubr.f32.gmra.mxu0 %v3678
    %v3746 = vpop.f32.mrf.mxu0
    %v3747 = vadd.f32 0.0, %v3746
    %v3748 = vpop.f32.mrf.mxu0
    %v3749 = vadd.f32 0.0, %v3748
    %3750 = vdwg.mxu0
    %3751 = vmatprep.subr.mxu0 0.0
    %3752 = vmatpush1.msra.mxu0 0.0
    %3753 = vmatprep.subr.mxu0 0.0
    %3754 = vmatpush1.msra.mxu0 0.0
    %3755 = vmatprep.subr.mxu0 0.0
    %3756 = vmatpush1.msra.mxu0 0.0
    %3757 = vmatprep.subr.mxu0 0.0
    %3758 = vmatpush1.msra.mxu0 0.0
    %3759 = vmatprep.subr.mxu0 0.0
    %3760 = vmatpush1.msra.mxu0 0.0
    %3761 = vmatprep.subr.mxu0 0.0
    %3762 = vmatpush1.msra.mxu0 0.0
    %3763 = vmatprep.subr.mxu0 0.0
    %3764 = vmatpush1.msra.mxu0 0.0
    %3765 = vmatprep.subr.mxu0 0.0
    %3766 = vmatpush1.msra.mxu0 0.0
    %3767 = vmatprep.subr.mxu0 0.0
    %3768 = vmatpush1.msra.mxu0 0.0
    %3769 = vmatprep.subr.mxu0 0.0
    %3770 = vmatpush1.msra.mxu0 0.0
    %3771 = vmatprep.subr.mxu0 0.0
    %3772 = vmatpush1.msra.mxu0 0.0
    %3773 = vmatprep.subr.mxu0 0.0
    %3774 = vmatpush1.msra.mxu0 0.0
    %3775 = vmatprep.subr.mxu0 0.0
    %3776 = vmatpush1.msra.mxu0 0.0
    %3777 = vmatprep.subr.mxu0 0.0
    %3778 = vmatpush1.msra.mxu0 0.0
    %3779 = vmatprep.subr.mxu0 0.0
    %3780 = vmatpush1.msra.mxu0 0.0
    %3781 = vmatprep.subr.mxu0 %v3672
    %3782 = vmatpush1.msra.mxu0 %v3671
    %3783 = vmatprep.subr.mxu0 0.0
    %3784 = vmatpush2.msra.mxu0 0.0
    %3785 = vmatprep.subr.mxu0 0.0
    %3786 = vmatpush2.msra.mxu0 0.0
    %3787 = vmatprep.subr.mxu0 0.0
    %3788 = vmatpush2.msra.mxu0 0.0
    %3789 = vmatprep.subr.mxu0 0.0
    %3790 = vmatpush2.msra.mxu0 0.0
    %3791 = vmatprep.subr.mxu0 0.0
    %3792 = vmatpush2.msra.mxu0 0.0
    %3793 = vmatprep.subr.mxu0 0.0
    %3794 = vmatpush2.msra.mxu0 0.0
    %3795 = vmatprep.subr.mxu0 0.0
    %3796 = vmatpush2.msra.mxu0 0.0
    %3797 = vmatprep.subr.mxu0 0.0
    %3798 = vmatpush2.msra.mxu0 0.0
    %3799 = vmatprep.subr.mxu0 0.0
    %3800 = vmatpush2.msra.mxu0 0.0
    %3801 = vmatprep.subr.mxu0 0.0
    %3802 = vmatpush2.msra.mxu0 0.0
    %3803 = vmatprep.subr.mxu0 0.0
    %3804 = vmatpush2.msra.mxu0 0.0
    %3805 = vmatprep.subr.mxu0 0.0
    %3806 = vmatpush2.msra.mxu0 0.0
    %3807 = vmatprep.subr.mxu0 0.0
    %3808 = vmatpush2.msra.mxu0 0.0
    %3809 = vmatprep.subr.mxu0 0.0
    %3810 = vmatpush2.msra.mxu0 0.0
    %3811 = vmatprep.subr.mxu0 0.0
    %3812 = vmatpush2.msra.mxu0 0.0
    %3813 = vmatprep.subr.mxu0 0.0
    %3814 = vmatpush2.msra.mxu0 0.0
    %3815 = vmatprep.mubr.f32.mxu0 0.0
    %3816 = vmatmul.mubr.f32.gmra.mxu0 %v3678
    %v3817 = vpop.f32.mrf.mxu0
    %v3818 = vadd.f32 0.0, %v3817
    %v3819 = vpop.f32.mrf.mxu0
    %v3820 = vadd.f32 0.0, %v3819
    %3821 = vdwg.mxu0
    %3822 = vmatprep.subr.mxu0 0.0
    %3823 = vmatpush1.msra.mxu0 0.0
    %3824 = vmatprep.subr.mxu0 0.0
    %3825 = vmatpush1.msra.mxu0 0.0
    %3826 = vmatprep.subr.mxu0 0.0
    %3827 = vmatpush1.msra.mxu0 0.0
    %3828 = vmatprep.subr.mxu0 0.0
    %3829 = vmatpush1.msra.mxu0 0.0
    %3830 = vmatprep.subr.mxu0 0.0
    %3831 = vmatpush1.msra.mxu0 0.0
    %3832 = vmatprep.subr.mxu0 0.0
    %3833 = vmatpush1.msra.mxu0 0.0
    %3834 = vmatprep.subr.mxu0 0.0
    %3835 = vmatpush1.msra.mxu0 0.0
    %3836 = vmatprep.subr.mxu0 0.0
    %3837 = vmatpush1.msra.mxu0 0.0
    %3838 = vmatprep.subr.mxu0 0.0
    %3839 = vmatpush1.msra.mxu0 0.0
    %3840 = vmatprep.subr.mxu0 0.0
    %3841 = vmatpush1.msra.mxu0 0.0
    %3842 = vmatprep.subr.mxu0 0.0
    %3843 = vmatpush1.msra.mxu0 0.0
    %3844 = vmatprep.subr.mxu0 0.0
    %3845 = vmatpush1.msra.mxu0 0.0
    %3846 = vmatprep.subr.mxu0 0.0
    %3847 = vmatpush1.msra.mxu0 0.0
    %3848 = vmatprep.subr.mxu0 0.0
    %3849 = vmatpush1.msra.mxu0 0.0
    %3850 = vmatprep.subr.mxu0 0.0
    %3851 = vmatpush1.msra.mxu0 0.0
    %3852 = vmatprep.subr.mxu0 %v3674
    %3853 = vmatpush1.msra.mxu0 %v3673
    %3854 = vmatprep.subr.mxu0 0.0
    %3855 = vmatpush2.msra.mxu0 0.0
    %3856 = vmatprep.subr.mxu0 0.0
    %3857 = vmatpush2.msra.mxu0 0.0
    %3858 = vmatprep.subr.mxu0 0.0
    %3859 = vmatpush2.msra.mxu0 0.0
    %3860 = vmatprep.subr.mxu0 0.0
    %3861 = vmatpush2.msra.mxu0 0.0
    %3862 = vmatprep.subr.mxu0 0.0
    %3863 = vmatpush2.msra.mxu0 0.0
    %3864 = vmatprep.subr.mxu0 0.0
    %3865 = vmatpush2.msra.mxu0 0.0
    %3866 = vmatprep.subr.mxu0 0.0
    %3867 = vmatpush2.msra.mxu0 0.0
    %3868 = vmatprep.subr.mxu0 0.0
    %3869 = vmatpush2.msra.mxu0 0.0
    %3870 = vmatprep.subr.mxu0 0.0
    %3871 = vmatpush2.msra.mxu0 0.0
    %3872 = vmatprep.subr.mxu0 0.0
    %3873 = vmatpush2.msra.mxu0 0.0
    %3874 = vmatprep.subr.mxu0 0.0
    %3875 = vmatpush2.msra.mxu0 0.0
    %3876 = vmatprep.subr.mxu0 0.0
    %3877 = vmatpush2.msra.mxu0 0.0
    %3878 = vmatprep.subr.mxu0 0.0
    %3879 = vmatpush2.msra.mxu0 0.0
    %3880 = vmatprep.subr.mxu0 0.0
    %3881 = vmatpush2.msra.mxu0 0.0
    %3882 = vmatprep.subr.mxu0 0.0
    %3883 = vmatpush2.msra.mxu0 0.0
    %3884 = vmatprep.subr.mxu0 0.0
    %3885 = vmatpush2.msra.mxu0 0.0
    %3886 = vmatprep.mubr.f32.mxu0 0.0
    %3887 = vmatmul.mubr.f32.gmra.mxu0 %v3678
    %v3888 = vpop.f32.mrf.mxu0
    %v3889 = vadd.f32 0.0, %v3888
    %v3890 = vpop.f32.mrf.mxu0
    %v3891 = vadd.f32 0.0, %v3890
    %3892 = vdwg.mxu0
    %3893 = vmatprep.subr.mxu0 0.0
    %3894 = vmatpush1.msra.mxu0 0.0
    %3895 = vmatprep.subr.mxu0 0.0
    %3896 = vmatpush1.msra.mxu0 0.0
    %3897 = vmatprep.subr.mxu0 0.0
    %3898 = vmatpush1.msra.mxu0 0.0
    %3899 = vmatprep.subr.mxu0 0.0
    %3900 = vmatpush1.msra.mxu0 0.0
    %3901 = vmatprep.subr.mxu0 0.0
    %3902 = vmatpush1.msra.mxu0 0.0
    %3903 = vmatprep.subr.mxu0 0.0
    %3904 = vmatpush1.msra.mxu0 0.0
    %3905 = vmatprep.subr.mxu0 0.0
    %3906 = vmatpush1.msra.mxu0 0.0
    %3907 = vmatprep.subr.mxu0 0.0
    %3908 = vmatpush1.msra.mxu0 0.0
    %3909 = vmatprep.subr.mxu0 0.0
    %3910 = vmatpush1.msra.mxu0 0.0
    %3911 = vmatprep.subr.mxu0 0.0
    %3912 = vmatpush1.msra.mxu0 0.0
    %3913 = vmatprep.subr.mxu0 0.0
    %3914 = vmatpush1.msra.mxu0 0.0
    %3915 = vmatprep.subr.mxu0 0.0
    %3916 = vmatpush1.msra.mxu0 0.0
    %3917 = vmatprep.subr.mxu0 0.0
    %3918 = vmatpush1.msra.mxu0 0.0
    %3919 = vmatprep.subr.mxu0 0.0
    %3920 = vmatpush1.msra.mxu0 0.0
    %3921 = vmatprep.subr.mxu0 0.0
    %3922 = vmatpush1.msra.mxu0 0.0
    %3923 = vmatprep.subr.mxu0 %v3676
    %3924 = vmatpush1.msra.mxu0 %v3675
    %3925 = vmatprep.subr.mxu0 0.0
    %3926 = vmatpush2.msra.mxu0 0.0
    %3927 = vmatprep.subr.mxu0 0.0
    %3928 = vmatpush2.msra.mxu0 0.0
    %3929 = vmatprep.subr.mxu0 0.0
    %3930 = vmatpush2.msra.mxu0 0.0
    %3931 = vmatprep.subr.mxu0 0.0
    %3932 = vmatpush2.msra.mxu0 0.0
    %3933 = vmatprep.subr.mxu0 0.0
    %3934 = vmatpush2.msra.mxu0 0.0
    %3935 = vmatprep.subr.mxu0 0.0
    %3936 = vmatpush2.msra.mxu0 0.0
    %3937 = vmatprep.subr.mxu0 0.0
    %3938 = vmatpush2.msra.mxu0 0.0
    %3939 = vmatprep.subr.mxu0 0.0
    %3940 = vmatpush2.msra.mxu0 0.0
    %3941 = vmatprep.subr.mxu0 0.0
    %3942 = vmatpush2.msra.mxu0 0.0
    %3943 = vmatprep.subr.mxu0 0.0
    %3944 = vmatpush2.msra.mxu0 0.0
    %3945 = vmatprep.subr.mxu0 0.0
    %3946 = vmatpush2.msra.mxu0 0.0
    %3947 = vmatprep.subr.mxu0 0.0
    %3948 = vmatpush2.msra.mxu0 0.0
    %3949 = vmatprep.subr.mxu0 0.0
    %3950 = vmatpush2.msra.mxu0 0.0
    %3951 = vmatprep.subr.mxu0 0.0
    %3952 = vmatpush2.msra.mxu0 0.0
    %3953 = vmatprep.subr.mxu0 0.0
    %3954 = vmatpush2.msra.mxu0 0.0
    %3955 = vmatprep.subr.mxu0 0.0
    %3956 = vmatpush2.msra.mxu0 0.0
    %3957 = vmatprep.mubr.f32.mxu0 0.0
    %3958 = vmatmul.mubr.f32.gmra.mxu0 %v3678
    %v3959 = vpop.f32.mrf.mxu0
    %v3960 = vadd.f32 0.0, %v3959
    %v3961 = vpop.f32.mrf.mxu0
    %v3962 = vadd.f32 0.0, %v3961
    %3963 = vdwg.mxu0
    %v3964 = vadd.f32 %v3660, %v3747
    %v3965 = vadd.f32 %v3661, %v3749
    %v3966 = vadd.f32 %v3662, %v3818
    %v3967 = vadd.f32 %v3663, %v3820
    %v3968 = vadd.f32 %v3664, %v3889
    %v3969 = vadd.f32 %v3665, %v3891
    %v3970 = vadd.f32 %v3666, %v3960
    %v3971 = vadd.f32 %v3667, %v3962
    %s3972 = scalar_lea.vmem [#allocation13], 704
    %v3973 = vld [vmem:[%s3972] sm:$0xff]
    %v3974 = vld [vmem:[%s3972 + $0x8] sm:$0xff]
    %v3975 = vld [vmem:[%s3972 + $0x10] sm:$0xff]
    %v3976 = vld [vmem:[%s3972 + $0x18] sm:$0xff]
    %v3977 = vld [vmem:[%s3972 + $0x20] sm:$0xff]
    %v3978 = vld [vmem:[%s3972 + $0x28] sm:$0xff]
    %v3979 = vld [vmem:[%s3972 + $0x30] sm:$0xff]
    %v3980 = vld [vmem:[%s3972 + $0x38] sm:$0xff]
    %v3981 = vrot.slane %v643, 3
    %v3982 = vsel %vm663, %v3981, 0
    %3984 = vmatprep.subr.mxu0 0.0
    %3985 = vmatpush1.msra.mxu0 0.0
    %3986 = vmatprep.subr.mxu0 0.0
    %3987 = vmatpush1.msra.mxu0 0.0
    %3988 = vmatprep.subr.mxu0 0.0
    %3989 = vmatpush1.msra.mxu0 0.0
    %3990 = vmatprep.subr.mxu0 0.0
    %3991 = vmatpush1.msra.mxu0 0.0
    %3992 = vmatprep.subr.mxu0 0.0
    %3993 = vmatpush1.msra.mxu0 0.0
    %3994 = vmatprep.subr.mxu0 0.0
    %3995 = vmatpush1.msra.mxu0 0.0
    %3996 = vmatprep.subr.mxu0 0.0
    %3997 = vmatpush1.msra.mxu0 0.0
    %3998 = vmatprep.subr.mxu0 0.0
    %3999 = vmatpush1.msra.mxu0 0.0
    %4000 = vmatprep.subr.mxu0 0.0
    %4001 = vmatpush1.msra.mxu0 0.0
    %4002 = vmatprep.subr.mxu0 0.0
    %4003 = vmatpush1.msra.mxu0 0.0
    %4004 = vmatprep.subr.mxu0 0.0
    %4005 = vmatpush1.msra.mxu0 0.0
    %4006 = vmatprep.subr.mxu0 0.0
    %4007 = vmatpush1.msra.mxu0 0.0
    %4008 = vmatprep.subr.mxu0 0.0
    %4009 = vmatpush1.msra.mxu0 0.0
    %4010 = vmatprep.subr.mxu0 0.0
    %4011 = vmatpush1.msra.mxu0 0.0
    %4012 = vmatprep.subr.mxu0 0.0
    %4013 = vmatpush1.msra.mxu0 0.0
    %4014 = vmatprep.subr.mxu0 %v3974
    %4015 = vmatpush1.msra.mxu0 %v3973
    %4016 = vmatprep.subr.mxu0 0.0
    %4017 = vmatpush2.msra.mxu0 0.0
    %4018 = vmatprep.subr.mxu0 0.0
    %4019 = vmatpush2.msra.mxu0 0.0
    %4020 = vmatprep.subr.mxu0 0.0
    %4021 = vmatpush2.msra.mxu0 0.0
    %4022 = vmatprep.subr.mxu0 0.0
    %4023 = vmatpush2.msra.mxu0 0.0
    %4024 = vmatprep.subr.mxu0 0.0
    %4025 = vmatpush2.msra.mxu0 0.0
    %4026 = vmatprep.subr.mxu0 0.0
    %4027 = vmatpush2.msra.mxu0 0.0
    %4028 = vmatprep.subr.mxu0 0.0
    %4029 = vmatpush2.msra.mxu0 0.0
    %4030 = vmatprep.subr.mxu0 0.0
    %4031 = vmatpush2.msra.mxu0 0.0
    %4032 = vmatprep.subr.mxu0 0.0
    %4033 = vmatpush2.msra.mxu0 0.0
    %4034 = vmatprep.subr.mxu0 0.0
    %4035 = vmatpush2.msra.mxu0 0.0
    %4036 = vmatprep.subr.mxu0 0.0
    %4037 = vmatpush2.msra.mxu0 0.0
    %4038 = vmatprep.subr.mxu0 0.0
    %4039 = vmatpush2.msra.mxu0 0.0
    %4040 = vmatprep.subr.mxu0 0.0
    %4041 = vmatpush2.msra.mxu0 0.0
    %4042 = vmatprep.subr.mxu0 0.0
    %4043 = vmatpush2.msra.mxu0 0.0
    %4044 = vmatprep.subr.mxu0 0.0
    %4045 = vmatpush2.msra.mxu0 0.0
    %4046 = vmatprep.subr.mxu0 0.0
    %4047 = vmatpush2.msra.mxu0 0.0
    %4048 = vmatprep.mubr.f32.mxu0 0.0
    %4049 = vmatmul.mubr.f32.gmra.mxu0 %v3982
    %v4050 = vpop.f32.mrf.mxu0
    %v4051 = vadd.f32 0.0, %v4050
    %v4052 = vpop.f32.mrf.mxu0
    %v4053 = vadd.f32 0.0, %v4052
    %4054 = vdwg.mxu0
    %4055 = vmatprep.subr.mxu0 0.0
    %4056 = vmatpush1.msra.mxu0 0.0
    %4057 = vmatprep.subr.mxu0 0.0
    %4058 = vmatpush1.msra.mxu0 0.0
    %4059 = vmatprep.subr.mxu0 0.0
    %4060 = vmatpush1.msra.mxu0 0.0
    %4061 = vmatprep.subr.mxu0 0.0
    %4062 = vmatpush1.msra.mxu0 0.0
    %4063 = vmatprep.subr.mxu0 0.0
    %4064 = vmatpush1.msra.mxu0 0.0
    %4065 = vmatprep.subr.mxu0 0.0
    %4066 = vmatpush1.msra.mxu0 0.0
    %4067 = vmatprep.subr.mxu0 0.0
    %4068 = vmatpush1.msra.mxu0 0.0
    %4069 = vmatprep.subr.mxu0 0.0
    %4070 = vmatpush1.msra.mxu0 0.0
    %4071 = vmatprep.subr.mxu0 0.0
    %4072 = vmatpush1.msra.mxu0 0.0
    %4073 = vmatprep.subr.mxu0 0.0
    %4074 = vmatpush1.msra.mxu0 0.0
    %4075 = vmatprep.subr.mxu0 0.0
    %4076 = vmatpush1.msra.mxu0 0.0
    %4077 = vmatprep.subr.mxu0 0.0
    %4078 = vmatpush1.msra.mxu0 0.0
    %4079 = vmatprep.subr.mxu0 0.0
    %4080 = vmatpush1.msra.mxu0 0.0
    %4081 = vmatprep.subr.mxu0 0.0
    %4082 = vmatpush1.msra.mxu0 0.0
    %4083 = vmatprep.subr.mxu0 0.0
    %4084 = vmatpush1.msra.mxu0 0.0
    %4085 = vmatprep.subr.mxu0 %v3976
    %4086 = vmatpush1.msra.mxu0 %v3975
    %4087 = vmatprep.subr.mxu0 0.0
    %4088 = vmatpush2.msra.mxu0 0.0
    %4089 = vmatprep.subr.mxu0 0.0
    %4090 = vmatpush2.msra.mxu0 0.0
    %4091 = vmatprep.subr.mxu0 0.0
    %4092 = vmatpush2.msra.mxu0 0.0
    %4093 = vmatprep.subr.mxu0 0.0
    %4094 = vmatpush2.msra.mxu0 0.0
    %4095 = vmatprep.subr.mxu0 0.0
    %4096 = vmatpush2.msra.mxu0 0.0
    %4097 = vmatprep.subr.mxu0 0.0
    %4098 = vmatpush2.msra.mxu0 0.0
    %4099 = vmatprep.subr.mxu0 0.0
    %4100 = vmatpush2.msra.mxu0 0.0
    %4101 = vmatprep.subr.mxu0 0.0
    %4102 = vmatpush2.msra.mxu0 0.0
    %4103 = vmatprep.subr.mxu0 0.0
    %4104 = vmatpush2.msra.mxu0 0.0
    %4105 = vmatprep.subr.mxu0 0.0
    %4106 = vmatpush2.msra.mxu0 0.0
    %4107 = vmatprep.subr.mxu0 0.0
    %4108 = vmatpush2.msra.mxu0 0.0
    %4109 = vmatprep.subr.mxu0 0.0
    %4110 = vmatpush2.msra.mxu0 0.0
    %4111 = vmatprep.subr.mxu0 0.0
    %4112 = vmatpush2.msra.mxu0 0.0
    %4113 = vmatprep.subr.mxu0 0.0
    %4114 = vmatpush2.msra.mxu0 0.0
    %4115 = vmatprep.subr.mxu0 0.0
    %4116 = vmatpush2.msra.mxu0 0.0
    %4117 = vmatprep.subr.mxu0 0.0
    %4118 = vmatpush2.msra.mxu0 0.0
    %4119 = vmatprep.mubr.f32.mxu0 0.0
    %4120 = vmatmul.mubr.f32.gmra.mxu0 %v3982
    %v4121 = vpop.f32.mrf.mxu0
    %v4122 = vadd.f32 0.0, %v4121
    %v4123 = vpop.f32.mrf.mxu0
    %v4124 = vadd.f32 0.0, %v4123
    %4125 = vdwg.mxu0
    %4126 = vmatprep.subr.mxu0 0.0
    %4127 = vmatpush1.msra.mxu0 0.0
    %4128 = vmatprep.subr.mxu0 0.0
    %4129 = vmatpush1.msra.mxu0 0.0
    %4130 = vmatprep.subr.mxu0 0.0
    %4131 = vmatpush1.msra.mxu0 0.0
    %4132 = vmatprep.subr.mxu0 0.0
    %4133 = vmatpush1.msra.mxu0 0.0
    %4134 = vmatprep.subr.mxu0 0.0
    %4135 = vmatpush1.msra.mxu0 0.0
    %4136 = vmatprep.subr.mxu0 0.0
    %4137 = vmatpush1.msra.mxu0 0.0
    %4138 = vmatprep.subr.mxu0 0.0
    %4139 = vmatpush1.msra.mxu0 0.0
    %4140 = vmatprep.subr.mxu0 0.0
    %4141 = vmatpush1.msra.mxu0 0.0
    %4142 = vmatprep.subr.mxu0 0.0
    %4143 = vmatpush1.msra.mxu0 0.0
    %4144 = vmatprep.subr.mxu0 0.0
    %4145 = vmatpush1.msra.mxu0 0.0
    %4146 = vmatprep.subr.mxu0 0.0
    %4147 = vmatpush1.msra.mxu0 0.0
    %4148 = vmatprep.subr.mxu0 0.0
    %4149 = vmatpush1.msra.mxu0 0.0
    %4150 = vmatprep.subr.mxu0 0.0
    %4151 = vmatpush1.msra.mxu0 0.0
    %4152 = vmatprep.subr.mxu0 0.0
    %4153 = vmatpush1.msra.mxu0 0.0
    %4154 = vmatprep.subr.mxu0 0.0
    %4155 = vmatpush1.msra.mxu0 0.0
    %4156 = vmatprep.subr.mxu0 %v3978
    %4157 = vmatpush1.msra.mxu0 %v3977
    %4158 = vmatprep.subr.mxu0 0.0
    %4159 = vmatpush2.msra.mxu0 0.0
    %4160 = vmatprep.subr.mxu0 0.0
    %4161 = vmatpush2.msra.mxu0 0.0
    %4162 = vmatprep.subr.mxu0 0.0
    %4163 = vmatpush2.msra.mxu0 0.0
    %4164 = vmatprep.subr.mxu0 0.0
    %4165 = vmatpush2.msra.mxu0 0.0
    %4166 = vmatprep.subr.mxu0 0.0
    %4167 = vmatpush2.msra.mxu0 0.0
    %4168 = vmatprep.subr.mxu0 0.0
    %4169 = vmatpush2.msra.mxu0 0.0
    %4170 = vmatprep.subr.mxu0 0.0
    %4171 = vmatpush2.msra.mxu0 0.0
    %4172 = vmatprep.subr.mxu0 0.0
    %4173 = vmatpush2.msra.mxu0 0.0
    %4174 = vmatprep.subr.mxu0 0.0
    %4175 = vmatpush2.msra.mxu0 0.0
    %4176 = vmatprep.subr.mxu0 0.0
    %4177 = vmatpush2.msra.mxu0 0.0
    %4178 = vmatprep.subr.mxu0 0.0
    %4179 = vmatpush2.msra.mxu0 0.0
    %4180 = vmatprep.subr.mxu0 0.0
    %4181 = vmatpush2.msra.mxu0 0.0
    %4182 = vmatprep.subr.mxu0 0.0
    %4183 = vmatpush2.msra.mxu0 0.0
    %4184 = vmatprep.subr.mxu0 0.0
    %4185 = vmatpush2.msra.mxu0 0.0
    %4186 = vmatprep.subr.mxu0 0.0
    %4187 = vmatpush2.msra.mxu0 0.0
    %4188 = vmatprep.subr.mxu0 0.0
    %4189 = vmatpush2.msra.mxu0 0.0
    %4190 = vmatprep.mubr.f32.mxu0 0.0
    %4191 = vmatmul.mubr.f32.gmra.mxu0 %v3982
    %v4192 = vpop.f32.mrf.mxu0
    %v4193 = vadd.f32 0.0, %v4192
    %v4194 = vpop.f32.mrf.mxu0
    %v4195 = vadd.f32 0.0, %v4194
    %4196 = vdwg.mxu0
    %4197 = vmatprep.subr.mxu0 0.0
    %4198 = vmatpush1.msra.mxu0 0.0
    %4199 = vmatprep.subr.mxu0 0.0
    %4200 = vmatpush1.msra.mxu0 0.0
    %4201 = vmatprep.subr.mxu0 0.0
    %4202 = vmatpush1.msra.mxu0 0.0
    %4203 = vmatprep.subr.mxu0 0.0
    %4204 = vmatpush1.msra.mxu0 0.0
    %4205 = vmatprep.subr.mxu0 0.0
    %4206 = vmatpush1.msra.mxu0 0.0
    %4207 = vmatprep.subr.mxu0 0.0
    %4208 = vmatpush1.msra.mxu0 0.0
    %4209 = vmatprep.subr.mxu0 0.0
    %4210 = vmatpush1.msra.mxu0 0.0
    %4211 = vmatprep.subr.mxu0 0.0
    %4212 = vmatpush1.msra.mxu0 0.0
    %4213 = vmatprep.subr.mxu0 0.0
    %4214 = vmatpush1.msra.mxu0 0.0
    %4215 = vmatprep.subr.mxu0 0.0
    %4216 = vmatpush1.msra.mxu0 0.0
    %4217 = vmatprep.subr.mxu0 0.0
    %4218 = vmatpush1.msra.mxu0 0.0
    %4219 = vmatprep.subr.mxu0 0.0
    %4220 = vmatpush1.msra.mxu0 0.0
    %4221 = vmatprep.subr.mxu0 0.0
    %4222 = vmatpush1.msra.mxu0 0.0
    %4223 = vmatprep.subr.mxu0 0.0
    %4224 = vmatpush1.msra.mxu0 0.0
    %4225 = vmatprep.subr.mxu0 0.0
    %4226 = vmatpush1.msra.mxu0 0.0
    %4227 = vmatprep.subr.mxu0 %v3980
    %4228 = vmatpush1.msra.mxu0 %v3979
    %4229 = vmatprep.subr.mxu0 0.0
    %4230 = vmatpush2.msra.mxu0 0.0
    %4231 = vmatprep.subr.mxu0 0.0
    %4232 = vmatpush2.msra.mxu0 0.0
    %4233 = vmatprep.subr.mxu0 0.0
    %4234 = vmatpush2.msra.mxu0 0.0
    %4235 = vmatprep.subr.mxu0 0.0
    %4236 = vmatpush2.msra.mxu0 0.0
    %4237 = vmatprep.subr.mxu0 0.0
    %4238 = vmatpush2.msra.mxu0 0.0
    %4239 = vmatprep.subr.mxu0 0.0
    %4240 = vmatpush2.msra.mxu0 0.0
    %4241 = vmatprep.subr.mxu0 0.0
    %4242 = vmatpush2.msra.mxu0 0.0
    %4243 = vmatprep.subr.mxu0 0.0
    %4244 = vmatpush2.msra.mxu0 0.0
    %4245 = vmatprep.subr.mxu0 0.0
    %4246 = vmatpush2.msra.mxu0 0.0
    %4247 = vmatprep.subr.mxu0 0.0
    %4248 = vmatpush2.msra.mxu0 0.0
    %4249 = vmatprep.subr.mxu0 0.0
    %4250 = vmatpush2.msra.mxu0 0.0
    %4251 = vmatprep.subr.mxu0 0.0
    %4252 = vmatpush2.msra.mxu0 0.0
    %4253 = vmatprep.subr.mxu0 0.0
    %4254 = vmatpush2.msra.mxu0 0.0
    %4255 = vmatprep.subr.mxu0 0.0
    %4256 = vmatpush2.msra.mxu0 0.0
    %4257 = vmatprep.subr.mxu0 0.0
    %4258 = vmatpush2.msra.mxu0 0.0
    %4259 = vmatprep.subr.mxu0 0.0
    %4260 = vmatpush2.msra.mxu0 0.0
    %4261 = vmatprep.mubr.f32.mxu0 0.0
    %4262 = vmatmul.mubr.f32.gmra.mxu0 %v3982
    %v4263 = vpop.f32.mrf.mxu0
    %v4264 = vadd.f32 0.0, %v4263
    %v4265 = vpop.f32.mrf.mxu0
    %v4266 = vadd.f32 0.0, %v4265
    %4267 = vdwg.mxu0
    %v4268 = vadd.f32 %v3964, %v4051
    %v4269 = vadd.f32 %v3965, %v4053
    %v4270 = vadd.f32 %v3966, %v4122
    %v4271 = vadd.f32 %v3967, %v4124
    %v4272 = vadd.f32 %v3968, %v4193
    %v4273 = vadd.f32 %v3969, %v4195
    %v4274 = vadd.f32 %v3970, %v4264
    %v4275 = vadd.f32 %v3971, %v4266
    %s4276 = scalar_lea.vmem [#allocation13], 768
    %v4277 = vld [vmem:[%s4276] sm:$0xff]
    %v4278 = vld [vmem:[%s4276 + $0x8] sm:$0xff]
    %v4279 = vld [vmem:[%s4276 + $0x10] sm:$0xff]
    %v4280 = vld [vmem:[%s4276 + $0x18] sm:$0xff]
    %v4281 = vld [vmem:[%s4276 + $0x20] sm:$0xff]
    %v4282 = vld [vmem:[%s4276 + $0x28] sm:$0xff]
    %v4283 = vld [vmem:[%s4276 + $0x30] sm:$0xff]
    %v4284 = vld [vmem:[%s4276 + $0x38] sm:$0xff]
    %v4285 = vrot.slane %v643, 4
    %v4286 = vsel %vm663, %v4285, 0
    %4288 = vmatprep.subr.mxu0 0.0
    %4289 = vmatpush1.msra.mxu0 0.0
    %4290 = vmatprep.subr.mxu0 0.0
    %4291 = vmatpush1.msra.mxu0 0.0
    %4292 = vmatprep.subr.mxu0 0.0
    %4293 = vmatpush1.msra.mxu0 0.0
    %4294 = vmatprep.subr.mxu0 0.0
    %4295 = vmatpush1.msra.mxu0 0.0
    %4296 = vmatprep.subr.mxu0 0.0
    %4297 = vmatpush1.msra.mxu0 0.0
    %4298 = vmatprep.subr.mxu0 0.0
    %4299 = vmatpush1.msra.mxu0 0.0
    %4300 = vmatprep.subr.mxu0 0.0
    %4301 = vmatpush1.msra.mxu0 0.0
    %4302 = vmatprep.subr.mxu0 0.0
    %4303 = vmatpush1.msra.mxu0 0.0
    %4304 = vmatprep.subr.mxu0 0.0
    %4305 = vmatpush1.msra.mxu0 0.0
    %4306 = vmatprep.subr.mxu0 0.0
    %4307 = vmatpush1.msra.mxu0 0.0
    %4308 = vmatprep.subr.mxu0 0.0
    %4309 = vmatpush1.msra.mxu0 0.0
    %4310 = vmatprep.subr.mxu0 0.0
    %4311 = vmatpush1.msra.mxu0 0.0
    %4312 = vmatprep.subr.mxu0 0.0
    %4313 = vmatpush1.msra.mxu0 0.0
    %4314 = vmatprep.subr.mxu0 0.0
    %4315 = vmatpush1.msra.mxu0 0.0
    %4316 = vmatprep.subr.mxu0 0.0
    %4317 = vmatpush1.msra.mxu0 0.0
    %4318 = vmatprep.subr.mxu0 %v4278
    %4319 = vmatpush1.msra.mxu0 %v4277
    %4320 = vmatprep.subr.mxu0 0.0
    %4321 = vmatpush2.msra.mxu0 0.0
    %4322 = vmatprep.subr.mxu0 0.0
    %4323 = vmatpush2.msra.mxu0 0.0
    %4324 = vmatprep.subr.mxu0 0.0
    %4325 = vmatpush2.msra.mxu0 0.0
    %4326 = vmatprep.subr.mxu0 0.0
    %4327 = vmatpush2.msra.mxu0 0.0
    %4328 = vmatprep.subr.mxu0 0.0
    %4329 = vmatpush2.msra.mxu0 0.0
    %4330 = vmatprep.subr.mxu0 0.0
    %4331 = vmatpush2.msra.mxu0 0.0
    %4332 = vmatprep.subr.mxu0 0.0
    %4333 = vmatpush2.msra.mxu0 0.0
    %4334 = vmatprep.subr.mxu0 0.0
    %4335 = vmatpush2.msra.mxu0 0.0
    %4336 = vmatprep.subr.mxu0 0.0
    %4337 = vmatpush2.msra.mxu0 0.0
    %4338 = vmatprep.subr.mxu0 0.0
    %4339 = vmatpush2.msra.mxu0 0.0
    %4340 = vmatprep.subr.mxu0 0.0
    %4341 = vmatpush2.msra.mxu0 0.0
    %4342 = vmatprep.subr.mxu0 0.0
    %4343 = vmatpush2.msra.mxu0 0.0
    %4344 = vmatprep.subr.mxu0 0.0
    %4345 = vmatpush2.msra.mxu0 0.0
    %4346 = vmatprep.subr.mxu0 0.0
    %4347 = vmatpush2.msra.mxu0 0.0
    %4348 = vmatprep.subr.mxu0 0.0
    %4349 = vmatpush2.msra.mxu0 0.0
    %4350 = vmatprep.subr.mxu0 0.0
    %4351 = vmatpush2.msra.mxu0 0.0
    %4352 = vmatprep.mubr.f32.mxu0 0.0
    %4353 = vmatmul.mubr.f32.gmra.mxu0 %v4286
    %v4354 = vpop.f32.mrf.mxu0
    %v4355 = vadd.f32 0.0, %v4354
    %v4356 = vpop.f32.mrf.mxu0
    %v4357 = vadd.f32 0.0, %v4356
    %4358 = vdwg.mxu0
    %4359 = vmatprep.subr.mxu0 0.0
    %4360 = vmatpush1.msra.mxu0 0.0
    %4361 = vmatprep.subr.mxu0 0.0
    %4362 = vmatpush1.msra.mxu0 0.0
    %4363 = vmatprep.subr.mxu0 0.0
    %4364 = vmatpush1.msra.mxu0 0.0
    %4365 = vmatprep.subr.mxu0 0.0
    %4366 = vmatpush1.msra.mxu0 0.0
    %4367 = vmatprep.subr.mxu0 0.0
    %4368 = vmatpush1.msra.mxu0 0.0
    %4369 = vmatprep.subr.mxu0 0.0
    %4370 = vmatpush1.msra.mxu0 0.0
    %4371 = vmatprep.subr.mxu0 0.0
    %4372 = vmatpush1.msra.mxu0 0.0
    %4373 = vmatprep.subr.mxu0 0.0
    %4374 = vmatpush1.msra.mxu0 0.0
    %4375 = vmatprep.subr.mxu0 0.0
    %4376 = vmatpush1.msra.mxu0 0.0
    %4377 = vmatprep.subr.mxu0 0.0
    %4378 = vmatpush1.msra.mxu0 0.0
    %4379 = vmatprep.subr.mxu0 0.0
    %4380 = vmatpush1.msra.mxu0 0.0
    %4381 = vmatprep.subr.mxu0 0.0
    %4382 = vmatpush1.msra.mxu0 0.0
    %4383 = vmatprep.subr.mxu0 0.0
    %4384 = vmatpush1.msra.mxu0 0.0
    %4385 = vmatprep.subr.mxu0 0.0
    %4386 = vmatpush1.msra.mxu0 0.0
    %4387 = vmatprep.subr.mxu0 0.0
    %4388 = vmatpush1.msra.mxu0 0.0
    %4389 = vmatprep.subr.mxu0 %v4280
    %4390 = vmatpush1.msra.mxu0 %v4279
    %4391 = vmatprep.subr.mxu0 0.0
    %4392 = vmatpush2.msra.mxu0 0.0
    %4393 = vmatprep.subr.mxu0 0.0
    %4394 = vmatpush2.msra.mxu0 0.0
    %4395 = vmatprep.subr.mxu0 0.0
    %4396 = vmatpush2.msra.mxu0 0.0
    %4397 = vmatprep.subr.mxu0 0.0
    %4398 = vmatpush2.msra.mxu0 0.0
    %4399 = vmatprep.subr.mxu0 0.0
    %4400 = vmatpush2.msra.mxu0 0.0
    %4401 = vmatprep.subr.mxu0 0.0
    %4402 = vmatpush2.msra.mxu0 0.0
    %4403 = vmatprep.subr.mxu0 0.0
    %4404 = vmatpush2.msra.mxu0 0.0
    %4405 = vmatprep.subr.mxu0 0.0
    %4406 = vmatpush2.msra.mxu0 0.0
    %4407 = vmatprep.subr.mxu0 0.0
    %4408 = vmatpush2.msra.mxu0 0.0
    %4409 = vmatprep.subr.mxu0 0.0
    %4410 = vmatpush2.msra.mxu0 0.0
    %4411 = vmatprep.subr.mxu0 0.0
    %4412 = vmatpush2.msra.mxu0 0.0
    %4413 = vmatprep.subr.mxu0 0.0
    %4414 = vmatpush2.msra.mxu0 0.0
    %4415 = vmatprep.subr.mxu0 0.0
    %4416 = vmatpush2.msra.mxu0 0.0
    %4417 = vmatprep.subr.mxu0 0.0
    %4418 = vmatpush2.msra.mxu0 0.0
    %4419 = vmatprep.subr.mxu0 0.0
    %4420 = vmatpush2.msra.mxu0 0.0
    %4421 = vmatprep.subr.mxu0 0.0
    %4422 = vmatpush2.msra.mxu0 0.0
    %4423 = vmatprep.mubr.f32.mxu0 0.0
    %4424 = vmatmul.mubr.f32.gmra.mxu0 %v4286
    %v4425 = vpop.f32.mrf.mxu0
    %v4426 = vadd.f32 0.0, %v4425
    %v4427 = vpop.f32.mrf.mxu0
    %v4428 = vadd.f32 0.0, %v4427
    %4429 = vdwg.mxu0
    %4430 = vmatprep.subr.mxu0 0.0
    %4431 = vmatpush1.msra.mxu0 0.0
    %4432 = vmatprep.subr.mxu0 0.0
    %4433 = vmatpush1.msra.mxu0 0.0
    %4434 = vmatprep.subr.mxu0 0.0
    %4435 = vmatpush1.msra.mxu0 0.0
    %4436 = vmatprep.subr.mxu0 0.0
    %4437 = vmatpush1.msra.mxu0 0.0
    %4438 = vmatprep.subr.mxu0 0.0
    %4439 = vmatpush1.msra.mxu0 0.0
    %4440 = vmatprep.subr.mxu0 0.0
    %4441 = vmatpush1.msra.mxu0 0.0
    %4442 = vmatprep.subr.mxu0 0.0
    %4443 = vmatpush1.msra.mxu0 0.0
    %4444 = vmatprep.subr.mxu0 0.0
    %4445 = vmatpush1.msra.mxu0 0.0
    %4446 = vmatprep.subr.mxu0 0.0
    %4447 = vmatpush1.msra.mxu0 0.0
    %4448 = vmatprep.subr.mxu0 0.0
    %4449 = vmatpush1.msra.mxu0 0.0
    %4450 = vmatprep.subr.mxu0 0.0
    %4451 = vmatpush1.msra.mxu0 0.0
    %4452 = vmatprep.subr.mxu0 0.0
    %4453 = vmatpush1.msra.mxu0 0.0
    %4454 = vmatprep.subr.mxu0 0.0
    %4455 = vmatpush1.msra.mxu0 0.0
    %4456 = vmatprep.subr.mxu0 0.0
    %4457 = vmatpush1.msra.mxu0 0.0
    %4458 = vmatprep.subr.mxu0 0.0
    %4459 = vmatpush1.msra.mxu0 0.0
    %4460 = vmatprep.subr.mxu0 %v4282
    %4461 = vmatpush1.msra.mxu0 %v4281
    %4462 = vmatprep.subr.mxu0 0.0
    %4463 = vmatpush2.msra.mxu0 0.0
    %4464 = vmatprep.subr.mxu0 0.0
    %4465 = vmatpush2.msra.mxu0 0.0
    %4466 = vmatprep.subr.mxu0 0.0
    %4467 = vmatpush2.msra.mxu0 0.0
    %4468 = vmatprep.subr.mxu0 0.0
    %4469 = vmatpush2.msra.mxu0 0.0
    %4470 = vmatprep.subr.mxu0 0.0
    %4471 = vmatpush2.msra.mxu0 0.0
    %4472 = vmatprep.subr.mxu0 0.0
    %4473 = vmatpush2.msra.mxu0 0.0
    %4474 = vmatprep.subr.mxu0 0.0
    %4475 = vmatpush2.msra.mxu0 0.0
    %4476 = vmatprep.subr.mxu0 0.0
    %4477 = vmatpush2.msra.mxu0 0.0
    %4478 = vmatprep.subr.mxu0 0.0
    %4479 = vmatpush2.msra.mxu0 0.0
    %4480 = vmatprep.subr.mxu0 0.0
    %4481 = vmatpush2.msra.mxu0 0.0
    %4482 = vmatprep.subr.mxu0 0.0
    %4483 = vmatpush2.msra.mxu0 0.0
    %4484 = vmatprep.subr.mxu0 0.0
    %4485 = vmatpush2.msra.mxu0 0.0
    %4486 = vmatprep.subr.mxu0 0.0
    %4487 = vmatpush2.msra.mxu0 0.0
    %4488 = vmatprep.subr.mxu0 0.0
    %4489 = vmatpush2.msra.mxu0 0.0
    %4490 = vmatprep.subr.mxu0 0.0
    %4491 = vmatpush2.msra.mxu0 0.0
    %4492 = vmatprep.subr.mxu0 0.0
    %4493 = vmatpush2.msra.mxu0 0.0
    %4494 = vmatprep.mubr.f32.mxu0 0.0
    %4495 = vmatmul.mubr.f32.gmra.mxu0 %v4286
    %v4496 = vpop.f32.mrf.mxu0
    %v4497 = vadd.f32 0.0, %v4496
    %v4498 = vpop.f32.mrf.mxu0
    %v4499 = vadd.f32 0.0, %v4498
    %4500 = vdwg.mxu0
    %4501 = vmatprep.subr.mxu0 0.0
    %4502 = vmatpush1.msra.mxu0 0.0
    %4503 = vmatprep.subr.mxu0 0.0
    %4504 = vmatpush1.msra.mxu0 0.0
    %4505 = vmatprep.subr.mxu0 0.0
    %4506 = vmatpush1.msra.mxu0 0.0
    %4507 = vmatprep.subr.mxu0 0.0
    %4508 = vmatpush1.msra.mxu0 0.0
    %4509 = vmatprep.subr.mxu0 0.0
    %4510 = vmatpush1.msra.mxu0 0.0
    %4511 = vmatprep.subr.mxu0 0.0
    %4512 = vmatpush1.msra.mxu0 0.0
    %4513 = vmatprep.subr.mxu0 0.0
    %4514 = vmatpush1.msra.mxu0 0.0
    %4515 = vmatprep.subr.mxu0 0.0
    %4516 = vmatpush1.msra.mxu0 0.0
    %4517 = vmatprep.subr.mxu0 0.0
    %4518 = vmatpush1.msra.mxu0 0.0
    %4519 = vmatprep.subr.mxu0 0.0
    %4520 = vmatpush1.msra.mxu0 0.0
    %4521 = vmatprep.subr.mxu0 0.0
    %4522 = vmatpush1.msra.mxu0 0.0
    %4523 = vmatprep.subr.mxu0 0.0
    %4524 = vmatpush1.msra.mxu0 0.0
    %4525 = vmatprep.subr.mxu0 0.0
    %4526 = vmatpush1.msra.mxu0 0.0
    %4527 = vmatprep.subr.mxu0 0.0
    %4528 = vmatpush1.msra.mxu0 0.0
    %4529 = vmatprep.subr.mxu0 0.0
    %4530 = vmatpush1.msra.mxu0 0.0
    %4531 = vmatprep.subr.mxu0 %v4284
    %4532 = vmatpush1.msra.mxu0 %v4283
    %4533 = vmatprep.subr.mxu0 0.0
    %4534 = vmatpush2.msra.mxu0 0.0
    %4535 = vmatprep.subr.mxu0 0.0
    %4536 = vmatpush2.msra.mxu0 0.0
    %4537 = vmatprep.subr.mxu0 0.0
    %4538 = vmatpush2.msra.mxu0 0.0
    %4539 = vmatprep.subr.mxu0 0.0
    %4540 = vmatpush2.msra.mxu0 0.0
    %4541 = vmatprep.subr.mxu0 0.0
    %4542 = vmatpush2.msra.mxu0 0.0
    %4543 = vmatprep.subr.mxu0 0.0
    %4544 = vmatpush2.msra.mxu0 0.0
    %4545 = vmatprep.subr.mxu0 0.0
    %4546 = vmatpush2.msra.mxu0 0.0
    %4547 = vmatprep.subr.mxu0 0.0
    %4548 = vmatpush2.msra.mxu0 0.0
    %4549 = vmatprep.subr.mxu0 0.0
    %4550 = vmatpush2.msra.mxu0 0.0
    %4551 = vmatprep.subr.mxu0 0.0
    %4552 = vmatpush2.msra.mxu0 0.0
    %4553 = vmatprep.subr.mxu0 0.0
    %4554 = vmatpush2.msra.mxu0 0.0
    %4555 = vmatprep.subr.mxu0 0.0
    %4556 = vmatpush2.msra.mxu0 0.0
    %4557 = vmatprep.subr.mxu0 0.0
    %4558 = vmatpush2.msra.mxu0 0.0
    %4559 = vmatprep.subr.mxu0 0.0
    %4560 = vmatpush2.msra.mxu0 0.0
    %4561 = vmatprep.subr.mxu0 0.0
    %4562 = vmatpush2.msra.mxu0 0.0
    %4563 = vmatprep.subr.mxu0 0.0
    %4564 = vmatpush2.msra.mxu0 0.0
    %4565 = vmatprep.mubr.f32.mxu0 0.0
    %4566 = vmatmul.mubr.f32.gmra.mxu0 %v4286
    %v4567 = vpop.f32.mrf.mxu0
    %v4568 = vadd.f32 0.0, %v4567
    %v4569 = vpop.f32.mrf.mxu0
    %v4570 = vadd.f32 0.0, %v4569
    %4571 = vdwg.mxu0
    %v4572 = vadd.f32 %v4268, %v4355
    %v4573 = vadd.f32 %v4269, %v4357
    %v4574 = vadd.f32 %v4270, %v4426
    %v4575 = vadd.f32 %v4271, %v4428
    %v4576 = vadd.f32 %v4272, %v4497
    %v4577 = vadd.f32 %v4273, %v4499
    %v4578 = vadd.f32 %v4274, %v4568
    %v4579 = vadd.f32 %v4275, %v4570
    %s4580 = scalar_lea.vmem [#allocation13], 832
    %v4581 = vld [vmem:[%s4580] sm:$0xff]
    %v4582 = vld [vmem:[%s4580 + $0x8] sm:$0xff]
    %v4583 = vld [vmem:[%s4580 + $0x10] sm:$0xff]
    %v4584 = vld [vmem:[%s4580 + $0x18] sm:$0xff]
    %v4585 = vld [vmem:[%s4580 + $0x20] sm:$0xff]
    %v4586 = vld [vmem:[%s4580 + $0x28] sm:$0xff]
    %v4587 = vld [vmem:[%s4580 + $0x30] sm:$0xff]
    %v4588 = vld [vmem:[%s4580 + $0x38] sm:$0xff]
    %v4589 = vrot.slane %v643, 5
    %v4590 = vsel %vm663, %v4589, 0
    %4592 = vmatprep.subr.mxu0 0.0
    %4593 = vmatpush1.msra.mxu0 0.0
    %4594 = vmatprep.subr.mxu0 0.0
    %4595 = vmatpush1.msra.mxu0 0.0
    %4596 = vmatprep.subr.mxu0 0.0
    %4597 = vmatpush1.msra.mxu0 0.0
    %4598 = vmatprep.subr.mxu0 0.0
    %4599 = vmatpush1.msra.mxu0 0.0
    %4600 = vmatprep.subr.mxu0 0.0
    %4601 = vmatpush1.msra.mxu0 0.0
    %4602 = vmatprep.subr.mxu0 0.0
    %4603 = vmatpush1.msra.mxu0 0.0
    %4604 = vmatprep.subr.mxu0 0.0
    %4605 = vmatpush1.msra.mxu0 0.0
    %4606 = vmatprep.subr.mxu0 0.0
    %4607 = vmatpush1.msra.mxu0 0.0
    %4608 = vmatprep.subr.mxu0 0.0
    %4609 = vmatpush1.msra.mxu0 0.0
    %4610 = vmatprep.subr.mxu0 0.0
    %4611 = vmatpush1.msra.mxu0 0.0
    %4612 = vmatprep.subr.mxu0 0.0
    %4613 = vmatpush1.msra.mxu0 0.0
    %4614 = vmatprep.subr.mxu0 0.0
    %4615 = vmatpush1.msra.mxu0 0.0
    %4616 = vmatprep.subr.mxu0 0.0
    %4617 = vmatpush1.msra.mxu0 0.0
    %4618 = vmatprep.subr.mxu0 0.0
    %4619 = vmatpush1.msra.mxu0 0.0
    %4620 = vmatprep.subr.mxu0 0.0
    %4621 = vmatpush1.msra.mxu0 0.0
    %4622 = vmatprep.subr.mxu0 %v4582
    %4623 = vmatpush1.msra.mxu0 %v4581
    %4624 = vmatprep.subr.mxu0 0.0
    %4625 = vmatpush2.msra.mxu0 0.0
    %4626 = vmatprep.subr.mxu0 0.0
    %4627 = vmatpush2.msra.mxu0 0.0
    %4628 = vmatprep.subr.mxu0 0.0
    %4629 = vmatpush2.msra.mxu0 0.0
    %4630 = vmatprep.subr.mxu0 0.0
    %4631 = vmatpush2.msra.mxu0 0.0
    %4632 = vmatprep.subr.mxu0 0.0
    %4633 = vmatpush2.msra.mxu0 0.0
    %4634 = vmatprep.subr.mxu0 0.0
    %4635 = vmatpush2.msra.mxu0 0.0
    %4636 = vmatprep.subr.mxu0 0.0
    %4637 = vmatpush2.msra.mxu0 0.0
    %4638 = vmatprep.subr.mxu0 0.0
    %4639 = vmatpush2.msra.mxu0 0.0
    %4640 = vmatprep.subr.mxu0 0.0
    %4641 = vmatpush2.msra.mxu0 0.0
    %4642 = vmatprep.subr.mxu0 0.0
    %4643 = vmatpush2.msra.mxu0 0.0
    %4644 = vmatprep.subr.mxu0 0.0
    %4645 = vmatpush2.msra.mxu0 0.0
    %4646 = vmatprep.subr.mxu0 0.0
    %4647 = vmatpush2.msra.mxu0 0.0
    %4648 = vmatprep.subr.mxu0 0.0
    %4649 = vmatpush2.msra.mxu0 0.0
    %4650 = vmatprep.subr.mxu0 0.0
    %4651 = vmatpush2.msra.mxu0 0.0
    %4652 = vmatprep.subr.mxu0 0.0
    %4653 = vmatpush2.msra.mxu0 0.0
    %4654 = vmatprep.subr.mxu0 0.0
    %4655 = vmatpush2.msra.mxu0 0.0
    %4656 = vmatprep.mubr.f32.mxu0 0.0
    %4657 = vmatmul.mubr.f32.gmra.mxu0 %v4590
    %v4658 = vpop.f32.mrf.mxu0
    %v4659 = vadd.f32 0.0, %v4658
    %v4660 = vpop.f32.mrf.mxu0
    %v4661 = vadd.f32 0.0, %v4660
    %4662 = vdwg.mxu0
    %4663 = vmatprep.subr.mxu0 0.0
    %4664 = vmatpush1.msra.mxu0 0.0
    %4665 = vmatprep.subr.mxu0 0.0
    %4666 = vmatpush1.msra.mxu0 0.0
    %4667 = vmatprep.subr.mxu0 0.0
    %4668 = vmatpush1.msra.mxu0 0.0
    %4669 = vmatprep.subr.mxu0 0.0
    %4670 = vmatpush1.msra.mxu0 0.0
    %4671 = vmatprep.subr.mxu0 0.0
    %4672 = vmatpush1.msra.mxu0 0.0
    %4673 = vmatprep.subr.mxu0 0.0
    %4674 = vmatpush1.msra.mxu0 0.0
    %4675 = vmatprep.subr.mxu0 0.0
    %4676 = vmatpush1.msra.mxu0 0.0
    %4677 = vmatprep.subr.mxu0 0.0
    %4678 = vmatpush1.msra.mxu0 0.0
    %4679 = vmatprep.subr.mxu0 0.0
    %4680 = vmatpush1.msra.mxu0 0.0
    %4681 = vmatprep.subr.mxu0 0.0
    %4682 = vmatpush1.msra.mxu0 0.0
    %4683 = vmatprep.subr.mxu0 0.0
    %4684 = vmatpush1.msra.mxu0 0.0
    %4685 = vmatprep.subr.mxu0 0.0
    %4686 = vmatpush1.msra.mxu0 0.0
    %4687 = vmatprep.subr.mxu0 0.0
    %4688 = vmatpush1.msra.mxu0 0.0
    %4689 = vmatprep.subr.mxu0 0.0
    %4690 = vmatpush1.msra.mxu0 0.0
    %4691 = vmatprep.subr.mxu0 0.0
    %4692 = vmatpush1.msra.mxu0 0.0
    %4693 = vmatprep.subr.mxu0 %v4584
    %4694 = vmatpush1.msra.mxu0 %v4583
    %4695 = vmatprep.subr.mxu0 0.0
    %4696 = vmatpush2.msra.mxu0 0.0
    %4697 = vmatprep.subr.mxu0 0.0
    %4698 = vmatpush2.msra.mxu0 0.0
    %4699 = vmatprep.subr.mxu0 0.0
    %4700 = vmatpush2.msra.mxu0 0.0
    %4701 = vmatprep.subr.mxu0 0.0
    %4702 = vmatpush2.msra.mxu0 0.0
    %4703 = vmatprep.subr.mxu0 0.0
    %4704 = vmatpush2.msra.mxu0 0.0
    %4705 = vmatprep.subr.mxu0 0.0
    %4706 = vmatpush2.msra.mxu0 0.0
    %4707 = vmatprep.subr.mxu0 0.0
    %4708 = vmatpush2.msra.mxu0 0.0
    %4709 = vmatprep.subr.mxu0 0.0
    %4710 = vmatpush2.msra.mxu0 0.0
    %4711 = vmatprep.subr.mxu0 0.0
    %4712 = vmatpush2.msra.mxu0 0.0
    %4713 = vmatprep.subr.mxu0 0.0
    %4714 = vmatpush2.msra.mxu0 0.0
    %4715 = vmatprep.subr.mxu0 0.0
    %4716 = vmatpush2.msra.mxu0 0.0
    %4717 = vmatprep.subr.mxu0 0.0
    %4718 = vmatpush2.msra.mxu0 0.0
    %4719 = vmatprep.subr.mxu0 0.0
    %4720 = vmatpush2.msra.mxu0 0.0
    %4721 = vmatprep.subr.mxu0 0.0
    %4722 = vmatpush2.msra.mxu0 0.0
    %4723 = vmatprep.subr.mxu0 0.0
    %4724 = vmatpush2.msra.mxu0 0.0
    %4725 = vmatprep.subr.mxu0 0.0
    %4726 = vmatpush2.msra.mxu0 0.0
    %4727 = vmatprep.mubr.f32.mxu0 0.0
    %4728 = vmatmul.mubr.f32.gmra.mxu0 %v4590
    %v4729 = vpop.f32.mrf.mxu0
    %v4730 = vadd.f32 0.0, %v4729
    %v4731 = vpop.f32.mrf.mxu0
    %v4732 = vadd.f32 0.0, %v4731
    %4733 = vdwg.mxu0
    %4734 = vmatprep.subr.mxu0 0.0
    %4735 = vmatpush1.msra.mxu0 0.0
    %4736 = vmatprep.subr.mxu0 0.0
    %4737 = vmatpush1.msra.mxu0 0.0
    %4738 = vmatprep.subr.mxu0 0.0
    %4739 = vmatpush1.msra.mxu0 0.0
    %4740 = vmatprep.subr.mxu0 0.0
    %4741 = vmatpush1.msra.mxu0 0.0
    %4742 = vmatprep.subr.mxu0 0.0
    %4743 = vmatpush1.msra.mxu0 0.0
    %4744 = vmatprep.subr.mxu0 0.0
    %4745 = vmatpush1.msra.mxu0 0.0
    %4746 = vmatprep.subr.mxu0 0.0
    %4747 = vmatpush1.msra.mxu0 0.0
    %4748 = vmatprep.subr.mxu0 0.0
    %4749 = vmatpush1.msra.mxu0 0.0
    %4750 = vmatprep.subr.mxu0 0.0
    %4751 = vmatpush1.msra.mxu0 0.0
    %4752 = vmatprep.subr.mxu0 0.0
    %4753 = vmatpush1.msra.mxu0 0.0
    %4754 = vmatprep.subr.mxu0 0.0
    %4755 = vmatpush1.msra.mxu0 0.0
    %4756 = vmatprep.subr.mxu0 0.0
    %4757 = vmatpush1.msra.mxu0 0.0
    %4758 = vmatprep.subr.mxu0 0.0
    %4759 = vmatpush1.msra.mxu0 0.0
    %4760 = vmatprep.subr.mxu0 0.0
    %4761 = vmatpush1.msra.mxu0 0.0
    %4762 = vmatprep.subr.mxu0 0.0
    %4763 = vmatpush1.msra.mxu0 0.0
    %4764 = vmatprep.subr.mxu0 %v4586
    %4765 = vmatpush1.msra.mxu0 %v4585
    %4766 = vmatprep.subr.mxu0 0.0
    %4767 = vmatpush2.msra.mxu0 0.0
    %4768 = vmatprep.subr.mxu0 0.0
    %4769 = vmatpush2.msra.mxu0 0.0
    %4770 = vmatprep.subr.mxu0 0.0
    %4771 = vmatpush2.msra.mxu0 0.0
    %4772 = vmatprep.subr.mxu0 0.0
    %4773 = vmatpush2.msra.mxu0 0.0
    %4774 = vmatprep.subr.mxu0 0.0
    %4775 = vmatpush2.msra.mxu0 0.0
    %4776 = vmatprep.subr.mxu0 0.0
    %4777 = vmatpush2.msra.mxu0 0.0
    %4778 = vmatprep.subr.mxu0 0.0
    %4779 = vmatpush2.msra.mxu0 0.0
    %4780 = vmatprep.subr.mxu0 0.0
    %4781 = vmatpush2.msra.mxu0 0.0
    %4782 = vmatprep.subr.mxu0 0.0
    %4783 = vmatpush2.msra.mxu0 0.0
    %4784 = vmatprep.subr.mxu0 0.0
    %4785 = vmatpush2.msra.mxu0 0.0
    %4786 = vmatprep.subr.mxu0 0.0
    %4787 = vmatpush2.msra.mxu0 0.0
    %4788 = vmatprep.subr.mxu0 0.0
    %4789 = vmatpush2.msra.mxu0 0.0
    %4790 = vmatprep.subr.mxu0 0.0
    %4791 = vmatpush2.msra.mxu0 0.0
    %4792 = vmatprep.subr.mxu0 0.0
    %4793 = vmatpush2.msra.mxu0 0.0
    %4794 = vmatprep.subr.mxu0 0.0
    %4795 = vmatpush2.msra.mxu0 0.0
    %4796 = vmatprep.subr.mxu0 0.0
    %4797 = vmatpush2.msra.mxu0 0.0
    %4798 = vmatprep.mubr.f32.mxu0 0.0
    %4799 = vmatmul.mubr.f32.gmra.mxu0 %v4590
    %v4800 = vpop.f32.mrf.mxu0
    %v4801 = vadd.f32 0.0, %v4800
    %v4802 = vpop.f32.mrf.mxu0
    %v4803 = vadd.f32 0.0, %v4802
    %4804 = vdwg.mxu0
    %4805 = vmatprep.subr.mxu0 0.0
    %4806 = vmatpush1.msra.mxu0 0.0
    %4807 = vmatprep.subr.mxu0 0.0
    %4808 = vmatpush1.msra.mxu0 0.0
    %4809 = vmatprep.subr.mxu0 0.0
    %4810 = vmatpush1.msra.mxu0 0.0
    %4811 = vmatprep.subr.mxu0 0.0
    %4812 = vmatpush1.msra.mxu0 0.0
    %4813 = vmatprep.subr.mxu0 0.0
    %4814 = vmatpush1.msra.mxu0 0.0
    %4815 = vmatprep.subr.mxu0 0.0
    %4816 = vmatpush1.msra.mxu0 0.0
    %4817 = vmatprep.subr.mxu0 0.0
    %4818 = vmatpush1.msra.mxu0 0.0
    %4819 = vmatprep.subr.mxu0 0.0
    %4820 = vmatpush1.msra.mxu0 0.0
    %4821 = vmatprep.subr.mxu0 0.0
    %4822 = vmatpush1.msra.mxu0 0.0
    %4823 = vmatprep.subr.mxu0 0.0
    %4824 = vmatpush1.msra.mxu0 0.0
    %4825 = vmatprep.subr.mxu0 0.0
    %4826 = vmatpush1.msra.mxu0 0.0
    %4827 = vmatprep.subr.mxu0 0.0
    %4828 = vmatpush1.msra.mxu0 0.0
    %4829 = vmatprep.subr.mxu0 0.0
    %4830 = vmatpush1.msra.mxu0 0.0
    %4831 = vmatprep.subr.mxu0 0.0
    %4832 = vmatpush1.msra.mxu0 0.0
    %4833 = vmatprep.subr.mxu0 0.0
    %4834 = vmatpush1.msra.mxu0 0.0
    %4835 = vmatprep.subr.mxu0 %v4588
    %4836 = vmatpush1.msra.mxu0 %v4587
    %4837 = vmatprep.subr.mxu0 0.0
    %4838 = vmatpush2.msra.mxu0 0.0
    %4839 = vmatprep.subr.mxu0 0.0
    %4840 = vmatpush2.msra.mxu0 0.0
    %4841 = vmatprep.subr.mxu0 0.0
    %4842 = vmatpush2.msra.mxu0 0.0
    %4843 = vmatprep.subr.mxu0 0.0
    %4844 = vmatpush2.msra.mxu0 0.0
    %4845 = vmatprep.subr.mxu0 0.0
    %4846 = vmatpush2.msra.mxu0 0.0
    %4847 = vmatprep.subr.mxu0 0.0
    %4848 = vmatpush2.msra.mxu0 0.0
    %4849 = vmatprep.subr.mxu0 0.0
    %4850 = vmatpush2.msra.mxu0 0.0
    %4851 = vmatprep.subr.mxu0 0.0
    %4852 = vmatpush2.msra.mxu0 0.0
    %4853 = vmatprep.subr.mxu0 0.0
    %4854 = vmatpush2.msra.mxu0 0.0
    %4855 = vmatprep.subr.mxu0 0.0
    %4856 = vmatpush2.msra.mxu0 0.0
    %4857 = vmatprep.subr.mxu0 0.0
    %4858 = vmatpush2.msra.mxu0 0.0
    %4859 = vmatprep.subr.mxu0 0.0
    %4860 = vmatpush2.msra.mxu0 0.0
    %4861 = vmatprep.subr.mxu0 0.0
    %4862 = vmatpush2.msra.mxu0 0.0
    %4863 = vmatprep.subr.mxu0 0.0
    %4864 = vmatpush2.msra.mxu0 0.0
    %4865 = vmatprep.subr.mxu0 0.0
    %4866 = vmatpush2.msra.mxu0 0.0
    %4867 = vmatprep.subr.mxu0 0.0
    %4868 = vmatpush2.msra.mxu0 0.0
    %4869 = vmatprep.mubr.f32.mxu0 0.0
    %4870 = vmatmul.mubr.f32.gmra.mxu0 %v4590
    %v4871 = vpop.f32.mrf.mxu0
    %v4872 = vadd.f32 0.0, %v4871
    %v4873 = vpop.f32.mrf.mxu0
    %v4874 = vadd.f32 0.0, %v4873
    %4875 = vdwg.mxu0
    %v4876 = vadd.f32 %v4572, %v4659
    %v4877 = vadd.f32 %v4573, %v4661
    %v4878 = vadd.f32 %v4574, %v4730
    %v4879 = vadd.f32 %v4575, %v4732
    %v4880 = vadd.f32 %v4576, %v4801
    %v4881 = vadd.f32 %v4577, %v4803
    %v4882 = vadd.f32 %v4578, %v4872
    %v4883 = vadd.f32 %v4579, %v4874
    %s4884 = scalar_lea.vmem [#allocation13], 896
    %v4885 = vld [vmem:[%s4884] sm:$0xff]
    %v4886 = vld [vmem:[%s4884 + $0x8] sm:$0xff]
    %v4887 = vld [vmem:[%s4884 + $0x10] sm:$0xff]
    %v4888 = vld [vmem:[%s4884 + $0x18] sm:$0xff]
    %v4889 = vld [vmem:[%s4884 + $0x20] sm:$0xff]
    %v4890 = vld [vmem:[%s4884 + $0x28] sm:$0xff]
    %v4891 = vld [vmem:[%s4884 + $0x30] sm:$0xff]
    %v4892 = vld [vmem:[%s4884 + $0x38] sm:$0xff]
    %v4893 = vrot.slane %v643, 6
    %v4894 = vsel %vm663, %v4893, 0
    %4896 = vmatprep.subr.mxu0 0.0
    %4897 = vmatpush1.msra.mxu0 0.0
    %4898 = vmatprep.subr.mxu0 0.0
    %4899 = vmatpush1.msra.mxu0 0.0
    %4900 = vmatprep.subr.mxu0 0.0
    %4901 = vmatpush1.msra.mxu0 0.0
    %4902 = vmatprep.subr.mxu0 0.0
    %4903 = vmatpush1.msra.mxu0 0.0
    %4904 = vmatprep.subr.mxu0 0.0
    %4905 = vmatpush1.msra.mxu0 0.0
    %4906 = vmatprep.subr.mxu0 0.0
    %4907 = vmatpush1.msra.mxu0 0.0
    %4908 = vmatprep.subr.mxu0 0.0
    %4909 = vmatpush1.msra.mxu0 0.0
    %4910 = vmatprep.subr.mxu0 0.0
    %4911 = vmatpush1.msra.mxu0 0.0
    %4912 = vmatprep.subr.mxu0 0.0
    %4913 = vmatpush1.msra.mxu0 0.0
    %4914 = vmatprep.subr.mxu0 0.0
    %4915 = vmatpush1.msra.mxu0 0.0
    %4916 = vmatprep.subr.mxu0 0.0
    %4917 = vmatpush1.msra.mxu0 0.0
    %4918 = vmatprep.subr.mxu0 0.0
    %4919 = vmatpush1.msra.mxu0 0.0
    %4920 = vmatprep.subr.mxu0 0.0
    %4921 = vmatpush1.msra.mxu0 0.0
    %4922 = vmatprep.subr.mxu0 0.0
    %4923 = vmatpush1.msra.mxu0 0.0
    %4924 = vmatprep.subr.mxu0 0.0
    %4925 = vmatpush1.msra.mxu0 0.0
    %4926 = vmatprep.subr.mxu0 %v4886
    %4927 = vmatpush1.msra.mxu0 %v4885
    %4928 = vmatprep.subr.mxu0 0.0
    %4929 = vmatpush2.msra.mxu0 0.0
    %4930 = vmatprep.subr.mxu0 0.0
    %4931 = vmatpush2.msra.mxu0 0.0
    %4932 = vmatprep.subr.mxu0 0.0
    %4933 = vmatpush2.msra.mxu0 0.0
    %4934 = vmatprep.subr.mxu0 0.0
    %4935 = vmatpush2.msra.mxu0 0.0
    %4936 = vmatprep.subr.mxu0 0.0
    %4937 = vmatpush2.msra.mxu0 0.0
    %4938 = vmatprep.subr.mxu0 0.0
    %4939 = vmatpush2.msra.mxu0 0.0
    %4940 = vmatprep.subr.mxu0 0.0
    %4941 = vmatpush2.msra.mxu0 0.0
    %4942 = vmatprep.subr.mxu0 0.0
    %4943 = vmatpush2.msra.mxu0 0.0
    %4944 = vmatprep.subr.mxu0 0.0
    %4945 = vmatpush2.msra.mxu0 0.0
    %4946 = vmatprep.subr.mxu0 0.0
    %4947 = vmatpush2.msra.mxu0 0.0
    %4948 = vmatprep.subr.mxu0 0.0
    %4949 = vmatpush2.msra.mxu0 0.0
    %4950 = vmatprep.subr.mxu0 0.0
    %4951 = vmatpush2.msra.mxu0 0.0
    %4952 = vmatprep.subr.mxu0 0.0
    %4953 = vmatpush2.msra.mxu0 0.0
    %4954 = vmatprep.subr.mxu0 0.0
    %4955 = vmatpush2.msra.mxu0 0.0
    %4956 = vmatprep.subr.mxu0 0.0
    %4957 = vmatpush2.msra.mxu0 0.0
    %4958 = vmatprep.subr.mxu0 0.0
    %4959 = vmatpush2.msra.mxu0 0.0
    %4960 = vmatprep.mubr.f32.mxu0 0.0
    %4961 = vmatmul.mubr.f32.gmra.mxu0 %v4894
    %v4962 = vpop.f32.mrf.mxu0
    %v4963 = vadd.f32 0.0, %v4962
    %v4964 = vpop.f32.mrf.mxu0
    %v4965 = vadd.f32 0.0, %v4964
    %4966 = vdwg.mxu0
    %4967 = vmatprep.subr.mxu0 0.0
    %4968 = vmatpush1.msra.mxu0 0.0
    %4969 = vmatprep.subr.mxu0 0.0
    %4970 = vmatpush1.msra.mxu0 0.0
    %4971 = vmatprep.subr.mxu0 0.0
    %4972 = vmatpush1.msra.mxu0 0.0
    %4973 = vmatprep.subr.mxu0 0.0
    %4974 = vmatpush1.msra.mxu0 0.0
    %4975 = vmatprep.subr.mxu0 0.0
    %4976 = vmatpush1.msra.mxu0 0.0
    %4977 = vmatprep.subr.mxu0 0.0
    %4978 = vmatpush1.msra.mxu0 0.0
    %4979 = vmatprep.subr.mxu0 0.0
    %4980 = vmatpush1.msra.mxu0 0.0
    %4981 = vmatprep.subr.mxu0 0.0
    %4982 = vmatpush1.msra.mxu0 0.0
    %4983 = vmatprep.subr.mxu0 0.0
    %4984 = vmatpush1.msra.mxu0 0.0
    %4985 = vmatprep.subr.mxu0 0.0
    %4986 = vmatpush1.msra.mxu0 0.0
    %4987 = vmatprep.subr.mxu0 0.0
    %4988 = vmatpush1.msra.mxu0 0.0
    %4989 = vmatprep.subr.mxu0 0.0
    %4990 = vmatpush1.msra.mxu0 0.0
    %4991 = vmatprep.subr.mxu0 0.0
    %4992 = vmatpush1.msra.mxu0 0.0
    %4993 = vmatprep.subr.mxu0 0.0
    %4994 = vmatpush1.msra.mxu0 0.0
    %4995 = vmatprep.subr.mxu0 0.0
    %4996 = vmatpush1.msra.mxu0 0.0
    %4997 = vmatprep.subr.mxu0 %v4888
    %4998 = vmatpush1.msra.mxu0 %v4887
    %4999 = vmatprep.subr.mxu0 0.0
    %5000 = vmatpush2.msra.mxu0 0.0
    %5001 = vmatprep.subr.mxu0 0.0
    %5002 = vmatpush2.msra.mxu0 0.0
    %5003 = vmatprep.subr.mxu0 0.0
    %5004 = vmatpush2.msra.mxu0 0.0
    %5005 = vmatprep.subr.mxu0 0.0
    %5006 = vmatpush2.msra.mxu0 0.0
    %5007 = vmatprep.subr.mxu0 0.0
    %5008 = vmatpush2.msra.mxu0 0.0
    %5009 = vmatprep.subr.mxu0 0.0
    %5010 = vmatpush2.msra.mxu0 0.0
    %5011 = vmatprep.subr.mxu0 0.0
    %5012 = vmatpush2.msra.mxu0 0.0
    %5013 = vmatprep.subr.mxu0 0.0
    %5014 = vmatpush2.msra.mxu0 0.0
    %5015 = vmatprep.subr.mxu0 0.0
    %5016 = vmatpush2.msra.mxu0 0.0
    %5017 = vmatprep.subr.mxu0 0.0
    %5018 = vmatpush2.msra.mxu0 0.0
    %5019 = vmatprep.subr.mxu0 0.0
    %5020 = vmatpush2.msra.mxu0 0.0
    %5021 = vmatprep.subr.mxu0 0.0
    %5022 = vmatpush2.msra.mxu0 0.0
    %5023 = vmatprep.subr.mxu0 0.0
    %5024 = vmatpush2.msra.mxu0 0.0
    %5025 = vmatprep.subr.mxu0 0.0
    %5026 = vmatpush2.msra.mxu0 0.0
    %5027 = vmatprep.subr.mxu0 0.0
    %5028 = vmatpush2.msra.mxu0 0.0
    %5029 = vmatprep.subr.mxu0 0.0
    %5030 = vmatpush2.msra.mxu0 0.0
    %5031 = vmatprep.mubr.f32.mxu0 0.0
    %5032 = vmatmul.mubr.f32.gmra.mxu0 %v4894
    %v5033 = vpop.f32.mrf.mxu0
    %v5034 = vadd.f32 0.0, %v5033
    %v5035 = vpop.f32.mrf.mxu0
    %v5036 = vadd.f32 0.0, %v5035
    %5037 = vdwg.mxu0
    %5038 = vmatprep.subr.mxu0 0.0
    %5039 = vmatpush1.msra.mxu0 0.0
    %5040 = vmatprep.subr.mxu0 0.0
    %5041 = vmatpush1.msra.mxu0 0.0
    %5042 = vmatprep.subr.mxu0 0.0
    %5043 = vmatpush1.msra.mxu0 0.0
    %5044 = vmatprep.subr.mxu0 0.0
    %5045 = vmatpush1.msra.mxu0 0.0
    %5046 = vmatprep.subr.mxu0 0.0
    %5047 = vmatpush1.msra.mxu0 0.0
    %5048 = vmatprep.subr.mxu0 0.0
    %5049 = vmatpush1.msra.mxu0 0.0
    %5050 = vmatprep.subr.mxu0 0.0
    %5051 = vmatpush1.msra.mxu0 0.0
    %5052 = vmatprep.subr.mxu0 0.0
    %5053 = vmatpush1.msra.mxu0 0.0
    %5054 = vmatprep.subr.mxu0 0.0
    %5055 = vmatpush1.msra.mxu0 0.0
    %5056 = vmatprep.subr.mxu0 0.0
    %5057 = vmatpush1.msra.mxu0 0.0
    %5058 = vmatprep.subr.mxu0 0.0
    %5059 = vmatpush1.msra.mxu0 0.0
    %5060 = vmatprep.subr.mxu0 0.0
    %5061 = vmatpush1.msra.mxu0 0.0
    %5062 = vmatprep.subr.mxu0 0.0
    %5063 = vmatpush1.msra.mxu0 0.0
    %5064 = vmatprep.subr.mxu0 0.0
    %5065 = vmatpush1.msra.mxu0 0.0
    %5066 = vmatprep.subr.mxu0 0.0
    %5067 = vmatpush1.msra.mxu0 0.0
    %5068 = vmatprep.subr.mxu0 %v4890
    %5069 = vmatpush1.msra.mxu0 %v4889
    %5070 = vmatprep.subr.mxu0 0.0
    %5071 = vmatpush2.msra.mxu0 0.0
    %5072 = vmatprep.subr.mxu0 0.0
    %5073 = vmatpush2.msra.mxu0 0.0
    %5074 = vmatprep.subr.mxu0 0.0
    %5075 = vmatpush2.msra.mxu0 0.0
    %5076 = vmatprep.subr.mxu0 0.0
    %5077 = vmatpush2.msra.mxu0 0.0
    %5078 = vmatprep.subr.mxu0 0.0
    %5079 = vmatpush2.msra.mxu0 0.0
    %5080 = vmatprep.subr.mxu0 0.0
    %5081 = vmatpush2.msra.mxu0 0.0
    %5082 = vmatprep.subr.mxu0 0.0
    %5083 = vmatpush2.msra.mxu0 0.0
    %5084 = vmatprep.subr.mxu0 0.0
    %5085 = vmatpush2.msra.mxu0 0.0
    %5086 = vmatprep.subr.mxu0 0.0
    %5087 = vmatpush2.msra.mxu0 0.0
    %5088 = vmatprep.subr.mxu0 0.0
    %5089 = vmatpush2.msra.mxu0 0.0
    %5090 = vmatprep.subr.mxu0 0.0
    %5091 = vmatpush2.msra.mxu0 0.0
    %5092 = vmatprep.subr.mxu0 0.0
    %5093 = vmatpush2.msra.mxu0 0.0
    %5094 = vmatprep.subr.mxu0 0.0
    %5095 = vmatpush2.msra.mxu0 0.0
    %5096 = vmatprep.subr.mxu0 0.0
    %5097 = vmatpush2.msra.mxu0 0.0
    %5098 = vmatprep.subr.mxu0 0.0
    %5099 = vmatpush2.msra.mxu0 0.0
    %5100 = vmatprep.subr.mxu0 0.0
    %5101 = vmatpush2.msra.mxu0 0.0
    %5102 = vmatprep.mubr.f32.mxu0 0.0
    %5103 = vmatmul.mubr.f32.gmra.mxu0 %v4894
    %v5104 = vpop.f32.mrf.mxu0
    %v5105 = vadd.f32 0.0, %v5104
    %v5106 = vpop.f32.mrf.mxu0
    %v5107 = vadd.f32 0.0, %v5106
    %5108 = vdwg.mxu0
    %5109 = vmatprep.subr.mxu0 0.0
    %5110 = vmatpush1.msra.mxu0 0.0
    %5111 = vmatprep.subr.mxu0 0.0
    %5112 = vmatpush1.msra.mxu0 0.0
    %5113 = vmatprep.subr.mxu0 0.0
    %5114 = vmatpush1.msra.mxu0 0.0
    %5115 = vmatprep.subr.mxu0 0.0
    %5116 = vmatpush1.msra.mxu0 0.0
    %5117 = vmatprep.subr.mxu0 0.0
    %5118 = vmatpush1.msra.mxu0 0.0
    %5119 = vmatprep.subr.mxu0 0.0
    %5120 = vmatpush1.msra.mxu0 0.0
    %5121 = vmatprep.subr.mxu0 0.0
    %5122 = vmatpush1.msra.mxu0 0.0
    %5123 = vmatprep.subr.mxu0 0.0
    %5124 = vmatpush1.msra.mxu0 0.0
    %5125 = vmatprep.subr.mxu0 0.0
    %5126 = vmatpush1.msra.mxu0 0.0
    %5127 = vmatprep.subr.mxu0 0.0
    %5128 = vmatpush1.msra.mxu0 0.0
    %5129 = vmatprep.subr.mxu0 0.0
    %5130 = vmatpush1.msra.mxu0 0.0
    %5131 = vmatprep.subr.mxu0 0.0
    %5132 = vmatpush1.msra.mxu0 0.0
    %5133 = vmatprep.subr.mxu0 0.0
    %5134 = vmatpush1.msra.mxu0 0.0
    %5135 = vmatprep.subr.mxu0 0.0
    %5136 = vmatpush1.msra.mxu0 0.0
    %5137 = vmatprep.subr.mxu0 0.0
    %5138 = vmatpush1.msra.mxu0 0.0
    %5139 = vmatprep.subr.mxu0 %v4892
    %5140 = vmatpush1.msra.mxu0 %v4891
    %5141 = vmatprep.subr.mxu0 0.0
    %5142 = vmatpush2.msra.mxu0 0.0
    %5143 = vmatprep.subr.mxu0 0.0
    %5144 = vmatpush2.msra.mxu0 0.0
    %5145 = vmatprep.subr.mxu0 0.0
    %5146 = vmatpush2.msra.mxu0 0.0
    %5147 = vmatprep.subr.mxu0 0.0
    %5148 = vmatpush2.msra.mxu0 0.0
    %5149 = vmatprep.subr.mxu0 0.0
    %5150 = vmatpush2.msra.mxu0 0.0
    %5151 = vmatprep.subr.mxu0 0.0
    %5152 = vmatpush2.msra.mxu0 0.0
    %5153 = vmatprep.subr.mxu0 0.0
    %5154 = vmatpush2.msra.mxu0 0.0
    %5155 = vmatprep.subr.mxu0 0.0
    %5156 = vmatpush2.msra.mxu0 0.0
    %5157 = vmatprep.subr.mxu0 0.0
    %5158 = vmatpush2.msra.mxu0 0.0
    %5159 = vmatprep.subr.mxu0 0.0
    %5160 = vmatpush2.msra.mxu0 0.0
    %5161 = vmatprep.subr.mxu0 0.0
    %5162 = vmatpush2.msra.mxu0 0.0
    %5163 = vmatprep.subr.mxu0 0.0
    %5164 = vmatpush2.msra.mxu0 0.0
    %5165 = vmatprep.subr.mxu0 0.0
    %5166 = vmatpush2.msra.mxu0 0.0
    %5167 = vmatprep.subr.mxu0 0.0
    %5168 = vmatpush2.msra.mxu0 0.0
    %5169 = vmatprep.subr.mxu0 0.0
    %5170 = vmatpush2.msra.mxu0 0.0
    %5171 = vmatprep.subr.mxu0 0.0
    %5172 = vmatpush2.msra.mxu0 0.0
    %5173 = vmatprep.mubr.f32.mxu0 0.0
    %5174 = vmatmul.mubr.f32.gmra.mxu0 %v4894
    %v5175 = vpop.f32.mrf.mxu0
    %v5176 = vadd.f32 0.0, %v5175
    %v5177 = vpop.f32.mrf.mxu0
    %v5178 = vadd.f32 0.0, %v5177
    %5179 = vdwg.mxu0
    %v5180 = vadd.f32 %v4876, %v4963
    %v5181 = vadd.f32 %v4877, %v4965
    %v5182 = vadd.f32 %v4878, %v5034
    %v5183 = vadd.f32 %v4879, %v5036
    %v5184 = vadd.f32 %v4880, %v5105
    %v5185 = vadd.f32 %v4881, %v5107
    %v5186 = vadd.f32 %v4882, %v5176
    %v5187 = vadd.f32 %v4883, %v5178
    %s5188 = scalar_lea.vmem [#allocation13], 960
    %v5189 = vld [vmem:[%s5188] sm:$0xff]
    %v5190 = vld [vmem:[%s5188 + $0x8] sm:$0xff]
    %v5191 = vld [vmem:[%s5188 + $0x10] sm:$0xff]
    %v5192 = vld [vmem:[%s5188 + $0x18] sm:$0xff]
    %v5193 = vld [vmem:[%s5188 + $0x20] sm:$0xff]
    %v5194 = vld [vmem:[%s5188 + $0x28] sm:$0xff]
    %v5195 = vld [vmem:[%s5188 + $0x30] sm:$0xff]
    %v5196 = vld [vmem:[%s5188 + $0x38] sm:$0xff]
    %v5197 = vrot.slane %v643, 7
    %v5198 = vsel %vm663, %v5197, 0
    %5200 = vmatprep.subr.mxu0 0.0
    %5201 = vmatpush1.msra.mxu0 0.0
    %5202 = vmatprep.subr.mxu0 0.0
    %5203 = vmatpush1.msra.mxu0 0.0
    %5204 = vmatprep.subr.mxu0 0.0
    %5205 = vmatpush1.msra.mxu0 0.0
    %5206 = vmatprep.subr.mxu0 0.0
    %5207 = vmatpush1.msra.mxu0 0.0
    %5208 = vmatprep.subr.mxu0 0.0
    %5209 = vmatpush1.msra.mxu0 0.0
    %5210 = vmatprep.subr.mxu0 0.0
    %5211 = vmatpush1.msra.mxu0 0.0
    %5212 = vmatprep.subr.mxu0 0.0
    %5213 = vmatpush1.msra.mxu0 0.0
    %5214 = vmatprep.subr.mxu0 0.0
    %5215 = vmatpush1.msra.mxu0 0.0
    %5216 = vmatprep.subr.mxu0 0.0
    %5217 = vmatpush1.msra.mxu0 0.0
    %5218 = vmatprep.subr.mxu0 0.0
    %5219 = vmatpush1.msra.mxu0 0.0
    %5220 = vmatprep.subr.mxu0 0.0
    %5221 = vmatpush1.msra.mxu0 0.0
    %5222 = vmatprep.subr.mxu0 0.0
    %5223 = vmatpush1.msra.mxu0 0.0
    %5224 = vmatprep.subr.mxu0 0.0
    %5225 = vmatpush1.msra.mxu0 0.0
    %5226 = vmatprep.subr.mxu0 0.0
    %5227 = vmatpush1.msra.mxu0 0.0
    %5228 = vmatprep.subr.mxu0 0.0
    %5229 = vmatpush1.msra.mxu0 0.0
    %5230 = vmatprep.subr.mxu0 %v5190
    %5231 = vmatpush1.msra.mxu0 %v5189
    %5232 = vmatprep.subr.mxu0 0.0
    %5233 = vmatpush2.msra.mxu0 0.0
    %5234 = vmatprep.subr.mxu0 0.0
    %5235 = vmatpush2.msra.mxu0 0.0
    %5236 = vmatprep.subr.mxu0 0.0
    %5237 = vmatpush2.msra.mxu0 0.0
    %5238 = vmatprep.subr.mxu0 0.0
    %5239 = vmatpush2.msra.mxu0 0.0
    %5240 = vmatprep.subr.mxu0 0.0
    %5241 = vmatpush2.msra.mxu0 0.0
    %5242 = vmatprep.subr.mxu0 0.0
    %5243 = vmatpush2.msra.mxu0 0.0
    %5244 = vmatprep.subr.mxu0 0.0
    %5245 = vmatpush2.msra.mxu0 0.0
    %5246 = vmatprep.subr.mxu0 0.0
    %5247 = vmatpush2.msra.mxu0 0.0
    %5248 = vmatprep.subr.mxu0 0.0
    %5249 = vmatpush2.msra.mxu0 0.0
    %5250 = vmatprep.subr.mxu0 0.0
    %5251 = vmatpush2.msra.mxu0 0.0
    %5252 = vmatprep.subr.mxu0 0.0
    %5253 = vmatpush2.msra.mxu0 0.0
    %5254 = vmatprep.subr.mxu0 0.0
    %5255 = vmatpush2.msra.mxu0 0.0
    %5256 = vmatprep.subr.mxu0 0.0
    %5257 = vmatpush2.msra.mxu0 0.0
    %5258 = vmatprep.subr.mxu0 0.0
    %5259 = vmatpush2.msra.mxu0 0.0
    %5260 = vmatprep.subr.mxu0 0.0
    %5261 = vmatpush2.msra.mxu0 0.0
    %5262 = vmatprep.subr.mxu0 0.0
    %5263 = vmatpush2.msra.mxu0 0.0
    %5264 = vmatprep.mubr.f32.mxu0 0.0
    %5265 = vmatmul.mubr.f32.gmra.mxu0 %v5198
    %v5266 = vpop.f32.mrf.mxu0
    %v5267 = vadd.f32 0.0, %v5266
    %v5268 = vpop.f32.mrf.mxu0
    %v5269 = vadd.f32 0.0, %v5268
    %5270 = vdwg.mxu0
    %5271 = vmatprep.subr.mxu0 0.0
    %5272 = vmatpush1.msra.mxu0 0.0
    %5273 = vmatprep.subr.mxu0 0.0
    %5274 = vmatpush1.msra.mxu0 0.0
    %5275 = vmatprep.subr.mxu0 0.0
    %5276 = vmatpush1.msra.mxu0 0.0
    %5277 = vmatprep.subr.mxu0 0.0
    %5278 = vmatpush1.msra.mxu0 0.0
    %5279 = vmatprep.subr.mxu0 0.0
    %5280 = vmatpush1.msra.mxu0 0.0
    %5281 = vmatprep.subr.mxu0 0.0
    %5282 = vmatpush1.msra.mxu0 0.0
    %5283 = vmatprep.subr.mxu0 0.0
    %5284 = vmatpush1.msra.mxu0 0.0
    %5285 = vmatprep.subr.mxu0 0.0
    %5286 = vmatpush1.msra.mxu0 0.0
    %5287 = vmatprep.subr.mxu0 0.0
    %5288 = vmatpush1.msra.mxu0 0.0
    %5289 = vmatprep.subr.mxu0 0.0
    %5290 = vmatpush1.msra.mxu0 0.0
    %5291 = vmatprep.subr.mxu0 0.0
    %5292 = vmatpush1.msra.mxu0 0.0
    %5293 = vmatprep.subr.mxu0 0.0
    %5294 = vmatpush1.msra.mxu0 0.0
    %5295 = vmatprep.subr.mxu0 0.0
    %5296 = vmatpush1.msra.mxu0 0.0
    %5297 = vmatprep.subr.mxu0 0.0
    %5298 = vmatpush1.msra.mxu0 0.0
    %5299 = vmatprep.subr.mxu0 0.0
    %5300 = vmatpush1.msra.mxu0 0.0
    %5301 = vmatprep.subr.mxu0 %v5192
    %5302 = vmatpush1.msra.mxu0 %v5191
    %5303 = vmatprep.subr.mxu0 0.0
    %5304 = vmatpush2.msra.mxu0 0.0
    %5305 = vmatprep.subr.mxu0 0.0
    %5306 = vmatpush2.msra.mxu0 0.0
    %5307 = vmatprep.subr.mxu0 0.0
    %5308 = vmatpush2.msra.mxu0 0.0
    %5309 = vmatprep.subr.mxu0 0.0
    %5310 = vmatpush2.msra.mxu0 0.0
    %5311 = vmatprep.subr.mxu0 0.0
    %5312 = vmatpush2.msra.mxu0 0.0
    %5313 = vmatprep.subr.mxu0 0.0
    %5314 = vmatpush2.msra.mxu0 0.0
    %5315 = vmatprep.subr.mxu0 0.0
    %5316 = vmatpush2.msra.mxu0 0.0
    %5317 = vmatprep.subr.mxu0 0.0
    %5318 = vmatpush2.msra.mxu0 0.0
    %5319 = vmatprep.subr.mxu0 0.0
    %5320 = vmatpush2.msra.mxu0 0.0
    %5321 = vmatprep.subr.mxu0 0.0
    %5322 = vmatpush2.msra.mxu0 0.0
    %5323 = vmatprep.subr.mxu0 0.0
    %5324 = vmatpush2.msra.mxu0 0.0
    %5325 = vmatprep.subr.mxu0 0.0
    %5326 = vmatpush2.msra.mxu0 0.0
    %5327 = vmatprep.subr.mxu0 0.0
    %5328 = vmatpush2.msra.mxu0 0.0
    %5329 = vmatprep.subr.mxu0 0.0
    %5330 = vmatpush2.msra.mxu0 0.0
    %5331 = vmatprep.subr.mxu0 0.0
    %5332 = vmatpush2.msra.mxu0 0.0
    %5333 = vmatprep.subr.mxu0 0.0
    %5334 = vmatpush2.msra.mxu0 0.0
    %5335 = vmatprep.mubr.f32.mxu0 0.0
    %5336 = vmatmul.mubr.f32.gmra.mxu0 %v5198
    %v5337 = vpop.f32.mrf.mxu0
    %v5338 = vadd.f32 0.0, %v5337
    %v5339 = vpop.f32.mrf.mxu0
    %v5340 = vadd.f32 0.0, %v5339
    %5341 = vdwg.mxu0
    %5342 = vmatprep.subr.mxu0 0.0
    %5343 = vmatpush1.msra.mxu0 0.0
    %5344 = vmatprep.subr.mxu0 0.0
    %5345 = vmatpush1.msra.mxu0 0.0
    %5346 = vmatprep.subr.mxu0 0.0
    %5347 = vmatpush1.msra.mxu0 0.0
    %5348 = vmatprep.subr.mxu0 0.0
    %5349 = vmatpush1.msra.mxu0 0.0
    %5350 = vmatprep.subr.mxu0 0.0
    %5351 = vmatpush1.msra.mxu0 0.0
    %5352 = vmatprep.subr.mxu0 0.0
    %5353 = vmatpush1.msra.mxu0 0.0
    %5354 = vmatprep.subr.mxu0 0.0
    %5355 = vmatpush1.msra.mxu0 0.0
    %5356 = vmatprep.subr.mxu0 0.0
    %5357 = vmatpush1.msra.mxu0 0.0
    %5358 = vmatprep.subr.mxu0 0.0
    %5359 = vmatpush1.msra.mxu0 0.0
    %5360 = vmatprep.subr.mxu0 0.0
    %5361 = vmatpush1.msra.mxu0 0.0
    %5362 = vmatprep.subr.mxu0 0.0
    %5363 = vmatpush1.msra.mxu0 0.0
    %5364 = vmatprep.subr.mxu0 0.0
    %5365 = vmatpush1.msra.mxu0 0.0
    %5366 = vmatprep.subr.mxu0 0.0
    %5367 = vmatpush1.msra.mxu0 0.0
    %5368 = vmatprep.subr.mxu0 0.0
    %5369 = vmatpush1.msra.mxu0 0.0
    %5370 = vmatprep.subr.mxu0 0.0
    %5371 = vmatpush1.msra.mxu0 0.0
    %5372 = vmatprep.subr.mxu0 %v5194
    %5373 = vmatpush1.msra.mxu0 %v5193
    %5374 = vmatprep.subr.mxu0 0.0
    %5375 = vmatpush2.msra.mxu0 0.0
    %5376 = vmatprep.subr.mxu0 0.0
    %5377 = vmatpush2.msra.mxu0 0.0
    %5378 = vmatprep.subr.mxu0 0.0
    %5379 = vmatpush2.msra.mxu0 0.0
    %5380 = vmatprep.subr.mxu0 0.0
    %5381 = vmatpush2.msra.mxu0 0.0
    %5382 = vmatprep.subr.mxu0 0.0
    %5383 = vmatpush2.msra.mxu0 0.0
    %5384 = vmatprep.subr.mxu0 0.0
    %5385 = vmatpush2.msra.mxu0 0.0
    %5386 = vmatprep.subr.mxu0 0.0
    %5387 = vmatpush2.msra.mxu0 0.0
    %5388 = vmatprep.subr.mxu0 0.0
    %5389 = vmatpush2.msra.mxu0 0.0
    %5390 = vmatprep.subr.mxu0 0.0
    %5391 = vmatpush2.msra.mxu0 0.0
    %5392 = vmatprep.subr.mxu0 0.0
    %5393 = vmatpush2.msra.mxu0 0.0
    %5394 = vmatprep.subr.mxu0 0.0
    %5395 = vmatpush2.msra.mxu0 0.0
    %5396 = vmatprep.subr.mxu0 0.0
    %5397 = vmatpush2.msra.mxu0 0.0
    %5398 = vmatprep.subr.mxu0 0.0
    %5399 = vmatpush2.msra.mxu0 0.0
    %5400 = vmatprep.subr.mxu0 0.0
    %5401 = vmatpush2.msra.mxu0 0.0
    %5402 = vmatprep.subr.mxu0 0.0
    %5403 = vmatpush2.msra.mxu0 0.0
    %5404 = vmatprep.subr.mxu0 0.0
    %5405 = vmatpush2.msra.mxu0 0.0
    %5406 = vmatprep.mubr.f32.mxu0 0.0
    %5407 = vmatmul.mubr.f32.gmra.mxu0 %v5198
    %v5408 = vpop.f32.mrf.mxu0
    %v5409 = vadd.f32 0.0, %v5408
    %v5410 = vpop.f32.mrf.mxu0
    %v5411 = vadd.f32 0.0, %v5410
    %5412 = vdwg.mxu0
    %5413 = vmatprep.subr.mxu0 0.0
    %5414 = vmatpush1.msra.mxu0 0.0
    %5415 = vmatprep.subr.mxu0 0.0
    %5416 = vmatpush1.msra.mxu0 0.0
    %5417 = vmatprep.subr.mxu0 0.0
    %5418 = vmatpush1.msra.mxu0 0.0
    %5419 = vmatprep.subr.mxu0 0.0
    %5420 = vmatpush1.msra.mxu0 0.0
    %5421 = vmatprep.subr.mxu0 0.0
    %5422 = vmatpush1.msra.mxu0 0.0
    %5423 = vmatprep.subr.mxu0 0.0
    %5424 = vmatpush1.msra.mxu0 0.0
    %5425 = vmatprep.subr.mxu0 0.0
    %5426 = vmatpush1.msra.mxu0 0.0
    %5427 = vmatprep.subr.mxu0 0.0
    %5428 = vmatpush1.msra.mxu0 0.0
    %5429 = vmatprep.subr.mxu0 0.0
    %5430 = vmatpush1.msra.mxu0 0.0
    %5431 = vmatprep.subr.mxu0 0.0
    %5432 = vmatpush1.msra.mxu0 0.0
    %5433 = vmatprep.subr.mxu0 0.0
    %5434 = vmatpush1.msra.mxu0 0.0
    %5435 = vmatprep.subr.mxu0 0.0
    %5436 = vmatpush1.msra.mxu0 0.0
    %5437 = vmatprep.subr.mxu0 0.0
    %5438 = vmatpush1.msra.mxu0 0.0
    %5439 = vmatprep.subr.mxu0 0.0
    %5440 = vmatpush1.msra.mxu0 0.0
    %5441 = vmatprep.subr.mxu0 0.0
    %5442 = vmatpush1.msra.mxu0 0.0
    %5443 = vmatprep.subr.mxu0 %v5196
    %5444 = vmatpush1.msra.mxu0 %v5195
    %5445 = vmatprep.subr.mxu0 0.0
    %5446 = vmatpush2.msra.mxu0 0.0
    %5447 = vmatprep.subr.mxu0 0.0
    %5448 = vmatpush2.msra.mxu0 0.0
    %5449 = vmatprep.subr.mxu0 0.0
    %5450 = vmatpush2.msra.mxu0 0.0
    %5451 = vmatprep.subr.mxu0 0.0
    %5452 = vmatpush2.msra.mxu0 0.0
    %5453 = vmatprep.subr.mxu0 0.0
    %5454 = vmatpush2.msra.mxu0 0.0
    %5455 = vmatprep.subr.mxu0 0.0
    %5456 = vmatpush2.msra.mxu0 0.0
    %5457 = vmatprep.subr.mxu0 0.0
    %5458 = vmatpush2.msra.mxu0 0.0
    %5459 = vmatprep.subr.mxu0 0.0
    %5460 = vmatpush2.msra.mxu0 0.0
    %5461 = vmatprep.subr.mxu0 0.0
    %5462 = vmatpush2.msra.mxu0 0.0
    %5463 = vmatprep.subr.mxu0 0.0
    %5464 = vmatpush2.msra.mxu0 0.0
    %5465 = vmatprep.subr.mxu0 0.0
    %5466 = vmatpush2.msra.mxu0 0.0
    %5467 = vmatprep.subr.mxu0 0.0
    %5468 = vmatpush2.msra.mxu0 0.0
    %5469 = vmatprep.subr.mxu0 0.0
    %5470 = vmatpush2.msra.mxu0 0.0
    %5471 = vmatprep.subr.mxu0 0.0
    %5472 = vmatpush2.msra.mxu0 0.0
    %5473 = vmatprep.subr.mxu0 0.0
    %5474 = vmatpush2.msra.mxu0 0.0
    %5475 = vmatprep.subr.mxu0 0.0
    %5476 = vmatpush2.msra.mxu0 0.0
    %5477 = vmatprep.mubr.f32.mxu0 0.0
    %5478 = vmatmul.mubr.f32.gmra.mxu0 %v5198
    %v5479 = vpop.f32.mrf.mxu0
    %v5480 = vadd.f32 0.0, %v5479
    %v5481 = vpop.f32.mrf.mxu0
    %v5482 = vadd.f32 0.0, %v5481
    %5483 = vdwg.mxu0
    %v5484 = vadd.f32 %v5180, %v5267
    %v5485 = vadd.f32 %v5181, %v5269
    %v5486 = vadd.f32 %v5182, %v5338
    %v5487 = vadd.f32 %v5183, %v5340
    %v5488 = vadd.f32 %v5184, %v5409
    %v5489 = vadd.f32 %v5185, %v5411
    %v5490 = vadd.f32 %v5186, %v5480
    %v5491 = vadd.f32 %v5187, %v5482
    %v5493 = vlaneseq
    %v5494 = vshrl.u32 %v5493, 7
    %v5495 = vsub.s32 0, %v5494
    %v5496 = vrot.slane %v158, %v5495
    %v5497 = vlaneseq
    %v5498 = vshrl.u32 %v5497, 7
    %v5499 = vsub.s32 1, %v5498
    %v5500 = vrot.slane %v158, %v5499
    %v5501 = vlaneseq
    %v5502 = vshrl.u32 %v5501, 7
    %v5503 = vsub.s32 2, %v5502
    %v5504 = vrot.slane %v158, %v5503
    %v5505 = vlaneseq
    %v5506 = vshrl.u32 %v5505, 7
    %v5507 = vsub.s32 3, %v5506
    %v5508 = vrot.slane %v158, %v5507
    %v5509 = vlaneseq
    %v5510 = vshrl.u32 %v5509, 7
    %v5511 = vsub.s32 4, %v5510
    %v5512 = vrot.slane %v158, %v5511
    %v5513 = vlaneseq
    %v5514 = vshrl.u32 %v5513, 7
    %v5515 = vsub.s32 5, %v5514
    %v5516 = vrot.slane %v158, %v5515
    %v5517 = vlaneseq
    %v5518 = vshrl.u32 %v5517, 7
    %v5519 = vsub.s32 6, %v5518
    %v5520 = vrot.slane %v158, %v5519
    %v5521 = vlaneseq
    %v5522 = vshrl.u32 %v5521, 7
    %v5523 = vsub.s32 7, %v5522
    %v5524 = vrot.slane %v158, %v5523
    %v5533 = vadd.f32 %v5484, %v5496
    %v5534 = vadd.f32 %v5485, %v5500
    %v5535 = vadd.f32 %v5486, %v5504
    %v5536 = vadd.f32 %v5487, %v5508
    %v5537 = vadd.f32 %v5488, %v5512
    %v5538 = vadd.f32 %v5489, %v5516
    %v5539 = vadd.f32 %v5490, %v5520
    %v5540 = vadd.f32 %v5491, %v5524
    %vm5541 = vcmp.ge.f32.partialorder %v5533, 0.0
    %vm5542 = vcmp.ge.f32.partialorder %v5534, 0.0
    %vm5543 = vcmp.ge.f32.partialorder %v5535, 0.0
    %vm5544 = vcmp.ge.f32.partialorder %v5536, 0.0
    %vm5545 = vcmp.ge.f32.partialorder %v5537, 0.0
    %vm5546 = vcmp.ge.f32.partialorder %v5538, 0.0
    %vm5547 = vcmp.ge.f32.partialorder %v5539, 0.0
    %vm5548 = vcmp.ge.f32.partialorder %v5540, 0.0
    %v5549 = vmul.f32 %v5533, 0.2
    %v5550 = vmul.f32 %v5534, 0.2
    %v5551 = vmul.f32 %v5535, 0.2
    %v5552 = vmul.f32 %v5536, 0.2
    %v5553 = vmul.f32 %v5537, 0.2
    %v5554 = vmul.f32 %v5538, 0.2
    %v5555 = vmul.f32 %v5539, 0.2
    %v5556 = vmul.f32 %v5540, 0.2
    %v5557 = vsel %vm5541, %v5533, %v5549
    %v5558 = vsel %vm5542, %v5534, %v5550
    %v5559 = vsel %vm5543, %v5535, %v5551
    %v5560 = vsel %vm5544, %v5536, %v5552
    %v5561 = vsel %vm5545, %v5537, %v5553
    %v5562 = vsel %vm5546, %v5538, %v5554
    %v5563 = vsel %vm5547, %v5539, %v5555
    %v5564 = vsel %vm5548, %v5540, %v5556
    %v5566 = vlaneseq
    %v5567 = vshrl.u32 %v5566, 7
    %v5568 = vsub.s32 0, %v5567
    %v5569 = vrot.slane %v159, %v5568
    %v5570 = vlaneseq
    %v5571 = vshrl.u32 %v5570, 7
    %v5572 = vsub.s32 1, %v5571
    %v5573 = vrot.slane %v159, %v5572
    %v5574 = vlaneseq
    %v5575 = vshrl.u32 %v5574, 7
    %v5576 = vsub.s32 2, %v5575
    %v5577 = vrot.slane %v159, %v5576
    %v5578 = vlaneseq
    %v5579 = vshrl.u32 %v5578, 7
    %v5580 = vsub.s32 3, %v5579
    %v5581 = vrot.slane %v159, %v5580
    %v5582 = vlaneseq
    %v5583 = vshrl.u32 %v5582, 7
    %v5584 = vsub.s32 4, %v5583
    %v5585 = vrot.slane %v159, %v5584
    %v5586 = vlaneseq
    %v5587 = vshrl.u32 %v5586, 7
    %v5588 = vsub.s32 5, %v5587
    %v5589 = vrot.slane %v159, %v5588
    %v5590 = vlaneseq
    %v5591 = vshrl.u32 %v5590, 7
    %v5592 = vsub.s32 6, %v5591
    %v5593 = vrot.slane %v159, %v5592
    %v5594 = vlaneseq
    %v5595 = vshrl.u32 %v5594, 7
    %v5596 = vsub.s32 7, %v5595
    %v5597 = vrot.slane %v159, %v5596
    %v5606 = vmul.f32 %v5557, %v5569
    %v5607 = vmul.f32 %v5558, %v5573
    %v5608 = vmul.f32 %v5559, %v5577
    %v5609 = vmul.f32 %v5560, %v5581
    %v5610 = vmul.f32 %v5561, %v5585
    %v5611 = vmul.f32 %v5562, %v5589
    %v5612 = vmul.f32 %v5563, %v5593
    %v5613 = vmul.f32 %v5564, %v5597
    %vm5614 = vcmask 1040384
    %v5615 = vsel %vm5614, %v5606, 0.0
    %v5616 = vsel %vm5614, %v5607, 0.0
    %v5617 = vadd.f32 %v5615, %v5616
    %v5618 = vsel %vm5614, %v5608, 0.0
    %v5619 = vadd.f32 %v5617, %v5618
    %v5620 = vsel %vm5614, %v5609, 0.0
    %v5621 = vadd.f32 %v5619, %v5620
    %v5622 = vsel %vm5614, %v5610, 0.0
    %v5623 = vadd.f32 %v5621, %v5622
    %v5624 = vsel %vm5614, %v5611, 0.0
    %v5625 = vadd.f32 %v5623, %v5624
    %v5626 = vsel %vm5614, %v5612, 0.0
    %v5627 = vadd.f32 %v5625, %v5626
    %v5628 = vsel %vm5614, %v5613, 0.0
    %v5629 = vadd.f32 %v5627, %v5628
    %5630 = vadd.xlane.f32.xlu0 %v5629
    %v5631 = vpop.xlane.xlu0 %5630
    %v5632 = vadd.f32 %v5631, %v160
    %v5633 = vsub.f32 0.0, %v5632
    %v5634 = vmul.f32 %v5633, 1.442695
    %v5635 = vpow.pop %v5634
    %v5636 = vadd.f32 %v5635, 1.0
    %v5637 = vrcp.pop %v5636
    %v5638 = vmul.f32 1.0, %v5637
    %vm5639 = vcmask 0
    %5640 = vst.msk [vmem:[%s19] sm:$0x1] %vm5639, %v5638
    %s5641 = scalar_lea.vmem %s0, 16
    %v5642 = vld [vmem:[%s5641] sm:$0xff]
    %v5643 = vld [vmem:[%s5641 + $0x8] sm:$0xff]
    %v5645 = vsel %vm187, %v5642, 0
    %v5648 = vsel %vm187, %v5643, 0
    %5650 = vmatprep.subr.mxu0 0.0
    %5651 = vmatpush1.msra.mxu0 0.0
    %5652 = vmatprep.subr.mxu0 0.0
    %5653 = vmatpush1.msra.mxu0 0.0
    %5654 = vmatprep.subr.mxu0 0.0
    %5655 = vmatpush1.msra.mxu0 0.0
    %5656 = vmatprep.subr.mxu0 0.0
    %5657 = vmatpush1.msra.mxu0 0.0
    %5658 = vmatprep.subr.mxu0 0.0
    %5659 = vmatpush1.msra.mxu0 0.0
    %5660 = vmatprep.subr.mxu0 0.0
    %5661 = vmatpush1.msra.mxu0 0.0
    %5662 = vmatprep.subr.mxu0 0.0
    %5663 = vmatpush1.msra.mxu0 0.0
    %5664 = vmatprep.subr.mxu0 0.0
    %5665 = vmatpush1.msra.mxu0 0.0
    %5666 = vmatprep.subr.mxu0 0.0
    %5667 = vmatpush1.msra.mxu0 0.0
    %5668 = vmatprep.subr.mxu0 0.0
    %5669 = vmatpush1.msra.mxu0 0.0
    %5670 = vmatprep.subr.mxu0 0.0
    %5671 = vmatpush1.msra.mxu0 0.0
    %5672 = vmatprep.subr.mxu0 0.0
    %5673 = vmatpush1.msra.mxu0 0.0
    %5674 = vmatprep.subr.mxu0 0.0
    %5675 = vmatpush1.msra.mxu0 0.0
    %5676 = vmatprep.subr.mxu0 0.0
    %5677 = vmatpush1.msra.mxu0 0.0
    %5678 = vmatprep.subr.mxu0 0.0
    %5679 = vmatpush1.msra.mxu0 %v148
    %5680 = vmatprep.subr.mxu0 0.0
    %5681 = vmatpush1.msra.mxu0 %v147
    %5682 = vmatprep.subr.mxu0 0.0
    %5683 = vmatpush2.msra.mxu0 0.0
    %5684 = vmatprep.subr.mxu0 0.0
    %5685 = vmatpush2.msra.mxu0 0.0
    %5686 = vmatprep.subr.mxu0 0.0
    %5687 = vmatpush2.msra.mxu0 0.0
    %5688 = vmatprep.subr.mxu0 0.0
    %5689 = vmatpush2.msra.mxu0 0.0
    %5690 = vmatprep.subr.mxu0 0.0
    %5691 = vmatpush2.msra.mxu0 0.0
    %5692 = vmatprep.subr.mxu0 0.0
    %5693 = vmatpush2.msra.mxu0 0.0
    %5694 = vmatprep.subr.mxu0 0.0
    %5695 = vmatpush2.msra.mxu0 0.0
    %5696 = vmatprep.subr.mxu0 0.0
    %5697 = vmatpush2.msra.mxu0 0.0
    %5698 = vmatprep.subr.mxu0 0.0
    %5699 = vmatpush2.msra.mxu0 0.0
    %5700 = vmatprep.subr.mxu0 0.0
    %5701 = vmatpush2.msra.mxu0 0.0
    %5702 = vmatprep.subr.mxu0 0.0
    %5703 = vmatpush2.msra.mxu0 0.0
    %5704 = vmatprep.subr.mxu0 0.0
    %5705 = vmatpush2.msra.mxu0 0.0
    %5706 = vmatprep.subr.mxu0 0.0
    %5707 = vmatpush2.msra.mxu0 0.0
    %5708 = vmatprep.subr.mxu0 0.0
    %5709 = vmatpush2.msra.mxu0 0.0
    %5710 = vmatprep.subr.mxu0 0.0
    %5711 = vmatpush2.msra.mxu0 0.0
    %5712 = vmatprep.subr.mxu0 0.0
    %5713 = vmatpush2.msra.mxu0 0.0
    %5714 = vmatprep.mubr.f32.mxu0 0.0
    %5715 = vmatmul.mubr.f32.gmra.mxu0 %v5645
    %v5716 = vpop.f32.mrf.mxu0
    %v5717 = vadd.f32 %v185, %v5716
    %v5718 = vpop.f32.mrf.mxu0
    %5719 = vmatprep.mubr.f32.mxu0 0.0
    %5720 = vmatmul.mubr.f32.gmra.mxu0 %v5648
    %v5721 = vpop.f32.mrf.mxu0
    %v5722 = vadd.f32 %v185, %v5721
    %v5723 = vpop.f32.mrf.mxu0
    %5724 = vdwg.mxu0
    %vm5725 = vcmp.ge.f32.partialorder %v5717, 0.0
    %vm5726 = vcmp.ge.f32.partialorder %v5722, 0.0
    %v5727 = vmul.f32 %v5717, 0.2
    %v5728 = vmul.f32 %v5722, 0.2
    %v5729 = vsel %vm5725, %v5717, %v5727
    %v5730 = vsel %vm5726, %v5722, %v5728
    %v5731 = vmul.f32 %v5729, %v279
    %v5732 = vmul.f32 %v5730, %v279
    %v5733 = vadd.f32 %v5731, %v287
    %v5734 = vadd.f32 %v5732, %v287
    %v5736 = vsel %vm291, %v5733, 0
    %v5739 = vsel %vm291, %v5734, 0
    %5741 = vmatprep.subr.mxu0 0.0
    %5742 = vmatpush1.msra.mxu0 0.0
    %5743 = vmatprep.subr.mxu0 0.0
    %5744 = vmatpush1.msra.mxu0 0.0
    %5745 = vmatprep.subr.mxu0 0.0
    %5746 = vmatpush1.msra.mxu0 0.0
    %5747 = vmatprep.subr.mxu0 0.0
    %5748 = vmatpush1.msra.mxu0 0.0
    %5749 = vmatprep.subr.mxu0 0.0
    %5750 = vmatpush1.msra.mxu0 0.0
    %5751 = vmatprep.subr.mxu0 0.0
    %5752 = vmatpush1.msra.mxu0 0.0
    %5753 = vmatprep.subr.mxu0 0.0
    %5754 = vmatpush1.msra.mxu0 0.0
    %5755 = vmatprep.subr.mxu0 0.0
    %5756 = vmatpush1.msra.mxu0 0.0
    %5757 = vmatprep.subr.mxu0 0.0
    %5758 = vmatpush1.msra.mxu0 0.0
    %5759 = vmatprep.subr.mxu0 0.0
    %5760 = vmatpush1.msra.mxu0 0.0
    %5761 = vmatprep.subr.mxu0 0.0
    %5762 = vmatpush1.msra.mxu0 0.0
    %5763 = vmatprep.subr.mxu0 0.0
    %5764 = vmatpush1.msra.mxu0 0.0
    %5765 = vmatprep.subr.mxu0 0.0
    %5766 = vmatpush1.msra.mxu0 %v152
    %5767 = vmatprep.subr.mxu0 0.0
    %5768 = vmatpush1.msra.mxu0 %v151
    %5769 = vmatprep.subr.mxu0 0.0
    %5770 = vmatpush1.msra.mxu0 %v150
    %5771 = vmatprep.subr.mxu0 0.0
    %5772 = vmatpush1.msra.mxu0 %v149
    %5773 = vmatprep.subr.mxu0 0.0
    %5774 = vmatpush2.msra.mxu0 0.0
    %5775 = vmatprep.subr.mxu0 0.0
    %5776 = vmatpush2.msra.mxu0 0.0
    %5777 = vmatprep.subr.mxu0 0.0
    %5778 = vmatpush2.msra.mxu0 0.0
    %5779 = vmatprep.subr.mxu0 0.0
    %5780 = vmatpush2.msra.mxu0 0.0
    %5781 = vmatprep.subr.mxu0 0.0
    %5782 = vmatpush2.msra.mxu0 0.0
    %5783 = vmatprep.subr.mxu0 0.0
    %5784 = vmatpush2.msra.mxu0 0.0
    %5785 = vmatprep.subr.mxu0 0.0
    %5786 = vmatpush2.msra.mxu0 0.0
    %5787 = vmatprep.subr.mxu0 0.0
    %5788 = vmatpush2.msra.mxu0 0.0
    %5789 = vmatprep.subr.mxu0 0.0
    %5790 = vmatpush2.msra.mxu0 0.0
    %5791 = vmatprep.subr.mxu0 0.0
    %5792 = vmatpush2.msra.mxu0 0.0
    %5793 = vmatprep.subr.mxu0 0.0
    %5794 = vmatpush2.msra.mxu0 0.0
    %5795 = vmatprep.subr.mxu0 0.0
    %5796 = vmatpush2.msra.mxu0 0.0
    %5797 = vmatprep.subr.mxu0 0.0
    %5798 = vmatpush2.msra.mxu0 0.0
    %5799 = vmatprep.subr.mxu0 0.0
    %5800 = vmatpush2.msra.mxu0 0.0
    %5801 = vmatprep.subr.mxu0 0.0
    %5802 = vmatpush2.msra.mxu0 0.0
    %5803 = vmatprep.subr.mxu0 0.0
    %5804 = vmatpush2.msra.mxu0 0.0
    %5805 = vmatprep.mubr.f32.mxu0 0.0
    %5806 = vmatmul.mubr.f32.gmra.mxu0 %v5736
    %v5807 = vpop.f32.mrf.mxu0
    %v5808 = vadd.f32 0.0, %v5807
    %v5809 = vpop.f32.mrf.mxu0
    %5810 = vmatprep.mubr.f32.mxu0 0.0
    %5811 = vmatmul.mubr.f32.gmra.mxu0 %v5739
    %v5812 = vpop.f32.mrf.mxu0
    %v5813 = vadd.f32 0.0, %v5812
    %v5814 = vpop.f32.mrf.mxu0
    %5815 = vdwg.mxu0
    %5816 = vmatprep.subr.mxu0 0.0
    %5817 = vmatpush1.msra.mxu0 0.0
    %5818 = vmatprep.subr.mxu0 0.0
    %5819 = vmatpush1.msra.mxu0 0.0
    %5820 = vmatprep.subr.mxu0 0.0
    %5821 = vmatpush1.msra.mxu0 0.0
    %5822 = vmatprep.subr.mxu0 0.0
    %5823 = vmatpush1.msra.mxu0 0.0
    %5824 = vmatprep.subr.mxu0 0.0
    %5825 = vmatpush1.msra.mxu0 0.0
    %5826 = vmatprep.subr.mxu0 0.0
    %5827 = vmatpush1.msra.mxu0 0.0
    %5828 = vmatprep.subr.mxu0 0.0
    %5829 = vmatpush1.msra.mxu0 0.0
    %5830 = vmatprep.subr.mxu0 0.0
    %5831 = vmatpush1.msra.mxu0 0.0
    %5832 = vmatprep.subr.mxu0 0.0
    %5833 = vmatpush1.msra.mxu0 0.0
    %5834 = vmatprep.subr.mxu0 0.0
    %5835 = vmatpush1.msra.mxu0 0.0
    %5836 = vmatprep.subr.mxu0 0.0
    %5837 = vmatpush1.msra.mxu0 0.0
    %5838 = vmatprep.subr.mxu0 0.0
    %5839 = vmatpush1.msra.mxu0 0.0
    %5840 = vmatprep.subr.mxu0 0.0
    %5841 = vmatpush1.msra.mxu0 0.0
    %5842 = vmatprep.subr.mxu0 0.0
    %5843 = vmatpush1.msra.mxu0 0.0
    %5844 = vmatprep.subr.mxu0 0.0
    %5845 = vmatpush1.msra.mxu0 %v5813
    %5846 = vmatprep.subr.mxu0 0.0
    %5847 = vmatpush1.msra.mxu0 %v5808
    %5848 = vmatprep.subr.mxu0 0.0
    %5849 = vmatpush2.msra.mxu0 0.0
    %5850 = vmatprep.subr.mxu0 0.0
    %5851 = vmatpush2.msra.mxu0 0.0
    %5852 = vmatprep.subr.mxu0 0.0
    %5853 = vmatpush2.msra.mxu0 0.0
    %5854 = vmatprep.subr.mxu0 0.0
    %5855 = vmatpush2.msra.mxu0 0.0
    %5856 = vmatprep.subr.mxu0 0.0
    %5857 = vmatpush2.msra.mxu0 0.0
    %5858 = vmatprep.subr.mxu0 0.0
    %5859 = vmatpush2.msra.mxu0 0.0
    %5860 = vmatprep.subr.mxu0 0.0
    %5861 = vmatpush2.msra.mxu0 0.0
    %5862 = vmatprep.subr.mxu0 0.0
    %5863 = vmatpush2.msra.mxu0 0.0
    %5864 = vmatprep.subr.mxu0 0.0
    %5865 = vmatpush2.msra.mxu0 0.0
    %5866 = vmatprep.subr.mxu0 0.0
    %5867 = vmatpush2.msra.mxu0 0.0
    %5868 = vmatprep.subr.mxu0 0.0
    %5869 = vmatpush2.msra.mxu0 0.0
    %5870 = vmatprep.subr.mxu0 0.0
    %5871 = vmatpush2.msra.mxu0 0.0
    %5872 = vmatprep.subr.mxu0 0.0
    %5873 = vmatpush2.msra.mxu0 0.0
    %5874 = vmatprep.subr.mxu0 0.0
    %5875 = vmatpush2.msra.mxu0 0.0
    %5876 = vmatprep.subr.mxu0 0.0
    %5877 = vmatpush2.msra.mxu0 0.0
    %5878 = vmatprep.subr.mxu0 0.0
    %5879 = vmatpush2.msra.mxu0 0.0
    %5880 = vmatprep.mubr.f32.mxu0 0.0
    %5881 = vmatmul.mubr.f32.gmra.mxu0 %v5645
    %v5882 = vpop.f32.mrf.mxu0
    %v5883 = vadd.f32 %v377, %v5882
    %v5884 = vpop.f32.mrf.mxu0
    %5885 = vmatprep.mubr.f32.mxu0 0.0
    %5886 = vmatmul.mubr.f32.gmra.mxu0 %v5648
    %v5887 = vpop.f32.mrf.mxu0
    %v5888 = vadd.f32 %v377, %v5887
    %v5889 = vpop.f32.mrf.mxu0
    %5890 = vdwg.mxu0
    %vm5891 = vcmp.ge.f32.partialorder %v5883, 0.0
    %vm5892 = vcmp.ge.f32.partialorder %v5888, 0.0
    %v5893 = vmul.f32 %v5883, 0.2
    %v5894 = vmul.f32 %v5888, 0.2
    %v5895 = vsel %vm5891, %v5883, %v5893
    %v5896 = vsel %vm5892, %v5888, %v5894
    %v5897 = vmul.f32 %v5895, %v464
    %v5898 = vmul.f32 %v5896, %v464
    %v5899 = vadd.f32 %v5897, %v472
    %v5900 = vadd.f32 %v5898, %v472
    %v5902 = vsel %vm187, %v5899, 0
    %v5905 = vsel %vm187, %v5900, 0
    %5907 = vmatprep.subr.mxu0 0.0
    %5908 = vmatpush1.msra.mxu0 0.0
    %5909 = vmatprep.subr.mxu0 0.0
    %5910 = vmatpush1.msra.mxu0 0.0
    %5911 = vmatprep.subr.mxu0 0.0
    %5912 = vmatpush1.msra.mxu0 0.0
    %5913 = vmatprep.subr.mxu0 0.0
    %5914 = vmatpush1.msra.mxu0 0.0
    %5915 = vmatprep.subr.mxu0 0.0
    %5916 = vmatpush1.msra.mxu0 0.0
    %5917 = vmatprep.subr.mxu0 0.0
    %5918 = vmatpush1.msra.mxu0 0.0
    %5919 = vmatprep.subr.mxu0 0.0
    %5920 = vmatpush1.msra.mxu0 0.0
    %5921 = vmatprep.subr.mxu0 0.0
    %5922 = vmatpush1.msra.mxu0 0.0
    %5923 = vmatprep.subr.mxu0 0.0
    %5924 = vmatpush1.msra.mxu0 0.0
    %5925 = vmatprep.subr.mxu0 0.0
    %5926 = vmatpush1.msra.mxu0 0.0
    %5927 = vmatprep.subr.mxu0 0.0
    %5928 = vmatpush1.msra.mxu0 0.0
    %5929 = vmatprep.subr.mxu0 0.0
    %5930 = vmatpush1.msra.mxu0 0.0
    %5931 = vmatprep.subr.mxu0 0.0
    %5932 = vmatpush1.msra.mxu0 0.0
    %5933 = vmatprep.subr.mxu0 0.0
    %5934 = vmatpush1.msra.mxu0 0.0
    %5935 = vmatprep.subr.mxu0 0.0
    %5936 = vmatpush1.msra.mxu0 %v154
    %5937 = vmatprep.subr.mxu0 0.0
    %5938 = vmatpush1.msra.mxu0 %v153
    %5939 = vmatprep.subr.mxu0 0.0
    %5940 = vmatpush2.msra.mxu0 0.0
    %5941 = vmatprep.subr.mxu0 0.0
    %5942 = vmatpush2.msra.mxu0 0.0
    %5943 = vmatprep.subr.mxu0 0.0
    %5944 = vmatpush2.msra.mxu0 0.0
    %5945 = vmatprep.subr.mxu0 0.0
    %5946 = vmatpush2.msra.mxu0 0.0
    %5947 = vmatprep.subr.mxu0 0.0
    %5948 = vmatpush2.msra.mxu0 0.0
    %5949 = vmatprep.subr.mxu0 0.0
    %5950 = vmatpush2.msra.mxu0 0.0
    %5951 = vmatprep.subr.mxu0 0.0
    %5952 = vmatpush2.msra.mxu0 0.0
    %5953 = vmatprep.subr.mxu0 0.0
    %5954 = vmatpush2.msra.mxu0 0.0
    %5955 = vmatprep.subr.mxu0 0.0
    %5956 = vmatpush2.msra.mxu0 0.0
    %5957 = vmatprep.subr.mxu0 0.0
    %5958 = vmatpush2.msra.mxu0 0.0
    %5959 = vmatprep.subr.mxu0 0.0
    %5960 = vmatpush2.msra.mxu0 0.0
    %5961 = vmatprep.subr.mxu0 0.0
    %5962 = vmatpush2.msra.mxu0 0.0
    %5963 = vmatprep.subr.mxu0 0.0
    %5964 = vmatpush2.msra.mxu0 0.0
    %5965 = vmatprep.subr.mxu0 0.0
    %5966 = vmatpush2.msra.mxu0 0.0
    %5967 = vmatprep.subr.mxu0 0.0
    %5968 = vmatpush2.msra.mxu0 0.0
    %5969 = vmatprep.subr.mxu0 0.0
    %5970 = vmatpush2.msra.mxu0 0.0
    %5971 = vmatprep.mubr.f32.mxu0 0.0
    %5972 = vmatmul.mubr.f32.gmra.mxu0 %v5902
    %v5973 = vpop.f32.mrf.mxu0
    %v5974 = vadd.f32 0.0, %v5973
    %v5975 = vpop.f32.mrf.mxu0
    %5976 = vmatprep.mubr.f32.mxu0 0.0
    %5977 = vmatmul.mubr.f32.gmra.mxu0 %v5905
    %v5978 = vpop.f32.mrf.mxu0
    %v5979 = vadd.f32 0.0, %v5978
    %v5980 = vpop.f32.mrf.mxu0
    %5981 = vdwg.mxu0
    %5982 = vmatprep.subr.mxu0 0.0
    %5983 = vmatpush1.msra.mxu0 0.0
    %5984 = vmatprep.subr.mxu0 0.0
    %5985 = vmatpush1.msra.mxu0 0.0
    %5986 = vmatprep.subr.mxu0 0.0
    %5987 = vmatpush1.msra.mxu0 0.0
    %5988 = vmatprep.subr.mxu0 0.0
    %5989 = vmatpush1.msra.mxu0 0.0
    %5990 = vmatprep.subr.mxu0 0.0
    %5991 = vmatpush1.msra.mxu0 0.0
    %5992 = vmatprep.subr.mxu0 0.0
    %5993 = vmatpush1.msra.mxu0 0.0
    %5994 = vmatprep.subr.mxu0 0.0
    %5995 = vmatpush1.msra.mxu0 0.0
    %5996 = vmatprep.subr.mxu0 0.0
    %5997 = vmatpush1.msra.mxu0 0.0
    %5998 = vmatprep.subr.mxu0 0.0
    %5999 = vmatpush1.msra.mxu0 0.0
    %6000 = vmatprep.subr.mxu0 0.0
    %6001 = vmatpush1.msra.mxu0 0.0
    %6002 = vmatprep.subr.mxu0 0.0
    %6003 = vmatpush1.msra.mxu0 0.0
    %6004 = vmatprep.subr.mxu0 0.0
    %6005 = vmatpush1.msra.mxu0 0.0
    %6006 = vmatprep.subr.mxu0 0.0
    %6007 = vmatpush1.msra.mxu0 0.0
    %6008 = vmatprep.subr.mxu0 0.0
    %6009 = vmatpush1.msra.mxu0 0.0
    %6010 = vmatprep.subr.mxu0 0.0
    %6011 = vmatpush1.msra.mxu0 %v5979
    %6012 = vmatprep.subr.mxu0 0.0
    %6013 = vmatpush1.msra.mxu0 %v5974
    %6014 = vmatprep.subr.mxu0 0.0
    %6015 = vmatpush2.msra.mxu0 0.0
    %6016 = vmatprep.subr.mxu0 0.0
    %6017 = vmatpush2.msra.mxu0 0.0
    %6018 = vmatprep.subr.mxu0 0.0
    %6019 = vmatpush2.msra.mxu0 0.0
    %6020 = vmatprep.subr.mxu0 0.0
    %6021 = vmatpush2.msra.mxu0 0.0
    %6022 = vmatprep.subr.mxu0 0.0
    %6023 = vmatpush2.msra.mxu0 0.0
    %6024 = vmatprep.subr.mxu0 0.0
    %6025 = vmatpush2.msra.mxu0 0.0
    %6026 = vmatprep.subr.mxu0 0.0
    %6027 = vmatpush2.msra.mxu0 0.0
    %6028 = vmatprep.subr.mxu0 0.0
    %6029 = vmatpush2.msra.mxu0 0.0
    %6030 = vmatprep.subr.mxu0 0.0
    %6031 = vmatpush2.msra.mxu0 0.0
    %6032 = vmatprep.subr.mxu0 0.0
    %6033 = vmatpush2.msra.mxu0 0.0
    %6034 = vmatprep.subr.mxu0 0.0
    %6035 = vmatpush2.msra.mxu0 0.0
    %6036 = vmatprep.subr.mxu0 0.0
    %6037 = vmatpush2.msra.mxu0 0.0
    %6038 = vmatprep.subr.mxu0 0.0
    %6039 = vmatpush2.msra.mxu0 0.0
    %6040 = vmatprep.subr.mxu0 0.0
    %6041 = vmatpush2.msra.mxu0 0.0
    %6042 = vmatprep.subr.mxu0 0.0
    %6043 = vmatpush2.msra.mxu0 0.0
    %6044 = vmatprep.subr.mxu0 0.0
    %6045 = vmatpush2.msra.mxu0 0.0
    %6046 = vmatprep.mubr.f32.mxu0 0.0
    %6047 = vmatmul.mubr.f32.gmra.mxu0 %v5645
    %v6048 = vpop.f32.mrf.mxu0
    %v6049 = vadd.f32 %v561, %v6048
    %v6050 = vpop.f32.mrf.mxu0
    %6051 = vmatprep.mubr.f32.mxu0 0.0
    %6052 = vmatmul.mubr.f32.gmra.mxu0 %v5648
    %v6053 = vpop.f32.mrf.mxu0
    %v6054 = vadd.f32 %v561, %v6053
    %v6055 = vpop.f32.mrf.mxu0
    %6056 = vdwg.mxu0
    %vm6057 = vcmp.ge.f32.partialorder %v6049, 0.0
    %vm6058 = vcmp.ge.f32.partialorder %v6054, 0.0
    %v6059 = vmul.f32 %v6049, 0.2
    %v6060 = vmul.f32 %v6054, 0.2
    %v6061 = vsel %vm6057, %v6049, %v6059
    %v6062 = vsel %vm6058, %v6054, %v6060
    %v6063 = vld [vmem:[#allocation13] sm:$0xff]
    %v6064 = vld [vmem:[#allocation13 + $0x8] sm:$0xff]
    %v6065 = vld [vmem:[#allocation13 + $0x10] sm:$0xff]
    %v6066 = vld [vmem:[#allocation13 + $0x18] sm:$0xff]
    %v6067 = vld [vmem:[#allocation13 + $0x20] sm:$0xff]
    %v6068 = vld [vmem:[#allocation13 + $0x28] sm:$0xff]
    %v6069 = vld [vmem:[#allocation13 + $0x30] sm:$0xff]
    %v6070 = vld [vmem:[#allocation13 + $0x38] sm:$0xff]
    %v6071 = vld [vmem:[%s652] sm:$0xff]
    %v6072 = vld [vmem:[%s652 + $0x8] sm:$0xff]
    %v6073 = vld [vmem:[%s652 + $0x10] sm:$0xff]
    %v6074 = vld [vmem:[%s652 + $0x18] sm:$0xff]
    %v6075 = vld [vmem:[%s652 + $0x20] sm:$0xff]
    %v6076 = vld [vmem:[%s652 + $0x28] sm:$0xff]
    %v6077 = vld [vmem:[%s652 + $0x30] sm:$0xff]
    %v6078 = vld [vmem:[%s652 + $0x38] sm:$0xff]
    %v6080 = vrot.slane %v6061, 1
    %v6081 = vsel %vm663, %v6080, 0
    %6083 = vmatprep.subr.mxu0 0.0
    %6084 = vmatpush1.msra.mxu0 0.0
    %6085 = vmatprep.subr.mxu0 0.0
    %6086 = vmatpush1.msra.mxu0 0.0
    %6087 = vmatprep.subr.mxu0 0.0
    %6088 = vmatpush1.msra.mxu0 0.0
    %6089 = vmatprep.subr.mxu0 0.0
    %6090 = vmatpush1.msra.mxu0 0.0
    %6091 = vmatprep.subr.mxu0 0.0
    %6092 = vmatpush1.msra.mxu0 0.0
    %6093 = vmatprep.subr.mxu0 0.0
    %6094 = vmatpush1.msra.mxu0 0.0
    %6095 = vmatprep.subr.mxu0 0.0
    %6096 = vmatpush1.msra.mxu0 0.0
    %6097 = vmatprep.subr.mxu0 0.0
    %6098 = vmatpush1.msra.mxu0 0.0
    %6099 = vmatprep.subr.mxu0 0.0
    %6100 = vmatpush1.msra.mxu0 0.0
    %6101 = vmatprep.subr.mxu0 0.0
    %6102 = vmatpush1.msra.mxu0 0.0
    %6103 = vmatprep.subr.mxu0 0.0
    %6104 = vmatpush1.msra.mxu0 0.0
    %6105 = vmatprep.subr.mxu0 0.0
    %6106 = vmatpush1.msra.mxu0 0.0
    %6107 = vmatprep.subr.mxu0 0.0
    %6108 = vmatpush1.msra.mxu0 0.0
    %6109 = vmatprep.subr.mxu0 0.0
    %6110 = vmatpush1.msra.mxu0 0.0
    %6111 = vmatprep.subr.mxu0 0.0
    %6112 = vmatpush1.msra.mxu0 0.0
    %6113 = vmatprep.subr.mxu0 %v6072
    %6114 = vmatpush1.msra.mxu0 %v6071
    %6115 = vmatprep.subr.mxu0 0.0
    %6116 = vmatpush2.msra.mxu0 0.0
    %6117 = vmatprep.subr.mxu0 0.0
    %6118 = vmatpush2.msra.mxu0 0.0
    %6119 = vmatprep.subr.mxu0 0.0
    %6120 = vmatpush2.msra.mxu0 0.0
    %6121 = vmatprep.subr.mxu0 0.0
    %6122 = vmatpush2.msra.mxu0 0.0
    %6123 = vmatprep.subr.mxu0 0.0
    %6124 = vmatpush2.msra.mxu0 0.0
    %6125 = vmatprep.subr.mxu0 0.0
    %6126 = vmatpush2.msra.mxu0 0.0
    %6127 = vmatprep.subr.mxu0 0.0
    %6128 = vmatpush2.msra.mxu0 0.0
    %6129 = vmatprep.subr.mxu0 0.0
    %6130 = vmatpush2.msra.mxu0 0.0
    %6131 = vmatprep.subr.mxu0 0.0
    %6132 = vmatpush2.msra.mxu0 0.0
    %6133 = vmatprep.subr.mxu0 0.0
    %6134 = vmatpush2.msra.mxu0 0.0
    %6135 = vmatprep.subr.mxu0 0.0
    %6136 = vmatpush2.msra.mxu0 0.0
    %6137 = vmatprep.subr.mxu0 0.0
    %6138 = vmatpush2.msra.mxu0 0.0
    %6139 = vmatprep.subr.mxu0 0.0
    %6140 = vmatpush2.msra.mxu0 0.0
    %6141 = vmatprep.subr.mxu0 0.0
    %6142 = vmatpush2.msra.mxu0 0.0
    %6143 = vmatprep.subr.mxu0 0.0
    %6144 = vmatpush2.msra.mxu0 0.0
    %6145 = vmatprep.subr.mxu0 0.0
    %6146 = vmatpush2.msra.mxu0 0.0
    %6147 = vmatprep.mubr.f32.mxu0 0.0
    %6148 = vmatmul.mubr.f32.gmra.mxu0 %v6081
    %v6149 = vpop.f32.mrf.mxu0
    %v6150 = vadd.f32 0.0, %v6149
    %v6151 = vpop.f32.mrf.mxu0
    %v6152 = vadd.f32 0.0, %v6151
    %6153 = vdwg.mxu0
    %6154 = vmatprep.subr.mxu0 0.0
    %6155 = vmatpush1.msra.mxu0 0.0
    %6156 = vmatprep.subr.mxu0 0.0
    %6157 = vmatpush1.msra.mxu0 0.0
    %6158 = vmatprep.subr.mxu0 0.0
    %6159 = vmatpush1.msra.mxu0 0.0
    %6160 = vmatprep.subr.mxu0 0.0
    %6161 = vmatpush1.msra.mxu0 0.0
    %6162 = vmatprep.subr.mxu0 0.0
    %6163 = vmatpush1.msra.mxu0 0.0
    %6164 = vmatprep.subr.mxu0 0.0
    %6165 = vmatpush1.msra.mxu0 0.0
    %6166 = vmatprep.subr.mxu0 0.0
    %6167 = vmatpush1.msra.mxu0 0.0
    %6168 = vmatprep.subr.mxu0 0.0
    %6169 = vmatpush1.msra.mxu0 0.0
    %6170 = vmatprep.subr.mxu0 0.0
    %6171 = vmatpush1.msra.mxu0 0.0
    %6172 = vmatprep.subr.mxu0 0.0
    %6173 = vmatpush1.msra.mxu0 0.0
    %6174 = vmatprep.subr.mxu0 0.0
    %6175 = vmatpush1.msra.mxu0 0.0
    %6176 = vmatprep.subr.mxu0 0.0
    %6177 = vmatpush1.msra.mxu0 0.0
    %6178 = vmatprep.subr.mxu0 0.0
    %6179 = vmatpush1.msra.mxu0 0.0
    %6180 = vmatprep.subr.mxu0 0.0
    %6181 = vmatpush1.msra.mxu0 0.0
    %6182 = vmatprep.subr.mxu0 0.0
    %6183 = vmatpush1.msra.mxu0 0.0
    %6184 = vmatprep.subr.mxu0 %v6074
    %6185 = vmatpush1.msra.mxu0 %v6073
    %6186 = vmatprep.subr.mxu0 0.0
    %6187 = vmatpush2.msra.mxu0 0.0
    %6188 = vmatprep.subr.mxu0 0.0
    %6189 = vmatpush2.msra.mxu0 0.0
    %6190 = vmatprep.subr.mxu0 0.0
    %6191 = vmatpush2.msra.mxu0 0.0
    %6192 = vmatprep.subr.mxu0 0.0
    %6193 = vmatpush2.msra.mxu0 0.0
    %6194 = vmatprep.subr.mxu0 0.0
    %6195 = vmatpush2.msra.mxu0 0.0
    %6196 = vmatprep.subr.mxu0 0.0
    %6197 = vmatpush2.msra.mxu0 0.0
    %6198 = vmatprep.subr.mxu0 0.0
    %6199 = vmatpush2.msra.mxu0 0.0
    %6200 = vmatprep.subr.mxu0 0.0
    %6201 = vmatpush2.msra.mxu0 0.0
    %6202 = vmatprep.subr.mxu0 0.0
    %6203 = vmatpush2.msra.mxu0 0.0
    %6204 = vmatprep.subr.mxu0 0.0
    %6205 = vmatpush2.msra.mxu0 0.0
    %6206 = vmatprep.subr.mxu0 0.0
    %6207 = vmatpush2.msra.mxu0 0.0
    %6208 = vmatprep.subr.mxu0 0.0
    %6209 = vmatpush2.msra.mxu0 0.0
    %6210 = vmatprep.subr.mxu0 0.0
    %6211 = vmatpush2.msra.mxu0 0.0
    %6212 = vmatprep.subr.mxu0 0.0
    %6213 = vmatpush2.msra.mxu0 0.0
    %6214 = vmatprep.subr.mxu0 0.0
    %6215 = vmatpush2.msra.mxu0 0.0
    %6216 = vmatprep.subr.mxu0 0.0
    %6217 = vmatpush2.msra.mxu0 0.0
    %6218 = vmatprep.mubr.f32.mxu0 0.0
    %6219 = vmatmul.mubr.f32.gmra.mxu0 %v6081
    %v6220 = vpop.f32.mrf.mxu0
    %v6221 = vadd.f32 0.0, %v6220
    %v6222 = vpop.f32.mrf.mxu0
    %v6223 = vadd.f32 0.0, %v6222
    %6224 = vdwg.mxu0
    %6225 = vmatprep.subr.mxu0 0.0
    %6226 = vmatpush1.msra.mxu0 0.0
    %6227 = vmatprep.subr.mxu0 0.0
    %6228 = vmatpush1.msra.mxu0 0.0
    %6229 = vmatprep.subr.mxu0 0.0
    %6230 = vmatpush1.msra.mxu0 0.0
    %6231 = vmatprep.subr.mxu0 0.0
    %6232 = vmatpush1.msra.mxu0 0.0
    %6233 = vmatprep.subr.mxu0 0.0
    %6234 = vmatpush1.msra.mxu0 0.0
    %6235 = vmatprep.subr.mxu0 0.0
    %6236 = vmatpush1.msra.mxu0 0.0
    %6237 = vmatprep.subr.mxu0 0.0
    %6238 = vmatpush1.msra.mxu0 0.0
    %6239 = vmatprep.subr.mxu0 0.0
    %6240 = vmatpush1.msra.mxu0 0.0
    %6241 = vmatprep.subr.mxu0 0.0
    %6242 = vmatpush1.msra.mxu0 0.0
    %6243 = vmatprep.subr.mxu0 0.0
    %6244 = vmatpush1.msra.mxu0 0.0
    %6245 = vmatprep.subr.mxu0 0.0
    %6246 = vmatpush1.msra.mxu0 0.0
    %6247 = vmatprep.subr.mxu0 0.0
    %6248 = vmatpush1.msra.mxu0 0.0
    %6249 = vmatprep.subr.mxu0 0.0
    %6250 = vmatpush1.msra.mxu0 0.0
    %6251 = vmatprep.subr.mxu0 0.0
    %6252 = vmatpush1.msra.mxu0 0.0
    %6253 = vmatprep.subr.mxu0 0.0
    %6254 = vmatpush1.msra.mxu0 0.0
    %6255 = vmatprep.subr.mxu0 %v6076
    %6256 = vmatpush1.msra.mxu0 %v6075
    %6257 = vmatprep.subr.mxu0 0.0
    %6258 = vmatpush2.msra.mxu0 0.0
    %6259 = vmatprep.subr.mxu0 0.0
    %6260 = vmatpush2.msra.mxu0 0.0
    %6261 = vmatprep.subr.mxu0 0.0
    %6262 = vmatpush2.msra.mxu0 0.0
    %6263 = vmatprep.subr.mxu0 0.0
    %6264 = vmatpush2.msra.mxu0 0.0
    %6265 = vmatprep.subr.mxu0 0.0
    %6266 = vmatpush2.msra.mxu0 0.0
    %6267 = vmatprep.subr.mxu0 0.0
    %6268 = vmatpush2.msra.mxu0 0.0
    %6269 = vmatprep.subr.mxu0 0.0
    %6270 = vmatpush2.msra.mxu0 0.0
    %6271 = vmatprep.subr.mxu0 0.0
    %6272 = vmatpush2.msra.mxu0 0.0
    %6273 = vmatprep.subr.mxu0 0.0
    %6274 = vmatpush2.msra.mxu0 0.0
    %6275 = vmatprep.subr.mxu0 0.0
    %6276 = vmatpush2.msra.mxu0 0.0
    %6277 = vmatprep.subr.mxu0 0.0
    %6278 = vmatpush2.msra.mxu0 0.0
    %6279 = vmatprep.subr.mxu0 0.0
    %6280 = vmatpush2.msra.mxu0 0.0
    %6281 = vmatprep.subr.mxu0 0.0
    %6282 = vmatpush2.msra.mxu0 0.0
    %6283 = vmatprep.subr.mxu0 0.0
    %6284 = vmatpush2.msra.mxu0 0.0
    %6285 = vmatprep.subr.mxu0 0.0
    %6286 = vmatpush2.msra.mxu0 0.0
    %6287 = vmatprep.subr.mxu0 0.0
    %6288 = vmatpush2.msra.mxu0 0.0
    %6289 = vmatprep.mubr.f32.mxu0 0.0
    %6290 = vmatmul.mubr.f32.gmra.mxu0 %v6081
    %v6291 = vpop.f32.mrf.mxu0
    %v6292 = vadd.f32 0.0, %v6291
    %v6293 = vpop.f32.mrf.mxu0
    %v6294 = vadd.f32 0.0, %v6293
    %6295 = vdwg.mxu0
    %6296 = vmatprep.subr.mxu0 0.0
    %6297 = vmatpush1.msra.mxu0 0.0
    %6298 = vmatprep.subr.mxu0 0.0
    %6299 = vmatpush1.msra.mxu0 0.0
    %6300 = vmatprep.subr.mxu0 0.0
    %6301 = vmatpush1.msra.mxu0 0.0
    %6302 = vmatprep.subr.mxu0 0.0
    %6303 = vmatpush1.msra.mxu0 0.0
    %6304 = vmatprep.subr.mxu0 0.0
    %6305 = vmatpush1.msra.mxu0 0.0
    %6306 = vmatprep.subr.mxu0 0.0
    %6307 = vmatpush1.msra.mxu0 0.0
    %6308 = vmatprep.subr.mxu0 0.0
    %6309 = vmatpush1.msra.mxu0 0.0
    %6310 = vmatprep.subr.mxu0 0.0
    %6311 = vmatpush1.msra.mxu0 0.0
    %6312 = vmatprep.subr.mxu0 0.0
    %6313 = vmatpush1.msra.mxu0 0.0
    %6314 = vmatprep.subr.mxu0 0.0
    %6315 = vmatpush1.msra.mxu0 0.0
    %6316 = vmatprep.subr.mxu0 0.0
    %6317 = vmatpush1.msra.mxu0 0.0
    %6318 = vmatprep.subr.mxu0 0.0
    %6319 = vmatpush1.msra.mxu0 0.0
    %6320 = vmatprep.subr.mxu0 0.0
    %6321 = vmatpush1.msra.mxu0 0.0
    %6322 = vmatprep.subr.mxu0 0.0
    %6323 = vmatpush1.msra.mxu0 0.0
    %6324 = vmatprep.subr.mxu0 0.0
    %6325 = vmatpush1.msra.mxu0 0.0
    %6326 = vmatprep.subr.mxu0 %v6078
    %6327 = vmatpush1.msra.mxu0 %v6077
    %6328 = vmatprep.subr.mxu0 0.0
    %6329 = vmatpush2.msra.mxu0 0.0
    %6330 = vmatprep.subr.mxu0 0.0
    %6331 = vmatpush2.msra.mxu0 0.0
    %6332 = vmatprep.subr.mxu0 0.0
    %6333 = vmatpush2.msra.mxu0 0.0
    %6334 = vmatprep.subr.mxu0 0.0
    %6335 = vmatpush2.msra.mxu0 0.0
    %6336 = vmatprep.subr.mxu0 0.0
    %6337 = vmatpush2.msra.mxu0 0.0
    %6338 = vmatprep.subr.mxu0 0.0
    %6339 = vmatpush2.msra.mxu0 0.0
    %6340 = vmatprep.subr.mxu0 0.0
    %6341 = vmatpush2.msra.mxu0 0.0
    %6342 = vmatprep.subr.mxu0 0.0
    %6343 = vmatpush2.msra.mxu0 0.0
    %6344 = vmatprep.subr.mxu0 0.0
    %6345 = vmatpush2.msra.mxu0 0.0
    %6346 = vmatprep.subr.mxu0 0.0
    %6347 = vmatpush2.msra.mxu0 0.0
    %6348 = vmatprep.subr.mxu0 0.0
    %6349 = vmatpush2.msra.mxu0 0.0
    %6350 = vmatprep.subr.mxu0 0.0
    %6351 = vmatpush2.msra.mxu0 0.0
    %6352 = vmatprep.subr.mxu0 0.0
    %6353 = vmatpush2.msra.mxu0 0.0
    %6354 = vmatprep.subr.mxu0 0.0
    %6355 = vmatpush2.msra.mxu0 0.0
    %6356 = vmatprep.subr.mxu0 0.0
    %6357 = vmatpush2.msra.mxu0 0.0
    %6358 = vmatprep.subr.mxu0 0.0
    %6359 = vmatpush2.msra.mxu0 0.0
    %6360 = vmatprep.mubr.f32.mxu0 0.0
    %6361 = vmatmul.mubr.f32.gmra.mxu0 %v6081
    %v6362 = vpop.f32.mrf.mxu0
    %v6363 = vadd.f32 0.0, %v6362
    %v6364 = vpop.f32.mrf.mxu0
    %v6365 = vadd.f32 0.0, %v6364
    %6366 = vdwg.mxu0
    %v6367 = vsel %vm663, %v6061, 0
    %6369 = vmatprep.subr.mxu0 0.0
    %6370 = vmatpush1.msra.mxu0 0.0
    %6371 = vmatprep.subr.mxu0 0.0
    %6372 = vmatpush1.msra.mxu0 0.0
    %6373 = vmatprep.subr.mxu0 0.0
    %6374 = vmatpush1.msra.mxu0 0.0
    %6375 = vmatprep.subr.mxu0 0.0
    %6376 = vmatpush1.msra.mxu0 0.0
    %6377 = vmatprep.subr.mxu0 0.0
    %6378 = vmatpush1.msra.mxu0 0.0
    %6379 = vmatprep.subr.mxu0 0.0
    %6380 = vmatpush1.msra.mxu0 0.0
    %6381 = vmatprep.subr.mxu0 0.0
    %6382 = vmatpush1.msra.mxu0 0.0
    %6383 = vmatprep.subr.mxu0 0.0
    %6384 = vmatpush1.msra.mxu0 0.0
    %6385 = vmatprep.subr.mxu0 0.0
    %6386 = vmatpush1.msra.mxu0 0.0
    %6387 = vmatprep.subr.mxu0 0.0
    %6388 = vmatpush1.msra.mxu0 0.0
    %6389 = vmatprep.subr.mxu0 0.0
    %6390 = vmatpush1.msra.mxu0 0.0
    %6391 = vmatprep.subr.mxu0 0.0
    %6392 = vmatpush1.msra.mxu0 0.0
    %6393 = vmatprep.subr.mxu0 0.0
    %6394 = vmatpush1.msra.mxu0 0.0
    %6395 = vmatprep.subr.mxu0 0.0
    %6396 = vmatpush1.msra.mxu0 0.0
    %6397 = vmatprep.subr.mxu0 0.0
    %6398 = vmatpush1.msra.mxu0 0.0
    %6399 = vmatprep.subr.mxu0 %v6064
    %6400 = vmatpush1.msra.mxu0 %v6063
    %6401 = vmatprep.subr.mxu0 0.0
    %6402 = vmatpush2.msra.mxu0 0.0
    %6403 = vmatprep.subr.mxu0 0.0
    %6404 = vmatpush2.msra.mxu0 0.0
    %6405 = vmatprep.subr.mxu0 0.0
    %6406 = vmatpush2.msra.mxu0 0.0
    %6407 = vmatprep.subr.mxu0 0.0
    %6408 = vmatpush2.msra.mxu0 0.0
    %6409 = vmatprep.subr.mxu0 0.0
    %6410 = vmatpush2.msra.mxu0 0.0
    %6411 = vmatprep.subr.mxu0 0.0
    %6412 = vmatpush2.msra.mxu0 0.0
    %6413 = vmatprep.subr.mxu0 0.0
    %6414 = vmatpush2.msra.mxu0 0.0
    %6415 = vmatprep.subr.mxu0 0.0
    %6416 = vmatpush2.msra.mxu0 0.0
    %6417 = vmatprep.subr.mxu0 0.0
    %6418 = vmatpush2.msra.mxu0 0.0
    %6419 = vmatprep.subr.mxu0 0.0
    %6420 = vmatpush2.msra.mxu0 0.0
    %6421 = vmatprep.subr.mxu0 0.0
    %6422 = vmatpush2.msra.mxu0 0.0
    %6423 = vmatprep.subr.mxu0 0.0
    %6424 = vmatpush2.msra.mxu0 0.0
    %6425 = vmatprep.subr.mxu0 0.0
    %6426 = vmatpush2.msra.mxu0 0.0
    %6427 = vmatprep.subr.mxu0 0.0
    %6428 = vmatpush2.msra.mxu0 0.0
    %6429 = vmatprep.subr.mxu0 0.0
    %6430 = vmatpush2.msra.mxu0 0.0
    %6431 = vmatprep.subr.mxu0 0.0
    %6432 = vmatpush2.msra.mxu0 0.0
    %6433 = vmatprep.mubr.f32.mxu0 0.0
    %6434 = vmatmul.mubr.f32.gmra.mxu0 %v6367
    %v6435 = vpop.f32.mrf.mxu0
    %v6436 = vadd.f32 %v6150, %v6435
    %v6437 = vpop.f32.mrf.mxu0
    %v6438 = vadd.f32 %v6152, %v6437
    %6439 = vdwg.mxu0
    %6440 = vmatprep.subr.mxu0 0.0
    %6441 = vmatpush1.msra.mxu0 0.0
    %6442 = vmatprep.subr.mxu0 0.0
    %6443 = vmatpush1.msra.mxu0 0.0
    %6444 = vmatprep.subr.mxu0 0.0
    %6445 = vmatpush1.msra.mxu0 0.0
    %6446 = vmatprep.subr.mxu0 0.0
    %6447 = vmatpush1.msra.mxu0 0.0
    %6448 = vmatprep.subr.mxu0 0.0
    %6449 = vmatpush1.msra.mxu0 0.0
    %6450 = vmatprep.subr.mxu0 0.0
    %6451 = vmatpush1.msra.mxu0 0.0
    %6452 = vmatprep.subr.mxu0 0.0
    %6453 = vmatpush1.msra.mxu0 0.0
    %6454 = vmatprep.subr.mxu0 0.0
    %6455 = vmatpush1.msra.mxu0 0.0
    %6456 = vmatprep.subr.mxu0 0.0
    %6457 = vmatpush1.msra.mxu0 0.0
    %6458 = vmatprep.subr.mxu0 0.0
    %6459 = vmatpush1.msra.mxu0 0.0
    %6460 = vmatprep.subr.mxu0 0.0
    %6461 = vmatpush1.msra.mxu0 0.0
    %6462 = vmatprep.subr.mxu0 0.0
    %6463 = vmatpush1.msra.mxu0 0.0
    %6464 = vmatprep.subr.mxu0 0.0
    %6465 = vmatpush1.msra.mxu0 0.0
    %6466 = vmatprep.subr.mxu0 0.0
    %6467 = vmatpush1.msra.mxu0 0.0
    %6468 = vmatprep.subr.mxu0 0.0
    %6469 = vmatpush1.msra.mxu0 0.0
    %6470 = vmatprep.subr.mxu0 %v6066
    %6471 = vmatpush1.msra.mxu0 %v6065
    %6472 = vmatprep.subr.mxu0 0.0
    %6473 = vmatpush2.msra.mxu0 0.0
    %6474 = vmatprep.subr.mxu0 0.0
    %6475 = vmatpush2.msra.mxu0 0.0
    %6476 = vmatprep.subr.mxu0 0.0
    %6477 = vmatpush2.msra.mxu0 0.0
    %6478 = vmatprep.subr.mxu0 0.0
    %6479 = vmatpush2.msra.mxu0 0.0
    %6480 = vmatprep.subr.mxu0 0.0
    %6481 = vmatpush2.msra.mxu0 0.0
    %6482 = vmatprep.subr.mxu0 0.0
    %6483 = vmatpush2.msra.mxu0 0.0
    %6484 = vmatprep.subr.mxu0 0.0
    %6485 = vmatpush2.msra.mxu0 0.0
    %6486 = vmatprep.subr.mxu0 0.0
    %6487 = vmatpush2.msra.mxu0 0.0
    %6488 = vmatprep.subr.mxu0 0.0
    %6489 = vmatpush2.msra.mxu0 0.0
    %6490 = vmatprep.subr.mxu0 0.0
    %6491 = vmatpush2.msra.mxu0 0.0
    %6492 = vmatprep.subr.mxu0 0.0
    %6493 = vmatpush2.msra.mxu0 0.0
    %6494 = vmatprep.subr.mxu0 0.0
    %6495 = vmatpush2.msra.mxu0 0.0
    %6496 = vmatprep.subr.mxu0 0.0
    %6497 = vmatpush2.msra.mxu0 0.0
    %6498 = vmatprep.subr.mxu0 0.0
    %6499 = vmatpush2.msra.mxu0 0.0
    %6500 = vmatprep.subr.mxu0 0.0
    %6501 = vmatpush2.msra.mxu0 0.0
    %6502 = vmatprep.subr.mxu0 0.0
    %6503 = vmatpush2.msra.mxu0 0.0
    %6504 = vmatprep.mubr.f32.mxu0 0.0
    %6505 = vmatmul.mubr.f32.gmra.mxu0 %v6367
    %v6506 = vpop.f32.mrf.mxu0
    %v6507 = vadd.f32 %v6221, %v6506
    %v6508 = vpop.f32.mrf.mxu0
    %v6509 = vadd.f32 %v6223, %v6508
    %6510 = vdwg.mxu0
    %6511 = vmatprep.subr.mxu0 0.0
    %6512 = vmatpush1.msra.mxu0 0.0
    %6513 = vmatprep.subr.mxu0 0.0
    %6514 = vmatpush1.msra.mxu0 0.0
    %6515 = vmatprep.subr.mxu0 0.0
    %6516 = vmatpush1.msra.mxu0 0.0
    %6517 = vmatprep.subr.mxu0 0.0
    %6518 = vmatpush1.msra.mxu0 0.0
    %6519 = vmatprep.subr.mxu0 0.0
    %6520 = vmatpush1.msra.mxu0 0.0
    %6521 = vmatprep.subr.mxu0 0.0
    %6522 = vmatpush1.msra.mxu0 0.0
    %6523 = vmatprep.subr.mxu0 0.0
    %6524 = vmatpush1.msra.mxu0 0.0
    %6525 = vmatprep.subr.mxu0 0.0
    %6526 = vmatpush1.msra.mxu0 0.0
    %6527 = vmatprep.subr.mxu0 0.0
    %6528 = vmatpush1.msra.mxu0 0.0
    %6529 = vmatprep.subr.mxu0 0.0
    %6530 = vmatpush1.msra.mxu0 0.0
    %6531 = vmatprep.subr.mxu0 0.0
    %6532 = vmatpush1.msra.mxu0 0.0
    %6533 = vmatprep.subr.mxu0 0.0
    %6534 = vmatpush1.msra.mxu0 0.0
    %6535 = vmatprep.subr.mxu0 0.0
    %6536 = vmatpush1.msra.mxu0 0.0
    %6537 = vmatprep.subr.mxu0 0.0
    %6538 = vmatpush1.msra.mxu0 0.0
    %6539 = vmatprep.subr.mxu0 0.0
    %6540 = vmatpush1.msra.mxu0 0.0
    %6541 = vmatprep.subr.mxu0 %v6068
    %6542 = vmatpush1.msra.mxu0 %v6067
    %6543 = vmatprep.subr.mxu0 0.0
    %6544 = vmatpush2.msra.mxu0 0.0
    %6545 = vmatprep.subr.mxu0 0.0
    %6546 = vmatpush2.msra.mxu0 0.0
    %6547 = vmatprep.subr.mxu0 0.0
    %6548 = vmatpush2.msra.mxu0 0.0
    %6549 = vmatprep.subr.mxu0 0.0
    %6550 = vmatpush2.msra.mxu0 0.0
    %6551 = vmatprep.subr.mxu0 0.0
    %6552 = vmatpush2.msra.mxu0 0.0
    %6553 = vmatprep.subr.mxu0 0.0
    %6554 = vmatpush2.msra.mxu0 0.0
    %6555 = vmatprep.subr.mxu0 0.0
    %6556 = vmatpush2.msra.mxu0 0.0
    %6557 = vmatprep.subr.mxu0 0.0
    %6558 = vmatpush2.msra.mxu0 0.0
    %6559 = vmatprep.subr.mxu0 0.0
    %6560 = vmatpush2.msra.mxu0 0.0
    %6561 = vmatprep.subr.mxu0 0.0
    %6562 = vmatpush2.msra.mxu0 0.0
    %6563 = vmatprep.subr.mxu0 0.0
    %6564 = vmatpush2.msra.mxu0 0.0
    %6565 = vmatprep.subr.mxu0 0.0
    %6566 = vmatpush2.msra.mxu0 0.0
    %6567 = vmatprep.subr.mxu0 0.0
    %6568 = vmatpush2.msra.mxu0 0.0
    %6569 = vmatprep.subr.mxu0 0.0
    %6570 = vmatpush2.msra.mxu0 0.0
    %6571 = vmatprep.subr.mxu0 0.0
    %6572 = vmatpush2.msra.mxu0 0.0
    %6573 = vmatprep.subr.mxu0 0.0
    %6574 = vmatpush2.msra.mxu0 0.0
    %6575 = vmatprep.mubr.f32.mxu0 0.0
    %6576 = vmatmul.mubr.f32.gmra.mxu0 %v6367
    %v6577 = vpop.f32.mrf.mxu0
    %v6578 = vadd.f32 %v6292, %v6577
    %v6579 = vpop.f32.mrf.mxu0
    %v6580 = vadd.f32 %v6294, %v6579
    %6581 = vdwg.mxu0
    %6582 = vmatprep.subr.mxu0 0.0
    %6583 = vmatpush1.msra.mxu0 0.0
    %6584 = vmatprep.subr.mxu0 0.0
    %6585 = vmatpush1.msra.mxu0 0.0
    %6586 = vmatprep.subr.mxu0 0.0
    %6587 = vmatpush1.msra.mxu0 0.0
    %6588 = vmatprep.subr.mxu0 0.0
    %6589 = vmatpush1.msra.mxu0 0.0
    %6590 = vmatprep.subr.mxu0 0.0
    %6591 = vmatpush1.msra.mxu0 0.0
    %6592 = vmatprep.subr.mxu0 0.0
    %6593 = vmatpush1.msra.mxu0 0.0
    %6594 = vmatprep.subr.mxu0 0.0
    %6595 = vmatpush1.msra.mxu0 0.0
    %6596 = vmatprep.subr.mxu0 0.0
    %6597 = vmatpush1.msra.mxu0 0.0
    %6598 = vmatprep.subr.mxu0 0.0
    %6599 = vmatpush1.msra.mxu0 0.0
    %6600 = vmatprep.subr.mxu0 0.0
    %6601 = vmatpush1.msra.mxu0 0.0
    %6602 = vmatprep.subr.mxu0 0.0
    %6603 = vmatpush1.msra.mxu0 0.0
    %6604 = vmatprep.subr.mxu0 0.0
    %6605 = vmatpush1.msra.mxu0 0.0
    %6606 = vmatprep.subr.mxu0 0.0
    %6607 = vmatpush1.msra.mxu0 0.0
    %6608 = vmatprep.subr.mxu0 0.0
    %6609 = vmatpush1.msra.mxu0 0.0
    %6610 = vmatprep.subr.mxu0 0.0
    %6611 = vmatpush1.msra.mxu0 0.0
    %6612 = vmatprep.subr.mxu0 %v6070
    %6613 = vmatpush1.msra.mxu0 %v6069
    %6614 = vmatprep.subr.mxu0 0.0
    %6615 = vmatpush2.msra.mxu0 0.0
    %6616 = vmatprep.subr.mxu0 0.0
    %6617 = vmatpush2.msra.mxu0 0.0
    %6618 = vmatprep.subr.mxu0 0.0
    %6619 = vmatpush2.msra.mxu0 0.0
    %6620 = vmatprep.subr.mxu0 0.0
    %6621 = vmatpush2.msra.mxu0 0.0
    %6622 = vmatprep.subr.mxu0 0.0
    %6623 = vmatpush2.msra.mxu0 0.0
    %6624 = vmatprep.subr.mxu0 0.0
    %6625 = vmatpush2.msra.mxu0 0.0
    %6626 = vmatprep.subr.mxu0 0.0
    %6627 = vmatpush2.msra.mxu0 0.0
    %6628 = vmatprep.subr.mxu0 0.0
    %6629 = vmatpush2.msra.mxu0 0.0
    %6630 = vmatprep.subr.mxu0 0.0
    %6631 = vmatpush2.msra.mxu0 0.0
    %6632 = vmatprep.subr.mxu0 0.0
    %6633 = vmatpush2.msra.mxu0 0.0
    %6634 = vmatprep.subr.mxu0 0.0
    %6635 = vmatpush2.msra.mxu0 0.0
    %6636 = vmatprep.subr.mxu0 0.0
    %6637 = vmatpush2.msra.mxu0 0.0
    %6638 = vmatprep.subr.mxu0 0.0
    %6639 = vmatpush2.msra.mxu0 0.0
    %6640 = vmatprep.subr.mxu0 0.0
    %6641 = vmatpush2.msra.mxu0 0.0
    %6642 = vmatprep.subr.mxu0 0.0
    %6643 = vmatpush2.msra.mxu0 0.0
    %6644 = vmatprep.subr.mxu0 0.0
    %6645 = vmatpush2.msra.mxu0 0.0
    %6646 = vmatprep.mubr.f32.mxu0 0.0
    %6647 = vmatmul.mubr.f32.gmra.mxu0 %v6367
    %v6648 = vpop.f32.mrf.mxu0
    %v6649 = vadd.f32 %v6363, %v6648
    %v6650 = vpop.f32.mrf.mxu0
    %v6651 = vadd.f32 %v6365, %v6650
    %6652 = vdwg.mxu0
    %v6653 = vld [vmem:[%s1236] sm:$0xff]
    %v6654 = vld [vmem:[%s1236 + $0x8] sm:$0xff]
    %v6655 = vld [vmem:[%s1236 + $0x10] sm:$0xff]
    %v6656 = vld [vmem:[%s1236 + $0x18] sm:$0xff]
    %v6657 = vld [vmem:[%s1236 + $0x20] sm:$0xff]
    %v6658 = vld [vmem:[%s1236 + $0x28] sm:$0xff]
    %v6659 = vld [vmem:[%s1236 + $0x30] sm:$0xff]
    %v6660 = vld [vmem:[%s1236 + $0x38] sm:$0xff]
    %v6661 = vrot.slane %v6061, 2
    %v6662 = vsel %vm663, %v6661, 0
    %6664 = vmatprep.subr.mxu0 0.0
    %6665 = vmatpush1.msra.mxu0 0.0
    %6666 = vmatprep.subr.mxu0 0.0
    %6667 = vmatpush1.msra.mxu0 0.0
    %6668 = vmatprep.subr.mxu0 0.0
    %6669 = vmatpush1.msra.mxu0 0.0
    %6670 = vmatprep.subr.mxu0 0.0
    %6671 = vmatpush1.msra.mxu0 0.0
    %6672 = vmatprep.subr.mxu0 0.0
    %6673 = vmatpush1.msra.mxu0 0.0
    %6674 = vmatprep.subr.mxu0 0.0
    %6675 = vmatpush1.msra.mxu0 0.0
    %6676 = vmatprep.subr.mxu0 0.0
    %6677 = vmatpush1.msra.mxu0 0.0
    %6678 = vmatprep.subr.mxu0 0.0
    %6679 = vmatpush1.msra.mxu0 0.0
    %6680 = vmatprep.subr.mxu0 0.0
    %6681 = vmatpush1.msra.mxu0 0.0
    %6682 = vmatprep.subr.mxu0 0.0
    %6683 = vmatpush1.msra.mxu0 0.0
    %6684 = vmatprep.subr.mxu0 0.0
    %6685 = vmatpush1.msra.mxu0 0.0
    %6686 = vmatprep.subr.mxu0 0.0
    %6687 = vmatpush1.msra.mxu0 0.0
    %6688 = vmatprep.subr.mxu0 0.0
    %6689 = vmatpush1.msra.mxu0 0.0
    %6690 = vmatprep.subr.mxu0 0.0
    %6691 = vmatpush1.msra.mxu0 0.0
    %6692 = vmatprep.subr.mxu0 0.0
    %6693 = vmatpush1.msra.mxu0 0.0
    %6694 = vmatprep.subr.mxu0 %v6654
    %6695 = vmatpush1.msra.mxu0 %v6653
    %6696 = vmatprep.subr.mxu0 0.0
    %6697 = vmatpush2.msra.mxu0 0.0
    %6698 = vmatprep.subr.mxu0 0.0
    %6699 = vmatpush2.msra.mxu0 0.0
    %6700 = vmatprep.subr.mxu0 0.0
    %6701 = vmatpush2.msra.mxu0 0.0
    %6702 = vmatprep.subr.mxu0 0.0
    %6703 = vmatpush2.msra.mxu0 0.0
    %6704 = vmatprep.subr.mxu0 0.0
    %6705 = vmatpush2.msra.mxu0 0.0
    %6706 = vmatprep.subr.mxu0 0.0
    %6707 = vmatpush2.msra.mxu0 0.0
    %6708 = vmatprep.subr.mxu0 0.0
    %6709 = vmatpush2.msra.mxu0 0.0
    %6710 = vmatprep.subr.mxu0 0.0
    %6711 = vmatpush2.msra.mxu0 0.0
    %6712 = vmatprep.subr.mxu0 0.0
    %6713 = vmatpush2.msra.mxu0 0.0
    %6714 = vmatprep.subr.mxu0 0.0
    %6715 = vmatpush2.msra.mxu0 0.0
    %6716 = vmatprep.subr.mxu0 0.0
    %6717 = vmatpush2.msra.mxu0 0.0
    %6718 = vmatprep.subr.mxu0 0.0
    %6719 = vmatpush2.msra.mxu0 0.0
    %6720 = vmatprep.subr.mxu0 0.0
    %6721 = vmatpush2.msra.mxu0 0.0
    %6722 = vmatprep.subr.mxu0 0.0
    %6723 = vmatpush2.msra.mxu0 0.0
    %6724 = vmatprep.subr.mxu0 0.0
    %6725 = vmatpush2.msra.mxu0 0.0
    %6726 = vmatprep.subr.mxu0 0.0
    %6727 = vmatpush2.msra.mxu0 0.0
    %6728 = vmatprep.mubr.f32.mxu0 0.0
    %6729 = vmatmul.mubr.f32.gmra.mxu0 %v6662
    %v6730 = vpop.f32.mrf.mxu0
    %v6731 = vadd.f32 0.0, %v6730
    %v6732 = vpop.f32.mrf.mxu0
    %v6733 = vadd.f32 0.0, %v6732
    %6734 = vdwg.mxu0
    %6735 = vmatprep.subr.mxu0 0.0
    %6736 = vmatpush1.msra.mxu0 0.0
    %6737 = vmatprep.subr.mxu0 0.0
    %6738 = vmatpush1.msra.mxu0 0.0
    %6739 = vmatprep.subr.mxu0 0.0
    %6740 = vmatpush1.msra.mxu0 0.0
    %6741 = vmatprep.subr.mxu0 0.0
    %6742 = vmatpush1.msra.mxu0 0.0
    %6743 = vmatprep.subr.mxu0 0.0
    %6744 = vmatpush1.msra.mxu0 0.0
    %6745 = vmatprep.subr.mxu0 0.0
    %6746 = vmatpush1.msra.mxu0 0.0
    %6747 = vmatprep.subr.mxu0 0.0
    %6748 = vmatpush1.msra.mxu0 0.0
    %6749 = vmatprep.subr.mxu0 0.0
    %6750 = vmatpush1.msra.mxu0 0.0
    %6751 = vmatprep.subr.mxu0 0.0
    %6752 = vmatpush1.msra.mxu0 0.0
    %6753 = vmatprep.subr.mxu0 0.0
    %6754 = vmatpush1.msra.mxu0 0.0
    %6755 = vmatprep.subr.mxu0 0.0
    %6756 = vmatpush1.msra.mxu0 0.0
    %6757 = vmatprep.subr.mxu0 0.0
    %6758 = vmatpush1.msra.mxu0 0.0
    %6759 = vmatprep.subr.mxu0 0.0
    %6760 = vmatpush1.msra.mxu0 0.0
    %6761 = vmatprep.subr.mxu0 0.0
    %6762 = vmatpush1.msra.mxu0 0.0
    %6763 = vmatprep.subr.mxu0 0.0
    %6764 = vmatpush1.msra.mxu0 0.0
    %6765 = vmatprep.subr.mxu0 %v6656
    %6766 = vmatpush1.msra.mxu0 %v6655
    %6767 = vmatprep.subr.mxu0 0.0
    %6768 = vmatpush2.msra.mxu0 0.0
    %6769 = vmatprep.subr.mxu0 0.0
    %6770 = vmatpush2.msra.mxu0 0.0
    %6771 = vmatprep.subr.mxu0 0.0
    %6772 = vmatpush2.msra.mxu0 0.0
    %6773 = vmatprep.subr.mxu0 0.0
    %6774 = vmatpush2.msra.mxu0 0.0
    %6775 = vmatprep.subr.mxu0 0.0
    %6776 = vmatpush2.msra.mxu0 0.0
    %6777 = vmatprep.subr.mxu0 0.0
    %6778 = vmatpush2.msra.mxu0 0.0
    %6779 = vmatprep.subr.mxu0 0.0
    %6780 = vmatpush2.msra.mxu0 0.0
    %6781 = vmatprep.subr.mxu0 0.0
    %6782 = vmatpush2.msra.mxu0 0.0
    %6783 = vmatprep.subr.mxu0 0.0
    %6784 = vmatpush2.msra.mxu0 0.0
    %6785 = vmatprep.subr.mxu0 0.0
    %6786 = vmatpush2.msra.mxu0 0.0
    %6787 = vmatprep.subr.mxu0 0.0
    %6788 = vmatpush2.msra.mxu0 0.0
    %6789 = vmatprep.subr.mxu0 0.0
    %6790 = vmatpush2.msra.mxu0 0.0
    %6791 = vmatprep.subr.mxu0 0.0
    %6792 = vmatpush2.msra.mxu0 0.0
    %6793 = vmatprep.subr.mxu0 0.0
    %6794 = vmatpush2.msra.mxu0 0.0
    %6795 = vmatprep.subr.mxu0 0.0
    %6796 = vmatpush2.msra.mxu0 0.0
    %6797 = vmatprep.subr.mxu0 0.0
    %6798 = vmatpush2.msra.mxu0 0.0
    %6799 = vmatprep.mubr.f32.mxu0 0.0
    %6800 = vmatmul.mubr.f32.gmra.mxu0 %v6662
    %v6801 = vpop.f32.mrf.mxu0
    %v6802 = vadd.f32 0.0, %v6801
    %v6803 = vpop.f32.mrf.mxu0
    %v6804 = vadd.f32 0.0, %v6803
    %6805 = vdwg.mxu0
    %6806 = vmatprep.subr.mxu0 0.0
    %6807 = vmatpush1.msra.mxu0 0.0
    %6808 = vmatprep.subr.mxu0 0.0
    %6809 = vmatpush1.msra.mxu0 0.0
    %6810 = vmatprep.subr.mxu0 0.0
    %6811 = vmatpush1.msra.mxu0 0.0
    %6812 = vmatprep.subr.mxu0 0.0
    %6813 = vmatpush1.msra.mxu0 0.0
    %6814 = vmatprep.subr.mxu0 0.0
    %6815 = vmatpush1.msra.mxu0 0.0
    %6816 = vmatprep.subr.mxu0 0.0
    %6817 = vmatpush1.msra.mxu0 0.0
    %6818 = vmatprep.subr.mxu0 0.0
    %6819 = vmatpush1.msra.mxu0 0.0
    %6820 = vmatprep.subr.mxu0 0.0
    %6821 = vmatpush1.msra.mxu0 0.0
    %6822 = vmatprep.subr.mxu0 0.0
    %6823 = vmatpush1.msra.mxu0 0.0
    %6824 = vmatprep.subr.mxu0 0.0
    %6825 = vmatpush1.msra.mxu0 0.0
    %6826 = vmatprep.subr.mxu0 0.0
    %6827 = vmatpush1.msra.mxu0 0.0
    %6828 = vmatprep.subr.mxu0 0.0
    %6829 = vmatpush1.msra.mxu0 0.0
    %6830 = vmatprep.subr.mxu0 0.0
    %6831 = vmatpush1.msra.mxu0 0.0
    %6832 = vmatprep.subr.mxu0 0.0
    %6833 = vmatpush1.msra.mxu0 0.0
    %6834 = vmatprep.subr.mxu0 0.0
    %6835 = vmatpush1.msra.mxu0 0.0
    %6836 = vmatprep.subr.mxu0 %v6658
    %6837 = vmatpush1.msra.mxu0 %v6657
    %6838 = vmatprep.subr.mxu0 0.0
    %6839 = vmatpush2.msra.mxu0 0.0
    %6840 = vmatprep.subr.mxu0 0.0
    %6841 = vmatpush2.msra.mxu0 0.0
    %6842 = vmatprep.subr.mxu0 0.0
    %6843 = vmatpush2.msra.mxu0 0.0
    %6844 = vmatprep.subr.mxu0 0.0
    %6845 = vmatpush2.msra.mxu0 0.0
    %6846 = vmatprep.subr.mxu0 0.0
    %6847 = vmatpush2.msra.mxu0 0.0
    %6848 = vmatprep.subr.mxu0 0.0
    %6849 = vmatpush2.msra.mxu0 0.0
    %6850 = vmatprep.subr.mxu0 0.0
    %6851 = vmatpush2.msra.mxu0 0.0
    %6852 = vmatprep.subr.mxu0 0.0
    %6853 = vmatpush2.msra.mxu0 0.0
    %6854 = vmatprep.subr.mxu0 0.0
    %6855 = vmatpush2.msra.mxu0 0.0
    %6856 = vmatprep.subr.mxu0 0.0
    %6857 = vmatpush2.msra.mxu0 0.0
    %6858 = vmatprep.subr.mxu0 0.0
    %6859 = vmatpush2.msra.mxu0 0.0
    %6860 = vmatprep.subr.mxu0 0.0
    %6861 = vmatpush2.msra.mxu0 0.0
    %6862 = vmatprep.subr.mxu0 0.0
    %6863 = vmatpush2.msra.mxu0 0.0
    %6864 = vmatprep.subr.mxu0 0.0
    %6865 = vmatpush2.msra.mxu0 0.0
    %6866 = vmatprep.subr.mxu0 0.0
    %6867 = vmatpush2.msra.mxu0 0.0
    %6868 = vmatprep.subr.mxu0 0.0
    %6869 = vmatpush2.msra.mxu0 0.0
    %6870 = vmatprep.mubr.f32.mxu0 0.0
    %6871 = vmatmul.mubr.f32.gmra.mxu0 %v6662
    %v6872 = vpop.f32.mrf.mxu0
    %v6873 = vadd.f32 0.0, %v6872
    %v6874 = vpop.f32.mrf.mxu0
    %v6875 = vadd.f32 0.0, %v6874
    %6876 = vdwg.mxu0
    %6877 = vmatprep.subr.mxu0 0.0
    %6878 = vmatpush1.msra.mxu0 0.0
    %6879 = vmatprep.subr.mxu0 0.0
    %6880 = vmatpush1.msra.mxu0 0.0
    %6881 = vmatprep.subr.mxu0 0.0
    %6882 = vmatpush1.msra.mxu0 0.0
    %6883 = vmatprep.subr.mxu0 0.0
    %6884 = vmatpush1.msra.mxu0 0.0
    %6885 = vmatprep.subr.mxu0 0.0
    %6886 = vmatpush1.msra.mxu0 0.0
    %6887 = vmatprep.subr.mxu0 0.0
    %6888 = vmatpush1.msra.mxu0 0.0
    %6889 = vmatprep.subr.mxu0 0.0
    %6890 = vmatpush1.msra.mxu0 0.0
    %6891 = vmatprep.subr.mxu0 0.0
    %6892 = vmatpush1.msra.mxu0 0.0
    %6893 = vmatprep.subr.mxu0 0.0
    %6894 = vmatpush1.msra.mxu0 0.0
    %6895 = vmatprep.subr.mxu0 0.0
    %6896 = vmatpush1.msra.mxu0 0.0
    %6897 = vmatprep.subr.mxu0 0.0
    %6898 = vmatpush1.msra.mxu0 0.0
    %6899 = vmatprep.subr.mxu0 0.0
    %6900 = vmatpush1.msra.mxu0 0.0
    %6901 = vmatprep.subr.mxu0 0.0
    %6902 = vmatpush1.msra.mxu0 0.0
    %6903 = vmatprep.subr.mxu0 0.0
    %6904 = vmatpush1.msra.mxu0 0.0
    %6905 = vmatprep.subr.mxu0 0.0
    %6906 = vmatpush1.msra.mxu0 0.0
    %6907 = vmatprep.subr.mxu0 %v6660
    %6908 = vmatpush1.msra.mxu0 %v6659
    %6909 = vmatprep.subr.mxu0 0.0
    %6910 = vmatpush2.msra.mxu0 0.0
    %6911 = vmatprep.subr.mxu0 0.0
    %6912 = vmatpush2.msra.mxu0 0.0
    %6913 = vmatprep.subr.mxu0 0.0
    %6914 = vmatpush2.msra.mxu0 0.0
    %6915 = vmatprep.subr.mxu0 0.0
    %6916 = vmatpush2.msra.mxu0 0.0
    %6917 = vmatprep.subr.mxu0 0.0
    %6918 = vmatpush2.msra.mxu0 0.0
    %6919 = vmatprep.subr.mxu0 0.0
    %6920 = vmatpush2.msra.mxu0 0.0
    %6921 = vmatprep.subr.mxu0 0.0
    %6922 = vmatpush2.msra.mxu0 0.0
    %6923 = vmatprep.subr.mxu0 0.0
    %6924 = vmatpush2.msra.mxu0 0.0
    %6925 = vmatprep.subr.mxu0 0.0
    %6926 = vmatpush2.msra.mxu0 0.0
    %6927 = vmatprep.subr.mxu0 0.0
    %6928 = vmatpush2.msra.mxu0 0.0
    %6929 = vmatprep.subr.mxu0 0.0
    %6930 = vmatpush2.msra.mxu0 0.0
    %6931 = vmatprep.subr.mxu0 0.0
    %6932 = vmatpush2.msra.mxu0 0.0
    %6933 = vmatprep.subr.mxu0 0.0
    %6934 = vmatpush2.msra.mxu0 0.0
    %6935 = vmatprep.subr.mxu0 0.0
    %6936 = vmatpush2.msra.mxu0 0.0
    %6937 = vmatprep.subr.mxu0 0.0
    %6938 = vmatpush2.msra.mxu0 0.0
    %6939 = vmatprep.subr.mxu0 0.0
    %6940 = vmatpush2.msra.mxu0 0.0
    %6941 = vmatprep.mubr.f32.mxu0 0.0
    %6942 = vmatmul.mubr.f32.gmra.mxu0 %v6662
    %v6943 = vpop.f32.mrf.mxu0
    %v6944 = vadd.f32 0.0, %v6943
    %v6945 = vpop.f32.mrf.mxu0
    %v6946 = vadd.f32 0.0, %v6945
    %6947 = vdwg.mxu0
    %v6948 = vadd.f32 %v6436, %v6731
    %v6949 = vadd.f32 %v6438, %v6733
    %v6950 = vadd.f32 %v6507, %v6802
    %v6951 = vadd.f32 %v6509, %v6804
    %v6952 = vadd.f32 %v6578, %v6873
    %v6953 = vadd.f32 %v6580, %v6875
    %v6954 = vadd.f32 %v6649, %v6944
    %v6955 = vadd.f32 %v6651, %v6946
    %v6956 = vld [vmem:[%s1540] sm:$0xff]
    %v6957 = vld [vmem:[%s1540 + $0x8] sm:$0xff]
    %v6958 = vld [vmem:[%s1540 + $0x10] sm:$0xff]
    %v6959 = vld [vmem:[%s1540 + $0x18] sm:$0xff]
    %v6960 = vld [vmem:[%s1540 + $0x20] sm:$0xff]
    %v6961 = vld [vmem:[%s1540 + $0x28] sm:$0xff]
    %v6962 = vld [vmem:[%s1540 + $0x30] sm:$0xff]
    %v6963 = vld [vmem:[%s1540 + $0x38] sm:$0xff]
    %v6964 = vrot.slane %v6061, 3
    %v6965 = vsel %vm663, %v6964, 0
    %6967 = vmatprep.subr.mxu0 0.0
    %6968 = vmatpush1.msra.mxu0 0.0
    %6969 = vmatprep.subr.mxu0 0.0
    %6970 = vmatpush1.msra.mxu0 0.0
    %6971 = vmatprep.subr.mxu0 0.0
    %6972 = vmatpush1.msra.mxu0 0.0
    %6973 = vmatprep.subr.mxu0 0.0
    %6974 = vmatpush1.msra.mxu0 0.0
    %6975 = vmatprep.subr.mxu0 0.0
    %6976 = vmatpush1.msra.mxu0 0.0
    %6977 = vmatprep.subr.mxu0 0.0
    %6978 = vmatpush1.msra.mxu0 0.0
    %6979 = vmatprep.subr.mxu0 0.0
    %6980 = vmatpush1.msra.mxu0 0.0
    %6981 = vmatprep.subr.mxu0 0.0
    %6982 = vmatpush1.msra.mxu0 0.0
    %6983 = vmatprep.subr.mxu0 0.0
    %6984 = vmatpush1.msra.mxu0 0.0
    %6985 = vmatprep.subr.mxu0 0.0
    %6986 = vmatpush1.msra.mxu0 0.0
    %6987 = vmatprep.subr.mxu0 0.0
    %6988 = vmatpush1.msra.mxu0 0.0
    %6989 = vmatprep.subr.mxu0 0.0
    %6990 = vmatpush1.msra.mxu0 0.0
    %6991 = vmatprep.subr.mxu0 0.0
    %6992 = vmatpush1.msra.mxu0 0.0
    %6993 = vmatprep.subr.mxu0 0.0
    %6994 = vmatpush1.msra.mxu0 0.0
    %6995 = vmatprep.subr.mxu0 0.0
    %6996 = vmatpush1.msra.mxu0 0.0
    %6997 = vmatprep.subr.mxu0 %v6957
    %6998 = vmatpush1.msra.mxu0 %v6956
    %6999 = vmatprep.subr.mxu0 0.0
    %7000 = vmatpush2.msra.mxu0 0.0
    %7001 = vmatprep.subr.mxu0 0.0
    %7002 = vmatpush2.msra.mxu0 0.0
    %7003 = vmatprep.subr.mxu0 0.0
    %7004 = vmatpush2.msra.mxu0 0.0
    %7005 = vmatprep.subr.mxu0 0.0
    %7006 = vmatpush2.msra.mxu0 0.0
    %7007 = vmatprep.subr.mxu0 0.0
    %7008 = vmatpush2.msra.mxu0 0.0
    %7009 = vmatprep.subr.mxu0 0.0
    %7010 = vmatpush2.msra.mxu0 0.0
    %7011 = vmatprep.subr.mxu0 0.0
    %7012 = vmatpush2.msra.mxu0 0.0
    %7013 = vmatprep.subr.mxu0 0.0
    %7014 = vmatpush2.msra.mxu0 0.0
    %7015 = vmatprep.subr.mxu0 0.0
    %7016 = vmatpush2.msra.mxu0 0.0
    %7017 = vmatprep.subr.mxu0 0.0
    %7018 = vmatpush2.msra.mxu0 0.0
    %7019 = vmatprep.subr.mxu0 0.0
    %7020 = vmatpush2.msra.mxu0 0.0
    %7021 = vmatprep.subr.mxu0 0.0
    %7022 = vmatpush2.msra.mxu0 0.0
    %7023 = vmatprep.subr.mxu0 0.0
    %7024 = vmatpush2.msra.mxu0 0.0
    %7025 = vmatprep.subr.mxu0 0.0
    %7026 = vmatpush2.msra.mxu0 0.0
    %7027 = vmatprep.subr.mxu0 0.0
    %7028 = vmatpush2.msra.mxu0 0.0
    %7029 = vmatprep.subr.mxu0 0.0
    %7030 = vmatpush2.msra.mxu0 0.0
    %7031 = vmatprep.mubr.f32.mxu0 0.0
    %7032 = vmatmul.mubr.f32.gmra.mxu0 %v6965
    %v7033 = vpop.f32.mrf.mxu0
    %v7034 = vadd.f32 0.0, %v7033
    %v7035 = vpop.f32.mrf.mxu0
    %v7036 = vadd.f32 0.0, %v7035
    %7037 = vdwg.mxu0
    %7038 = vmatprep.subr.mxu0 0.0
    %7039 = vmatpush1.msra.mxu0 0.0
    %7040 = vmatprep.subr.mxu0 0.0
    %7041 = vmatpush1.msra.mxu0 0.0
    %7042 = vmatprep.subr.mxu0 0.0
    %7043 = vmatpush1.msra.mxu0 0.0
    %7044 = vmatprep.subr.mxu0 0.0
    %7045 = vmatpush1.msra.mxu0 0.0
    %7046 = vmatprep.subr.mxu0 0.0
    %7047 = vmatpush1.msra.mxu0 0.0
    %7048 = vmatprep.subr.mxu0 0.0
    %7049 = vmatpush1.msra.mxu0 0.0
    %7050 = vmatprep.subr.mxu0 0.0
    %7051 = vmatpush1.msra.mxu0 0.0
    %7052 = vmatprep.subr.mxu0 0.0
    %7053 = vmatpush1.msra.mxu0 0.0
    %7054 = vmatprep.subr.mxu0 0.0
    %7055 = vmatpush1.msra.mxu0 0.0
    %7056 = vmatprep.subr.mxu0 0.0
    %7057 = vmatpush1.msra.mxu0 0.0
    %7058 = vmatprep.subr.mxu0 0.0
    %7059 = vmatpush1.msra.mxu0 0.0
    %7060 = vmatprep.subr.mxu0 0.0
    %7061 = vmatpush1.msra.mxu0 0.0
    %7062 = vmatprep.subr.mxu0 0.0
    %7063 = vmatpush1.msra.mxu0 0.0
    %7064 = vmatprep.subr.mxu0 0.0
    %7065 = vmatpush1.msra.mxu0 0.0
    %7066 = vmatprep.subr.mxu0 0.0
    %7067 = vmatpush1.msra.mxu0 0.0
    %7068 = vmatprep.subr.mxu0 %v6959
    %7069 = vmatpush1.msra.mxu0 %v6958
    %7070 = vmatprep.subr.mxu0 0.0
    %7071 = vmatpush2.msra.mxu0 0.0
    %7072 = vmatprep.subr.mxu0 0.0
    %7073 = vmatpush2.msra.mxu0 0.0
    %7074 = vmatprep.subr.mxu0 0.0
    %7075 = vmatpush2.msra.mxu0 0.0
    %7076 = vmatprep.subr.mxu0 0.0
    %7077 = vmatpush2.msra.mxu0 0.0
    %7078 = vmatprep.subr.mxu0 0.0
    %7079 = vmatpush2.msra.mxu0 0.0
    %7080 = vmatprep.subr.mxu0 0.0
    %7081 = vmatpush2.msra.mxu0 0.0
    %7082 = vmatprep.subr.mxu0 0.0
    %7083 = vmatpush2.msra.mxu0 0.0
    %7084 = vmatprep.subr.mxu0 0.0
    %7085 = vmatpush2.msra.mxu0 0.0
    %7086 = vmatprep.subr.mxu0 0.0
    %7087 = vmatpush2.msra.mxu0 0.0
    %7088 = vmatprep.subr.mxu0 0.0
    %7089 = vmatpush2.msra.mxu0 0.0
    %7090 = vmatprep.subr.mxu0 0.0
    %7091 = vmatpush2.msra.mxu0 0.0
    %7092 = vmatprep.subr.mxu0 0.0
    %7093 = vmatpush2.msra.mxu0 0.0
    %7094 = vmatprep.subr.mxu0 0.0
    %7095 = vmatpush2.msra.mxu0 0.0
    %7096 = vmatprep.subr.mxu0 0.0
    %7097 = vmatpush2.msra.mxu0 0.0
    %7098 = vmatprep.subr.mxu0 0.0
    %7099 = vmatpush2.msra.mxu0 0.0
    %7100 = vmatprep.subr.mxu0 0.0
    %7101 = vmatpush2.msra.mxu0 0.0
    %7102 = vmatprep.mubr.f32.mxu0 0.0
    %7103 = vmatmul.mubr.f32.gmra.mxu0 %v6965
    %v7104 = vpop.f32.mrf.mxu0
    %v7105 = vadd.f32 0.0, %v7104
    %v7106 = vpop.f32.mrf.mxu0
    %v7107 = vadd.f32 0.0, %v7106
    %7108 = vdwg.mxu0
    %7109 = vmatprep.subr.mxu0 0.0
    %7110 = vmatpush1.msra.mxu0 0.0
    %7111 = vmatprep.subr.mxu0 0.0
    %7112 = vmatpush1.msra.mxu0 0.0
    %7113 = vmatprep.subr.mxu0 0.0
    %7114 = vmatpush1.msra.mxu0 0.0
    %7115 = vmatprep.subr.mxu0 0.0
    %7116 = vmatpush1.msra.mxu0 0.0
    %7117 = vmatprep.subr.mxu0 0.0
    %7118 = vmatpush1.msra.mxu0 0.0
    %7119 = vmatprep.subr.mxu0 0.0
    %7120 = vmatpush1.msra.mxu0 0.0
    %7121 = vmatprep.subr.mxu0 0.0
    %7122 = vmatpush1.msra.mxu0 0.0
    %7123 = vmatprep.subr.mxu0 0.0
    %7124 = vmatpush1.msra.mxu0 0.0
    %7125 = vmatprep.subr.mxu0 0.0
    %7126 = vmatpush1.msra.mxu0 0.0
    %7127 = vmatprep.subr.mxu0 0.0
    %7128 = vmatpush1.msra.mxu0 0.0
    %7129 = vmatprep.subr.mxu0 0.0
    %7130 = vmatpush1.msra.mxu0 0.0
    %7131 = vmatprep.subr.mxu0 0.0
    %7132 = vmatpush1.msra.mxu0 0.0
    %7133 = vmatprep.subr.mxu0 0.0
    %7134 = vmatpush1.msra.mxu0 0.0
    %7135 = vmatprep.subr.mxu0 0.0
    %7136 = vmatpush1.msra.mxu0 0.0
    %7137 = vmatprep.subr.mxu0 0.0
    %7138 = vmatpush1.msra.mxu0 0.0
    %7139 = vmatprep.subr.mxu0 %v6961
    %7140 = vmatpush1.msra.mxu0 %v6960
    %7141 = vmatprep.subr.mxu0 0.0
    %7142 = vmatpush2.msra.mxu0 0.0
    %7143 = vmatprep.subr.mxu0 0.0
    %7144 = vmatpush2.msra.mxu0 0.0
    %7145 = vmatprep.subr.mxu0 0.0
    %7146 = vmatpush2.msra.mxu0 0.0
    %7147 = vmatprep.subr.mxu0 0.0
    %7148 = vmatpush2.msra.mxu0 0.0
    %7149 = vmatprep.subr.mxu0 0.0
    %7150 = vmatpush2.msra.mxu0 0.0
    %7151 = vmatprep.subr.mxu0 0.0
    %7152 = vmatpush2.msra.mxu0 0.0
    %7153 = vmatprep.subr.mxu0 0.0
    %7154 = vmatpush2.msra.mxu0 0.0
    %7155 = vmatprep.subr.mxu0 0.0
    %7156 = vmatpush2.msra.mxu0 0.0
    %7157 = vmatprep.subr.mxu0 0.0
    %7158 = vmatpush2.msra.mxu0 0.0
    %7159 = vmatprep.subr.mxu0 0.0
    %7160 = vmatpush2.msra.mxu0 0.0
    %7161 = vmatprep.subr.mxu0 0.0
    %7162 = vmatpush2.msra.mxu0 0.0
    %7163 = vmatprep.subr.mxu0 0.0
    %7164 = vmatpush2.msra.mxu0 0.0
    %7165 = vmatprep.subr.mxu0 0.0
    %7166 = vmatpush2.msra.mxu0 0.0
    %7167 = vmatprep.subr.mxu0 0.0
    %7168 = vmatpush2.msra.mxu0 0.0
    %7169 = vmatprep.subr.mxu0 0.0
    %7170 = vmatpush2.msra.mxu0 0.0
    %7171 = vmatprep.subr.mxu0 0.0
    %7172 = vmatpush2.msra.mxu0 0.0
    %7173 = vmatprep.mubr.f32.mxu0 0.0
    %7174 = vmatmul.mubr.f32.gmra.mxu0 %v6965
    %v7175 = vpop.f32.mrf.mxu0
    %v7176 = vadd.f32 0.0, %v7175
    %v7177 = vpop.f32.mrf.mxu0
    %v7178 = vadd.f32 0.0, %v7177
    %7179 = vdwg.mxu0
    %7180 = vmatprep.subr.mxu0 0.0
    %7181 = vmatpush1.msra.mxu0 0.0
    %7182 = vmatprep.subr.mxu0 0.0
    %7183 = vmatpush1.msra.mxu0 0.0
    %7184 = vmatprep.subr.mxu0 0.0
    %7185 = vmatpush1.msra.mxu0 0.0
    %7186 = vmatprep.subr.mxu0 0.0
    %7187 = vmatpush1.msra.mxu0 0.0
    %7188 = vmatprep.subr.mxu0 0.0
    %7189 = vmatpush1.msra.mxu0 0.0
    %7190 = vmatprep.subr.mxu0 0.0
    %7191 = vmatpush1.msra.mxu0 0.0
    %7192 = vmatprep.subr.mxu0 0.0
    %7193 = vmatpush1.msra.mxu0 0.0
    %7194 = vmatprep.subr.mxu0 0.0
    %7195 = vmatpush1.msra.mxu0 0.0
    %7196 = vmatprep.subr.mxu0 0.0
    %7197 = vmatpush1.msra.mxu0 0.0
    %7198 = vmatprep.subr.mxu0 0.0
    %7199 = vmatpush1.msra.mxu0 0.0
    %7200 = vmatprep.subr.mxu0 0.0
    %7201 = vmatpush1.msra.mxu0 0.0
    %7202 = vmatprep.subr.mxu0 0.0
    %7203 = vmatpush1.msra.mxu0 0.0
    %7204 = vmatprep.subr.mxu0 0.0
    %7205 = vmatpush1.msra.mxu0 0.0
    %7206 = vmatprep.subr.mxu0 0.0
    %7207 = vmatpush1.msra.mxu0 0.0
    %7208 = vmatprep.subr.mxu0 0.0
    %7209 = vmatpush1.msra.mxu0 0.0
    %7210 = vmatprep.subr.mxu0 %v6963
    %7211 = vmatpush1.msra.mxu0 %v6962
    %7212 = vmatprep.subr.mxu0 0.0
    %7213 = vmatpush2.msra.mxu0 0.0
    %7214 = vmatprep.subr.mxu0 0.0
    %7215 = vmatpush2.msra.mxu0 0.0
    %7216 = vmatprep.subr.mxu0 0.0
    %7217 = vmatpush2.msra.mxu0 0.0
    %7218 = vmatprep.subr.mxu0 0.0
    %7219 = vmatpush2.msra.mxu0 0.0
    %7220 = vmatprep.subr.mxu0 0.0
    %7221 = vmatpush2.msra.mxu0 0.0
    %7222 = vmatprep.subr.mxu0 0.0
    %7223 = vmatpush2.msra.mxu0 0.0
    %7224 = vmatprep.subr.mxu0 0.0
    %7225 = vmatpush2.msra.mxu0 0.0
    %7226 = vmatprep.subr.mxu0 0.0
    %7227 = vmatpush2.msra.mxu0 0.0
    %7228 = vmatprep.subr.mxu0 0.0
    %7229 = vmatpush2.msra.mxu0 0.0
    %7230 = vmatprep.subr.mxu0 0.0
    %7231 = vmatpush2.msra.mxu0 0.0
    %7232 = vmatprep.subr.mxu0 0.0
    %7233 = vmatpush2.msra.mxu0 0.0
    %7234 = vmatprep.subr.mxu0 0.0
    %7235 = vmatpush2.msra.mxu0 0.0
    %7236 = vmatprep.subr.mxu0 0.0
    %7237 = vmatpush2.msra.mxu0 0.0
    %7238 = vmatprep.subr.mxu0 0.0
    %7239 = vmatpush2.msra.mxu0 0.0
    %7240 = vmatprep.subr.mxu0 0.0
    %7241 = vmatpush2.msra.mxu0 0.0
    %7242 = vmatprep.subr.mxu0 0.0
    %7243 = vmatpush2.msra.mxu0 0.0
    %7244 = vmatprep.mubr.f32.mxu0 0.0
    %7245 = vmatmul.mubr.f32.gmra.mxu0 %v6965
    %v7246 = vpop.f32.mrf.mxu0
    %v7247 = vadd.f32 0.0, %v7246
    %v7248 = vpop.f32.mrf.mxu0
    %v7249 = vadd.f32 0.0, %v7248
    %7250 = vdwg.mxu0
    %v7251 = vadd.f32 %v6948, %v7034
    %v7252 = vadd.f32 %v6949, %v7036
    %v7253 = vadd.f32 %v6950, %v7105
    %v7254 = vadd.f32 %v6951, %v7107
    %v7255 = vadd.f32 %v6952, %v7176
    %v7256 = vadd.f32 %v6953, %v7178
    %v7257 = vadd.f32 %v6954, %v7247
    %v7258 = vadd.f32 %v6955, %v7249
    %v7259 = vld [vmem:[%s1844] sm:$0xff]
    %v7260 = vld [vmem:[%s1844 + $0x8] sm:$0xff]
    %v7261 = vld [vmem:[%s1844 + $0x10] sm:$0xff]
    %v7262 = vld [vmem:[%s1844 + $0x18] sm:$0xff]
    %v7263 = vld [vmem:[%s1844 + $0x20] sm:$0xff]
    %v7264 = vld [vmem:[%s1844 + $0x28] sm:$0xff]
    %v7265 = vld [vmem:[%s1844 + $0x30] sm:$0xff]
    %v7266 = vld [vmem:[%s1844 + $0x38] sm:$0xff]
    %v7267 = vrot.slane %v6061, 4
    %v7268 = vsel %vm663, %v7267, 0
    %7270 = vmatprep.subr.mxu0 0.0
    %7271 = vmatpush1.msra.mxu0 0.0
    %7272 = vmatprep.subr.mxu0 0.0
    %7273 = vmatpush1.msra.mxu0 0.0
    %7274 = vmatprep.subr.mxu0 0.0
    %7275 = vmatpush1.msra.mxu0 0.0
    %7276 = vmatprep.subr.mxu0 0.0
    %7277 = vmatpush1.msra.mxu0 0.0
    %7278 = vmatprep.subr.mxu0 0.0
    %7279 = vmatpush1.msra.mxu0 0.0
    %7280 = vmatprep.subr.mxu0 0.0
    %7281 = vmatpush1.msra.mxu0 0.0
    %7282 = vmatprep.subr.mxu0 0.0
    %7283 = vmatpush1.msra.mxu0 0.0
    %7284 = vmatprep.subr.mxu0 0.0
    %7285 = vmatpush1.msra.mxu0 0.0
    %7286 = vmatprep.subr.mxu0 0.0
    %7287 = vmatpush1.msra.mxu0 0.0
    %7288 = vmatprep.subr.mxu0 0.0
    %7289 = vmatpush1.msra.mxu0 0.0
    %7290 = vmatprep.subr.mxu0 0.0
    %7291 = vmatpush1.msra.mxu0 0.0
    %7292 = vmatprep.subr.mxu0 0.0
    %7293 = vmatpush1.msra.mxu0 0.0
    %7294 = vmatprep.subr.mxu0 0.0
    %7295 = vmatpush1.msra.mxu0 0.0
    %7296 = vmatprep.subr.mxu0 0.0
    %7297 = vmatpush1.msra.mxu0 0.0
    %7298 = vmatprep.subr.mxu0 0.0
    %7299 = vmatpush1.msra.mxu0 0.0
    %7300 = vmatprep.subr.mxu0 %v7260
    %7301 = vmatpush1.msra.mxu0 %v7259
    %7302 = vmatprep.subr.mxu0 0.0
    %7303 = vmatpush2.msra.mxu0 0.0
    %7304 = vmatprep.subr.mxu0 0.0
    %7305 = vmatpush2.msra.mxu0 0.0
    %7306 = vmatprep.subr.mxu0 0.0
    %7307 = vmatpush2.msra.mxu0 0.0
    %7308 = vmatprep.subr.mxu0 0.0
    %7309 = vmatpush2.msra.mxu0 0.0
    %7310 = vmatprep.subr.mxu0 0.0
    %7311 = vmatpush2.msra.mxu0 0.0
    %7312 = vmatprep.subr.mxu0 0.0
    %7313 = vmatpush2.msra.mxu0 0.0
    %7314 = vmatprep.subr.mxu0 0.0
    %7315 = vmatpush2.msra.mxu0 0.0
    %7316 = vmatprep.subr.mxu0 0.0
    %7317 = vmatpush2.msra.mxu0 0.0
    %7318 = vmatprep.subr.mxu0 0.0
    %7319 = vmatpush2.msra.mxu0 0.0
    %7320 = vmatprep.subr.mxu0 0.0
    %7321 = vmatpush2.msra.mxu0 0.0
    %7322 = vmatprep.subr.mxu0 0.0
    %7323 = vmatpush2.msra.mxu0 0.0
    %7324 = vmatprep.subr.mxu0 0.0
    %7325 = vmatpush2.msra.mxu0 0.0
    %7326 = vmatprep.subr.mxu0 0.0
    %7327 = vmatpush2.msra.mxu0 0.0
    %7328 = vmatprep.subr.mxu0 0.0
    %7329 = vmatpush2.msra.mxu0 0.0
    %7330 = vmatprep.subr.mxu0 0.0
    %7331 = vmatpush2.msra.mxu0 0.0
    %7332 = vmatprep.subr.mxu0 0.0
    %7333 = vmatpush2.msra.mxu0 0.0
    %7334 = vmatprep.mubr.f32.mxu0 0.0
    %7335 = vmatmul.mubr.f32.gmra.mxu0 %v7268
    %v7336 = vpop.f32.mrf.mxu0
    %v7337 = vadd.f32 0.0, %v7336
    %v7338 = vpop.f32.mrf.mxu0
    %v7339 = vadd.f32 0.0, %v7338
    %7340 = vdwg.mxu0
    %7341 = vmatprep.subr.mxu0 0.0
    %7342 = vmatpush1.msra.mxu0 0.0
    %7343 = vmatprep.subr.mxu0 0.0
    %7344 = vmatpush1.msra.mxu0 0.0
    %7345 = vmatprep.subr.mxu0 0.0
    %7346 = vmatpush1.msra.mxu0 0.0
    %7347 = vmatprep.subr.mxu0 0.0
    %7348 = vmatpush1.msra.mxu0 0.0
    %7349 = vmatprep.subr.mxu0 0.0
    %7350 = vmatpush1.msra.mxu0 0.0
    %7351 = vmatprep.subr.mxu0 0.0
    %7352 = vmatpush1.msra.mxu0 0.0
    %7353 = vmatprep.subr.mxu0 0.0
    %7354 = vmatpush1.msra.mxu0 0.0
    %7355 = vmatprep.subr.mxu0 0.0
    %7356 = vmatpush1.msra.mxu0 0.0
    %7357 = vmatprep.subr.mxu0 0.0
    %7358 = vmatpush1.msra.mxu0 0.0
    %7359 = vmatprep.subr.mxu0 0.0
    %7360 = vmatpush1.msra.mxu0 0.0
    %7361 = vmatprep.subr.mxu0 0.0
    %7362 = vmatpush1.msra.mxu0 0.0
    %7363 = vmatprep.subr.mxu0 0.0
    %7364 = vmatpush1.msra.mxu0 0.0
    %7365 = vmatprep.subr.mxu0 0.0
    %7366 = vmatpush1.msra.mxu0 0.0
    %7367 = vmatprep.subr.mxu0 0.0
    %7368 = vmatpush1.msra.mxu0 0.0
    %7369 = vmatprep.subr.mxu0 0.0
    %7370 = vmatpush1.msra.mxu0 0.0
    %7371 = vmatprep.subr.mxu0 %v7262
    %7372 = vmatpush1.msra.mxu0 %v7261
    %7373 = vmatprep.subr.mxu0 0.0
    %7374 = vmatpush2.msra.mxu0 0.0
    %7375 = vmatprep.subr.mxu0 0.0
    %7376 = vmatpush2.msra.mxu0 0.0
    %7377 = vmatprep.subr.mxu0 0.0
    %7378 = vmatpush2.msra.mxu0 0.0
    %7379 = vmatprep.subr.mxu0 0.0
    %7380 = vmatpush2.msra.mxu0 0.0
    %7381 = vmatprep.subr.mxu0 0.0
    %7382 = vmatpush2.msra.mxu0 0.0
    %7383 = vmatprep.subr.mxu0 0.0
    %7384 = vmatpush2.msra.mxu0 0.0
    %7385 = vmatprep.subr.mxu0 0.0
    %7386 = vmatpush2.msra.mxu0 0.0
    %7387 = vmatprep.subr.mxu0 0.0
    %7388 = vmatpush2.msra.mxu0 0.0
    %7389 = vmatprep.subr.mxu0 0.0
    %7390 = vmatpush2.msra.mxu0 0.0
    %7391 = vmatprep.subr.mxu0 0.0
    %7392 = vmatpush2.msra.mxu0 0.0
    %7393 = vmatprep.subr.mxu0 0.0
    %7394 = vmatpush2.msra.mxu0 0.0
    %7395 = vmatprep.subr.mxu0 0.0
    %7396 = vmatpush2.msra.mxu0 0.0
    %7397 = vmatprep.subr.mxu0 0.0
    %7398 = vmatpush2.msra.mxu0 0.0
    %7399 = vmatprep.subr.mxu0 0.0
    %7400 = vmatpush2.msra.mxu0 0.0
    %7401 = vmatprep.subr.mxu0 0.0
    %7402 = vmatpush2.msra.mxu0 0.0
    %7403 = vmatprep.subr.mxu0 0.0
    %7404 = vmatpush2.msra.mxu0 0.0
    %7405 = vmatprep.mubr.f32.mxu0 0.0
    %7406 = vmatmul.mubr.f32.gmra.mxu0 %v7268
    %v7407 = vpop.f32.mrf.mxu0
    %v7408 = vadd.f32 0.0, %v7407
    %v7409 = vpop.f32.mrf.mxu0
    %v7410 = vadd.f32 0.0, %v7409
    %7411 = vdwg.mxu0
    %7412 = vmatprep.subr.mxu0 0.0
    %7413 = vmatpush1.msra.mxu0 0.0
    %7414 = vmatprep.subr.mxu0 0.0
    %7415 = vmatpush1.msra.mxu0 0.0
    %7416 = vmatprep.subr.mxu0 0.0
    %7417 = vmatpush1.msra.mxu0 0.0
    %7418 = vmatprep.subr.mxu0 0.0
    %7419 = vmatpush1.msra.mxu0 0.0
    %7420 = vmatprep.subr.mxu0 0.0
    %7421 = vmatpush1.msra.mxu0 0.0
    %7422 = vmatprep.subr.mxu0 0.0
    %7423 = vmatpush1.msra.mxu0 0.0
    %7424 = vmatprep.subr.mxu0 0.0
    %7425 = vmatpush1.msra.mxu0 0.0
    %7426 = vmatprep.subr.mxu0 0.0
    %7427 = vmatpush1.msra.mxu0 0.0
    %7428 = vmatprep.subr.mxu0 0.0
    %7429 = vmatpush1.msra.mxu0 0.0
    %7430 = vmatprep.subr.mxu0 0.0
    %7431 = vmatpush1.msra.mxu0 0.0
    %7432 = vmatprep.subr.mxu0 0.0
    %7433 = vmatpush1.msra.mxu0 0.0
    %7434 = vmatprep.subr.mxu0 0.0
    %7435 = vmatpush1.msra.mxu0 0.0
    %7436 = vmatprep.subr.mxu0 0.0
    %7437 = vmatpush1.msra.mxu0 0.0
    %7438 = vmatprep.subr.mxu0 0.0
    %7439 = vmatpush1.msra.mxu0 0.0
    %7440 = vmatprep.subr.mxu0 0.0
    %7441 = vmatpush1.msra.mxu0 0.0
    %7442 = vmatprep.subr.mxu0 %v7264
    %7443 = vmatpush1.msra.mxu0 %v7263
    %7444 = vmatprep.subr.mxu0 0.0
    %7445 = vmatpush2.msra.mxu0 0.0
    %7446 = vmatprep.subr.mxu0 0.0
    %7447 = vmatpush2.msra.mxu0 0.0
    %7448 = vmatprep.subr.mxu0 0.0
    %7449 = vmatpush2.msra.mxu0 0.0
    %7450 = vmatprep.subr.mxu0 0.0
    %7451 = vmatpush2.msra.mxu0 0.0
    %7452 = vmatprep.subr.mxu0 0.0
    %7453 = vmatpush2.msra.mxu0 0.0
    %7454 = vmatprep.subr.mxu0 0.0
    %7455 = vmatpush2.msra.mxu0 0.0
    %7456 = vmatprep.subr.mxu0 0.0
    %7457 = vmatpush2.msra.mxu0 0.0
    %7458 = vmatprep.subr.mxu0 0.0
    %7459 = vmatpush2.msra.mxu0 0.0
    %7460 = vmatprep.subr.mxu0 0.0
    %7461 = vmatpush2.msra.mxu0 0.0
    %7462 = vmatprep.subr.mxu0 0.0
    %7463 = vmatpush2.msra.mxu0 0.0
    %7464 = vmatprep.subr.mxu0 0.0
    %7465 = vmatpush2.msra.mxu0 0.0
    %7466 = vmatprep.subr.mxu0 0.0
    %7467 = vmatpush2.msra.mxu0 0.0
    %7468 = vmatprep.subr.mxu0 0.0
    %7469 = vmatpush2.msra.mxu0 0.0
    %7470 = vmatprep.subr.mxu0 0.0
    %7471 = vmatpush2.msra.mxu0 0.0
    %7472 = vmatprep.subr.mxu0 0.0
    %7473 = vmatpush2.msra.mxu0 0.0
    %7474 = vmatprep.subr.mxu0 0.0
    %7475 = vmatpush2.msra.mxu0 0.0
    %7476 = vmatprep.mubr.f32.mxu0 0.0
    %7477 = vmatmul.mubr.f32.gmra.mxu0 %v7268
    %v7478 = vpop.f32.mrf.mxu0
    %v7479 = vadd.f32 0.0, %v7478
    %v7480 = vpop.f32.mrf.mxu0
    %v7481 = vadd.f32 0.0, %v7480
    %7482 = vdwg.mxu0
    %7483 = vmatprep.subr.mxu0 0.0
    %7484 = vmatpush1.msra.mxu0 0.0
    %7485 = vmatprep.subr.mxu0 0.0
    %7486 = vmatpush1.msra.mxu0 0.0
    %7487 = vmatprep.subr.mxu0 0.0
    %7488 = vmatpush1.msra.mxu0 0.0
    %7489 = vmatprep.subr.mxu0 0.0
    %7490 = vmatpush1.msra.mxu0 0.0
    %7491 = vmatprep.subr.mxu0 0.0
    %7492 = vmatpush1.msra.mxu0 0.0
    %7493 = vmatprep.subr.mxu0 0.0
    %7494 = vmatpush1.msra.mxu0 0.0
    %7495 = vmatprep.subr.mxu0 0.0
    %7496 = vmatpush1.msra.mxu0 0.0
    %7497 = vmatprep.subr.mxu0 0.0
    %7498 = vmatpush1.msra.mxu0 0.0
    %7499 = vmatprep.subr.mxu0 0.0
    %7500 = vmatpush1.msra.mxu0 0.0
    %7501 = vmatprep.subr.mxu0 0.0
    %7502 = vmatpush1.msra.mxu0 0.0
    %7503 = vmatprep.subr.mxu0 0.0
    %7504 = vmatpush1.msra.mxu0 0.0
    %7505 = vmatprep.subr.mxu0 0.0
    %7506 = vmatpush1.msra.mxu0 0.0
    %7507 = vmatprep.subr.mxu0 0.0
    %7508 = vmatpush1.msra.mxu0 0.0
    %7509 = vmatprep.subr.mxu0 0.0
    %7510 = vmatpush1.msra.mxu0 0.0
    %7511 = vmatprep.subr.mxu0 0.0
    %7512 = vmatpush1.msra.mxu0 0.0
    %7513 = vmatprep.subr.mxu0 %v7266
    %7514 = vmatpush1.msra.mxu0 %v7265
    %7515 = vmatprep.subr.mxu0 0.0
    %7516 = vmatpush2.msra.mxu0 0.0
    %7517 = vmatprep.subr.mxu0 0.0
    %7518 = vmatpush2.msra.mxu0 0.0
    %7519 = vmatprep.subr.mxu0 0.0
    %7520 = vmatpush2.msra.mxu0 0.0
    %7521 = vmatprep.subr.mxu0 0.0
    %7522 = vmatpush2.msra.mxu0 0.0
    %7523 = vmatprep.subr.mxu0 0.0
    %7524 = vmatpush2.msra.mxu0 0.0
    %7525 = vmatprep.subr.mxu0 0.0
    %7526 = vmatpush2.msra.mxu0 0.0
    %7527 = vmatprep.subr.mxu0 0.0
    %7528 = vmatpush2.msra.mxu0 0.0
    %7529 = vmatprep.subr.mxu0 0.0
    %7530 = vmatpush2.msra.mxu0 0.0
    %7531 = vmatprep.subr.mxu0 0.0
    %7532 = vmatpush2.msra.mxu0 0.0
    %7533 = vmatprep.subr.mxu0 0.0
    %7534 = vmatpush2.msra.mxu0 0.0
    %7535 = vmatprep.subr.mxu0 0.0
    %7536 = vmatpush2.msra.mxu0 0.0
    %7537 = vmatprep.subr.mxu0 0.0
    %7538 = vmatpush2.msra.mxu0 0.0
    %7539 = vmatprep.subr.mxu0 0.0
    %7540 = vmatpush2.msra.mxu0 0.0
    %7541 = vmatprep.subr.mxu0 0.0
    %7542 = vmatpush2.msra.mxu0 0.0
    %7543 = vmatprep.subr.mxu0 0.0
    %7544 = vmatpush2.msra.mxu0 0.0
    %7545 = vmatprep.subr.mxu0 0.0
    %7546 = vmatpush2.msra.mxu0 0.0
    %7547 = vmatprep.mubr.f32.mxu0 0.0
    %7548 = vmatmul.mubr.f32.gmra.mxu0 %v7268
    %v7549 = vpop.f32.mrf.mxu0
    %v7550 = vadd.f32 0.0, %v7549
    %v7551 = vpop.f32.mrf.mxu0
    %v7552 = vadd.f32 0.0, %v7551
    %7553 = vdwg.mxu0
    %v7554 = vadd.f32 %v7251, %v7337
    %v7555 = vadd.f32 %v7252, %v7339
    %v7556 = vadd.f32 %v7253, %v7408
    %v7557 = vadd.f32 %v7254, %v7410
    %v7558 = vadd.f32 %v7255, %v7479
    %v7559 = vadd.f32 %v7256, %v7481
    %v7560 = vadd.f32 %v7257, %v7550
    %v7561 = vadd.f32 %v7258, %v7552
    %v7562 = vld [vmem:[%s2148] sm:$0xff]
    %v7563 = vld [vmem:[%s2148 + $0x8] sm:$0xff]
    %v7564 = vld [vmem:[%s2148 + $0x10] sm:$0xff]
    %v7565 = vld [vmem:[%s2148 + $0x18] sm:$0xff]
    %v7566 = vld [vmem:[%s2148 + $0x20] sm:$0xff]
    %v7567 = vld [vmem:[%s2148 + $0x28] sm:$0xff]
    %v7568 = vld [vmem:[%s2148 + $0x30] sm:$0xff]
    %v7569 = vld [vmem:[%s2148 + $0x38] sm:$0xff]
    %v7570 = vrot.slane %v6061, 5
    %v7571 = vsel %vm663, %v7570, 0
    %7573 = vmatprep.subr.mxu0 0.0
    %7574 = vmatpush1.msra.mxu0 0.0
    %7575 = vmatprep.subr.mxu0 0.0
    %7576 = vmatpush1.msra.mxu0 0.0
    %7577 = vmatprep.subr.mxu0 0.0
    %7578 = vmatpush1.msra.mxu0 0.0
    %7579 = vmatprep.subr.mxu0 0.0
    %7580 = vmatpush1.msra.mxu0 0.0
    %7581 = vmatprep.subr.mxu0 0.0
    %7582 = vmatpush1.msra.mxu0 0.0
    %7583 = vmatprep.subr.mxu0 0.0
    %7584 = vmatpush1.msra.mxu0 0.0
    %7585 = vmatprep.subr.mxu0 0.0
    %7586 = vmatpush1.msra.mxu0 0.0
    %7587 = vmatprep.subr.mxu0 0.0
    %7588 = vmatpush1.msra.mxu0 0.0
    %7589 = vmatprep.subr.mxu0 0.0
    %7590 = vmatpush1.msra.mxu0 0.0
    %7591 = vmatprep.subr.mxu0 0.0
    %7592 = vmatpush1.msra.mxu0 0.0
    %7593 = vmatprep.subr.mxu0 0.0
    %7594 = vmatpush1.msra.mxu0 0.0
    %7595 = vmatprep.subr.mxu0 0.0
    %7596 = vmatpush1.msra.mxu0 0.0
    %7597 = vmatprep.subr.mxu0 0.0
    %7598 = vmatpush1.msra.mxu0 0.0
    %7599 = vmatprep.subr.mxu0 0.0
    %7600 = vmatpush1.msra.mxu0 0.0
    %7601 = vmatprep.subr.mxu0 0.0
    %7602 = vmatpush1.msra.mxu0 0.0
    %7603 = vmatprep.subr.mxu0 %v7563
    %7604 = vmatpush1.msra.mxu0 %v7562
    %7605 = vmatprep.subr.mxu0 0.0
    %7606 = vmatpush2.msra.mxu0 0.0
    %7607 = vmatprep.subr.mxu0 0.0
    %7608 = vmatpush2.msra.mxu0 0.0
    %7609 = vmatprep.subr.mxu0 0.0
    %7610 = vmatpush2.msra.mxu0 0.0
    %7611 = vmatprep.subr.mxu0 0.0
    %7612 = vmatpush2.msra.mxu0 0.0
    %7613 = vmatprep.subr.mxu0 0.0
    %7614 = vmatpush2.msra.mxu0 0.0
    %7615 = vmatprep.subr.mxu0 0.0
    %7616 = vmatpush2.msra.mxu0 0.0
    %7617 = vmatprep.subr.mxu0 0.0
    %7618 = vmatpush2.msra.mxu0 0.0
    %7619 = vmatprep.subr.mxu0 0.0
    %7620 = vmatpush2.msra.mxu0 0.0
    %7621 = vmatprep.subr.mxu0 0.0
    %7622 = vmatpush2.msra.mxu0 0.0
    %7623 = vmatprep.subr.mxu0 0.0
    %7624 = vmatpush2.msra.mxu0 0.0
    %7625 = vmatprep.subr.mxu0 0.0
    %7626 = vmatpush2.msra.mxu0 0.0
    %7627 = vmatprep.subr.mxu0 0.0
    %7628 = vmatpush2.msra.mxu0 0.0
    %7629 = vmatprep.subr.mxu0 0.0
    %7630 = vmatpush2.msra.mxu0 0.0
    %7631 = vmatprep.subr.mxu0 0.0
    %7632 = vmatpush2.msra.mxu0 0.0
    %7633 = vmatprep.subr.mxu0 0.0
    %7634 = vmatpush2.msra.mxu0 0.0
    %7635 = vmatprep.subr.mxu0 0.0
    %7636 = vmatpush2.msra.mxu0 0.0
    %7637 = vmatprep.mubr.f32.mxu0 0.0
    %7638 = vmatmul.mubr.f32.gmra.mxu0 %v7571
    %v7639 = vpop.f32.mrf.mxu0
    %v7640 = vadd.f32 0.0, %v7639
    %v7641 = vpop.f32.mrf.mxu0
    %v7642 = vadd.f32 0.0, %v7641
    %7643 = vdwg.mxu0
    %7644 = vmatprep.subr.mxu0 0.0
    %7645 = vmatpush1.msra.mxu0 0.0
    %7646 = vmatprep.subr.mxu0 0.0
    %7647 = vmatpush1.msra.mxu0 0.0
    %7648 = vmatprep.subr.mxu0 0.0
    %7649 = vmatpush1.msra.mxu0 0.0
    %7650 = vmatprep.subr.mxu0 0.0
    %7651 = vmatpush1.msra.mxu0 0.0
    %7652 = vmatprep.subr.mxu0 0.0
    %7653 = vmatpush1.msra.mxu0 0.0
    %7654 = vmatprep.subr.mxu0 0.0
    %7655 = vmatpush1.msra.mxu0 0.0
    %7656 = vmatprep.subr.mxu0 0.0
    %7657 = vmatpush1.msra.mxu0 0.0
    %7658 = vmatprep.subr.mxu0 0.0
    %7659 = vmatpush1.msra.mxu0 0.0
    %7660 = vmatprep.subr.mxu0 0.0
    %7661 = vmatpush1.msra.mxu0 0.0
    %7662 = vmatprep.subr.mxu0 0.0
    %7663 = vmatpush1.msra.mxu0 0.0
    %7664 = vmatprep.subr.mxu0 0.0
    %7665 = vmatpush1.msra.mxu0 0.0
    %7666 = vmatprep.subr.mxu0 0.0
    %7667 = vmatpush1.msra.mxu0 0.0
    %7668 = vmatprep.subr.mxu0 0.0
    %7669 = vmatpush1.msra.mxu0 0.0
    %7670 = vmatprep.subr.mxu0 0.0
    %7671 = vmatpush1.msra.mxu0 0.0
    %7672 = vmatprep.subr.mxu0 0.0
    %7673 = vmatpush1.msra.mxu0 0.0
    %7674 = vmatprep.subr.mxu0 %v7565
    %7675 = vmatpush1.msra.mxu0 %v7564
    %7676 = vmatprep.subr.mxu0 0.0
    %7677 = vmatpush2.msra.mxu0 0.0
    %7678 = vmatprep.subr.mxu0 0.0
    %7679 = vmatpush2.msra.mxu0 0.0
    %7680 = vmatprep.subr.mxu0 0.0
    %7681 = vmatpush2.msra.mxu0 0.0
    %7682 = vmatprep.subr.mxu0 0.0
    %7683 = vmatpush2.msra.mxu0 0.0
    %7684 = vmatprep.subr.mxu0 0.0
    %7685 = vmatpush2.msra.mxu0 0.0
    %7686 = vmatprep.subr.mxu0 0.0
    %7687 = vmatpush2.msra.mxu0 0.0
    %7688 = vmatprep.subr.mxu0 0.0
    %7689 = vmatpush2.msra.mxu0 0.0
    %7690 = vmatprep.subr.mxu0 0.0
    %7691 = vmatpush2.msra.mxu0 0.0
    %7692 = vmatprep.subr.mxu0 0.0
    %7693 = vmatpush2.msra.mxu0 0.0
    %7694 = vmatprep.subr.mxu0 0.0
    %7695 = vmatpush2.msra.mxu0 0.0
    %7696 = vmatprep.subr.mxu0 0.0
    %7697 = vmatpush2.msra.mxu0 0.0
    %7698 = vmatprep.subr.mxu0 0.0
    %7699 = vmatpush2.msra.mxu0 0.0
    %7700 = vmatprep.subr.mxu0 0.0
    %7701 = vmatpush2.msra.mxu0 0.0
    %7702 = vmatprep.subr.mxu0 0.0
    %7703 = vmatpush2.msra.mxu0 0.0
    %7704 = vmatprep.subr.mxu0 0.0
    %7705 = vmatpush2.msra.mxu0 0.0
    %7706 = vmatprep.subr.mxu0 0.0
    %7707 = vmatpush2.msra.mxu0 0.0
    %7708 = vmatprep.mubr.f32.mxu0 0.0
    %7709 = vmatmul.mubr.f32.gmra.mxu0 %v7571
    %v7710 = vpop.f32.mrf.mxu0
    %v7711 = vadd.f32 0.0, %v7710
    %v7712 = vpop.f32.mrf.mxu0
    %v7713 = vadd.f32 0.0, %v7712
    %7714 = vdwg.mxu0
    %7715 = vmatprep.subr.mxu0 0.0
    %7716 = vmatpush1.msra.mxu0 0.0
    %7717 = vmatprep.subr.mxu0 0.0
    %7718 = vmatpush1.msra.mxu0 0.0
    %7719 = vmatprep.subr.mxu0 0.0
    %7720 = vmatpush1.msra.mxu0 0.0
    %7721 = vmatprep.subr.mxu0 0.0
    %7722 = vmatpush1.msra.mxu0 0.0
    %7723 = vmatprep.subr.mxu0 0.0
    %7724 = vmatpush1.msra.mxu0 0.0
    %7725 = vmatprep.subr.mxu0 0.0
    %7726 = vmatpush1.msra.mxu0 0.0
    %7727 = vmatprep.subr.mxu0 0.0
    %7728 = vmatpush1.msra.mxu0 0.0
    %7729 = vmatprep.subr.mxu0 0.0
    %7730 = vmatpush1.msra.mxu0 0.0
    %7731 = vmatprep.subr.mxu0 0.0
    %7732 = vmatpush1.msra.mxu0 0.0
    %7733 = vmatprep.subr.mxu0 0.0
    %7734 = vmatpush1.msra.mxu0 0.0
    %7735 = vmatprep.subr.mxu0 0.0
    %7736 = vmatpush1.msra.mxu0 0.0
    %7737 = vmatprep.subr.mxu0 0.0
    %7738 = vmatpush1.msra.mxu0 0.0
    %7739 = vmatprep.subr.mxu0 0.0
    %7740 = vmatpush1.msra.mxu0 0.0
    %7741 = vmatprep.subr.mxu0 0.0
    %7742 = vmatpush1.msra.mxu0 0.0
    %7743 = vmatprep.subr.mxu0 0.0
    %7744 = vmatpush1.msra.mxu0 0.0
    %7745 = vmatprep.subr.mxu0 %v7567
    %7746 = vmatpush1.msra.mxu0 %v7566
    %7747 = vmatprep.subr.mxu0 0.0
    %7748 = vmatpush2.msra.mxu0 0.0
    %7749 = vmatprep.subr.mxu0 0.0
    %7750 = vmatpush2.msra.mxu0 0.0
    %7751 = vmatprep.subr.mxu0 0.0
    %7752 = vmatpush2.msra.mxu0 0.0
    %7753 = vmatprep.subr.mxu0 0.0
    %7754 = vmatpush2.msra.mxu0 0.0
    %7755 = vmatprep.subr.mxu0 0.0
    %7756 = vmatpush2.msra.mxu0 0.0
    %7757 = vmatprep.subr.mxu0 0.0
    %7758 = vmatpush2.msra.mxu0 0.0
    %7759 = vmatprep.subr.mxu0 0.0
    %7760 = vmatpush2.msra.mxu0 0.0
    %7761 = vmatprep.subr.mxu0 0.0
    %7762 = vmatpush2.msra.mxu0 0.0
    %7763 = vmatprep.subr.mxu0 0.0
    %7764 = vmatpush2.msra.mxu0 0.0
    %7765 = vmatprep.subr.mxu0 0.0
    %7766 = vmatpush2.msra.mxu0 0.0
    %7767 = vmatprep.subr.mxu0 0.0
    %7768 = vmatpush2.msra.mxu0 0.0
    %7769 = vmatprep.subr.mxu0 0.0
    %7770 = vmatpush2.msra.mxu0 0.0
    %7771 = vmatprep.subr.mxu0 0.0
    %7772 = vmatpush2.msra.mxu0 0.0
    %7773 = vmatprep.subr.mxu0 0.0
    %7774 = vmatpush2.msra.mxu0 0.0
    %7775 = vmatprep.subr.mxu0 0.0
    %7776 = vmatpush2.msra.mxu0 0.0
    %7777 = vmatprep.subr.mxu0 0.0
    %7778 = vmatpush2.msra.mxu0 0.0
    %7779 = vmatprep.mubr.f32.mxu0 0.0
    %7780 = vmatmul.mubr.f32.gmra.mxu0 %v7571
    %v7781 = vpop.f32.mrf.mxu0
    %v7782 = vadd.f32 0.0, %v7781
    %v7783 = vpop.f32.mrf.mxu0
    %v7784 = vadd.f32 0.0, %v7783
    %7785 = vdwg.mxu0
    %7786 = vmatprep.subr.mxu0 0.0
    %7787 = vmatpush1.msra.mxu0 0.0
    %7788 = vmatprep.subr.mxu0 0.0
    %7789 = vmatpush1.msra.mxu0 0.0
    %7790 = vmatprep.subr.mxu0 0.0
    %7791 = vmatpush1.msra.mxu0 0.0
    %7792 = vmatprep.subr.mxu0 0.0
    %7793 = vmatpush1.msra.mxu0 0.0
    %7794 = vmatprep.subr.mxu0 0.0
    %7795 = vmatpush1.msra.mxu0 0.0
    %7796 = vmatprep.subr.mxu0 0.0
    %7797 = vmatpush1.msra.mxu0 0.0
    %7798 = vmatprep.subr.mxu0 0.0
    %7799 = vmatpush1.msra.mxu0 0.0
    %7800 = vmatprep.subr.mxu0 0.0
    %7801 = vmatpush1.msra.mxu0 0.0
    %7802 = vmatprep.subr.mxu0 0.0
    %7803 = vmatpush1.msra.mxu0 0.0
    %7804 = vmatprep.subr.mxu0 0.0
    %7805 = vmatpush1.msra.mxu0 0.0
    %7806 = vmatprep.subr.mxu0 0.0
    %7807 = vmatpush1.msra.mxu0 0.0
    %7808 = vmatprep.subr.mxu0 0.0
    %7809 = vmatpush1.msra.mxu0 0.0
    %7810 = vmatprep.subr.mxu0 0.0
    %7811 = vmatpush1.msra.mxu0 0.0
    %7812 = vmatprep.subr.mxu0 0.0
    %7813 = vmatpush1.msra.mxu0 0.0
    %7814 = vmatprep.subr.mxu0 0.0
    %7815 = vmatpush1.msra.mxu0 0.0
    %7816 = vmatprep.subr.mxu0 %v7569
    %7817 = vmatpush1.msra.mxu0 %v7568
    %7818 = vmatprep.subr.mxu0 0.0
    %7819 = vmatpush2.msra.mxu0 0.0
    %7820 = vmatprep.subr.mxu0 0.0
    %7821 = vmatpush2.msra.mxu0 0.0
    %7822 = vmatprep.subr.mxu0 0.0
    %7823 = vmatpush2.msra.mxu0 0.0
    %7824 = vmatprep.subr.mxu0 0.0
    %7825 = vmatpush2.msra.mxu0 0.0
    %7826 = vmatprep.subr.mxu0 0.0
    %7827 = vmatpush2.msra.mxu0 0.0
    %7828 = vmatprep.subr.mxu0 0.0
    %7829 = vmatpush2.msra.mxu0 0.0
    %7830 = vmatprep.subr.mxu0 0.0
    %7831 = vmatpush2.msra.mxu0 0.0
    %7832 = vmatprep.subr.mxu0 0.0
    %7833 = vmatpush2.msra.mxu0 0.0
    %7834 = vmatprep.subr.mxu0 0.0
    %7835 = vmatpush2.msra.mxu0 0.0
    %7836 = vmatprep.subr.mxu0 0.0
    %7837 = vmatpush2.msra.mxu0 0.0
    %7838 = vmatprep.subr.mxu0 0.0
    %7839 = vmatpush2.msra.mxu0 0.0
    %7840 = vmatprep.subr.mxu0 0.0
    %7841 = vmatpush2.msra.mxu0 0.0
    %7842 = vmatprep.subr.mxu0 0.0
    %7843 = vmatpush2.msra.mxu0 0.0
    %7844 = vmatprep.subr.mxu0 0.0
    %7845 = vmatpush2.msra.mxu0 0.0
    %7846 = vmatprep.subr.mxu0 0.0
    %7847 = vmatpush2.msra.mxu0 0.0
    %7848 = vmatprep.subr.mxu0 0.0
    %7849 = vmatpush2.msra.mxu0 0.0
    %7850 = vmatprep.mubr.f32.mxu0 0.0
    %7851 = vmatmul.mubr.f32.gmra.mxu0 %v7571
    %v7852 = vpop.f32.mrf.mxu0
    %v7853 = vadd.f32 0.0, %v7852
    %v7854 = vpop.f32.mrf.mxu0
    %v7855 = vadd.f32 0.0, %v7854
    %7856 = vdwg.mxu0
    %v7857 = vadd.f32 %v7554, %v7640
    %v7858 = vadd.f32 %v7555, %v7642
    %v7859 = vadd.f32 %v7556, %v7711
    %v7860 = vadd.f32 %v7557, %v7713
    %v7861 = vadd.f32 %v7558, %v7782
    %v7862 = vadd.f32 %v7559, %v7784
    %v7863 = vadd.f32 %v7560, %v7853
    %v7864 = vadd.f32 %v7561, %v7855
    %v7865 = vld [vmem:[%s2452] sm:$0xff]
    %v7866 = vld [vmem:[%s2452 + $0x8] sm:$0xff]
    %v7867 = vld [vmem:[%s2452 + $0x10] sm:$0xff]
    %v7868 = vld [vmem:[%s2452 + $0x18] sm:$0xff]
    %v7869 = vld [vmem:[%s2452 + $0x20] sm:$0xff]
    %v7870 = vld [vmem:[%s2452 + $0x28] sm:$0xff]
    %v7871 = vld [vmem:[%s2452 + $0x30] sm:$0xff]
    %v7872 = vld [vmem:[%s2452 + $0x38] sm:$0xff]
    %v7873 = vrot.slane %v6061, 6
    %v7874 = vsel %vm663, %v7873, 0
    %7876 = vmatprep.subr.mxu0 0.0
    %7877 = vmatpush1.msra.mxu0 0.0
    %7878 = vmatprep.subr.mxu0 0.0
    %7879 = vmatpush1.msra.mxu0 0.0
    %7880 = vmatprep.subr.mxu0 0.0
    %7881 = vmatpush1.msra.mxu0 0.0
    %7882 = vmatprep.subr.mxu0 0.0
    %7883 = vmatpush1.msra.mxu0 0.0
    %7884 = vmatprep.subr.mxu0 0.0
    %7885 = vmatpush1.msra.mxu0 0.0
    %7886 = vmatprep.subr.mxu0 0.0
    %7887 = vmatpush1.msra.mxu0 0.0
    %7888 = vmatprep.subr.mxu0 0.0
    %7889 = vmatpush1.msra.mxu0 0.0
    %7890 = vmatprep.subr.mxu0 0.0
    %7891 = vmatpush1.msra.mxu0 0.0
    %7892 = vmatprep.subr.mxu0 0.0
    %7893 = vmatpush1.msra.mxu0 0.0
    %7894 = vmatprep.subr.mxu0 0.0
    %7895 = vmatpush1.msra.mxu0 0.0
    %7896 = vmatprep.subr.mxu0 0.0
    %7897 = vmatpush1.msra.mxu0 0.0
    %7898 = vmatprep.subr.mxu0 0.0
    %7899 = vmatpush1.msra.mxu0 0.0
    %7900 = vmatprep.subr.mxu0 0.0
    %7901 = vmatpush1.msra.mxu0 0.0
    %7902 = vmatprep.subr.mxu0 0.0
    %7903 = vmatpush1.msra.mxu0 0.0
    %7904 = vmatprep.subr.mxu0 0.0
    %7905 = vmatpush1.msra.mxu0 0.0
    %7906 = vmatprep.subr.mxu0 %v7866
    %7907 = vmatpush1.msra.mxu0 %v7865
    %7908 = vmatprep.subr.mxu0 0.0
    %7909 = vmatpush2.msra.mxu0 0.0
    %7910 = vmatprep.subr.mxu0 0.0
    %7911 = vmatpush2.msra.mxu0 0.0
    %7912 = vmatprep.subr.mxu0 0.0
    %7913 = vmatpush2.msra.mxu0 0.0
    %7914 = vmatprep.subr.mxu0 0.0
    %7915 = vmatpush2.msra.mxu0 0.0
    %7916 = vmatprep.subr.mxu0 0.0
    %7917 = vmatpush2.msra.mxu0 0.0
    %7918 = vmatprep.subr.mxu0 0.0
    %7919 = vmatpush2.msra.mxu0 0.0
    %7920 = vmatprep.subr.mxu0 0.0
    %7921 = vmatpush2.msra.mxu0 0.0
    %7922 = vmatprep.subr.mxu0 0.0
    %7923 = vmatpush2.msra.mxu0 0.0
    %7924 = vmatprep.subr.mxu0 0.0
    %7925 = vmatpush2.msra.mxu0 0.0
    %7926 = vmatprep.subr.mxu0 0.0
    %7927 = vmatpush2.msra.mxu0 0.0
    %7928 = vmatprep.subr.mxu0 0.0
    %7929 = vmatpush2.msra.mxu0 0.0
    %7930 = vmatprep.subr.mxu0 0.0
    %7931 = vmatpush2.msra.mxu0 0.0
    %7932 = vmatprep.subr.mxu0 0.0
    %7933 = vmatpush2.msra.mxu0 0.0
    %7934 = vmatprep.subr.mxu0 0.0
    %7935 = vmatpush2.msra.mxu0 0.0
    %7936 = vmatprep.subr.mxu0 0.0
    %7937 = vmatpush2.msra.mxu0 0.0
    %7938 = vmatprep.subr.mxu0 0.0
    %7939 = vmatpush2.msra.mxu0 0.0
    %7940 = vmatprep.mubr.f32.mxu0 0.0
    %7941 = vmatmul.mubr.f32.gmra.mxu0 %v7874
    %v7942 = vpop.f32.mrf.mxu0
    %v7943 = vadd.f32 0.0, %v7942
    %v7944 = vpop.f32.mrf.mxu0
    %v7945 = vadd.f32 0.0, %v7944
    %7946 = vdwg.mxu0
    %7947 = vmatprep.subr.mxu0 0.0
    %7948 = vmatpush1.msra.mxu0 0.0
    %7949 = vmatprep.subr.mxu0 0.0
    %7950 = vmatpush1.msra.mxu0 0.0
    %7951 = vmatprep.subr.mxu0 0.0
    %7952 = vmatpush1.msra.mxu0 0.0
    %7953 = vmatprep.subr.mxu0 0.0
    %7954 = vmatpush1.msra.mxu0 0.0
    %7955 = vmatprep.subr.mxu0 0.0
    %7956 = vmatpush1.msra.mxu0 0.0
    %7957 = vmatprep.subr.mxu0 0.0
    %7958 = vmatpush1.msra.mxu0 0.0
    %7959 = vmatprep.subr.mxu0 0.0
    %7960 = vmatpush1.msra.mxu0 0.0
    %7961 = vmatprep.subr.mxu0 0.0
    %7962 = vmatpush1.msra.mxu0 0.0
    %7963 = vmatprep.subr.mxu0 0.0
    %7964 = vmatpush1.msra.mxu0 0.0
    %7965 = vmatprep.subr.mxu0 0.0
    %7966 = vmatpush1.msra.mxu0 0.0
    %7967 = vmatprep.subr.mxu0 0.0
    %7968 = vmatpush1.msra.mxu0 0.0
    %7969 = vmatprep.subr.mxu0 0.0
    %7970 = vmatpush1.msra.mxu0 0.0
    %7971 = vmatprep.subr.mxu0 0.0
    %7972 = vmatpush1.msra.mxu0 0.0
    %7973 = vmatprep.subr.mxu0 0.0
    %7974 = vmatpush1.msra.mxu0 0.0
    %7975 = vmatprep.subr.mxu0 0.0
    %7976 = vmatpush1.msra.mxu0 0.0
    %7977 = vmatprep.subr.mxu0 %v7868
    %7978 = vmatpush1.msra.mxu0 %v7867
    %7979 = vmatprep.subr.mxu0 0.0
    %7980 = vmatpush2.msra.mxu0 0.0
    %7981 = vmatprep.subr.mxu0 0.0
    %7982 = vmatpush2.msra.mxu0 0.0
    %7983 = vmatprep.subr.mxu0 0.0
    %7984 = vmatpush2.msra.mxu0 0.0
    %7985 = vmatprep.subr.mxu0 0.0
    %7986 = vmatpush2.msra.mxu0 0.0
    %7987 = vmatprep.subr.mxu0 0.0
    %7988 = vmatpush2.msra.mxu0 0.0
    %7989 = vmatprep.subr.mxu0 0.0
    %7990 = vmatpush2.msra.mxu0 0.0
    %7991 = vmatprep.subr.mxu0 0.0
    %7992 = vmatpush2.msra.mxu0 0.0
    %7993 = vmatprep.subr.mxu0 0.0
    %7994 = vmatpush2.msra.mxu0 0.0
    %7995 = vmatprep.subr.mxu0 0.0
    %7996 = vmatpush2.msra.mxu0 0.0
    %7997 = vmatprep.subr.mxu0 0.0
    %7998 = vmatpush2.msra.mxu0 0.0
    %7999 = vmatprep.subr.mxu0 0.0
    %8000 = vmatpush2.msra.mxu0 0.0
    %8001 = vmatprep.subr.mxu0 0.0
    %8002 = vmatpush2.msra.mxu0 0.0
    %8003 = vmatprep.subr.mxu0 0.0
    %8004 = vmatpush2.msra.mxu0 0.0
    %8005 = vmatprep.subr.mxu0 0.0
    %8006 = vmatpush2.msra.mxu0 0.0
    %8007 = vmatprep.subr.mxu0 0.0
    %8008 = vmatpush2.msra.mxu0 0.0
    %8009 = vmatprep.subr.mxu0 0.0
    %8010 = vmatpush2.msra.mxu0 0.0
    %8011 = vmatprep.mubr.f32.mxu0 0.0
    %8012 = vmatmul.mubr.f32.gmra.mxu0 %v7874
    %v8013 = vpop.f32.mrf.mxu0
    %v8014 = vadd.f32 0.0, %v8013
    %v8015 = vpop.f32.mrf.mxu0
    %v8016 = vadd.f32 0.0, %v8015
    %8017 = vdwg.mxu0
    %8018 = vmatprep.subr.mxu0 0.0
    %8019 = vmatpush1.msra.mxu0 0.0
    %8020 = vmatprep.subr.mxu0 0.0
    %8021 = vmatpush1.msra.mxu0 0.0
    %8022 = vmatprep.subr.mxu0 0.0
    %8023 = vmatpush1.msra.mxu0 0.0
    %8024 = vmatprep.subr.mxu0 0.0
    %8025 = vmatpush1.msra.mxu0 0.0
    %8026 = vmatprep.subr.mxu0 0.0
    %8027 = vmatpush1.msra.mxu0 0.0
    %8028 = vmatprep.subr.mxu0 0.0
    %8029 = vmatpush1.msra.mxu0 0.0
    %8030 = vmatprep.subr.mxu0 0.0
    %8031 = vmatpush1.msra.mxu0 0.0
    %8032 = vmatprep.subr.mxu0 0.0
    %8033 = vmatpush1.msra.mxu0 0.0
    %8034 = vmatprep.subr.mxu0 0.0
    %8035 = vmatpush1.msra.mxu0 0.0
    %8036 = vmatprep.subr.mxu0 0.0
    %8037 = vmatpush1.msra.mxu0 0.0
    %8038 = vmatprep.subr.mxu0 0.0
    %8039 = vmatpush1.msra.mxu0 0.0
    %8040 = vmatprep.subr.mxu0 0.0
    %8041 = vmatpush1.msra.mxu0 0.0
    %8042 = vmatprep.subr.mxu0 0.0
    %8043 = vmatpush1.msra.mxu0 0.0
    %8044 = vmatprep.subr.mxu0 0.0
    %8045 = vmatpush1.msra.mxu0 0.0
    %8046 = vmatprep.subr.mxu0 0.0
    %8047 = vmatpush1.msra.mxu0 0.0
    %8048 = vmatprep.subr.mxu0 %v7870
    %8049 = vmatpush1.msra.mxu0 %v7869
    %8050 = vmatprep.subr.mxu0 0.0
    %8051 = vmatpush2.msra.mxu0 0.0
    %8052 = vmatprep.subr.mxu0 0.0
    %8053 = vmatpush2.msra.mxu0 0.0
    %8054 = vmatprep.subr.mxu0 0.0
    %8055 = vmatpush2.msra.mxu0 0.0
    %8056 = vmatprep.subr.mxu0 0.0
    %8057 = vmatpush2.msra.mxu0 0.0
    %8058 = vmatprep.subr.mxu0 0.0
    %8059 = vmatpush2.msra.mxu0 0.0
    %8060 = vmatprep.subr.mxu0 0.0
    %8061 = vmatpush2.msra.mxu0 0.0
    %8062 = vmatprep.subr.mxu0 0.0
    %8063 = vmatpush2.msra.mxu0 0.0
    %8064 = vmatprep.subr.mxu0 0.0
    %8065 = vmatpush2.msra.mxu0 0.0
    %8066 = vmatprep.subr.mxu0 0.0
    %8067 = vmatpush2.msra.mxu0 0.0
    %8068 = vmatprep.subr.mxu0 0.0
    %8069 = vmatpush2.msra.mxu0 0.0
    %8070 = vmatprep.subr.mxu0 0.0
    %8071 = vmatpush2.msra.mxu0 0.0
    %8072 = vmatprep.subr.mxu0 0.0
    %8073 = vmatpush2.msra.mxu0 0.0
    %8074 = vmatprep.subr.mxu0 0.0
    %8075 = vmatpush2.msra.mxu0 0.0
    %8076 = vmatprep.subr.mxu0 0.0
    %8077 = vmatpush2.msra.mxu0 0.0
    %8078 = vmatprep.subr.mxu0 0.0
    %8079 = vmatpush2.msra.mxu0 0.0
    %8080 = vmatprep.subr.mxu0 0.0
    %8081 = vmatpush2.msra.mxu0 0.0
    %8082 = vmatprep.mubr.f32.mxu0 0.0
    %8083 = vmatmul.mubr.f32.gmra.mxu0 %v7874
    %v8084 = vpop.f32.mrf.mxu0
    %v8085 = vadd.f32 0.0, %v8084
    %v8086 = vpop.f32.mrf.mxu0
    %v8087 = vadd.f32 0.0, %v8086
    %8088 = vdwg.mxu0
    %8089 = vmatprep.subr.mxu0 0.0
    %8090 = vmatpush1.msra.mxu0 0.0
    %8091 = vmatprep.subr.mxu0 0.0
    %8092 = vmatpush1.msra.mxu0 0.0
    %8093 = vmatprep.subr.mxu0 0.0
    %8094 = vmatpush1.msra.mxu0 0.0
    %8095 = vmatprep.subr.mxu0 0.0
    %8096 = vmatpush1.msra.mxu0 0.0
    %8097 = vmatprep.subr.mxu0 0.0
    %8098 = vmatpush1.msra.mxu0 0.0
    %8099 = vmatprep.subr.mxu0 0.0
    %8100 = vmatpush1.msra.mxu0 0.0
    %8101 = vmatprep.subr.mxu0 0.0
    %8102 = vmatpush1.msra.mxu0 0.0
    %8103 = vmatprep.subr.mxu0 0.0
    %8104 = vmatpush1.msra.mxu0 0.0
    %8105 = vmatprep.subr.mxu0 0.0
    %8106 = vmatpush1.msra.mxu0 0.0
    %8107 = vmatprep.subr.mxu0 0.0
    %8108 = vmatpush1.msra.mxu0 0.0
    %8109 = vmatprep.subr.mxu0 0.0
    %8110 = vmatpush1.msra.mxu0 0.0
    %8111 = vmatprep.subr.mxu0 0.0
    %8112 = vmatpush1.msra.mxu0 0.0
    %8113 = vmatprep.subr.mxu0 0.0
    %8114 = vmatpush1.msra.mxu0 0.0
    %8115 = vmatprep.subr.mxu0 0.0
    %8116 = vmatpush1.msra.mxu0 0.0
    %8117 = vmatprep.subr.mxu0 0.0
    %8118 = vmatpush1.msra.mxu0 0.0
    %8119 = vmatprep.subr.mxu0 %v7872
    %8120 = vmatpush1.msra.mxu0 %v7871
    %8121 = vmatprep.subr.mxu0 0.0
    %8122 = vmatpush2.msra.mxu0 0.0
    %8123 = vmatprep.subr.mxu0 0.0
    %8124 = vmatpush2.msra.mxu0 0.0
    %8125 = vmatprep.subr.mxu0 0.0
    %8126 = vmatpush2.msra.mxu0 0.0
    %8127 = vmatprep.subr.mxu0 0.0
    %8128 = vmatpush2.msra.mxu0 0.0
    %8129 = vmatprep.subr.mxu0 0.0
    %8130 = vmatpush2.msra.mxu0 0.0
    %8131 = vmatprep.subr.mxu0 0.0
    %8132 = vmatpush2.msra.mxu0 0.0
    %8133 = vmatprep.subr.mxu0 0.0
    %8134 = vmatpush2.msra.mxu0 0.0
    %8135 = vmatprep.subr.mxu0 0.0
    %8136 = vmatpush2.msra.mxu0 0.0
    %8137 = vmatprep.subr.mxu0 0.0
    %8138 = vmatpush2.msra.mxu0 0.0
    %8139 = vmatprep.subr.mxu0 0.0
    %8140 = vmatpush2.msra.mxu0 0.0
    %8141 = vmatprep.subr.mxu0 0.0
    %8142 = vmatpush2.msra.mxu0 0.0
    %8143 = vmatprep.subr.mxu0 0.0
    %8144 = vmatpush2.msra.mxu0 0.0
    %8145 = vmatprep.subr.mxu0 0.0
    %8146 = vmatpush2.msra.mxu0 0.0
    %8147 = vmatprep.subr.mxu0 0.0
    %8148 = vmatpush2.msra.mxu0 0.0
    %8149 = vmatprep.subr.mxu0 0.0
    %8150 = vmatpush2.msra.mxu0 0.0
    %8151 = vmatprep.subr.mxu0 0.0
    %8152 = vmatpush2.msra.mxu0 0.0
    %8153 = vmatprep.mubr.f32.mxu0 0.0
    %8154 = vmatmul.mubr.f32.gmra.mxu0 %v7874
    %v8155 = vpop.f32.mrf.mxu0
    %v8156 = vadd.f32 0.0, %v8155
    %v8157 = vpop.f32.mrf.mxu0
    %v8158 = vadd.f32 0.0, %v8157
    %8159 = vdwg.mxu0
    %v8160 = vadd.f32 %v7857, %v7943
    %v8161 = vadd.f32 %v7858, %v7945
    %v8162 = vadd.f32 %v7859, %v8014
    %v8163 = vadd.f32 %v7860, %v8016
    %v8164 = vadd.f32 %v7861, %v8085
    %v8165 = vadd.f32 %v7862, %v8087
    %v8166 = vadd.f32 %v7863, %v8156
    %v8167 = vadd.f32 %v7864, %v8158
    %v8168 = vld [vmem:[%s2756] sm:$0xff]
    %v8169 = vld [vmem:[%s2756 + $0x8] sm:$0xff]
    %v8170 = vld [vmem:[%s2756 + $0x10] sm:$0xff]
    %v8171 = vld [vmem:[%s2756 + $0x18] sm:$0xff]
    %v8172 = vld [vmem:[%s2756 + $0x20] sm:$0xff]
    %v8173 = vld [vmem:[%s2756 + $0x28] sm:$0xff]
    %v8174 = vld [vmem:[%s2756 + $0x30] sm:$0xff]
    %v8175 = vld [vmem:[%s2756 + $0x38] sm:$0xff]
    %v8176 = vrot.slane %v6061, 7
    %v8177 = vsel %vm663, %v8176, 0
    %8179 = vmatprep.subr.mxu0 0.0
    %8180 = vmatpush1.msra.mxu0 0.0
    %8181 = vmatprep.subr.mxu0 0.0
    %8182 = vmatpush1.msra.mxu0 0.0
    %8183 = vmatprep.subr.mxu0 0.0
    %8184 = vmatpush1.msra.mxu0 0.0
    %8185 = vmatprep.subr.mxu0 0.0
    %8186 = vmatpush1.msra.mxu0 0.0
    %8187 = vmatprep.subr.mxu0 0.0
    %8188 = vmatpush1.msra.mxu0 0.0
    %8189 = vmatprep.subr.mxu0 0.0
    %8190 = vmatpush1.msra.mxu0 0.0
    %8191 = vmatprep.subr.mxu0 0.0
    %8192 = vmatpush1.msra.mxu0 0.0
    %8193 = vmatprep.subr.mxu0 0.0
    %8194 = vmatpush1.msra.mxu0 0.0
    %8195 = vmatprep.subr.mxu0 0.0
    %8196 = vmatpush1.msra.mxu0 0.0
    %8197 = vmatprep.subr.mxu0 0.0
    %8198 = vmatpush1.msra.mxu0 0.0
    %8199 = vmatprep.subr.mxu0 0.0
    %8200 = vmatpush1.msra.mxu0 0.0
    %8201 = vmatprep.subr.mxu0 0.0
    %8202 = vmatpush1.msra.mxu0 0.0
    %8203 = vmatprep.subr.mxu0 0.0
    %8204 = vmatpush1.msra.mxu0 0.0
    %8205 = vmatprep.subr.mxu0 0.0
    %8206 = vmatpush1.msra.mxu0 0.0
    %8207 = vmatprep.subr.mxu0 0.0
    %8208 = vmatpush1.msra.mxu0 0.0
    %8209 = vmatprep.subr.mxu0 %v8169
    %8210 = vmatpush1.msra.mxu0 %v8168
    %8211 = vmatprep.subr.mxu0 0.0
    %8212 = vmatpush2.msra.mxu0 0.0
    %8213 = vmatprep.subr.mxu0 0.0
    %8214 = vmatpush2.msra.mxu0 0.0
    %8215 = vmatprep.subr.mxu0 0.0
    %8216 = vmatpush2.msra.mxu0 0.0
    %8217 = vmatprep.subr.mxu0 0.0
    %8218 = vmatpush2.msra.mxu0 0.0
    %8219 = vmatprep.subr.mxu0 0.0
    %8220 = vmatpush2.msra.mxu0 0.0
    %8221 = vmatprep.subr.mxu0 0.0
    %8222 = vmatpush2.msra.mxu0 0.0
    %8223 = vmatprep.subr.mxu0 0.0
    %8224 = vmatpush2.msra.mxu0 0.0
    %8225 = vmatprep.subr.mxu0 0.0
    %8226 = vmatpush2.msra.mxu0 0.0
    %8227 = vmatprep.subr.mxu0 0.0
    %8228 = vmatpush2.msra.mxu0 0.0
    %8229 = vmatprep.subr.mxu0 0.0
    %8230 = vmatpush2.msra.mxu0 0.0
    %8231 = vmatprep.subr.mxu0 0.0
    %8232 = vmatpush2.msra.mxu0 0.0
    %8233 = vmatprep.subr.mxu0 0.0
    %8234 = vmatpush2.msra.mxu0 0.0
    %8235 = vmatprep.subr.mxu0 0.0
    %8236 = vmatpush2.msra.mxu0 0.0
    %8237 = vmatprep.subr.mxu0 0.0
    %8238 = vmatpush2.msra.mxu0 0.0
    %8239 = vmatprep.subr.mxu0 0.0
    %8240 = vmatpush2.msra.mxu0 0.0
    %8241 = vmatprep.subr.mxu0 0.0
    %8242 = vmatpush2.msra.mxu0 0.0
    %8243 = vmatprep.mubr.f32.mxu0 0.0
    %8244 = vmatmul.mubr.f32.gmra.mxu0 %v8177
    %v8245 = vpop.f32.mrf.mxu0
    %v8246 = vadd.f32 0.0, %v8245
    %v8247 = vpop.f32.mrf.mxu0
    %v8248 = vadd.f32 0.0, %v8247
    %8249 = vdwg.mxu0
    %8250 = vmatprep.subr.mxu0 0.0
    %8251 = vmatpush1.msra.mxu0 0.0
    %8252 = vmatprep.subr.mxu0 0.0
    %8253 = vmatpush1.msra.mxu0 0.0
    %8254 = vmatprep.subr.mxu0 0.0
    %8255 = vmatpush1.msra.mxu0 0.0
    %8256 = vmatprep.subr.mxu0 0.0
    %8257 = vmatpush1.msra.mxu0 0.0
    %8258 = vmatprep.subr.mxu0 0.0
    %8259 = vmatpush1.msra.mxu0 0.0
    %8260 = vmatprep.subr.mxu0 0.0
    %8261 = vmatpush1.msra.mxu0 0.0
    %8262 = vmatprep.subr.mxu0 0.0
    %8263 = vmatpush1.msra.mxu0 0.0
    %8264 = vmatprep.subr.mxu0 0.0
    %8265 = vmatpush1.msra.mxu0 0.0
    %8266 = vmatprep.subr.mxu0 0.0
    %8267 = vmatpush1.msra.mxu0 0.0
    %8268 = vmatprep.subr.mxu0 0.0
    %8269 = vmatpush1.msra.mxu0 0.0
    %8270 = vmatprep.subr.mxu0 0.0
    %8271 = vmatpush1.msra.mxu0 0.0
    %8272 = vmatprep.subr.mxu0 0.0
    %8273 = vmatpush1.msra.mxu0 0.0
    %8274 = vmatprep.subr.mxu0 0.0
    %8275 = vmatpush1.msra.mxu0 0.0
    %8276 = vmatprep.subr.mxu0 0.0
    %8277 = vmatpush1.msra.mxu0 0.0
    %8278 = vmatprep.subr.mxu0 0.0
    %8279 = vmatpush1.msra.mxu0 0.0
    %8280 = vmatprep.subr.mxu0 %v8171
    %8281 = vmatpush1.msra.mxu0 %v8170
    %8282 = vmatprep.subr.mxu0 0.0
    %8283 = vmatpush2.msra.mxu0 0.0
    %8284 = vmatprep.subr.mxu0 0.0
    %8285 = vmatpush2.msra.mxu0 0.0
    %8286 = vmatprep.subr.mxu0 0.0
    %8287 = vmatpush2.msra.mxu0 0.0
    %8288 = vmatprep.subr.mxu0 0.0
    %8289 = vmatpush2.msra.mxu0 0.0
    %8290 = vmatprep.subr.mxu0 0.0
    %8291 = vmatpush2.msra.mxu0 0.0
    %8292 = vmatprep.subr.mxu0 0.0
    %8293 = vmatpush2.msra.mxu0 0.0
    %8294 = vmatprep.subr.mxu0 0.0
    %8295 = vmatpush2.msra.mxu0 0.0
    %8296 = vmatprep.subr.mxu0 0.0
    %8297 = vmatpush2.msra.mxu0 0.0
    %8298 = vmatprep.subr.mxu0 0.0
    %8299 = vmatpush2.msra.mxu0 0.0
    %8300 = vmatprep.subr.mxu0 0.0
    %8301 = vmatpush2.msra.mxu0 0.0
    %8302 = vmatprep.subr.mxu0 0.0
    %8303 = vmatpush2.msra.mxu0 0.0
    %8304 = vmatprep.subr.mxu0 0.0
    %8305 = vmatpush2.msra.mxu0 0.0
    %8306 = vmatprep.subr.mxu0 0.0
    %8307 = vmatpush2.msra.mxu0 0.0
    %8308 = vmatprep.subr.mxu0 0.0
    %8309 = vmatpush2.msra.mxu0 0.0
    %8310 = vmatprep.subr.mxu0 0.0
    %8311 = vmatpush2.msra.mxu0 0.0
    %8312 = vmatprep.subr.mxu0 0.0
    %8313 = vmatpush2.msra.mxu0 0.0
    %8314 = vmatprep.mubr.f32.mxu0 0.0
    %8315 = vmatmul.mubr.f32.gmra.mxu0 %v8177
    %v8316 = vpop.f32.mrf.mxu0
    %v8317 = vadd.f32 0.0, %v8316
    %v8318 = vpop.f32.mrf.mxu0
    %v8319 = vadd.f32 0.0, %v8318
    %8320 = vdwg.mxu0
    %8321 = vmatprep.subr.mxu0 0.0
    %8322 = vmatpush1.msra.mxu0 0.0
    %8323 = vmatprep.subr.mxu0 0.0
    %8324 = vmatpush1.msra.mxu0 0.0
    %8325 = vmatprep.subr.mxu0 0.0
    %8326 = vmatpush1.msra.mxu0 0.0
    %8327 = vmatprep.subr.mxu0 0.0
    %8328 = vmatpush1.msra.mxu0 0.0
    %8329 = vmatprep.subr.mxu0 0.0
    %8330 = vmatpush1.msra.mxu0 0.0
    %8331 = vmatprep.subr.mxu0 0.0
    %8332 = vmatpush1.msra.mxu0 0.0
    %8333 = vmatprep.subr.mxu0 0.0
    %8334 = vmatpush1.msra.mxu0 0.0
    %8335 = vmatprep.subr.mxu0 0.0
    %8336 = vmatpush1.msra.mxu0 0.0
    %8337 = vmatprep.subr.mxu0 0.0
    %8338 = vmatpush1.msra.mxu0 0.0
    %8339 = vmatprep.subr.mxu0 0.0
    %8340 = vmatpush1.msra.mxu0 0.0
    %8341 = vmatprep.subr.mxu0 0.0
    %8342 = vmatpush1.msra.mxu0 0.0
    %8343 = vmatprep.subr.mxu0 0.0
    %8344 = vmatpush1.msra.mxu0 0.0
    %8345 = vmatprep.subr.mxu0 0.0
    %8346 = vmatpush1.msra.mxu0 0.0
    %8347 = vmatprep.subr.mxu0 0.0
    %8348 = vmatpush1.msra.mxu0 0.0
    %8349 = vmatprep.subr.mxu0 0.0
    %8350 = vmatpush1.msra.mxu0 0.0
    %8351 = vmatprep.subr.mxu0 %v8173
    %8352 = vmatpush1.msra.mxu0 %v8172
    %8353 = vmatprep.subr.mxu0 0.0
    %8354 = vmatpush2.msra.mxu0 0.0
    %8355 = vmatprep.subr.mxu0 0.0
    %8356 = vmatpush2.msra.mxu0 0.0
    %8357 = vmatprep.subr.mxu0 0.0
    %8358 = vmatpush2.msra.mxu0 0.0
    %8359 = vmatprep.subr.mxu0 0.0
    %8360 = vmatpush2.msra.mxu0 0.0
    %8361 = vmatprep.subr.mxu0 0.0
    %8362 = vmatpush2.msra.mxu0 0.0
    %8363 = vmatprep.subr.mxu0 0.0
    %8364 = vmatpush2.msra.mxu0 0.0
    %8365 = vmatprep.subr.mxu0 0.0
    %8366 = vmatpush2.msra.mxu0 0.0
    %8367 = vmatprep.subr.mxu0 0.0
    %8368 = vmatpush2.msra.mxu0 0.0
    %8369 = vmatprep.subr.mxu0 0.0
    %8370 = vmatpush2.msra.mxu0 0.0
    %8371 = vmatprep.subr.mxu0 0.0
    %8372 = vmatpush2.msra.mxu0 0.0
    %8373 = vmatprep.subr.mxu0 0.0
    %8374 = vmatpush2.msra.mxu0 0.0
    %8375 = vmatprep.subr.mxu0 0.0
    %8376 = vmatpush2.msra.mxu0 0.0
    %8377 = vmatprep.subr.mxu0 0.0
    %8378 = vmatpush2.msra.mxu0 0.0
    %8379 = vmatprep.subr.mxu0 0.0
    %8380 = vmatpush2.msra.mxu0 0.0
    %8381 = vmatprep.subr.mxu0 0.0
    %8382 = vmatpush2.msra.mxu0 0.0
    %8383 = vmatprep.subr.mxu0 0.0
    %8384 = vmatpush2.msra.mxu0 0.0
    %8385 = vmatprep.mubr.f32.mxu0 0.0
    %8386 = vmatmul.mubr.f32.gmra.mxu0 %v8177
    %v8387 = vpop.f32.mrf.mxu0
    %v8388 = vadd.f32 0.0, %v8387
    %v8389 = vpop.f32.mrf.mxu0
    %v8390 = vadd.f32 0.0, %v8389
    %8391 = vdwg.mxu0
    %8392 = vmatprep.subr.mxu0 0.0
    %8393 = vmatpush1.msra.mxu0 0.0
    %8394 = vmatprep.subr.mxu0 0.0
    %8395 = vmatpush1.msra.mxu0 0.0
    %8396 = vmatprep.subr.mxu0 0.0
    %8397 = vmatpush1.msra.mxu0 0.0
    %8398 = vmatprep.subr.mxu0 0.0
    %8399 = vmatpush1.msra.mxu0 0.0
    %8400 = vmatprep.subr.mxu0 0.0
    %8401 = vmatpush1.msra.mxu0 0.0
    %8402 = vmatprep.subr.mxu0 0.0
    %8403 = vmatpush1.msra.mxu0 0.0
    %8404 = vmatprep.subr.mxu0 0.0
    %8405 = vmatpush1.msra.mxu0 0.0
    %8406 = vmatprep.subr.mxu0 0.0
    %8407 = vmatpush1.msra.mxu0 0.0
    %8408 = vmatprep.subr.mxu0 0.0
    %8409 = vmatpush1.msra.mxu0 0.0
    %8410 = vmatprep.subr.mxu0 0.0
    %8411 = vmatpush1.msra.mxu0 0.0
    %8412 = vmatprep.subr.mxu0 0.0
    %8413 = vmatpush1.msra.mxu0 0.0
    %8414 = vmatprep.subr.mxu0 0.0
    %8415 = vmatpush1.msra.mxu0 0.0
    %8416 = vmatprep.subr.mxu0 0.0
    %8417 = vmatpush1.msra.mxu0 0.0
    %8418 = vmatprep.subr.mxu0 0.0
    %8419 = vmatpush1.msra.mxu0 0.0
    %8420 = vmatprep.subr.mxu0 0.0
    %8421 = vmatpush1.msra.mxu0 0.0
    %8422 = vmatprep.subr.mxu0 %v8175
    %8423 = vmatpush1.msra.mxu0 %v8174
    %8424 = vmatprep.subr.mxu0 0.0
    %8425 = vmatpush2.msra.mxu0 0.0
    %8426 = vmatprep.subr.mxu0 0.0
    %8427 = vmatpush2.msra.mxu0 0.0
    %8428 = vmatprep.subr.mxu0 0.0
    %8429 = vmatpush2.msra.mxu0 0.0
    %8430 = vmatprep.subr.mxu0 0.0
    %8431 = vmatpush2.msra.mxu0 0.0
    %8432 = vmatprep.subr.mxu0 0.0
    %8433 = vmatpush2.msra.mxu0 0.0
    %8434 = vmatprep.subr.mxu0 0.0
    %8435 = vmatpush2.msra.mxu0 0.0
    %8436 = vmatprep.subr.mxu0 0.0
    %8437 = vmatpush2.msra.mxu0 0.0
    %8438 = vmatprep.subr.mxu0 0.0
    %8439 = vmatpush2.msra.mxu0 0.0
    %8440 = vmatprep.subr.mxu0 0.0
    %8441 = vmatpush2.msra.mxu0 0.0
    %8442 = vmatprep.subr.mxu0 0.0
    %8443 = vmatpush2.msra.mxu0 0.0
    %8444 = vmatprep.subr.mxu0 0.0
    %8445 = vmatpush2.msra.mxu0 0.0
    %8446 = vmatprep.subr.mxu0 0.0
    %8447 = vmatpush2.msra.mxu0 0.0
    %8448 = vmatprep.subr.mxu0 0.0
    %8449 = vmatpush2.msra.mxu0 0.0
    %8450 = vmatprep.subr.mxu0 0.0
    %8451 = vmatpush2.msra.mxu0 0.0
    %8452 = vmatprep.subr.mxu0 0.0
    %8453 = vmatpush2.msra.mxu0 0.0
    %8454 = vmatprep.subr.mxu0 0.0
    %8455 = vmatpush2.msra.mxu0 0.0
    %8456 = vmatprep.mubr.f32.mxu0 0.0
    %8457 = vmatmul.mubr.f32.gmra.mxu0 %v8177
    %v8458 = vpop.f32.mrf.mxu0
    %v8459 = vadd.f32 0.0, %v8458
    %v8460 = vpop.f32.mrf.mxu0
    %v8461 = vadd.f32 0.0, %v8460
    %8462 = vdwg.mxu0
    %v8463 = vadd.f32 %v8160, %v8246
    %v8464 = vadd.f32 %v8161, %v8248
    %v8465 = vadd.f32 %v8162, %v8317
    %v8466 = vadd.f32 %v8163, %v8319
    %v8467 = vadd.f32 %v8164, %v8388
    %v8468 = vadd.f32 %v8165, %v8390
    %v8469 = vadd.f32 %v8166, %v8459
    %v8470 = vadd.f32 %v8167, %v8461
    %v8471 = vld [vmem:[%s3060] sm:$0xff]
    %v8472 = vld [vmem:[%s3060 + $0x8] sm:$0xff]
    %v8473 = vld [vmem:[%s3060 + $0x10] sm:$0xff]
    %v8474 = vld [vmem:[%s3060 + $0x18] sm:$0xff]
    %v8475 = vld [vmem:[%s3060 + $0x20] sm:$0xff]
    %v8476 = vld [vmem:[%s3060 + $0x28] sm:$0xff]
    %v8477 = vld [vmem:[%s3060 + $0x30] sm:$0xff]
    %v8478 = vld [vmem:[%s3060 + $0x38] sm:$0xff]
    %v8480 = vsel %vm663, %v6062, 0
    %8482 = vmatprep.subr.mxu0 0.0
    %8483 = vmatpush1.msra.mxu0 0.0
    %8484 = vmatprep.subr.mxu0 0.0
    %8485 = vmatpush1.msra.mxu0 0.0
    %8486 = vmatprep.subr.mxu0 0.0
    %8487 = vmatpush1.msra.mxu0 0.0
    %8488 = vmatprep.subr.mxu0 0.0
    %8489 = vmatpush1.msra.mxu0 0.0
    %8490 = vmatprep.subr.mxu0 0.0
    %8491 = vmatpush1.msra.mxu0 0.0
    %8492 = vmatprep.subr.mxu0 0.0
    %8493 = vmatpush1.msra.mxu0 0.0
    %8494 = vmatprep.subr.mxu0 0.0
    %8495 = vmatpush1.msra.mxu0 0.0
    %8496 = vmatprep.subr.mxu0 0.0
    %8497 = vmatpush1.msra.mxu0 0.0
    %8498 = vmatprep.subr.mxu0 0.0
    %8499 = vmatpush1.msra.mxu0 0.0
    %8500 = vmatprep.subr.mxu0 0.0
    %8501 = vmatpush1.msra.mxu0 0.0
    %8502 = vmatprep.subr.mxu0 0.0
    %8503 = vmatpush1.msra.mxu0 0.0
    %8504 = vmatprep.subr.mxu0 0.0
    %8505 = vmatpush1.msra.mxu0 0.0
    %8506 = vmatprep.subr.mxu0 0.0
    %8507 = vmatpush1.msra.mxu0 0.0
    %8508 = vmatprep.subr.mxu0 0.0
    %8509 = vmatpush1.msra.mxu0 0.0
    %8510 = vmatprep.subr.mxu0 0.0
    %8511 = vmatpush1.msra.mxu0 0.0
    %8512 = vmatprep.subr.mxu0 %v8472
    %8513 = vmatpush1.msra.mxu0 %v8471
    %8514 = vmatprep.subr.mxu0 0.0
    %8515 = vmatpush2.msra.mxu0 0.0
    %8516 = vmatprep.subr.mxu0 0.0
    %8517 = vmatpush2.msra.mxu0 0.0
    %8518 = vmatprep.subr.mxu0 0.0
    %8519 = vmatpush2.msra.mxu0 0.0
    %8520 = vmatprep.subr.mxu0 0.0
    %8521 = vmatpush2.msra.mxu0 0.0
    %8522 = vmatprep.subr.mxu0 0.0
    %8523 = vmatpush2.msra.mxu0 0.0
    %8524 = vmatprep.subr.mxu0 0.0
    %8525 = vmatpush2.msra.mxu0 0.0
    %8526 = vmatprep.subr.mxu0 0.0
    %8527 = vmatpush2.msra.mxu0 0.0
    %8528 = vmatprep.subr.mxu0 0.0
    %8529 = vmatpush2.msra.mxu0 0.0
    %8530 = vmatprep.subr.mxu0 0.0
    %8531 = vmatpush2.msra.mxu0 0.0
    %8532 = vmatprep.subr.mxu0 0.0
    %8533 = vmatpush2.msra.mxu0 0.0
    %8534 = vmatprep.subr.mxu0 0.0
    %8535 = vmatpush2.msra.mxu0 0.0
    %8536 = vmatprep.subr.mxu0 0.0
    %8537 = vmatpush2.msra.mxu0 0.0
    %8538 = vmatprep.subr.mxu0 0.0
    %8539 = vmatpush2.msra.mxu0 0.0
    %8540 = vmatprep.subr.mxu0 0.0
    %8541 = vmatpush2.msra.mxu0 0.0
    %8542 = vmatprep.subr.mxu0 0.0
    %8543 = vmatpush2.msra.mxu0 0.0
    %8544 = vmatprep.subr.mxu0 0.0
    %8545 = vmatpush2.msra.mxu0 0.0
    %8546 = vmatprep.mubr.f32.mxu0 0.0
    %8547 = vmatmul.mubr.f32.gmra.mxu0 %v8480
    %v8548 = vpop.f32.mrf.mxu0
    %v8549 = vadd.f32 0.0, %v8548
    %v8550 = vpop.f32.mrf.mxu0
    %v8551 = vadd.f32 0.0, %v8550
    %8552 = vdwg.mxu0
    %8553 = vmatprep.subr.mxu0 0.0
    %8554 = vmatpush1.msra.mxu0 0.0
    %8555 = vmatprep.subr.mxu0 0.0
    %8556 = vmatpush1.msra.mxu0 0.0
    %8557 = vmatprep.subr.mxu0 0.0
    %8558 = vmatpush1.msra.mxu0 0.0
    %8559 = vmatprep.subr.mxu0 0.0
    %8560 = vmatpush1.msra.mxu0 0.0
    %8561 = vmatprep.subr.mxu0 0.0
    %8562 = vmatpush1.msra.mxu0 0.0
    %8563 = vmatprep.subr.mxu0 0.0
    %8564 = vmatpush1.msra.mxu0 0.0
    %8565 = vmatprep.subr.mxu0 0.0
    %8566 = vmatpush1.msra.mxu0 0.0
    %8567 = vmatprep.subr.mxu0 0.0
    %8568 = vmatpush1.msra.mxu0 0.0
    %8569 = vmatprep.subr.mxu0 0.0
    %8570 = vmatpush1.msra.mxu0 0.0
    %8571 = vmatprep.subr.mxu0 0.0
    %8572 = vmatpush1.msra.mxu0 0.0
    %8573 = vmatprep.subr.mxu0 0.0
    %8574 = vmatpush1.msra.mxu0 0.0
    %8575 = vmatprep.subr.mxu0 0.0
    %8576 = vmatpush1.msra.mxu0 0.0
    %8577 = vmatprep.subr.mxu0 0.0
    %8578 = vmatpush1.msra.mxu0 0.0
    %8579 = vmatprep.subr.mxu0 0.0
    %8580 = vmatpush1.msra.mxu0 0.0
    %8581 = vmatprep.subr.mxu0 0.0
    %8582 = vmatpush1.msra.mxu0 0.0
    %8583 = vmatprep.subr.mxu0 %v8474
    %8584 = vmatpush1.msra.mxu0 %v8473
    %8585 = vmatprep.subr.mxu0 0.0
    %8586 = vmatpush2.msra.mxu0 0.0
    %8587 = vmatprep.subr.mxu0 0.0
    %8588 = vmatpush2.msra.mxu0 0.0
    %8589 = vmatprep.subr.mxu0 0.0
    %8590 = vmatpush2.msra.mxu0 0.0
    %8591 = vmatprep.subr.mxu0 0.0
    %8592 = vmatpush2.msra.mxu0 0.0
    %8593 = vmatprep.subr.mxu0 0.0
    %8594 = vmatpush2.msra.mxu0 0.0
    %8595 = vmatprep.subr.mxu0 0.0
    %8596 = vmatpush2.msra.mxu0 0.0
    %8597 = vmatprep.subr.mxu0 0.0
    %8598 = vmatpush2.msra.mxu0 0.0
    %8599 = vmatprep.subr.mxu0 0.0
    %8600 = vmatpush2.msra.mxu0 0.0
    %8601 = vmatprep.subr.mxu0 0.0
    %8602 = vmatpush2.msra.mxu0 0.0
    %8603 = vmatprep.subr.mxu0 0.0
    %8604 = vmatpush2.msra.mxu0 0.0
    %8605 = vmatprep.subr.mxu0 0.0
    %8606 = vmatpush2.msra.mxu0 0.0
    %8607 = vmatprep.subr.mxu0 0.0
    %8608 = vmatpush2.msra.mxu0 0.0
    %8609 = vmatprep.subr.mxu0 0.0
    %8610 = vmatpush2.msra.mxu0 0.0
    %8611 = vmatprep.subr.mxu0 0.0
    %8612 = vmatpush2.msra.mxu0 0.0
    %8613 = vmatprep.subr.mxu0 0.0
    %8614 = vmatpush2.msra.mxu0 0.0
    %8615 = vmatprep.subr.mxu0 0.0
    %8616 = vmatpush2.msra.mxu0 0.0
    %8617 = vmatprep.mubr.f32.mxu0 0.0
    %8618 = vmatmul.mubr.f32.gmra.mxu0 %v8480
    %v8619 = vpop.f32.mrf.mxu0
    %v8620 = vadd.f32 0.0, %v8619
    %v8621 = vpop.f32.mrf.mxu0
    %v8622 = vadd.f32 0.0, %v8621
    %8623 = vdwg.mxu0
    %8624 = vmatprep.subr.mxu0 0.0
    %8625 = vmatpush1.msra.mxu0 0.0
    %8626 = vmatprep.subr.mxu0 0.0
    %8627 = vmatpush1.msra.mxu0 0.0
    %8628 = vmatprep.subr.mxu0 0.0
    %8629 = vmatpush1.msra.mxu0 0.0
    %8630 = vmatprep.subr.mxu0 0.0
    %8631 = vmatpush1.msra.mxu0 0.0
    %8632 = vmatprep.subr.mxu0 0.0
    %8633 = vmatpush1.msra.mxu0 0.0
    %8634 = vmatprep.subr.mxu0 0.0
    %8635 = vmatpush1.msra.mxu0 0.0
    %8636 = vmatprep.subr.mxu0 0.0
    %8637 = vmatpush1.msra.mxu0 0.0
    %8638 = vmatprep.subr.mxu0 0.0
    %8639 = vmatpush1.msra.mxu0 0.0
    %8640 = vmatprep.subr.mxu0 0.0
    %8641 = vmatpush1.msra.mxu0 0.0
    %8642 = vmatprep.subr.mxu0 0.0
    %8643 = vmatpush1.msra.mxu0 0.0
    %8644 = vmatprep.subr.mxu0 0.0
    %8645 = vmatpush1.msra.mxu0 0.0
    %8646 = vmatprep.subr.mxu0 0.0
    %8647 = vmatpush1.msra.mxu0 0.0
    %8648 = vmatprep.subr.mxu0 0.0
    %8649 = vmatpush1.msra.mxu0 0.0
    %8650 = vmatprep.subr.mxu0 0.0
    %8651 = vmatpush1.msra.mxu0 0.0
    %8652 = vmatprep.subr.mxu0 0.0
    %8653 = vmatpush1.msra.mxu0 0.0
    %8654 = vmatprep.subr.mxu0 %v8476
    %8655 = vmatpush1.msra.mxu0 %v8475
    %8656 = vmatprep.subr.mxu0 0.0
    %8657 = vmatpush2.msra.mxu0 0.0
    %8658 = vmatprep.subr.mxu0 0.0
    %8659 = vmatpush2.msra.mxu0 0.0
    %8660 = vmatprep.subr.mxu0 0.0
    %8661 = vmatpush2.msra.mxu0 0.0
    %8662 = vmatprep.subr.mxu0 0.0
    %8663 = vmatpush2.msra.mxu0 0.0
    %8664 = vmatprep.subr.mxu0 0.0
    %8665 = vmatpush2.msra.mxu0 0.0
    %8666 = vmatprep.subr.mxu0 0.0
    %8667 = vmatpush2.msra.mxu0 0.0
    %8668 = vmatprep.subr.mxu0 0.0
    %8669 = vmatpush2.msra.mxu0 0.0
    %8670 = vmatprep.subr.mxu0 0.0
    %8671 = vmatpush2.msra.mxu0 0.0
    %8672 = vmatprep.subr.mxu0 0.0
    %8673 = vmatpush2.msra.mxu0 0.0
    %8674 = vmatprep.subr.mxu0 0.0
    %8675 = vmatpush2.msra.mxu0 0.0
    %8676 = vmatprep.subr.mxu0 0.0
    %8677 = vmatpush2.msra.mxu0 0.0
    %8678 = vmatprep.subr.mxu0 0.0
    %8679 = vmatpush2.msra.mxu0 0.0
    %8680 = vmatprep.subr.mxu0 0.0
    %8681 = vmatpush2.msra.mxu0 0.0
    %8682 = vmatprep.subr.mxu0 0.0
    %8683 = vmatpush2.msra.mxu0 0.0
    %8684 = vmatprep.subr.mxu0 0.0
    %8685 = vmatpush2.msra.mxu0 0.0
    %8686 = vmatprep.subr.mxu0 0.0
    %8687 = vmatpush2.msra.mxu0 0.0
    %8688 = vmatprep.mubr.f32.mxu0 0.0
    %8689 = vmatmul.mubr.f32.gmra.mxu0 %v8480
    %v8690 = vpop.f32.mrf.mxu0
    %v8691 = vadd.f32 0.0, %v8690
    %v8692 = vpop.f32.mrf.mxu0
    %v8693 = vadd.f32 0.0, %v8692
    %8694 = vdwg.mxu0
    %8695 = vmatprep.subr.mxu0 0.0
    %8696 = vmatpush1.msra.mxu0 0.0
    %8697 = vmatprep.subr.mxu0 0.0
    %8698 = vmatpush1.msra.mxu0 0.0
    %8699 = vmatprep.subr.mxu0 0.0
    %8700 = vmatpush1.msra.mxu0 0.0
    %8701 = vmatprep.subr.mxu0 0.0
    %8702 = vmatpush1.msra.mxu0 0.0
    %8703 = vmatprep.subr.mxu0 0.0
    %8704 = vmatpush1.msra.mxu0 0.0
    %8705 = vmatprep.subr.mxu0 0.0
    %8706 = vmatpush1.msra.mxu0 0.0
    %8707 = vmatprep.subr.mxu0 0.0
    %8708 = vmatpush1.msra.mxu0 0.0
    %8709 = vmatprep.subr.mxu0 0.0
    %8710 = vmatpush1.msra.mxu0 0.0
    %8711 = vmatprep.subr.mxu0 0.0
    %8712 = vmatpush1.msra.mxu0 0.0
    %8713 = vmatprep.subr.mxu0 0.0
    %8714 = vmatpush1.msra.mxu0 0.0
    %8715 = vmatprep.subr.mxu0 0.0
    %8716 = vmatpush1.msra.mxu0 0.0
    %8717 = vmatprep.subr.mxu0 0.0
    %8718 = vmatpush1.msra.mxu0 0.0
    %8719 = vmatprep.subr.mxu0 0.0
    %8720 = vmatpush1.msra.mxu0 0.0
    %8721 = vmatprep.subr.mxu0 0.0
    %8722 = vmatpush1.msra.mxu0 0.0
    %8723 = vmatprep.subr.mxu0 0.0
    %8724 = vmatpush1.msra.mxu0 0.0
    %8725 = vmatprep.subr.mxu0 %v8478
    %8726 = vmatpush1.msra.mxu0 %v8477
    %8727 = vmatprep.subr.mxu0 0.0
    %8728 = vmatpush2.msra.mxu0 0.0
    %8729 = vmatprep.subr.mxu0 0.0
    %8730 = vmatpush2.msra.mxu0 0.0
    %8731 = vmatprep.subr.mxu0 0.0
    %8732 = vmatpush2.msra.mxu0 0.0
    %8733 = vmatprep.subr.mxu0 0.0
    %8734 = vmatpush2.msra.mxu0 0.0
    %8735 = vmatprep.subr.mxu0 0.0
    %8736 = vmatpush2.msra.mxu0 0.0
    %8737 = vmatprep.subr.mxu0 0.0
    %8738 = vmatpush2.msra.mxu0 0.0
    %8739 = vmatprep.subr.mxu0 0.0
    %8740 = vmatpush2.msra.mxu0 0.0
    %8741 = vmatprep.subr.mxu0 0.0
    %8742 = vmatpush2.msra.mxu0 0.0
    %8743 = vmatprep.subr.mxu0 0.0
    %8744 = vmatpush2.msra.mxu0 0.0
    %8745 = vmatprep.subr.mxu0 0.0
    %8746 = vmatpush2.msra.mxu0 0.0
    %8747 = vmatprep.subr.mxu0 0.0
    %8748 = vmatpush2.msra.mxu0 0.0
    %8749 = vmatprep.subr.mxu0 0.0
    %8750 = vmatpush2.msra.mxu0 0.0
    %8751 = vmatprep.subr.mxu0 0.0
    %8752 = vmatpush2.msra.mxu0 0.0
    %8753 = vmatprep.subr.mxu0 0.0
    %8754 = vmatpush2.msra.mxu0 0.0
    %8755 = vmatprep.subr.mxu0 0.0
    %8756 = vmatpush2.msra.mxu0 0.0
    %8757 = vmatprep.subr.mxu0 0.0
    %8758 = vmatpush2.msra.mxu0 0.0
    %8759 = vmatprep.mubr.f32.mxu0 0.0
    %8760 = vmatmul.mubr.f32.gmra.mxu0 %v8480
    %v8761 = vpop.f32.mrf.mxu0
    %v8762 = vadd.f32 0.0, %v8761
    %v8763 = vpop.f32.mrf.mxu0
    %v8764 = vadd.f32 0.0, %v8763
    %8765 = vdwg.mxu0
    %v8766 = vadd.f32 %v8463, %v8549
    %v8767 = vadd.f32 %v8464, %v8551
    %v8768 = vadd.f32 %v8465, %v8620
    %v8769 = vadd.f32 %v8466, %v8622
    %v8770 = vadd.f32 %v8467, %v8691
    %v8771 = vadd.f32 %v8468, %v8693
    %v8772 = vadd.f32 %v8469, %v8762
    %v8773 = vadd.f32 %v8470, %v8764
    %v8774 = vld [vmem:[%s3364] sm:$0xff]
    %v8775 = vld [vmem:[%s3364 + $0x8] sm:$0xff]
    %v8776 = vld [vmem:[%s3364 + $0x10] sm:$0xff]
    %v8777 = vld [vmem:[%s3364 + $0x18] sm:$0xff]
    %v8778 = vld [vmem:[%s3364 + $0x20] sm:$0xff]
    %v8779 = vld [vmem:[%s3364 + $0x28] sm:$0xff]
    %v8780 = vld [vmem:[%s3364 + $0x30] sm:$0xff]
    %v8781 = vld [vmem:[%s3364 + $0x38] sm:$0xff]
    %v8782 = vrot.slane %v6062, 1
    %v8783 = vsel %vm663, %v8782, 0
    %8785 = vmatprep.subr.mxu0 0.0
    %8786 = vmatpush1.msra.mxu0 0.0
    %8787 = vmatprep.subr.mxu0 0.0
    %8788 = vmatpush1.msra.mxu0 0.0
    %8789 = vmatprep.subr.mxu0 0.0
    %8790 = vmatpush1.msra.mxu0 0.0
    %8791 = vmatprep.subr.mxu0 0.0
    %8792 = vmatpush1.msra.mxu0 0.0
    %8793 = vmatprep.subr.mxu0 0.0
    %8794 = vmatpush1.msra.mxu0 0.0
    %8795 = vmatprep.subr.mxu0 0.0
    %8796 = vmatpush1.msra.mxu0 0.0
    %8797 = vmatprep.subr.mxu0 0.0
    %8798 = vmatpush1.msra.mxu0 0.0
    %8799 = vmatprep.subr.mxu0 0.0
    %8800 = vmatpush1.msra.mxu0 0.0
    %8801 = vmatprep.subr.mxu0 0.0
    %8802 = vmatpush1.msra.mxu0 0.0
    %8803 = vmatprep.subr.mxu0 0.0
    %8804 = vmatpush1.msra.mxu0 0.0
    %8805 = vmatprep.subr.mxu0 0.0
    %8806 = vmatpush1.msra.mxu0 0.0
    %8807 = vmatprep.subr.mxu0 0.0
    %8808 = vmatpush1.msra.mxu0 0.0
    %8809 = vmatprep.subr.mxu0 0.0
    %8810 = vmatpush1.msra.mxu0 0.0
    %8811 = vmatprep.subr.mxu0 0.0
    %8812 = vmatpush1.msra.mxu0 0.0
    %8813 = vmatprep.subr.mxu0 0.0
    %8814 = vmatpush1.msra.mxu0 0.0
    %8815 = vmatprep.subr.mxu0 %v8775
    %8816 = vmatpush1.msra.mxu0 %v8774
    %8817 = vmatprep.subr.mxu0 0.0
    %8818 = vmatpush2.msra.mxu0 0.0
    %8819 = vmatprep.subr.mxu0 0.0
    %8820 = vmatpush2.msra.mxu0 0.0
    %8821 = vmatprep.subr.mxu0 0.0
    %8822 = vmatpush2.msra.mxu0 0.0
    %8823 = vmatprep.subr.mxu0 0.0
    %8824 = vmatpush2.msra.mxu0 0.0
    %8825 = vmatprep.subr.mxu0 0.0
    %8826 = vmatpush2.msra.mxu0 0.0
    %8827 = vmatprep.subr.mxu0 0.0
    %8828 = vmatpush2.msra.mxu0 0.0
    %8829 = vmatprep.subr.mxu0 0.0
    %8830 = vmatpush2.msra.mxu0 0.0
    %8831 = vmatprep.subr.mxu0 0.0
    %8832 = vmatpush2.msra.mxu0 0.0
    %8833 = vmatprep.subr.mxu0 0.0
    %8834 = vmatpush2.msra.mxu0 0.0
    %8835 = vmatprep.subr.mxu0 0.0
    %8836 = vmatpush2.msra.mxu0 0.0
    %8837 = vmatprep.subr.mxu0 0.0
    %8838 = vmatpush2.msra.mxu0 0.0
    %8839 = vmatprep.subr.mxu0 0.0
    %8840 = vmatpush2.msra.mxu0 0.0
    %8841 = vmatprep.subr.mxu0 0.0
    %8842 = vmatpush2.msra.mxu0 0.0
    %8843 = vmatprep.subr.mxu0 0.0
    %8844 = vmatpush2.msra.mxu0 0.0
    %8845 = vmatprep.subr.mxu0 0.0
    %8846 = vmatpush2.msra.mxu0 0.0
    %8847 = vmatprep.subr.mxu0 0.0
    %8848 = vmatpush2.msra.mxu0 0.0
    %8849 = vmatprep.mubr.f32.mxu0 0.0
    %8850 = vmatmul.mubr.f32.gmra.mxu0 %v8783
    %v8851 = vpop.f32.mrf.mxu0
    %v8852 = vadd.f32 0.0, %v8851
    %v8853 = vpop.f32.mrf.mxu0
    %v8854 = vadd.f32 0.0, %v8853
    %8855 = vdwg.mxu0
    %8856 = vmatprep.subr.mxu0 0.0
    %8857 = vmatpush1.msra.mxu0 0.0
    %8858 = vmatprep.subr.mxu0 0.0
    %8859 = vmatpush1.msra.mxu0 0.0
    %8860 = vmatprep.subr.mxu0 0.0
    %8861 = vmatpush1.msra.mxu0 0.0
    %8862 = vmatprep.subr.mxu0 0.0
    %8863 = vmatpush1.msra.mxu0 0.0
    %8864 = vmatprep.subr.mxu0 0.0
    %8865 = vmatpush1.msra.mxu0 0.0
    %8866 = vmatprep.subr.mxu0 0.0
    %8867 = vmatpush1.msra.mxu0 0.0
    %8868 = vmatprep.subr.mxu0 0.0
    %8869 = vmatpush1.msra.mxu0 0.0
    %8870 = vmatprep.subr.mxu0 0.0
    %8871 = vmatpush1.msra.mxu0 0.0
    %8872 = vmatprep.subr.mxu0 0.0
    %8873 = vmatpush1.msra.mxu0 0.0
    %8874 = vmatprep.subr.mxu0 0.0
    %8875 = vmatpush1.msra.mxu0 0.0
    %8876 = vmatprep.subr.mxu0 0.0
    %8877 = vmatpush1.msra.mxu0 0.0
    %8878 = vmatprep.subr.mxu0 0.0
    %8879 = vmatpush1.msra.mxu0 0.0
    %8880 = vmatprep.subr.mxu0 0.0
    %8881 = vmatpush1.msra.mxu0 0.0
    %8882 = vmatprep.subr.mxu0 0.0
    %8883 = vmatpush1.msra.mxu0 0.0
    %8884 = vmatprep.subr.mxu0 0.0
    %8885 = vmatpush1.msra.mxu0 0.0
    %8886 = vmatprep.subr.mxu0 %v8777
    %8887 = vmatpush1.msra.mxu0 %v8776
    %8888 = vmatprep.subr.mxu0 0.0
    %8889 = vmatpush2.msra.mxu0 0.0
    %8890 = vmatprep.subr.mxu0 0.0
    %8891 = vmatpush2.msra.mxu0 0.0
    %8892 = vmatprep.subr.mxu0 0.0
    %8893 = vmatpush2.msra.mxu0 0.0
    %8894 = vmatprep.subr.mxu0 0.0
    %8895 = vmatpush2.msra.mxu0 0.0
    %8896 = vmatprep.subr.mxu0 0.0
    %8897 = vmatpush2.msra.mxu0 0.0
    %8898 = vmatprep.subr.mxu0 0.0
    %8899 = vmatpush2.msra.mxu0 0.0
    %8900 = vmatprep.subr.mxu0 0.0
    %8901 = vmatpush2.msra.mxu0 0.0
    %8902 = vmatprep.subr.mxu0 0.0
    %8903 = vmatpush2.msra.mxu0 0.0
    %8904 = vmatprep.subr.mxu0 0.0
    %8905 = vmatpush2.msra.mxu0 0.0
    %8906 = vmatprep.subr.mxu0 0.0
    %8907 = vmatpush2.msra.mxu0 0.0
    %8908 = vmatprep.subr.mxu0 0.0
    %8909 = vmatpush2.msra.mxu0 0.0
    %8910 = vmatprep.subr.mxu0 0.0
    %8911 = vmatpush2.msra.mxu0 0.0
    %8912 = vmatprep.subr.mxu0 0.0
    %8913 = vmatpush2.msra.mxu0 0.0
    %8914 = vmatprep.subr.mxu0 0.0
    %8915 = vmatpush2.msra.mxu0 0.0
    %8916 = vmatprep.subr.mxu0 0.0
    %8917 = vmatpush2.msra.mxu0 0.0
    %8918 = vmatprep.subr.mxu0 0.0
    %8919 = vmatpush2.msra.mxu0 0.0
    %8920 = vmatprep.mubr.f32.mxu0 0.0
    %8921 = vmatmul.mubr.f32.gmra.mxu0 %v8783
    %v8922 = vpop.f32.mrf.mxu0
    %v8923 = vadd.f32 0.0, %v8922
    %v8924 = vpop.f32.mrf.mxu0
    %v8925 = vadd.f32 0.0, %v8924
    %8926 = vdwg.mxu0
    %8927 = vmatprep.subr.mxu0 0.0
    %8928 = vmatpush1.msra.mxu0 0.0
    %8929 = vmatprep.subr.mxu0 0.0
    %8930 = vmatpush1.msra.mxu0 0.0
    %8931 = vmatprep.subr.mxu0 0.0
    %8932 = vmatpush1.msra.mxu0 0.0
    %8933 = vmatprep.subr.mxu0 0.0
    %8934 = vmatpush1.msra.mxu0 0.0
    %8935 = vmatprep.subr.mxu0 0.0
    %8936 = vmatpush1.msra.mxu0 0.0
    %8937 = vmatprep.subr.mxu0 0.0
    %8938 = vmatpush1.msra.mxu0 0.0
    %8939 = vmatprep.subr.mxu0 0.0
    %8940 = vmatpush1.msra.mxu0 0.0
    %8941 = vmatprep.subr.mxu0 0.0
    %8942 = vmatpush1.msra.mxu0 0.0
    %8943 = vmatprep.subr.mxu0 0.0
    %8944 = vmatpush1.msra.mxu0 0.0
    %8945 = vmatprep.subr.mxu0 0.0
    %8946 = vmatpush1.msra.mxu0 0.0
    %8947 = vmatprep.subr.mxu0 0.0
    %8948 = vmatpush1.msra.mxu0 0.0
    %8949 = vmatprep.subr.mxu0 0.0
    %8950 = vmatpush1.msra.mxu0 0.0
    %8951 = vmatprep.subr.mxu0 0.0
    %8952 = vmatpush1.msra.mxu0 0.0
    %8953 = vmatprep.subr.mxu0 0.0
    %8954 = vmatpush1.msra.mxu0 0.0
    %8955 = vmatprep.subr.mxu0 0.0
    %8956 = vmatpush1.msra.mxu0 0.0
    %8957 = vmatprep.subr.mxu0 %v8779
    %8958 = vmatpush1.msra.mxu0 %v8778
    %8959 = vmatprep.subr.mxu0 0.0
    %8960 = vmatpush2.msra.mxu0 0.0
    %8961 = vmatprep.subr.mxu0 0.0
    %8962 = vmatpush2.msra.mxu0 0.0
    %8963 = vmatprep.subr.mxu0 0.0
    %8964 = vmatpush2.msra.mxu0 0.0
    %8965 = vmatprep.subr.mxu0 0.0
    %8966 = vmatpush2.msra.mxu0 0.0
    %8967 = vmatprep.subr.mxu0 0.0
    %8968 = vmatpush2.msra.mxu0 0.0
    %8969 = vmatprep.subr.mxu0 0.0
    %8970 = vmatpush2.msra.mxu0 0.0
    %8971 = vmatprep.subr.mxu0 0.0
    %8972 = vmatpush2.msra.mxu0 0.0
    %8973 = vmatprep.subr.mxu0 0.0
    %8974 = vmatpush2.msra.mxu0 0.0
    %8975 = vmatprep.subr.mxu0 0.0
    %8976 = vmatpush2.msra.mxu0 0.0
    %8977 = vmatprep.subr.mxu0 0.0
    %8978 = vmatpush2.msra.mxu0 0.0
    %8979 = vmatprep.subr.mxu0 0.0
    %8980 = vmatpush2.msra.mxu0 0.0
    %8981 = vmatprep.subr.mxu0 0.0
    %8982 = vmatpush2.msra.mxu0 0.0
    %8983 = vmatprep.subr.mxu0 0.0
    %8984 = vmatpush2.msra.mxu0 0.0
    %8985 = vmatprep.subr.mxu0 0.0
    %8986 = vmatpush2.msra.mxu0 0.0
    %8987 = vmatprep.subr.mxu0 0.0
    %8988 = vmatpush2.msra.mxu0 0.0
    %8989 = vmatprep.subr.mxu0 0.0
    %8990 = vmatpush2.msra.mxu0 0.0
    %8991 = vmatprep.mubr.f32.mxu0 0.0
    %8992 = vmatmul.mubr.f32.gmra.mxu0 %v8783
    %v8993 = vpop.f32.mrf.mxu0
    %v8994 = vadd.f32 0.0, %v8993
    %v8995 = vpop.f32.mrf.mxu0
    %v8996 = vadd.f32 0.0, %v8995
    %8997 = vdwg.mxu0
    %8998 = vmatprep.subr.mxu0 0.0
    %8999 = vmatpush1.msra.mxu0 0.0
    %9000 = vmatprep.subr.mxu0 0.0
    %9001 = vmatpush1.msra.mxu0 0.0
    %9002 = vmatprep.subr.mxu0 0.0
    %9003 = vmatpush1.msra.mxu0 0.0
    %9004 = vmatprep.subr.mxu0 0.0
    %9005 = vmatpush1.msra.mxu0 0.0
    %9006 = vmatprep.subr.mxu0 0.0
    %9007 = vmatpush1.msra.mxu0 0.0
    %9008 = vmatprep.subr.mxu0 0.0
    %9009 = vmatpush1.msra.mxu0 0.0
    %9010 = vmatprep.subr.mxu0 0.0
    %9011 = vmatpush1.msra.mxu0 0.0
    %9012 = vmatprep.subr.mxu0 0.0
    %9013 = vmatpush1.msra.mxu0 0.0
    %9014 = vmatprep.subr.mxu0 0.0
    %9015 = vmatpush1.msra.mxu0 0.0
    %9016 = vmatprep.subr.mxu0 0.0
    %9017 = vmatpush1.msra.mxu0 0.0
    %9018 = vmatprep.subr.mxu0 0.0
    %9019 = vmatpush1.msra.mxu0 0.0
    %9020 = vmatprep.subr.mxu0 0.0
    %9021 = vmatpush1.msra.mxu0 0.0
    %9022 = vmatprep.subr.mxu0 0.0
    %9023 = vmatpush1.msra.mxu0 0.0
    %9024 = vmatprep.subr.mxu0 0.0
    %9025 = vmatpush1.msra.mxu0 0.0
    %9026 = vmatprep.subr.mxu0 0.0
    %9027 = vmatpush1.msra.mxu0 0.0
    %9028 = vmatprep.subr.mxu0 %v8781
    %9029 = vmatpush1.msra.mxu0 %v8780
    %9030 = vmatprep.subr.mxu0 0.0
    %9031 = vmatpush2.msra.mxu0 0.0
    %9032 = vmatprep.subr.mxu0 0.0
    %9033 = vmatpush2.msra.mxu0 0.0
    %9034 = vmatprep.subr.mxu0 0.0
    %9035 = vmatpush2.msra.mxu0 0.0
    %9036 = vmatprep.subr.mxu0 0.0
    %9037 = vmatpush2.msra.mxu0 0.0
    %9038 = vmatprep.subr.mxu0 0.0
    %9039 = vmatpush2.msra.mxu0 0.0
    %9040 = vmatprep.subr.mxu0 0.0
    %9041 = vmatpush2.msra.mxu0 0.0
    %9042 = vmatprep.subr.mxu0 0.0
    %9043 = vmatpush2.msra.mxu0 0.0
    %9044 = vmatprep.subr.mxu0 0.0
    %9045 = vmatpush2.msra.mxu0 0.0
    %9046 = vmatprep.subr.mxu0 0.0
    %9047 = vmatpush2.msra.mxu0 0.0
    %9048 = vmatprep.subr.mxu0 0.0
    %9049 = vmatpush2.msra.mxu0 0.0
    %9050 = vmatprep.subr.mxu0 0.0
    %9051 = vmatpush2.msra.mxu0 0.0
    %9052 = vmatprep.subr.mxu0 0.0
    %9053 = vmatpush2.msra.mxu0 0.0
    %9054 = vmatprep.subr.mxu0 0.0
    %9055 = vmatpush2.msra.mxu0 0.0
    %9056 = vmatprep.subr.mxu0 0.0
    %9057 = vmatpush2.msra.mxu0 0.0
    %9058 = vmatprep.subr.mxu0 0.0
    %9059 = vmatpush2.msra.mxu0 0.0
    %9060 = vmatprep.subr.mxu0 0.0
    %9061 = vmatpush2.msra.mxu0 0.0
    %9062 = vmatprep.mubr.f32.mxu0 0.0
    %9063 = vmatmul.mubr.f32.gmra.mxu0 %v8783
    %v9064 = vpop.f32.mrf.mxu0
    %v9065 = vadd.f32 0.0, %v9064
    %v9066 = vpop.f32.mrf.mxu0
    %v9067 = vadd.f32 0.0, %v9066
    %9068 = vdwg.mxu0
    %v9069 = vadd.f32 %v8766, %v8852
    %v9070 = vadd.f32 %v8767, %v8854
    %v9071 = vadd.f32 %v8768, %v8923
    %v9072 = vadd.f32 %v8769, %v8925
    %v9073 = vadd.f32 %v8770, %v8994
    %v9074 = vadd.f32 %v8771, %v8996
    %v9075 = vadd.f32 %v8772, %v9065
    %v9076 = vadd.f32 %v8773, %v9067
    %v9077 = vld [vmem:[%s3668] sm:$0xff]
    %v9078 = vld [vmem:[%s3668 + $0x8] sm:$0xff]
    %v9079 = vld [vmem:[%s3668 + $0x10] sm:$0xff]
    %v9080 = vld [vmem:[%s3668 + $0x18] sm:$0xff]
    %v9081 = vld [vmem:[%s3668 + $0x20] sm:$0xff]
    %v9082 = vld [vmem:[%s3668 + $0x28] sm:$0xff]
    %v9083 = vld [vmem:[%s3668 + $0x30] sm:$0xff]
    %v9084 = vld [vmem:[%s3668 + $0x38] sm:$0xff]
    %v9085 = vrot.slane %v6062, 2
    %v9086 = vsel %vm663, %v9085, 0
    %9088 = vmatprep.subr.mxu0 0.0
    %9089 = vmatpush1.msra.mxu0 0.0
    %9090 = vmatprep.subr.mxu0 0.0
    %9091 = vmatpush1.msra.mxu0 0.0
    %9092 = vmatprep.subr.mxu0 0.0
    %9093 = vmatpush1.msra.mxu0 0.0
    %9094 = vmatprep.subr.mxu0 0.0
    %9095 = vmatpush1.msra.mxu0 0.0
    %9096 = vmatprep.subr.mxu0 0.0
    %9097 = vmatpush1.msra.mxu0 0.0
    %9098 = vmatprep.subr.mxu0 0.0
    %9099 = vmatpush1.msra.mxu0 0.0
    %9100 = vmatprep.subr.mxu0 0.0
    %9101 = vmatpush1.msra.mxu0 0.0
    %9102 = vmatprep.subr.mxu0 0.0
    %9103 = vmatpush1.msra.mxu0 0.0
    %9104 = vmatprep.subr.mxu0 0.0
    %9105 = vmatpush1.msra.mxu0 0.0
    %9106 = vmatprep.subr.mxu0 0.0
    %9107 = vmatpush1.msra.mxu0 0.0
    %9108 = vmatprep.subr.mxu0 0.0
    %9109 = vmatpush1.msra.mxu0 0.0
    %9110 = vmatprep.subr.mxu0 0.0
    %9111 = vmatpush1.msra.mxu0 0.0
    %9112 = vmatprep.subr.mxu0 0.0
    %9113 = vmatpush1.msra.mxu0 0.0
    %9114 = vmatprep.subr.mxu0 0.0
    %9115 = vmatpush1.msra.mxu0 0.0
    %9116 = vmatprep.subr.mxu0 0.0
    %9117 = vmatpush1.msra.mxu0 0.0
    %9118 = vmatprep.subr.mxu0 %v9078
    %9119 = vmatpush1.msra.mxu0 %v9077
    %9120 = vmatprep.subr.mxu0 0.0
    %9121 = vmatpush2.msra.mxu0 0.0
    %9122 = vmatprep.subr.mxu0 0.0
    %9123 = vmatpush2.msra.mxu0 0.0
    %9124 = vmatprep.subr.mxu0 0.0
    %9125 = vmatpush2.msra.mxu0 0.0
    %9126 = vmatprep.subr.mxu0 0.0
    %9127 = vmatpush2.msra.mxu0 0.0
    %9128 = vmatprep.subr.mxu0 0.0
    %9129 = vmatpush2.msra.mxu0 0.0
    %9130 = vmatprep.subr.mxu0 0.0
    %9131 = vmatpush2.msra.mxu0 0.0
    %9132 = vmatprep.subr.mxu0 0.0
    %9133 = vmatpush2.msra.mxu0 0.0
    %9134 = vmatprep.subr.mxu0 0.0
    %9135 = vmatpush2.msra.mxu0 0.0
    %9136 = vmatprep.subr.mxu0 0.0
    %9137 = vmatpush2.msra.mxu0 0.0
    %9138 = vmatprep.subr.mxu0 0.0
    %9139 = vmatpush2.msra.mxu0 0.0
    %9140 = vmatprep.subr.mxu0 0.0
    %9141 = vmatpush2.msra.mxu0 0.0
    %9142 = vmatprep.subr.mxu0 0.0
    %9143 = vmatpush2.msra.mxu0 0.0
    %9144 = vmatprep.subr.mxu0 0.0
    %9145 = vmatpush2.msra.mxu0 0.0
    %9146 = vmatprep.subr.mxu0 0.0
    %9147 = vmatpush2.msra.mxu0 0.0
    %9148 = vmatprep.subr.mxu0 0.0
    %9149 = vmatpush2.msra.mxu0 0.0
    %9150 = vmatprep.subr.mxu0 0.0
    %9151 = vmatpush2.msra.mxu0 0.0
    %9152 = vmatprep.mubr.f32.mxu0 0.0
    %9153 = vmatmul.mubr.f32.gmra.mxu0 %v9086
    %v9154 = vpop.f32.mrf.mxu0
    %v9155 = vadd.f32 0.0, %v9154
    %v9156 = vpop.f32.mrf.mxu0
    %v9157 = vadd.f32 0.0, %v9156
    %9158 = vdwg.mxu0
    %9159 = vmatprep.subr.mxu0 0.0
    %9160 = vmatpush1.msra.mxu0 0.0
    %9161 = vmatprep.subr.mxu0 0.0
    %9162 = vmatpush1.msra.mxu0 0.0
    %9163 = vmatprep.subr.mxu0 0.0
    %9164 = vmatpush1.msra.mxu0 0.0
    %9165 = vmatprep.subr.mxu0 0.0
    %9166 = vmatpush1.msra.mxu0 0.0
    %9167 = vmatprep.subr.mxu0 0.0
    %9168 = vmatpush1.msra.mxu0 0.0
    %9169 = vmatprep.subr.mxu0 0.0
    %9170 = vmatpush1.msra.mxu0 0.0
    %9171 = vmatprep.subr.mxu0 0.0
    %9172 = vmatpush1.msra.mxu0 0.0
    %9173 = vmatprep.subr.mxu0 0.0
    %9174 = vmatpush1.msra.mxu0 0.0
    %9175 = vmatprep.subr.mxu0 0.0
    %9176 = vmatpush1.msra.mxu0 0.0
    %9177 = vmatprep.subr.mxu0 0.0
    %9178 = vmatpush1.msra.mxu0 0.0
    %9179 = vmatprep.subr.mxu0 0.0
    %9180 = vmatpush1.msra.mxu0 0.0
    %9181 = vmatprep.subr.mxu0 0.0
    %9182 = vmatpush1.msra.mxu0 0.0
    %9183 = vmatprep.subr.mxu0 0.0
    %9184 = vmatpush1.msra.mxu0 0.0
    %9185 = vmatprep.subr.mxu0 0.0
    %9186 = vmatpush1.msra.mxu0 0.0
    %9187 = vmatprep.subr.mxu0 0.0
    %9188 = vmatpush1.msra.mxu0 0.0
    %9189 = vmatprep.subr.mxu0 %v9080
    %9190 = vmatpush1.msra.mxu0 %v9079
    %9191 = vmatprep.subr.mxu0 0.0
    %9192 = vmatpush2.msra.mxu0 0.0
    %9193 = vmatprep.subr.mxu0 0.0
    %9194 = vmatpush2.msra.mxu0 0.0
    %9195 = vmatprep.subr.mxu0 0.0
    %9196 = vmatpush2.msra.mxu0 0.0
    %9197 = vmatprep.subr.mxu0 0.0
    %9198 = vmatpush2.msra.mxu0 0.0
    %9199 = vmatprep.subr.mxu0 0.0
    %9200 = vmatpush2.msra.mxu0 0.0
    %9201 = vmatprep.subr.mxu0 0.0
    %9202 = vmatpush2.msra.mxu0 0.0
    %9203 = vmatprep.subr.mxu0 0.0
    %9204 = vmatpush2.msra.mxu0 0.0
    %9205 = vmatprep.subr.mxu0 0.0
    %9206 = vmatpush2.msra.mxu0 0.0
    %9207 = vmatprep.subr.mxu0 0.0
    %9208 = vmatpush2.msra.mxu0 0.0
    %9209 = vmatprep.subr.mxu0 0.0
    %9210 = vmatpush2.msra.mxu0 0.0
    %9211 = vmatprep.subr.mxu0 0.0
    %9212 = vmatpush2.msra.mxu0 0.0
    %9213 = vmatprep.subr.mxu0 0.0
    %9214 = vmatpush2.msra.mxu0 0.0
    %9215 = vmatprep.subr.mxu0 0.0
    %9216 = vmatpush2.msra.mxu0 0.0
    %9217 = vmatprep.subr.mxu0 0.0
    %9218 = vmatpush2.msra.mxu0 0.0
    %9219 = vmatprep.subr.mxu0 0.0
    %9220 = vmatpush2.msra.mxu0 0.0
    %9221 = vmatprep.subr.mxu0 0.0
    %9222 = vmatpush2.msra.mxu0 0.0
    %9223 = vmatprep.mubr.f32.mxu0 0.0
    %9224 = vmatmul.mubr.f32.gmra.mxu0 %v9086
    %v9225 = vpop.f32.mrf.mxu0
    %v9226 = vadd.f32 0.0, %v9225
    %v9227 = vpop.f32.mrf.mxu0
    %v9228 = vadd.f32 0.0, %v9227
    %9229 = vdwg.mxu0
    %9230 = vmatprep.subr.mxu0 0.0
    %9231 = vmatpush1.msra.mxu0 0.0
    %9232 = vmatprep.subr.mxu0 0.0
    %9233 = vmatpush1.msra.mxu0 0.0
    %9234 = vmatprep.subr.mxu0 0.0
    %9235 = vmatpush1.msra.mxu0 0.0
    %9236 = vmatprep.subr.mxu0 0.0
    %9237 = vmatpush1.msra.mxu0 0.0
    %9238 = vmatprep.subr.mxu0 0.0
    %9239 = vmatpush1.msra.mxu0 0.0
    %9240 = vmatprep.subr.mxu0 0.0
    %9241 = vmatpush1.msra.mxu0 0.0
    %9242 = vmatprep.subr.mxu0 0.0
    %9243 = vmatpush1.msra.mxu0 0.0
    %9244 = vmatprep.subr.mxu0 0.0
    %9245 = vmatpush1.msra.mxu0 0.0
    %9246 = vmatprep.subr.mxu0 0.0
    %9247 = vmatpush1.msra.mxu0 0.0
    %9248 = vmatprep.subr.mxu0 0.0
    %9249 = vmatpush1.msra.mxu0 0.0
    %9250 = vmatprep.subr.mxu0 0.0
    %9251 = vmatpush1.msra.mxu0 0.0
    %9252 = vmatprep.subr.mxu0 0.0
    %9253 = vmatpush1.msra.mxu0 0.0
    %9254 = vmatprep.subr.mxu0 0.0
    %9255 = vmatpush1.msra.mxu0 0.0
    %9256 = vmatprep.subr.mxu0 0.0
    %9257 = vmatpush1.msra.mxu0 0.0
    %9258 = vmatprep.subr.mxu0 0.0
    %9259 = vmatpush1.msra.mxu0 0.0
    %9260 = vmatprep.subr.mxu0 %v9082
    %9261 = vmatpush1.msra.mxu0 %v9081
    %9262 = vmatprep.subr.mxu0 0.0
    %9263 = vmatpush2.msra.mxu0 0.0
    %9264 = vmatprep.subr.mxu0 0.0
    %9265 = vmatpush2.msra.mxu0 0.0
    %9266 = vmatprep.subr.mxu0 0.0
    %9267 = vmatpush2.msra.mxu0 0.0
    %9268 = vmatprep.subr.mxu0 0.0
    %9269 = vmatpush2.msra.mxu0 0.0
    %9270 = vmatprep.subr.mxu0 0.0
    %9271 = vmatpush2.msra.mxu0 0.0
    %9272 = vmatprep.subr.mxu0 0.0
    %9273 = vmatpush2.msra.mxu0 0.0
    %9274 = vmatprep.subr.mxu0 0.0
    %9275 = vmatpush2.msra.mxu0 0.0
    %9276 = vmatprep.subr.mxu0 0.0
    %9277 = vmatpush2.msra.mxu0 0.0
    %9278 = vmatprep.subr.mxu0 0.0
    %9279 = vmatpush2.msra.mxu0 0.0
    %9280 = vmatprep.subr.mxu0 0.0
    %9281 = vmatpush2.msra.mxu0 0.0
    %9282 = vmatprep.subr.mxu0 0.0
    %9283 = vmatpush2.msra.mxu0 0.0
    %9284 = vmatprep.subr.mxu0 0.0
    %9285 = vmatpush2.msra.mxu0 0.0
    %9286 = vmatprep.subr.mxu0 0.0
    %9287 = vmatpush2.msra.mxu0 0.0
    %9288 = vmatprep.subr.mxu0 0.0
    %9289 = vmatpush2.msra.mxu0 0.0
    %9290 = vmatprep.subr.mxu0 0.0
    %9291 = vmatpush2.msra.mxu0 0.0
    %9292 = vmatprep.subr.mxu0 0.0
    %9293 = vmatpush2.msra.mxu0 0.0
    %9294 = vmatprep.mubr.f32.mxu0 0.0
    %9295 = vmatmul.mubr.f32.gmra.mxu0 %v9086
    %v9296 = vpop.f32.mrf.mxu0
    %v9297 = vadd.f32 0.0, %v9296
    %v9298 = vpop.f32.mrf.mxu0
    %v9299 = vadd.f32 0.0, %v9298
    %9300 = vdwg.mxu0
    %9301 = vmatprep.subr.mxu0 0.0
    %9302 = vmatpush1.msra.mxu0 0.0
    %9303 = vmatprep.subr.mxu0 0.0
    %9304 = vmatpush1.msra.mxu0 0.0
    %9305 = vmatprep.subr.mxu0 0.0
    %9306 = vmatpush1.msra.mxu0 0.0
    %9307 = vmatprep.subr.mxu0 0.0
    %9308 = vmatpush1.msra.mxu0 0.0
    %9309 = vmatprep.subr.mxu0 0.0
    %9310 = vmatpush1.msra.mxu0 0.0
    %9311 = vmatprep.subr.mxu0 0.0
    %9312 = vmatpush1.msra.mxu0 0.0
    %9313 = vmatprep.subr.mxu0 0.0
    %9314 = vmatpush1.msra.mxu0 0.0
    %9315 = vmatprep.subr.mxu0 0.0
    %9316 = vmatpush1.msra.mxu0 0.0
    %9317 = vmatprep.subr.mxu0 0.0
    %9318 = vmatpush1.msra.mxu0 0.0
    %9319 = vmatprep.subr.mxu0 0.0
    %9320 = vmatpush1.msra.mxu0 0.0
    %9321 = vmatprep.subr.mxu0 0.0
    %9322 = vmatpush1.msra.mxu0 0.0
    %9323 = vmatprep.subr.mxu0 0.0
    %9324 = vmatpush1.msra.mxu0 0.0
    %9325 = vmatprep.subr.mxu0 0.0
    %9326 = vmatpush1.msra.mxu0 0.0
    %9327 = vmatprep.subr.mxu0 0.0
    %9328 = vmatpush1.msra.mxu0 0.0
    %9329 = vmatprep.subr.mxu0 0.0
    %9330 = vmatpush1.msra.mxu0 0.0
    %9331 = vmatprep.subr.mxu0 %v9084
    %9332 = vmatpush1.msra.mxu0 %v9083
    %9333 = vmatprep.subr.mxu0 0.0
    %9334 = vmatpush2.msra.mxu0 0.0
    %9335 = vmatprep.subr.mxu0 0.0
    %9336 = vmatpush2.msra.mxu0 0.0
    %9337 = vmatprep.subr.mxu0 0.0
    %9338 = vmatpush2.msra.mxu0 0.0
    %9339 = vmatprep.subr.mxu0 0.0
    %9340 = vmatpush2.msra.mxu0 0.0
    %9341 = vmatprep.subr.mxu0 0.0
    %9342 = vmatpush2.msra.mxu0 0.0
    %9343 = vmatprep.subr.mxu0 0.0
    %9344 = vmatpush2.msra.mxu0 0.0
    %9345 = vmatprep.subr.mxu0 0.0
    %9346 = vmatpush2.msra.mxu0 0.0
    %9347 = vmatprep.subr.mxu0 0.0
    %9348 = vmatpush2.msra.mxu0 0.0
    %9349 = vmatprep.subr.mxu0 0.0
    %9350 = vmatpush2.msra.mxu0 0.0
    %9351 = vmatprep.subr.mxu0 0.0
    %9352 = vmatpush2.msra.mxu0 0.0
    %9353 = vmatprep.subr.mxu0 0.0
    %9354 = vmatpush2.msra.mxu0 0.0
    %9355 = vmatprep.subr.mxu0 0.0
    %9356 = vmatpush2.msra.mxu0 0.0
    %9357 = vmatprep.subr.mxu0 0.0
    %9358 = vmatpush2.msra.mxu0 0.0
    %9359 = vmatprep.subr.mxu0 0.0
    %9360 = vmatpush2.msra.mxu0 0.0
    %9361 = vmatprep.subr.mxu0 0.0
    %9362 = vmatpush2.msra.mxu0 0.0
    %9363 = vmatprep.subr.mxu0 0.0
    %9364 = vmatpush2.msra.mxu0 0.0
    %9365 = vmatprep.mubr.f32.mxu0 0.0
    %9366 = vmatmul.mubr.f32.gmra.mxu0 %v9086
    %v9367 = vpop.f32.mrf.mxu0
    %v9368 = vadd.f32 0.0, %v9367
    %v9369 = vpop.f32.mrf.mxu0
    %v9370 = vadd.f32 0.0, %v9369
    %9371 = vdwg.mxu0
    %v9372 = vadd.f32 %v9069, %v9155
    %v9373 = vadd.f32 %v9070, %v9157
    %v9374 = vadd.f32 %v9071, %v9226
    %v9375 = vadd.f32 %v9072, %v9228
    %v9376 = vadd.f32 %v9073, %v9297
    %v9377 = vadd.f32 %v9074, %v9299
    %v9378 = vadd.f32 %v9075, %v9368
    %v9379 = vadd.f32 %v9076, %v9370
    %v9380 = vld [vmem:[%s3972] sm:$0xff]
    %v9381 = vld [vmem:[%s3972 + $0x8] sm:$0xff]
    %v9382 = vld [vmem:[%s3972 + $0x10] sm:$0xff]
    %v9383 = vld [vmem:[%s3972 + $0x18] sm:$0xff]
    %v9384 = vld [vmem:[%s3972 + $0x20] sm:$0xff]
    %v9385 = vld [vmem:[%s3972 + $0x28] sm:$0xff]
    %v9386 = vld [vmem:[%s3972 + $0x30] sm:$0xff]
    %v9387 = vld [vmem:[%s3972 + $0x38] sm:$0xff]
    %v9388 = vrot.slane %v6062, 3
    %v9389 = vsel %vm663, %v9388, 0
    %9391 = vmatprep.subr.mxu0 0.0
    %9392 = vmatpush1.msra.mxu0 0.0
    %9393 = vmatprep.subr.mxu0 0.0
    %9394 = vmatpush1.msra.mxu0 0.0
    %9395 = vmatprep.subr.mxu0 0.0
    %9396 = vmatpush1.msra.mxu0 0.0
    %9397 = vmatprep.subr.mxu0 0.0
    %9398 = vmatpush1.msra.mxu0 0.0
    %9399 = vmatprep.subr.mxu0 0.0
    %9400 = vmatpush1.msra.mxu0 0.0
    %9401 = vmatprep.subr.mxu0 0.0
    %9402 = vmatpush1.msra.mxu0 0.0
    %9403 = vmatprep.subr.mxu0 0.0
    %9404 = vmatpush1.msra.mxu0 0.0
    %9405 = vmatprep.subr.mxu0 0.0
    %9406 = vmatpush1.msra.mxu0 0.0
    %9407 = vmatprep.subr.mxu0 0.0
    %9408 = vmatpush1.msra.mxu0 0.0
    %9409 = vmatprep.subr.mxu0 0.0
    %9410 = vmatpush1.msra.mxu0 0.0
    %9411 = vmatprep.subr.mxu0 0.0
    %9412 = vmatpush1.msra.mxu0 0.0
    %9413 = vmatprep.subr.mxu0 0.0
    %9414 = vmatpush1.msra.mxu0 0.0
    %9415 = vmatprep.subr.mxu0 0.0
    %9416 = vmatpush1.msra.mxu0 0.0
    %9417 = vmatprep.subr.mxu0 0.0
    %9418 = vmatpush1.msra.mxu0 0.0
    %9419 = vmatprep.subr.mxu0 0.0
    %9420 = vmatpush1.msra.mxu0 0.0
    %9421 = vmatprep.subr.mxu0 %v9381
    %9422 = vmatpush1.msra.mxu0 %v9380
    %9423 = vmatprep.subr.mxu0 0.0
    %9424 = vmatpush2.msra.mxu0 0.0
    %9425 = vmatprep.subr.mxu0 0.0
    %9426 = vmatpush2.msra.mxu0 0.0
    %9427 = vmatprep.subr.mxu0 0.0
    %9428 = vmatpush2.msra.mxu0 0.0
    %9429 = vmatprep.subr.mxu0 0.0
    %9430 = vmatpush2.msra.mxu0 0.0
    %9431 = vmatprep.subr.mxu0 0.0
    %9432 = vmatpush2.msra.mxu0 0.0
    %9433 = vmatprep.subr.mxu0 0.0
    %9434 = vmatpush2.msra.mxu0 0.0
    %9435 = vmatprep.subr.mxu0 0.0
    %9436 = vmatpush2.msra.mxu0 0.0
    %9437 = vmatprep.subr.mxu0 0.0
    %9438 = vmatpush2.msra.mxu0 0.0
    %9439 = vmatprep.subr.mxu0 0.0
    %9440 = vmatpush2.msra.mxu0 0.0
    %9441 = vmatprep.subr.mxu0 0.0
    %9442 = vmatpush2.msra.mxu0 0.0
    %9443 = vmatprep.subr.mxu0 0.0
    %9444 = vmatpush2.msra.mxu0 0.0
    %9445 = vmatprep.subr.mxu0 0.0
    %9446 = vmatpush2.msra.mxu0 0.0
    %9447 = vmatprep.subr.mxu0 0.0
    %9448 = vmatpush2.msra.mxu0 0.0
    %9449 = vmatprep.subr.mxu0 0.0
    %9450 = vmatpush2.msra.mxu0 0.0
    %9451 = vmatprep.subr.mxu0 0.0
    %9452 = vmatpush2.msra.mxu0 0.0
    %9453 = vmatprep.subr.mxu0 0.0
    %9454 = vmatpush2.msra.mxu0 0.0
    %9455 = vmatprep.mubr.f32.mxu0 0.0
    %9456 = vmatmul.mubr.f32.gmra.mxu0 %v9389
    %v9457 = vpop.f32.mrf.mxu0
    %v9458 = vadd.f32 0.0, %v9457
    %v9459 = vpop.f32.mrf.mxu0
    %v9460 = vadd.f32 0.0, %v9459
    %9461 = vdwg.mxu0
    %9462 = vmatprep.subr.mxu0 0.0
    %9463 = vmatpush1.msra.mxu0 0.0
    %9464 = vmatprep.subr.mxu0 0.0
    %9465 = vmatpush1.msra.mxu0 0.0
    %9466 = vmatprep.subr.mxu0 0.0
    %9467 = vmatpush1.msra.mxu0 0.0
    %9468 = vmatprep.subr.mxu0 0.0
    %9469 = vmatpush1.msra.mxu0 0.0
    %9470 = vmatprep.subr.mxu0 0.0
    %9471 = vmatpush1.msra.mxu0 0.0
    %9472 = vmatprep.subr.mxu0 0.0
    %9473 = vmatpush1.msra.mxu0 0.0
    %9474 = vmatprep.subr.mxu0 0.0
    %9475 = vmatpush1.msra.mxu0 0.0
    %9476 = vmatprep.subr.mxu0 0.0
    %9477 = vmatpush1.msra.mxu0 0.0
    %9478 = vmatprep.subr.mxu0 0.0
    %9479 = vmatpush1.msra.mxu0 0.0
    %9480 = vmatprep.subr.mxu0 0.0
    %9481 = vmatpush1.msra.mxu0 0.0
    %9482 = vmatprep.subr.mxu0 0.0
    %9483 = vmatpush1.msra.mxu0 0.0
    %9484 = vmatprep.subr.mxu0 0.0
    %9485 = vmatpush1.msra.mxu0 0.0
    %9486 = vmatprep.subr.mxu0 0.0
    %9487 = vmatpush1.msra.mxu0 0.0
    %9488 = vmatprep.subr.mxu0 0.0
    %9489 = vmatpush1.msra.mxu0 0.0
    %9490 = vmatprep.subr.mxu0 0.0
    %9491 = vmatpush1.msra.mxu0 0.0
    %9492 = vmatprep.subr.mxu0 %v9383
    %9493 = vmatpush1.msra.mxu0 %v9382
    %9494 = vmatprep.subr.mxu0 0.0
    %9495 = vmatpush2.msra.mxu0 0.0
    %9496 = vmatprep.subr.mxu0 0.0
    %9497 = vmatpush2.msra.mxu0 0.0
    %9498 = vmatprep.subr.mxu0 0.0
    %9499 = vmatpush2.msra.mxu0 0.0
    %9500 = vmatprep.subr.mxu0 0.0
    %9501 = vmatpush2.msra.mxu0 0.0
    %9502 = vmatprep.subr.mxu0 0.0
    %9503 = vmatpush2.msra.mxu0 0.0
    %9504 = vmatprep.subr.mxu0 0.0
    %9505 = vmatpush2.msra.mxu0 0.0
    %9506 = vmatprep.subr.mxu0 0.0
    %9507 = vmatpush2.msra.mxu0 0.0
    %9508 = vmatprep.subr.mxu0 0.0
    %9509 = vmatpush2.msra.mxu0 0.0
    %9510 = vmatprep.subr.mxu0 0.0
    %9511 = vmatpush2.msra.mxu0 0.0
    %9512 = vmatprep.subr.mxu0 0.0
    %9513 = vmatpush2.msra.mxu0 0.0
    %9514 = vmatprep.subr.mxu0 0.0
    %9515 = vmatpush2.msra.mxu0 0.0
    %9516 = vmatprep.subr.mxu0 0.0
    %9517 = vmatpush2.msra.mxu0 0.0
    %9518 = vmatprep.subr.mxu0 0.0
    %9519 = vmatpush2.msra.mxu0 0.0
    %9520 = vmatprep.subr.mxu0 0.0
    %9521 = vmatpush2.msra.mxu0 0.0
    %9522 = vmatprep.subr.mxu0 0.0
    %9523 = vmatpush2.msra.mxu0 0.0
    %9524 = vmatprep.subr.mxu0 0.0
    %9525 = vmatpush2.msra.mxu0 0.0
    %9526 = vmatprep.mubr.f32.mxu0 0.0
    %9527 = vmatmul.mubr.f32.gmra.mxu0 %v9389
    %v9528 = vpop.f32.mrf.mxu0
    %v9529 = vadd.f32 0.0, %v9528
    %v9530 = vpop.f32.mrf.mxu0
    %v9531 = vadd.f32 0.0, %v9530
    %9532 = vdwg.mxu0
    %9533 = vmatprep.subr.mxu0 0.0
    %9534 = vmatpush1.msra.mxu0 0.0
    %9535 = vmatprep.subr.mxu0 0.0
    %9536 = vmatpush1.msra.mxu0 0.0
    %9537 = vmatprep.subr.mxu0 0.0
    %9538 = vmatpush1.msra.mxu0 0.0
    %9539 = vmatprep.subr.mxu0 0.0
    %9540 = vmatpush1.msra.mxu0 0.0
    %9541 = vmatprep.subr.mxu0 0.0
    %9542 = vmatpush1.msra.mxu0 0.0
    %9543 = vmatprep.subr.mxu0 0.0
    %9544 = vmatpush1.msra.mxu0 0.0
    %9545 = vmatprep.subr.mxu0 0.0
    %9546 = vmatpush1.msra.mxu0 0.0
    %9547 = vmatprep.subr.mxu0 0.0
    %9548 = vmatpush1.msra.mxu0 0.0
    %9549 = vmatprep.subr.mxu0 0.0
    %9550 = vmatpush1.msra.mxu0 0.0
    %9551 = vmatprep.subr.mxu0 0.0
    %9552 = vmatpush1.msra.mxu0 0.0
    %9553 = vmatprep.subr.mxu0 0.0
    %9554 = vmatpush1.msra.mxu0 0.0
    %9555 = vmatprep.subr.mxu0 0.0
    %9556 = vmatpush1.msra.mxu0 0.0
    %9557 = vmatprep.subr.mxu0 0.0
    %9558 = vmatpush1.msra.mxu0 0.0
    %9559 = vmatprep.subr.mxu0 0.0
    %9560 = vmatpush1.msra.mxu0 0.0
    %9561 = vmatprep.subr.mxu0 0.0
    %9562 = vmatpush1.msra.mxu0 0.0
    %9563 = vmatprep.subr.mxu0 %v9385
    %9564 = vmatpush1.msra.mxu0 %v9384
    %9565 = vmatprep.subr.mxu0 0.0
    %9566 = vmatpush2.msra.mxu0 0.0
    %9567 = vmatprep.subr.mxu0 0.0
    %9568 = vmatpush2.msra.mxu0 0.0
    %9569 = vmatprep.subr.mxu0 0.0
    %9570 = vmatpush2.msra.mxu0 0.0
    %9571 = vmatprep.subr.mxu0 0.0
    %9572 = vmatpush2.msra.mxu0 0.0
    %9573 = vmatprep.subr.mxu0 0.0
    %9574 = vmatpush2.msra.mxu0 0.0
    %9575 = vmatprep.subr.mxu0 0.0
    %9576 = vmatpush2.msra.mxu0 0.0
    %9577 = vmatprep.subr.mxu0 0.0
    %9578 = vmatpush2.msra.mxu0 0.0
    %9579 = vmatprep.subr.mxu0 0.0
    %9580 = vmatpush2.msra.mxu0 0.0
    %9581 = vmatprep.subr.mxu0 0.0
    %9582 = vmatpush2.msra.mxu0 0.0
    %9583 = vmatprep.subr.mxu0 0.0
    %9584 = vmatpush2.msra.mxu0 0.0
    %9585 = vmatprep.subr.mxu0 0.0
    %9586 = vmatpush2.msra.mxu0 0.0
    %9587 = vmatprep.subr.mxu0 0.0
    %9588 = vmatpush2.msra.mxu0 0.0
    %9589 = vmatprep.subr.mxu0 0.0
    %9590 = vmatpush2.msra.mxu0 0.0
    %9591 = vmatprep.subr.mxu0 0.0
    %9592 = vmatpush2.msra.mxu0 0.0
    %9593 = vmatprep.subr.mxu0 0.0
    %9594 = vmatpush2.msra.mxu0 0.0
    %9595 = vmatprep.subr.mxu0 0.0
    %9596 = vmatpush2.msra.mxu0 0.0
    %9597 = vmatprep.mubr.f32.mxu0 0.0
    %9598 = vmatmul.mubr.f32.gmra.mxu0 %v9389
    %v9599 = vpop.f32.mrf.mxu0
    %v9600 = vadd.f32 0.0, %v9599
    %v9601 = vpop.f32.mrf.mxu0
    %v9602 = vadd.f32 0.0, %v9601
    %9603 = vdwg.mxu0
    %9604 = vmatprep.subr.mxu0 0.0
    %9605 = vmatpush1.msra.mxu0 0.0
    %9606 = vmatprep.subr.mxu0 0.0
    %9607 = vmatpush1.msra.mxu0 0.0
    %9608 = vmatprep.subr.mxu0 0.0
    %9609 = vmatpush1.msra.mxu0 0.0
    %9610 = vmatprep.subr.mxu0 0.0
    %9611 = vmatpush1.msra.mxu0 0.0
    %9612 = vmatprep.subr.mxu0 0.0
    %9613 = vmatpush1.msra.mxu0 0.0
    %9614 = vmatprep.subr.mxu0 0.0
    %9615 = vmatpush1.msra.mxu0 0.0
    %9616 = vmatprep.subr.mxu0 0.0
    %9617 = vmatpush1.msra.mxu0 0.0
    %9618 = vmatprep.subr.mxu0 0.0
    %9619 = vmatpush1.msra.mxu0 0.0
    %9620 = vmatprep.subr.mxu0 0.0
    %9621 = vmatpush1.msra.mxu0 0.0
    %9622 = vmatprep.subr.mxu0 0.0
    %9623 = vmatpush1.msra.mxu0 0.0
    %9624 = vmatprep.subr.mxu0 0.0
    %9625 = vmatpush1.msra.mxu0 0.0
    %9626 = vmatprep.subr.mxu0 0.0
    %9627 = vmatpush1.msra.mxu0 0.0
    %9628 = vmatprep.subr.mxu0 0.0
    %9629 = vmatpush1.msra.mxu0 0.0
    %9630 = vmatprep.subr.mxu0 0.0
    %9631 = vmatpush1.msra.mxu0 0.0
    %9632 = vmatprep.subr.mxu0 0.0
    %9633 = vmatpush1.msra.mxu0 0.0
    %9634 = vmatprep.subr.mxu0 %v9387
    %9635 = vmatpush1.msra.mxu0 %v9386
    %9636 = vmatprep.subr.mxu0 0.0
    %9637 = vmatpush2.msra.mxu0 0.0
    %9638 = vmatprep.subr.mxu0 0.0
    %9639 = vmatpush2.msra.mxu0 0.0
    %9640 = vmatprep.subr.mxu0 0.0
    %9641 = vmatpush2.msra.mxu0 0.0
    %9642 = vmatprep.subr.mxu0 0.0
    %9643 = vmatpush2.msra.mxu0 0.0
    %9644 = vmatprep.subr.mxu0 0.0
    %9645 = vmatpush2.msra.mxu0 0.0
    %9646 = vmatprep.subr.mxu0 0.0
    %9647 = vmatpush2.msra.mxu0 0.0
    %9648 = vmatprep.subr.mxu0 0.0
    %9649 = vmatpush2.msra.mxu0 0.0
    %9650 = vmatprep.subr.mxu0 0.0
    %9651 = vmatpush2.msra.mxu0 0.0
    %9652 = vmatprep.subr.mxu0 0.0
    %9653 = vmatpush2.msra.mxu0 0.0
    %9654 = vmatprep.subr.mxu0 0.0
    %9655 = vmatpush2.msra.mxu0 0.0
    %9656 = vmatprep.subr.mxu0 0.0
    %9657 = vmatpush2.msra.mxu0 0.0
    %9658 = vmatprep.subr.mxu0 0.0
    %9659 = vmatpush2.msra.mxu0 0.0
    %9660 = vmatprep.subr.mxu0 0.0
    %9661 = vmatpush2.msra.mxu0 0.0
    %9662 = vmatprep.subr.mxu0 0.0
    %9663 = vmatpush2.msra.mxu0 0.0
    %9664 = vmatprep.subr.mxu0 0.0
    %9665 = vmatpush2.msra.mxu0 0.0
    %9666 = vmatprep.subr.mxu0 0.0
    %9667 = vmatpush2.msra.mxu0 0.0
    %9668 = vmatprep.mubr.f32.mxu0 0.0
    %9669 = vmatmul.mubr.f32.gmra.mxu0 %v9389
    %v9670 = vpop.f32.mrf.mxu0
    %v9671 = vadd.f32 0.0, %v9670
    %v9672 = vpop.f32.mrf.mxu0
    %v9673 = vadd.f32 0.0, %v9672
    %9674 = vdwg.mxu0
    %v9675 = vadd.f32 %v9372, %v9458
    %v9676 = vadd.f32 %v9373, %v9460
    %v9677 = vadd.f32 %v9374, %v9529
    %v9678 = vadd.f32 %v9375, %v9531
    %v9679 = vadd.f32 %v9376, %v9600
    %v9680 = vadd.f32 %v9377, %v9602
    %v9681 = vadd.f32 %v9378, %v9671
    %v9682 = vadd.f32 %v9379, %v9673
    %v9683 = vld [vmem:[%s4276] sm:$0xff]
    %v9684 = vld [vmem:[%s4276 + $0x8] sm:$0xff]
    %v9685 = vld [vmem:[%s4276 + $0x10] sm:$0xff]
    %v9686 = vld [vmem:[%s4276 + $0x18] sm:$0xff]
    %v9687 = vld [vmem:[%s4276 + $0x20] sm:$0xff]
    %v9688 = vld [vmem:[%s4276 + $0x28] sm:$0xff]
    %v9689 = vld [vmem:[%s4276 + $0x30] sm:$0xff]
    %v9690 = vld [vmem:[%s4276 + $0x38] sm:$0xff]
    %v9691 = vrot.slane %v6062, 4
    %v9692 = vsel %vm663, %v9691, 0
    %9694 = vmatprep.subr.mxu0 0.0
    %9695 = vmatpush1.msra.mxu0 0.0
    %9696 = vmatprep.subr.mxu0 0.0
    %9697 = vmatpush1.msra.mxu0 0.0
    %9698 = vmatprep.subr.mxu0 0.0
    %9699 = vmatpush1.msra.mxu0 0.0
    %9700 = vmatprep.subr.mxu0 0.0
    %9701 = vmatpush1.msra.mxu0 0.0
    %9702 = vmatprep.subr.mxu0 0.0
    %9703 = vmatpush1.msra.mxu0 0.0
    %9704 = vmatprep.subr.mxu0 0.0
    %9705 = vmatpush1.msra.mxu0 0.0
    %9706 = vmatprep.subr.mxu0 0.0
    %9707 = vmatpush1.msra.mxu0 0.0
    %9708 = vmatprep.subr.mxu0 0.0
    %9709 = vmatpush1.msra.mxu0 0.0
    %9710 = vmatprep.subr.mxu0 0.0
    %9711 = vmatpush1.msra.mxu0 0.0
    %9712 = vmatprep.subr.mxu0 0.0
    %9713 = vmatpush1.msra.mxu0 0.0
    %9714 = vmatprep.subr.mxu0 0.0
    %9715 = vmatpush1.msra.mxu0 0.0
    %9716 = vmatprep.subr.mxu0 0.0
    %9717 = vmatpush1.msra.mxu0 0.0
    %9718 = vmatprep.subr.mxu0 0.0
    %9719 = vmatpush1.msra.mxu0 0.0
    %9720 = vmatprep.subr.mxu0 0.0
    %9721 = vmatpush1.msra.mxu0 0.0
    %9722 = vmatprep.subr.mxu0 0.0
    %9723 = vmatpush1.msra.mxu0 0.0
    %9724 = vmatprep.subr.mxu0 %v9684
    %9725 = vmatpush1.msra.mxu0 %v9683
    %9726 = vmatprep.subr.mxu0 0.0
    %9727 = vmatpush2.msra.mxu0 0.0
    %9728 = vmatprep.subr.mxu0 0.0
    %9729 = vmatpush2.msra.mxu0 0.0
    %9730 = vmatprep.subr.mxu0 0.0
    %9731 = vmatpush2.msra.mxu0 0.0
    %9732 = vmatprep.subr.mxu0 0.0
    %9733 = vmatpush2.msra.mxu0 0.0
    %9734 = vmatprep.subr.mxu0 0.0
    %9735 = vmatpush2.msra.mxu0 0.0
    %9736 = vmatprep.subr.mxu0 0.0
    %9737 = vmatpush2.msra.mxu0 0.0
    %9738 = vmatprep.subr.mxu0 0.0
    %9739 = vmatpush2.msra.mxu0 0.0
    %9740 = vmatprep.subr.mxu0 0.0
    %9741 = vmatpush2.msra.mxu0 0.0
    %9742 = vmatprep.subr.mxu0 0.0
    %9743 = vmatpush2.msra.mxu0 0.0
    %9744 = vmatprep.subr.mxu0 0.0
    %9745 = vmatpush2.msra.mxu0 0.0
    %9746 = vmatprep.subr.mxu0 0.0
    %9747 = vmatpush2.msra.mxu0 0.0
    %9748 = vmatprep.subr.mxu0 0.0
    %9749 = vmatpush2.msra.mxu0 0.0
    %9750 = vmatprep.subr.mxu0 0.0
    %9751 = vmatpush2.msra.mxu0 0.0
    %9752 = vmatprep.subr.mxu0 0.0
    %9753 = vmatpush2.msra.mxu0 0.0
    %9754 = vmatprep.subr.mxu0 0.0
    %9755 = vmatpush2.msra.mxu0 0.0
    %9756 = vmatprep.subr.mxu0 0.0
    %9757 = vmatpush2.msra.mxu0 0.0
    %9758 = vmatprep.mubr.f32.mxu0 0.0
    %9759 = vmatmul.mubr.f32.gmra.mxu0 %v9692
    %v9760 = vpop.f32.mrf.mxu0
    %v9761 = vadd.f32 0.0, %v9760
    %v9762 = vpop.f32.mrf.mxu0
    %v9763 = vadd.f32 0.0, %v9762
    %9764 = vdwg.mxu0
    %9765 = vmatprep.subr.mxu0 0.0
    %9766 = vmatpush1.msra.mxu0 0.0
    %9767 = vmatprep.subr.mxu0 0.0
    %9768 = vmatpush1.msra.mxu0 0.0
    %9769 = vmatprep.subr.mxu0 0.0
    %9770 = vmatpush1.msra.mxu0 0.0
    %9771 = vmatprep.subr.mxu0 0.0
    %9772 = vmatpush1.msra.mxu0 0.0
    %9773 = vmatprep.subr.mxu0 0.0
    %9774 = vmatpush1.msra.mxu0 0.0
    %9775 = vmatprep.subr.mxu0 0.0
    %9776 = vmatpush1.msra.mxu0 0.0
    %9777 = vmatprep.subr.mxu0 0.0
    %9778 = vmatpush1.msra.mxu0 0.0
    %9779 = vmatprep.subr.mxu0 0.0
    %9780 = vmatpush1.msra.mxu0 0.0
    %9781 = vmatprep.subr.mxu0 0.0
    %9782 = vmatpush1.msra.mxu0 0.0
    %9783 = vmatprep.subr.mxu0 0.0
    %9784 = vmatpush1.msra.mxu0 0.0
    %9785 = vmatprep.subr.mxu0 0.0
    %9786 = vmatpush1.msra.mxu0 0.0
    %9787 = vmatprep.subr.mxu0 0.0
    %9788 = vmatpush1.msra.mxu0 0.0
    %9789 = vmatprep.subr.mxu0 0.0
    %9790 = vmatpush1.msra.mxu0 0.0
    %9791 = vmatprep.subr.mxu0 0.0
    %9792 = vmatpush1.msra.mxu0 0.0
    %9793 = vmatprep.subr.mxu0 0.0
    %9794 = vmatpush1.msra.mxu0 0.0
    %9795 = vmatprep.subr.mxu0 %v9686
    %9796 = vmatpush1.msra.mxu0 %v9685
    %9797 = vmatprep.subr.mxu0 0.0
    %9798 = vmatpush2.msra.mxu0 0.0
    %9799 = vmatprep.subr.mxu0 0.0
    %9800 = vmatpush2.msra.mxu0 0.0
    %9801 = vmatprep.subr.mxu0 0.0
    %9802 = vmatpush2.msra.mxu0 0.0
    %9803 = vmatprep.subr.mxu0 0.0
    %9804 = vmatpush2.msra.mxu0 0.0
    %9805 = vmatprep.subr.mxu0 0.0
    %9806 = vmatpush2.msra.mxu0 0.0
    %9807 = vmatprep.subr.mxu0 0.0
    %9808 = vmatpush2.msra.mxu0 0.0
    %9809 = vmatprep.subr.mxu0 0.0
    %9810 = vmatpush2.msra.mxu0 0.0
    %9811 = vmatprep.subr.mxu0 0.0
    %9812 = vmatpush2.msra.mxu0 0.0
    %9813 = vmatprep.subr.mxu0 0.0
    %9814 = vmatpush2.msra.mxu0 0.0
    %9815 = vmatprep.subr.mxu0 0.0
    %9816 = vmatpush2.msra.mxu0 0.0
    %9817 = vmatprep.subr.mxu0 0.0
    %9818 = vmatpush2.msra.mxu0 0.0
    %9819 = vmatprep.subr.mxu0 0.0
    %9820 = vmatpush2.msra.mxu0 0.0
    %9821 = vmatprep.subr.mxu0 0.0
    %9822 = vmatpush2.msra.mxu0 0.0
    %9823 = vmatprep.subr.mxu0 0.0
    %9824 = vmatpush2.msra.mxu0 0.0
    %9825 = vmatprep.subr.mxu0 0.0
    %9826 = vmatpush2.msra.mxu0 0.0
    %9827 = vmatprep.subr.mxu0 0.0
    %9828 = vmatpush2.msra.mxu0 0.0
    %9829 = vmatprep.mubr.f32.mxu0 0.0
    %9830 = vmatmul.mubr.f32.gmra.mxu0 %v9692
    %v9831 = vpop.f32.mrf.mxu0
    %v9832 = vadd.f32 0.0, %v9831
    %v9833 = vpop.f32.mrf.mxu0
    %v9834 = vadd.f32 0.0, %v9833
    %9835 = vdwg.mxu0
    %9836 = vmatprep.subr.mxu0 0.0
    %9837 = vmatpush1.msra.mxu0 0.0
    %9838 = vmatprep.subr.mxu0 0.0
    %9839 = vmatpush1.msra.mxu0 0.0
    %9840 = vmatprep.subr.mxu0 0.0
    %9841 = vmatpush1.msra.mxu0 0.0
    %9842 = vmatprep.subr.mxu0 0.0
    %9843 = vmatpush1.msra.mxu0 0.0
    %9844 = vmatprep.subr.mxu0 0.0
    %9845 = vmatpush1.msra.mxu0 0.0
    %9846 = vmatprep.subr.mxu0 0.0
    %9847 = vmatpush1.msra.mxu0 0.0
    %9848 = vmatprep.subr.mxu0 0.0
    %9849 = vmatpush1.msra.mxu0 0.0
    %9850 = vmatprep.subr.mxu0 0.0
    %9851 = vmatpush1.msra.mxu0 0.0
    %9852 = vmatprep.subr.mxu0 0.0
    %9853 = vmatpush1.msra.mxu0 0.0
    %9854 = vmatprep.subr.mxu0 0.0
    %9855 = vmatpush1.msra.mxu0 0.0
    %9856 = vmatprep.subr.mxu0 0.0
    %9857 = vmatpush1.msra.mxu0 0.0
    %9858 = vmatprep.subr.mxu0 0.0
    %9859 = vmatpush1.msra.mxu0 0.0
    %9860 = vmatprep.subr.mxu0 0.0
    %9861 = vmatpush1.msra.mxu0 0.0
    %9862 = vmatprep.subr.mxu0 0.0
    %9863 = vmatpush1.msra.mxu0 0.0
    %9864 = vmatprep.subr.mxu0 0.0
    %9865 = vmatpush1.msra.mxu0 0.0
    %9866 = vmatprep.subr.mxu0 %v9688
    %9867 = vmatpush1.msra.mxu0 %v9687
    %9868 = vmatprep.subr.mxu0 0.0
    %9869 = vmatpush2.msra.mxu0 0.0
    %9870 = vmatprep.subr.mxu0 0.0
    %9871 = vmatpush2.msra.mxu0 0.0
    %9872 = vmatprep.subr.mxu0 0.0
    %9873 = vmatpush2.msra.mxu0 0.0
    %9874 = vmatprep.subr.mxu0 0.0
    %9875 = vmatpush2.msra.mxu0 0.0
    %9876 = vmatprep.subr.mxu0 0.0
    %9877 = vmatpush2.msra.mxu0 0.0
    %9878 = vmatprep.subr.mxu0 0.0
    %9879 = vmatpush2.msra.mxu0 0.0
    %9880 = vmatprep.subr.mxu0 0.0
    %9881 = vmatpush2.msra.mxu0 0.0
    %9882 = vmatprep.subr.mxu0 0.0
    %9883 = vmatpush2.msra.mxu0 0.0
    %9884 = vmatprep.subr.mxu0 0.0
    %9885 = vmatpush2.msra.mxu0 0.0
    %9886 = vmatprep.subr.mxu0 0.0
    %9887 = vmatpush2.msra.mxu0 0.0
    %9888 = vmatprep.subr.mxu0 0.0
    %9889 = vmatpush2.msra.mxu0 0.0
    %9890 = vmatprep.subr.mxu0 0.0
    %9891 = vmatpush2.msra.mxu0 0.0
    %9892 = vmatprep.subr.mxu0 0.0
    %9893 = vmatpush2.msra.mxu0 0.0
    %9894 = vmatprep.subr.mxu0 0.0
    %9895 = vmatpush2.msra.mxu0 0.0
    %9896 = vmatprep.subr.mxu0 0.0
    %9897 = vmatpush2.msra.mxu0 0.0
    %9898 = vmatprep.subr.mxu0 0.0
    %9899 = vmatpush2.msra.mxu0 0.0
    %9900 = vmatprep.mubr.f32.mxu0 0.0
    %9901 = vmatmul.mubr.f32.gmra.mxu0 %v9692
    %v9902 = vpop.f32.mrf.mxu0
    %v9903 = vadd.f32 0.0, %v9902
    %v9904 = vpop.f32.mrf.mxu0
    %v9905 = vadd.f32 0.0, %v9904
    %9906 = vdwg.mxu0
    %9907 = vmatprep.subr.mxu0 0.0
    %9908 = vmatpush1.msra.mxu0 0.0
    %9909 = vmatprep.subr.mxu0 0.0
    %9910 = vmatpush1.msra.mxu0 0.0
    %9911 = vmatprep.subr.mxu0 0.0
    %9912 = vmatpush1.msra.mxu0 0.0
    %9913 = vmatprep.subr.mxu0 0.0
    %9914 = vmatpush1.msra.mxu0 0.0
    %9915 = vmatprep.subr.mxu0 0.0
    %9916 = vmatpush1.msra.mxu0 0.0
    %9917 = vmatprep.subr.mxu0 0.0
    %9918 = vmatpush1.msra.mxu0 0.0
    %9919 = vmatprep.subr.mxu0 0.0
    %9920 = vmatpush1.msra.mxu0 0.0
    %9921 = vmatprep.subr.mxu0 0.0
    %9922 = vmatpush1.msra.mxu0 0.0
    %9923 = vmatprep.subr.mxu0 0.0
    %9924 = vmatpush1.msra.mxu0 0.0
    %9925 = vmatprep.subr.mxu0 0.0
    %9926 = vmatpush1.msra.mxu0 0.0
    %9927 = vmatprep.subr.mxu0 0.0
    %9928 = vmatpush1.msra.mxu0 0.0
    %9929 = vmatprep.subr.mxu0 0.0
    %9930 = vmatpush1.msra.mxu0 0.0
    %9931 = vmatprep.subr.mxu0 0.0
    %9932 = vmatpush1.msra.mxu0 0.0
    %9933 = vmatprep.subr.mxu0 0.0
    %9934 = vmatpush1.msra.mxu0 0.0
    %9935 = vmatprep.subr.mxu0 0.0
    %9936 = vmatpush1.msra.mxu0 0.0
    %9937 = vmatprep.subr.mxu0 %v9690
    %9938 = vmatpush1.msra.mxu0 %v9689
    %9939 = vmatprep.subr.mxu0 0.0
    %9940 = vmatpush2.msra.mxu0 0.0
    %9941 = vmatprep.subr.mxu0 0.0
    %9942 = vmatpush2.msra.mxu0 0.0
    %9943 = vmatprep.subr.mxu0 0.0
    %9944 = vmatpush2.msra.mxu0 0.0
    %9945 = vmatprep.subr.mxu0 0.0
    %9946 = vmatpush2.msra.mxu0 0.0
    %9947 = vmatprep.subr.mxu0 0.0
    %9948 = vmatpush2.msra.mxu0 0.0
    %9949 = vmatprep.subr.mxu0 0.0
    %9950 = vmatpush2.msra.mxu0 0.0
    %9951 = vmatprep.subr.mxu0 0.0
    %9952 = vmatpush2.msra.mxu0 0.0
    %9953 = vmatprep.subr.mxu0 0.0
    %9954 = vmatpush2.msra.mxu0 0.0
    %9955 = vmatprep.subr.mxu0 0.0
    %9956 = vmatpush2.msra.mxu0 0.0
    %9957 = vmatprep.subr.mxu0 0.0
    %9958 = vmatpush2.msra.mxu0 0.0
    %9959 = vmatprep.subr.mxu0 0.0
    %9960 = vmatpush2.msra.mxu0 0.0
    %9961 = vmatprep.subr.mxu0 0.0
    %9962 = vmatpush2.msra.mxu0 0.0
    %9963 = vmatprep.subr.mxu0 0.0
    %9964 = vmatpush2.msra.mxu0 0.0
    %9965 = vmatprep.subr.mxu0 0.0
    %9966 = vmatpush2.msra.mxu0 0.0
    %9967 = vmatprep.subr.mxu0 0.0
    %9968 = vmatpush2.msra.mxu0 0.0
    %9969 = vmatprep.subr.mxu0 0.0
    %9970 = vmatpush2.msra.mxu0 0.0
    %9971 = vmatprep.mubr.f32.mxu0 0.0
    %9972 = vmatmul.mubr.f32.gmra.mxu0 %v9692
    %v9973 = vpop.f32.mrf.mxu0
    %v9974 = vadd.f32 0.0, %v9973
    %v9975 = vpop.f32.mrf.mxu0
    %v9976 = vadd.f32 0.0, %v9975
    %9977 = vdwg.mxu0
    %v9978 = vadd.f32 %v9675, %v9761
    %v9979 = vadd.f32 %v9676, %v9763
    %v9980 = vadd.f32 %v9677, %v9832
    %v9981 = vadd.f32 %v9678, %v9834
    %v9982 = vadd.f32 %v9679, %v9903
    %v9983 = vadd.f32 %v9680, %v9905
    %v9984 = vadd.f32 %v9681, %v9974
    %v9985 = vadd.f32 %v9682, %v9976
    %v9986 = vld [vmem:[%s4580] sm:$0xff]
    %v9987 = vld [vmem:[%s4580 + $0x8] sm:$0xff]
    %v9988 = vld [vmem:[%s4580 + $0x10] sm:$0xff]
    %v9989 = vld [vmem:[%s4580 + $0x18] sm:$0xff]
    %v9990 = vld [vmem:[%s4580 + $0x20] sm:$0xff]
    %v9991 = vld [vmem:[%s4580 + $0x28] sm:$0xff]
    %v9992 = vld [vmem:[%s4580 + $0x30] sm:$0xff]
    %v9993 = vld [vmem:[%s4580 + $0x38] sm:$0xff]
    %v9994 = vrot.slane %v6062, 5
    %v9995 = vsel %vm663, %v9994, 0
    %9997 = vmatprep.subr.mxu0 0.0
    %9998 = vmatpush1.msra.mxu0 0.0
    %9999 = vmatprep.subr.mxu0 0.0
    %10000 = vmatpush1.msra.mxu0 0.0
    %10001 = vmatprep.subr.mxu0 0.0
    %10002 = vmatpush1.msra.mxu0 0.0
    %10003 = vmatprep.subr.mxu0 0.0
    %10004 = vmatpush1.msra.mxu0 0.0
    %10005 = vmatprep.subr.mxu0 0.0
    %10006 = vmatpush1.msra.mxu0 0.0
    %10007 = vmatprep.subr.mxu0 0.0
    %10008 = vmatpush1.msra.mxu0 0.0
    %10009 = vmatprep.subr.mxu0 0.0
    %10010 = vmatpush1.msra.mxu0 0.0
    %10011 = vmatprep.subr.mxu0 0.0
    %10012 = vmatpush1.msra.mxu0 0.0
    %10013 = vmatprep.subr.mxu0 0.0
    %10014 = vmatpush1.msra.mxu0 0.0
    %10015 = vmatprep.subr.mxu0 0.0
    %10016 = vmatpush1.msra.mxu0 0.0
    %10017 = vmatprep.subr.mxu0 0.0
    %10018 = vmatpush1.msra.mxu0 0.0
    %10019 = vmatprep.subr.mxu0 0.0
    %10020 = vmatpush1.msra.mxu0 0.0
    %10021 = vmatprep.subr.mxu0 0.0
    %10022 = vmatpush1.msra.mxu0 0.0
    %10023 = vmatprep.subr.mxu0 0.0
    %10024 = vmatpush1.msra.mxu0 0.0
    %10025 = vmatprep.subr.mxu0 0.0
    %10026 = vmatpush1.msra.mxu0 0.0
    %10027 = vmatprep.subr.mxu0 %v9987
    %10028 = vmatpush1.msra.mxu0 %v9986
    %10029 = vmatprep.subr.mxu0 0.0
    %10030 = vmatpush2.msra.mxu0 0.0
    %10031 = vmatprep.subr.mxu0 0.0
    %10032 = vmatpush2.msra.mxu0 0.0
    %10033 = vmatprep.subr.mxu0 0.0
    %10034 = vmatpush2.msra.mxu0 0.0
    %10035 = vmatprep.subr.mxu0 0.0
    %10036 = vmatpush2.msra.mxu0 0.0
    %10037 = vmatprep.subr.mxu0 0.0
    %10038 = vmatpush2.msra.mxu0 0.0
    %10039 = vmatprep.subr.mxu0 0.0
    %10040 = vmatpush2.msra.mxu0 0.0
    %10041 = vmatprep.subr.mxu0 0.0
    %10042 = vmatpush2.msra.mxu0 0.0
    %10043 = vmatprep.subr.mxu0 0.0
    %10044 = vmatpush2.msra.mxu0 0.0
    %10045 = vmatprep.subr.mxu0 0.0
    %10046 = vmatpush2.msra.mxu0 0.0
    %10047 = vmatprep.subr.mxu0 0.0
    %10048 = vmatpush2.msra.mxu0 0.0
    %10049 = vmatprep.subr.mxu0 0.0
    %10050 = vmatpush2.msra.mxu0 0.0
    %10051 = vmatprep.subr.mxu0 0.0
    %10052 = vmatpush2.msra.mxu0 0.0
    %10053 = vmatprep.subr.mxu0 0.0
    %10054 = vmatpush2.msra.mxu0 0.0
    %10055 = vmatprep.subr.mxu0 0.0
    %10056 = vmatpush2.msra.mxu0 0.0
    %10057 = vmatprep.subr.mxu0 0.0
    %10058 = vmatpush2.msra.mxu0 0.0
    %10059 = vmatprep.subr.mxu0 0.0
    %10060 = vmatpush2.msra.mxu0 0.0
    %10061 = vmatprep.mubr.f32.mxu0 0.0
    %10062 = vmatmul.mubr.f32.gmra.mxu0 %v9995
    %v10063 = vpop.f32.mrf.mxu0
    %v10064 = vadd.f32 0.0, %v10063
    %v10065 = vpop.f32.mrf.mxu0
    %v10066 = vadd.f32 0.0, %v10065
    %10067 = vdwg.mxu0
    %10068 = vmatprep.subr.mxu0 0.0
    %10069 = vmatpush1.msra.mxu0 0.0
    %10070 = vmatprep.subr.mxu0 0.0
    %10071 = vmatpush1.msra.mxu0 0.0
    %10072 = vmatprep.subr.mxu0 0.0
    %10073 = vmatpush1.msra.mxu0 0.0
    %10074 = vmatprep.subr.mxu0 0.0
    %10075 = vmatpush1.msra.mxu0 0.0
    %10076 = vmatprep.subr.mxu0 0.0
    %10077 = vmatpush1.msra.mxu0 0.0
    %10078 = vmatprep.subr.mxu0 0.0
    %10079 = vmatpush1.msra.mxu0 0.0
    %10080 = vmatprep.subr.mxu0 0.0
    %10081 = vmatpush1.msra.mxu0 0.0
    %10082 = vmatprep.subr.mxu0 0.0
    %10083 = vmatpush1.msra.mxu0 0.0
    %10084 = vmatprep.subr.mxu0 0.0
    %10085 = vmatpush1.msra.mxu0 0.0
    %10086 = vmatprep.subr.mxu0 0.0
    %10087 = vmatpush1.msra.mxu0 0.0
    %10088 = vmatprep.subr.mxu0 0.0
    %10089 = vmatpush1.msra.mxu0 0.0
    %10090 = vmatprep.subr.mxu0 0.0
    %10091 = vmatpush1.msra.mxu0 0.0
    %10092 = vmatprep.subr.mxu0 0.0
    %10093 = vmatpush1.msra.mxu0 0.0
    %10094 = vmatprep.subr.mxu0 0.0
    %10095 = vmatpush1.msra.mxu0 0.0
    %10096 = vmatprep.subr.mxu0 0.0
    %10097 = vmatpush1.msra.mxu0 0.0
    %10098 = vmatprep.subr.mxu0 %v9989
    %10099 = vmatpush1.msra.mxu0 %v9988
    %10100 = vmatprep.subr.mxu0 0.0
    %10101 = vmatpush2.msra.mxu0 0.0
    %10102 = vmatprep.subr.mxu0 0.0
    %10103 = vmatpush2.msra.mxu0 0.0
    %10104 = vmatprep.subr.mxu0 0.0
    %10105 = vmatpush2.msra.mxu0 0.0
    %10106 = vmatprep.subr.mxu0 0.0
    %10107 = vmatpush2.msra.mxu0 0.0
    %10108 = vmatprep.subr.mxu0 0.0
    %10109 = vmatpush2.msra.mxu0 0.0
    %10110 = vmatprep.subr.mxu0 0.0
    %10111 = vmatpush2.msra.mxu0 0.0
    %10112 = vmatprep.subr.mxu0 0.0
    %10113 = vmatpush2.msra.mxu0 0.0
    %10114 = vmatprep.subr.mxu0 0.0
    %10115 = vmatpush2.msra.mxu0 0.0
    %10116 = vmatprep.subr.mxu0 0.0
    %10117 = vmatpush2.msra.mxu0 0.0
    %10118 = vmatprep.subr.mxu0 0.0
    %10119 = vmatpush2.msra.mxu0 0.0
    %10120 = vmatprep.subr.mxu0 0.0
    %10121 = vmatpush2.msra.mxu0 0.0
    %10122 = vmatprep.subr.mxu0 0.0
    %10123 = vmatpush2.msra.mxu0 0.0
    %10124 = vmatprep.subr.mxu0 0.0
    %10125 = vmatpush2.msra.mxu0 0.0
    %10126 = vmatprep.subr.mxu0 0.0
    %10127 = vmatpush2.msra.mxu0 0.0
    %10128 = vmatprep.subr.mxu0 0.0
    %10129 = vmatpush2.msra.mxu0 0.0
    %10130 = vmatprep.subr.mxu0 0.0
    %10131 = vmatpush2.msra.mxu0 0.0
    %10132 = vmatprep.mubr.f32.mxu0 0.0
    %10133 = vmatmul.mubr.f32.gmra.mxu0 %v9995
    %v10134 = vpop.f32.mrf.mxu0
    %v10135 = vadd.f32 0.0, %v10134
    %v10136 = vpop.f32.mrf.mxu0
    %v10137 = vadd.f32 0.0, %v10136
    %10138 = vdwg.mxu0
    %10139 = vmatprep.subr.mxu0 0.0
    %10140 = vmatpush1.msra.mxu0 0.0
    %10141 = vmatprep.subr.mxu0 0.0
    %10142 = vmatpush1.msra.mxu0 0.0
    %10143 = vmatprep.subr.mxu0 0.0
    %10144 = vmatpush1.msra.mxu0 0.0
    %10145 = vmatprep.subr.mxu0 0.0
    %10146 = vmatpush1.msra.mxu0 0.0
    %10147 = vmatprep.subr.mxu0 0.0
    %10148 = vmatpush1.msra.mxu0 0.0
    %10149 = vmatprep.subr.mxu0 0.0
    %10150 = vmatpush1.msra.mxu0 0.0
    %10151 = vmatprep.subr.mxu0 0.0
    %10152 = vmatpush1.msra.mxu0 0.0
    %10153 = vmatprep.subr.mxu0 0.0
    %10154 = vmatpush1.msra.mxu0 0.0
    %10155 = vmatprep.subr.mxu0 0.0
    %10156 = vmatpush1.msra.mxu0 0.0
    %10157 = vmatprep.subr.mxu0 0.0
    %10158 = vmatpush1.msra.mxu0 0.0
    %10159 = vmatprep.subr.mxu0 0.0
    %10160 = vmatpush1.msra.mxu0 0.0
    %10161 = vmatprep.subr.mxu0 0.0
    %10162 = vmatpush1.msra.mxu0 0.0
    %10163 = vmatprep.subr.mxu0 0.0
    %10164 = vmatpush1.msra.mxu0 0.0
    %10165 = vmatprep.subr.mxu0 0.0
    %10166 = vmatpush1.msra.mxu0 0.0
    %10167 = vmatprep.subr.mxu0 0.0
    %10168 = vmatpush1.msra.mxu0 0.0
    %10169 = vmatprep.subr.mxu0 %v9991
    %10170 = vmatpush1.msra.mxu0 %v9990
    %10171 = vmatprep.subr.mxu0 0.0
    %10172 = vmatpush2.msra.mxu0 0.0
    %10173 = vmatprep.subr.mxu0 0.0
    %10174 = vmatpush2.msra.mxu0 0.0
    %10175 = vmatprep.subr.mxu0 0.0
    %10176 = vmatpush2.msra.mxu0 0.0
    %10177 = vmatprep.subr.mxu0 0.0
    %10178 = vmatpush2.msra.mxu0 0.0
    %10179 = vmatprep.subr.mxu0 0.0
    %10180 = vmatpush2.msra.mxu0 0.0
    %10181 = vmatprep.subr.mxu0 0.0
    %10182 = vmatpush2.msra.mxu0 0.0
    %10183 = vmatprep.subr.mxu0 0.0
    %10184 = vmatpush2.msra.mxu0 0.0
    %10185 = vmatprep.subr.mxu0 0.0
    %10186 = vmatpush2.msra.mxu0 0.0
    %10187 = vmatprep.subr.mxu0 0.0
    %10188 = vmatpush2.msra.mxu0 0.0
    %10189 = vmatprep.subr.mxu0 0.0
    %10190 = vmatpush2.msra.mxu0 0.0
    %10191 = vmatprep.subr.mxu0 0.0
    %10192 = vmatpush2.msra.mxu0 0.0
    %10193 = vmatprep.subr.mxu0 0.0
    %10194 = vmatpush2.msra.mxu0 0.0
    %10195 = vmatprep.subr.mxu0 0.0
    %10196 = vmatpush2.msra.mxu0 0.0
    %10197 = vmatprep.subr.mxu0 0.0
    %10198 = vmatpush2.msra.mxu0 0.0
    %10199 = vmatprep.subr.mxu0 0.0
    %10200 = vmatpush2.msra.mxu0 0.0
    %10201 = vmatprep.subr.mxu0 0.0
    %10202 = vmatpush2.msra.mxu0 0.0
    %10203 = vmatprep.mubr.f32.mxu0 0.0
    %10204 = vmatmul.mubr.f32.gmra.mxu0 %v9995
    %v10205 = vpop.f32.mrf.mxu0
    %v10206 = vadd.f32 0.0, %v10205
    %v10207 = vpop.f32.mrf.mxu0
    %v10208 = vadd.f32 0.0, %v10207
    %10209 = vdwg.mxu0
    %10210 = vmatprep.subr.mxu0 0.0
    %10211 = vmatpush1.msra.mxu0 0.0
    %10212 = vmatprep.subr.mxu0 0.0
    %10213 = vmatpush1.msra.mxu0 0.0
    %10214 = vmatprep.subr.mxu0 0.0
    %10215 = vmatpush1.msra.mxu0 0.0
    %10216 = vmatprep.subr.mxu0 0.0
    %10217 = vmatpush1.msra.mxu0 0.0
    %10218 = vmatprep.subr.mxu0 0.0
    %10219 = vmatpush1.msra.mxu0 0.0
    %10220 = vmatprep.subr.mxu0 0.0
    %10221 = vmatpush1.msra.mxu0 0.0
    %10222 = vmatprep.subr.mxu0 0.0
    %10223 = vmatpush1.msra.mxu0 0.0
    %10224 = vmatprep.subr.mxu0 0.0
    %10225 = vmatpush1.msra.mxu0 0.0
    %10226 = vmatprep.subr.mxu0 0.0
    %10227 = vmatpush1.msra.mxu0 0.0
    %10228 = vmatprep.subr.mxu0 0.0
    %10229 = vmatpush1.msra.mxu0 0.0
    %10230 = vmatprep.subr.mxu0 0.0
    %10231 = vmatpush1.msra.mxu0 0.0
    %10232 = vmatprep.subr.mxu0 0.0
    %10233 = vmatpush1.msra.mxu0 0.0
    %10234 = vmatprep.subr.mxu0 0.0
    %10235 = vmatpush1.msra.mxu0 0.0
    %10236 = vmatprep.subr.mxu0 0.0
    %10237 = vmatpush1.msra.mxu0 0.0
    %10238 = vmatprep.subr.mxu0 0.0
    %10239 = vmatpush1.msra.mxu0 0.0
    %10240 = vmatprep.subr.mxu0 %v9993
    %10241 = vmatpush1.msra.mxu0 %v9992
    %10242 = vmatprep.subr.mxu0 0.0
    %10243 = vmatpush2.msra.mxu0 0.0
    %10244 = vmatprep.subr.mxu0 0.0
    %10245 = vmatpush2.msra.mxu0 0.0
    %10246 = vmatprep.subr.mxu0 0.0
    %10247 = vmatpush2.msra.mxu0 0.0
    %10248 = vmatprep.subr.mxu0 0.0
    %10249 = vmatpush2.msra.mxu0 0.0
    %10250 = vmatprep.subr.mxu0 0.0
    %10251 = vmatpush2.msra.mxu0 0.0
    %10252 = vmatprep.subr.mxu0 0.0
    %10253 = vmatpush2.msra.mxu0 0.0
    %10254 = vmatprep.subr.mxu0 0.0
    %10255 = vmatpush2.msra.mxu0 0.0
    %10256 = vmatprep.subr.mxu0 0.0
    %10257 = vmatpush2.msra.mxu0 0.0
    %10258 = vmatprep.subr.mxu0 0.0
    %10259 = vmatpush2.msra.mxu0 0.0
    %10260 = vmatprep.subr.mxu0 0.0
    %10261 = vmatpush2.msra.mxu0 0.0
    %10262 = vmatprep.subr.mxu0 0.0
    %10263 = vmatpush2.msra.mxu0 0.0
    %10264 = vmatprep.subr.mxu0 0.0
    %10265 = vmatpush2.msra.mxu0 0.0
    %10266 = vmatprep.subr.mxu0 0.0
    %10267 = vmatpush2.msra.mxu0 0.0
    %10268 = vmatprep.subr.mxu0 0.0
    %10269 = vmatpush2.msra.mxu0 0.0
    %10270 = vmatprep.subr.mxu0 0.0
    %10271 = vmatpush2.msra.mxu0 0.0
    %10272 = vmatprep.subr.mxu0 0.0
    %10273 = vmatpush2.msra.mxu0 0.0
    %10274 = vmatprep.mubr.f32.mxu0 0.0
    %10275 = vmatmul.mubr.f32.gmra.mxu0 %v9995
    %v10276 = vpop.f32.mrf.mxu0
    %v10277 = vadd.f32 0.0, %v10276
    %v10278 = vpop.f32.mrf.mxu0
    %v10279 = vadd.f32 0.0, %v10278
    %10280 = vdwg.mxu0
    %v10281 = vadd.f32 %v9978, %v10064
    %v10282 = vadd.f32 %v9979, %v10066
    %v10283 = vadd.f32 %v9980, %v10135
    %v10284 = vadd.f32 %v9981, %v10137
    %v10285 = vadd.f32 %v9982, %v10206
    %v10286 = vadd.f32 %v9983, %v10208
    %v10287 = vadd.f32 %v9984, %v10277
    %v10288 = vadd.f32 %v9985, %v10279
    %v10289 = vld [vmem:[%s4884] sm:$0xff]
    %v10290 = vld [vmem:[%s4884 + $0x8] sm:$0xff]
    %v10291 = vld [vmem:[%s4884 + $0x10] sm:$0xff]
    %v10292 = vld [vmem:[%s4884 + $0x18] sm:$0xff]
    %v10293 = vld [vmem:[%s4884 + $0x20] sm:$0xff]
    %v10294 = vld [vmem:[%s4884 + $0x28] sm:$0xff]
    %v10295 = vld [vmem:[%s4884 + $0x30] sm:$0xff]
    %v10296 = vld [vmem:[%s4884 + $0x38] sm:$0xff]
    %v10297 = vrot.slane %v6062, 6
    %v10298 = vsel %vm663, %v10297, 0
    %10300 = vmatprep.subr.mxu0 0.0
    %10301 = vmatpush1.msra.mxu0 0.0
    %10302 = vmatprep.subr.mxu0 0.0
    %10303 = vmatpush1.msra.mxu0 0.0
    %10304 = vmatprep.subr.mxu0 0.0
    %10305 = vmatpush1.msra.mxu0 0.0
    %10306 = vmatprep.subr.mxu0 0.0
    %10307 = vmatpush1.msra.mxu0 0.0
    %10308 = vmatprep.subr.mxu0 0.0
    %10309 = vmatpush1.msra.mxu0 0.0
    %10310 = vmatprep.subr.mxu0 0.0
    %10311 = vmatpush1.msra.mxu0 0.0
    %10312 = vmatprep.subr.mxu0 0.0
    %10313 = vmatpush1.msra.mxu0 0.0
    %10314 = vmatprep.subr.mxu0 0.0
    %10315 = vmatpush1.msra.mxu0 0.0
    %10316 = vmatprep.subr.mxu0 0.0
    %10317 = vmatpush1.msra.mxu0 0.0
    %10318 = vmatprep.subr.mxu0 0.0
    %10319 = vmatpush1.msra.mxu0 0.0
    %10320 = vmatprep.subr.mxu0 0.0
    %10321 = vmatpush1.msra.mxu0 0.0
    %10322 = vmatprep.subr.mxu0 0.0
    %10323 = vmatpush1.msra.mxu0 0.0
    %10324 = vmatprep.subr.mxu0 0.0
    %10325 = vmatpush1.msra.mxu0 0.0
    %10326 = vmatprep.subr.mxu0 0.0
    %10327 = vmatpush1.msra.mxu0 0.0
    %10328 = vmatprep.subr.mxu0 0.0
    %10329 = vmatpush1.msra.mxu0 0.0
    %10330 = vmatprep.subr.mxu0 %v10290
    %10331 = vmatpush1.msra.mxu0 %v10289
    %10332 = vmatprep.subr.mxu0 0.0
    %10333 = vmatpush2.msra.mxu0 0.0
    %10334 = vmatprep.subr.mxu0 0.0
    %10335 = vmatpush2.msra.mxu0 0.0
    %10336 = vmatprep.subr.mxu0 0.0
    %10337 = vmatpush2.msra.mxu0 0.0
    %10338 = vmatprep.subr.mxu0 0.0
    %10339 = vmatpush2.msra.mxu0 0.0
    %10340 = vmatprep.subr.mxu0 0.0
    %10341 = vmatpush2.msra.mxu0 0.0
    %10342 = vmatprep.subr.mxu0 0.0
    %10343 = vmatpush2.msra.mxu0 0.0
    %10344 = vmatprep.subr.mxu0 0.0
    %10345 = vmatpush2.msra.mxu0 0.0
    %10346 = vmatprep.subr.mxu0 0.0
    %10347 = vmatpush2.msra.mxu0 0.0
    %10348 = vmatprep.subr.mxu0 0.0
    %10349 = vmatpush2.msra.mxu0 0.0
    %10350 = vmatprep.subr.mxu0 0.0
    %10351 = vmatpush2.msra.mxu0 0.0
    %10352 = vmatprep.subr.mxu0 0.0
    %10353 = vmatpush2.msra.mxu0 0.0
    %10354 = vmatprep.subr.mxu0 0.0
    %10355 = vmatpush2.msra.mxu0 0.0
    %10356 = vmatprep.subr.mxu0 0.0
    %10357 = vmatpush2.msra.mxu0 0.0
    %10358 = vmatprep.subr.mxu0 0.0
    %10359 = vmatpush2.msra.mxu0 0.0
    %10360 = vmatprep.subr.mxu0 0.0
    %10361 = vmatpush2.msra.mxu0 0.0
    %10362 = vmatprep.subr.mxu0 0.0
    %10363 = vmatpush2.msra.mxu0 0.0
    %10364 = vmatprep.mubr.f32.mxu0 0.0
    %10365 = vmatmul.mubr.f32.gmra.mxu0 %v10298
    %v10366 = vpop.f32.mrf.mxu0
    %v10367 = vadd.f32 0.0, %v10366
    %v10368 = vpop.f32.mrf.mxu0
    %v10369 = vadd.f32 0.0, %v10368
    %10370 = vdwg.mxu0
    %10371 = vmatprep.subr.mxu0 0.0
    %10372 = vmatpush1.msra.mxu0 0.0
    %10373 = vmatprep.subr.mxu0 0.0
    %10374 = vmatpush1.msra.mxu0 0.0
    %10375 = vmatprep.subr.mxu0 0.0
    %10376 = vmatpush1.msra.mxu0 0.0
    %10377 = vmatprep.subr.mxu0 0.0
    %10378 = vmatpush1.msra.mxu0 0.0
    %10379 = vmatprep.subr.mxu0 0.0
    %10380 = vmatpush1.msra.mxu0 0.0
    %10381 = vmatprep.subr.mxu0 0.0
    %10382 = vmatpush1.msra.mxu0 0.0
    %10383 = vmatprep.subr.mxu0 0.0
    %10384 = vmatpush1.msra.mxu0 0.0
    %10385 = vmatprep.subr.mxu0 0.0
    %10386 = vmatpush1.msra.mxu0 0.0
    %10387 = vmatprep.subr.mxu0 0.0
    %10388 = vmatpush1.msra.mxu0 0.0
    %10389 = vmatprep.subr.mxu0 0.0
    %10390 = vmatpush1.msra.mxu0 0.0
    %10391 = vmatprep.subr.mxu0 0.0
    %10392 = vmatpush1.msra.mxu0 0.0
    %10393 = vmatprep.subr.mxu0 0.0
    %10394 = vmatpush1.msra.mxu0 0.0
    %10395 = vmatprep.subr.mxu0 0.0
    %10396 = vmatpush1.msra.mxu0 0.0
    %10397 = vmatprep.subr.mxu0 0.0
    %10398 = vmatpush1.msra.mxu0 0.0
    %10399 = vmatprep.subr.mxu0 0.0
    %10400 = vmatpush1.msra.mxu0 0.0
    %10401 = vmatprep.subr.mxu0 %v10292
    %10402 = vmatpush1.msra.mxu0 %v10291
    %10403 = vmatprep.subr.mxu0 0.0
    %10404 = vmatpush2.msra.mxu0 0.0
    %10405 = vmatprep.subr.mxu0 0.0
    %10406 = vmatpush2.msra.mxu0 0.0
    %10407 = vmatprep.subr.mxu0 0.0
    %10408 = vmatpush2.msra.mxu0 0.0
    %10409 = vmatprep.subr.mxu0 0.0
    %10410 = vmatpush2.msra.mxu0 0.0
    %10411 = vmatprep.subr.mxu0 0.0
    %10412 = vmatpush2.msra.mxu0 0.0
    %10413 = vmatprep.subr.mxu0 0.0
    %10414 = vmatpush2.msra.mxu0 0.0
    %10415 = vmatprep.subr.mxu0 0.0
    %10416 = vmatpush2.msra.mxu0 0.0
    %10417 = vmatprep.subr.mxu0 0.0
    %10418 = vmatpush2.msra.mxu0 0.0
    %10419 = vmatprep.subr.mxu0 0.0
    %10420 = vmatpush2.msra.mxu0 0.0
    %10421 = vmatprep.subr.mxu0 0.0
    %10422 = vmatpush2.msra.mxu0 0.0
    %10423 = vmatprep.subr.mxu0 0.0
    %10424 = vmatpush2.msra.mxu0 0.0
    %10425 = vmatprep.subr.mxu0 0.0
    %10426 = vmatpush2.msra.mxu0 0.0
    %10427 = vmatprep.subr.mxu0 0.0
    %10428 = vmatpush2.msra.mxu0 0.0
    %10429 = vmatprep.subr.mxu0 0.0
    %10430 = vmatpush2.msra.mxu0 0.0
    %10431 = vmatprep.subr.mxu0 0.0
    %10432 = vmatpush2.msra.mxu0 0.0
    %10433 = vmatprep.subr.mxu0 0.0
    %10434 = vmatpush2.msra.mxu0 0.0
    %10435 = vmatprep.mubr.f32.mxu0 0.0
    %10436 = vmatmul.mubr.f32.gmra.mxu0 %v10298
    %v10437 = vpop.f32.mrf.mxu0
    %v10438 = vadd.f32 0.0, %v10437
    %v10439 = vpop.f32.mrf.mxu0
    %v10440 = vadd.f32 0.0, %v10439
    %10441 = vdwg.mxu0
    %10442 = vmatprep.subr.mxu0 0.0
    %10443 = vmatpush1.msra.mxu0 0.0
    %10444 = vmatprep.subr.mxu0 0.0
    %10445 = vmatpush1.msra.mxu0 0.0
    %10446 = vmatprep.subr.mxu0 0.0
    %10447 = vmatpush1.msra.mxu0 0.0
    %10448 = vmatprep.subr.mxu0 0.0
    %10449 = vmatpush1.msra.mxu0 0.0
    %10450 = vmatprep.subr.mxu0 0.0
    %10451 = vmatpush1.msra.mxu0 0.0
    %10452 = vmatprep.subr.mxu0 0.0
    %10453 = vmatpush1.msra.mxu0 0.0
    %10454 = vmatprep.subr.mxu0 0.0
    %10455 = vmatpush1.msra.mxu0 0.0
    %10456 = vmatprep.subr.mxu0 0.0
    %10457 = vmatpush1.msra.mxu0 0.0
    %10458 = vmatprep.subr.mxu0 0.0
    %10459 = vmatpush1.msra.mxu0 0.0
    %10460 = vmatprep.subr.mxu0 0.0
    %10461 = vmatpush1.msra.mxu0 0.0
    %10462 = vmatprep.subr.mxu0 0.0
    %10463 = vmatpush1.msra.mxu0 0.0
    %10464 = vmatprep.subr.mxu0 0.0
    %10465 = vmatpush1.msra.mxu0 0.0
    %10466 = vmatprep.subr.mxu0 0.0
    %10467 = vmatpush1.msra.mxu0 0.0
    %10468 = vmatprep.subr.mxu0 0.0
    %10469 = vmatpush1.msra.mxu0 0.0
    %10470 = vmatprep.subr.mxu0 0.0
    %10471 = vmatpush1.msra.mxu0 0.0
    %10472 = vmatprep.subr.mxu0 %v10294
    %10473 = vmatpush1.msra.mxu0 %v10293
    %10474 = vmatprep.subr.mxu0 0.0
    %10475 = vmatpush2.msra.mxu0 0.0
    %10476 = vmatprep.subr.mxu0 0.0
    %10477 = vmatpush2.msra.mxu0 0.0
    %10478 = vmatprep.subr.mxu0 0.0
    %10479 = vmatpush2.msra.mxu0 0.0
    %10480 = vmatprep.subr.mxu0 0.0
    %10481 = vmatpush2.msra.mxu0 0.0
    %10482 = vmatprep.subr.mxu0 0.0
    %10483 = vmatpush2.msra.mxu0 0.0
    %10484 = vmatprep.subr.mxu0 0.0
    %10485 = vmatpush2.msra.mxu0 0.0
    %10486 = vmatprep.subr.mxu0 0.0
    %10487 = vmatpush2.msra.mxu0 0.0
    %10488 = vmatprep.subr.mxu0 0.0
    %10489 = vmatpush2.msra.mxu0 0.0
    %10490 = vmatprep.subr.mxu0 0.0
    %10491 = vmatpush2.msra.mxu0 0.0
    %10492 = vmatprep.subr.mxu0 0.0
    %10493 = vmatpush2.msra.mxu0 0.0
    %10494 = vmatprep.subr.mxu0 0.0
    %10495 = vmatpush2.msra.mxu0 0.0
    %10496 = vmatprep.subr.mxu0 0.0
    %10497 = vmatpush2.msra.mxu0 0.0
    %10498 = vmatprep.subr.mxu0 0.0
    %10499 = vmatpush2.msra.mxu0 0.0
    %10500 = vmatprep.subr.mxu0 0.0
    %10501 = vmatpush2.msra.mxu0 0.0
    %10502 = vmatprep.subr.mxu0 0.0
    %10503 = vmatpush2.msra.mxu0 0.0
    %10504 = vmatprep.subr.mxu0 0.0
    %10505 = vmatpush2.msra.mxu0 0.0
    %10506 = vmatprep.mubr.f32.mxu0 0.0
    %10507 = vmatmul.mubr.f32.gmra.mxu0 %v10298
    %v10508 = vpop.f32.mrf.mxu0
    %v10509 = vadd.f32 0.0, %v10508
    %v10510 = vpop.f32.mrf.mxu0
    %v10511 = vadd.f32 0.0, %v10510
    %10512 = vdwg.mxu0
    %10513 = vmatprep.subr.mxu0 0.0
    %10514 = vmatpush1.msra.mxu0 0.0
    %10515 = vmatprep.subr.mxu0 0.0
    %10516 = vmatpush1.msra.mxu0 0.0
    %10517 = vmatprep.subr.mxu0 0.0
    %10518 = vmatpush1.msra.mxu0 0.0
    %10519 = vmatprep.subr.mxu0 0.0
    %10520 = vmatpush1.msra.mxu0 0.0
    %10521 = vmatprep.subr.mxu0 0.0
    %10522 = vmatpush1.msra.mxu0 0.0
    %10523 = vmatprep.subr.mxu0 0.0
    %10524 = vmatpush1.msra.mxu0 0.0
    %10525 = vmatprep.subr.mxu0 0.0
    %10526 = vmatpush1.msra.mxu0 0.0
    %10527 = vmatprep.subr.mxu0 0.0
    %10528 = vmatpush1.msra.mxu0 0.0
    %10529 = vmatprep.subr.mxu0 0.0
    %10530 = vmatpush1.msra.mxu0 0.0
    %10531 = vmatprep.subr.mxu0 0.0
    %10532 = vmatpush1.msra.mxu0 0.0
    %10533 = vmatprep.subr.mxu0 0.0
    %10534 = vmatpush1.msra.mxu0 0.0
    %10535 = vmatprep.subr.mxu0 0.0
    %10536 = vmatpush1.msra.mxu0 0.0
    %10537 = vmatprep.subr.mxu0 0.0
    %10538 = vmatpush1.msra.mxu0 0.0
    %10539 = vmatprep.subr.mxu0 0.0
    %10540 = vmatpush1.msra.mxu0 0.0
    %10541 = vmatprep.subr.mxu0 0.0
    %10542 = vmatpush1.msra.mxu0 0.0
    %10543 = vmatprep.subr.mxu0 %v10296
    %10544 = vmatpush1.msra.mxu0 %v10295
    %10545 = vmatprep.subr.mxu0 0.0
    %10546 = vmatpush2.msra.mxu0 0.0
    %10547 = vmatprep.subr.mxu0 0.0
    %10548 = vmatpush2.msra.mxu0 0.0
    %10549 = vmatprep.subr.mxu0 0.0
    %10550 = vmatpush2.msra.mxu0 0.0
    %10551 = vmatprep.subr.mxu0 0.0
    %10552 = vmatpush2.msra.mxu0 0.0
    %10553 = vmatprep.subr.mxu0 0.0
    %10554 = vmatpush2.msra.mxu0 0.0
    %10555 = vmatprep.subr.mxu0 0.0
    %10556 = vmatpush2.msra.mxu0 0.0
    %10557 = vmatprep.subr.mxu0 0.0
    %10558 = vmatpush2.msra.mxu0 0.0
    %10559 = vmatprep.subr.mxu0 0.0
    %10560 = vmatpush2.msra.mxu0 0.0
    %10561 = vmatprep.subr.mxu0 0.0
    %10562 = vmatpush2.msra.mxu0 0.0
    %10563 = vmatprep.subr.mxu0 0.0
    %10564 = vmatpush2.msra.mxu0 0.0
    %10565 = vmatprep.subr.mxu0 0.0
    %10566 = vmatpush2.msra.mxu0 0.0
    %10567 = vmatprep.subr.mxu0 0.0
    %10568 = vmatpush2.msra.mxu0 0.0
    %10569 = vmatprep.subr.mxu0 0.0
    %10570 = vmatpush2.msra.mxu0 0.0
    %10571 = vmatprep.subr.mxu0 0.0
    %10572 = vmatpush2.msra.mxu0 0.0
    %10573 = vmatprep.subr.mxu0 0.0
    %10574 = vmatpush2.msra.mxu0 0.0
    %10575 = vmatprep.subr.mxu0 0.0
    %10576 = vmatpush2.msra.mxu0 0.0
    %10577 = vmatprep.mubr.f32.mxu0 0.0
    %10578 = vmatmul.mubr.f32.gmra.mxu0 %v10298
    %v10579 = vpop.f32.mrf.mxu0
    %v10580 = vadd.f32 0.0, %v10579
    %v10581 = vpop.f32.mrf.mxu0
    %v10582 = vadd.f32 0.0, %v10581
    %10583 = vdwg.mxu0
    %v10584 = vadd.f32 %v10281, %v10367
    %v10585 = vadd.f32 %v10282, %v10369
    %v10586 = vadd.f32 %v10283, %v10438
    %v10587 = vadd.f32 %v10284, %v10440
    %v10588 = vadd.f32 %v10285, %v10509
    %v10589 = vadd.f32 %v10286, %v10511
    %v10590 = vadd.f32 %v10287, %v10580
    %v10591 = vadd.f32 %v10288, %v10582
    %v10592 = vld [vmem:[%s5188] sm:$0xff]
    %v10593 = vld [vmem:[%s5188 + $0x8] sm:$0xff]
    %v10594 = vld [vmem:[%s5188 + $0x10] sm:$0xff]
    %v10595 = vld [vmem:[%s5188 + $0x18] sm:$0xff]
    %v10596 = vld [vmem:[%s5188 + $0x20] sm:$0xff]
    %v10597 = vld [vmem:[%s5188 + $0x28] sm:$0xff]
    %v10598 = vld [vmem:[%s5188 + $0x30] sm:$0xff]
    %v10599 = vld [vmem:[%s5188 + $0x38] sm:$0xff]
    %v10600 = vrot.slane %v6062, 7
    %v10601 = vsel %vm663, %v10600, 0
    %10603 = vmatprep.subr.mxu0 0.0
    %10604 = vmatpush1.msra.mxu0 0.0
    %10605 = vmatprep.subr.mxu0 0.0
    %10606 = vmatpush1.msra.mxu0 0.0
    %10607 = vmatprep.subr.mxu0 0.0
    %10608 = vmatpush1.msra.mxu0 0.0
    %10609 = vmatprep.subr.mxu0 0.0
    %10610 = vmatpush1.msra.mxu0 0.0
    %10611 = vmatprep.subr.mxu0 0.0
    %10612 = vmatpush1.msra.mxu0 0.0
    %10613 = vmatprep.subr.mxu0 0.0
    %10614 = vmatpush1.msra.mxu0 0.0
    %10615 = vmatprep.subr.mxu0 0.0
    %10616 = vmatpush1.msra.mxu0 0.0
    %10617 = vmatprep.subr.mxu0 0.0
    %10618 = vmatpush1.msra.mxu0 0.0
    %10619 = vmatprep.subr.mxu0 0.0
    %10620 = vmatpush1.msra.mxu0 0.0
    %10621 = vmatprep.subr.mxu0 0.0
    %10622 = vmatpush1.msra.mxu0 0.0
    %10623 = vmatprep.subr.mxu0 0.0
    %10624 = vmatpush1.msra.mxu0 0.0
    %10625 = vmatprep.subr.mxu0 0.0
    %10626 = vmatpush1.msra.mxu0 0.0
    %10627 = vmatprep.subr.mxu0 0.0
    %10628 = vmatpush1.msra.mxu0 0.0
    %10629 = vmatprep.subr.mxu0 0.0
    %10630 = vmatpush1.msra.mxu0 0.0
    %10631 = vmatprep.subr.mxu0 0.0
    %10632 = vmatpush1.msra.mxu0 0.0
    %10633 = vmatprep.subr.mxu0 %v10593
    %10634 = vmatpush1.msra.mxu0 %v10592
    %10635 = vmatprep.subr.mxu0 0.0
    %10636 = vmatpush2.msra.mxu0 0.0
    %10637 = vmatprep.subr.mxu0 0.0
    %10638 = vmatpush2.msra.mxu0 0.0
    %10639 = vmatprep.subr.mxu0 0.0
    %10640 = vmatpush2.msra.mxu0 0.0
    %10641 = vmatprep.subr.mxu0 0.0
    %10642 = vmatpush2.msra.mxu0 0.0
    %10643 = vmatprep.subr.mxu0 0.0
    %10644 = vmatpush2.msra.mxu0 0.0
    %10645 = vmatprep.subr.mxu0 0.0
    %10646 = vmatpush2.msra.mxu0 0.0
    %10647 = vmatprep.subr.mxu0 0.0
    %10648 = vmatpush2.msra.mxu0 0.0
    %10649 = vmatprep.subr.mxu0 0.0
    %10650 = vmatpush2.msra.mxu0 0.0
    %10651 = vmatprep.subr.mxu0 0.0
    %10652 = vmatpush2.msra.mxu0 0.0
    %10653 = vmatprep.subr.mxu0 0.0
    %10654 = vmatpush2.msra.mxu0 0.0
    %10655 = vmatprep.subr.mxu0 0.0
    %10656 = vmatpush2.msra.mxu0 0.0
    %10657 = vmatprep.subr.mxu0 0.0
    %10658 = vmatpush2.msra.mxu0 0.0
    %10659 = vmatprep.subr.mxu0 0.0
    %10660 = vmatpush2.msra.mxu0 0.0
    %10661 = vmatprep.subr.mxu0 0.0
    %10662 = vmatpush2.msra.mxu0 0.0
    %10663 = vmatprep.subr.mxu0 0.0
    %10664 = vmatpush2.msra.mxu0 0.0
    %10665 = vmatprep.subr.mxu0 0.0
    %10666 = vmatpush2.msra.mxu0 0.0
    %10667 = vmatprep.mubr.f32.mxu0 0.0
    %10668 = vmatmul.mubr.f32.gmra.mxu0 %v10601
    %v10669 = vpop.f32.mrf.mxu0
    %v10670 = vadd.f32 0.0, %v10669
    %v10671 = vpop.f32.mrf.mxu0
    %v10672 = vadd.f32 0.0, %v10671
    %10673 = vdwg.mxu0
    %10674 = vmatprep.subr.mxu0 0.0
    %10675 = vmatpush1.msra.mxu0 0.0
    %10676 = vmatprep.subr.mxu0 0.0
    %10677 = vmatpush1.msra.mxu0 0.0
    %10678 = vmatprep.subr.mxu0 0.0
    %10679 = vmatpush1.msra.mxu0 0.0
    %10680 = vmatprep.subr.mxu0 0.0
    %10681 = vmatpush1.msra.mxu0 0.0
    %10682 = vmatprep.subr.mxu0 0.0
    %10683 = vmatpush1.msra.mxu0 0.0
    %10684 = vmatprep.subr.mxu0 0.0
    %10685 = vmatpush1.msra.mxu0 0.0
    %10686 = vmatprep.subr.mxu0 0.0
    %10687 = vmatpush1.msra.mxu0 0.0
    %10688 = vmatprep.subr.mxu0 0.0
    %10689 = vmatpush1.msra.mxu0 0.0
    %10690 = vmatprep.subr.mxu0 0.0
    %10691 = vmatpush1.msra.mxu0 0.0
    %10692 = vmatprep.subr.mxu0 0.0
    %10693 = vmatpush1.msra.mxu0 0.0
    %10694 = vmatprep.subr.mxu0 0.0
    %10695 = vmatpush1.msra.mxu0 0.0
    %10696 = vmatprep.subr.mxu0 0.0
    %10697 = vmatpush1.msra.mxu0 0.0
    %10698 = vmatprep.subr.mxu0 0.0
    %10699 = vmatpush1.msra.mxu0 0.0
    %10700 = vmatprep.subr.mxu0 0.0
    %10701 = vmatpush1.msra.mxu0 0.0
    %10702 = vmatprep.subr.mxu0 0.0
    %10703 = vmatpush1.msra.mxu0 0.0
    %10704 = vmatprep.subr.mxu0 %v10595
    %10705 = vmatpush1.msra.mxu0 %v10594
    %10706 = vmatprep.subr.mxu0 0.0
    %10707 = vmatpush2.msra.mxu0 0.0
    %10708 = vmatprep.subr.mxu0 0.0
    %10709 = vmatpush2.msra.mxu0 0.0
    %10710 = vmatprep.subr.mxu0 0.0
    %10711 = vmatpush2.msra.mxu0 0.0
    %10712 = vmatprep.subr.mxu0 0.0
    %10713 = vmatpush2.msra.mxu0 0.0
    %10714 = vmatprep.subr.mxu0 0.0
    %10715 = vmatpush2.msra.mxu0 0.0
    %10716 = vmatprep.subr.mxu0 0.0
    %10717 = vmatpush2.msra.mxu0 0.0
    %10718 = vmatprep.subr.mxu0 0.0
    %10719 = vmatpush2.msra.mxu0 0.0
    %10720 = vmatprep.subr.mxu0 0.0
    %10721 = vmatpush2.msra.mxu0 0.0
    %10722 = vmatprep.subr.mxu0 0.0
    %10723 = vmatpush2.msra.mxu0 0.0
    %10724 = vmatprep.subr.mxu0 0.0
    %10725 = vmatpush2.msra.mxu0 0.0
    %10726 = vmatprep.subr.mxu0 0.0
    %10727 = vmatpush2.msra.mxu0 0.0
    %10728 = vmatprep.subr.mxu0 0.0
    %10729 = vmatpush2.msra.mxu0 0.0
    %10730 = vmatprep.subr.mxu0 0.0
    %10731 = vmatpush2.msra.mxu0 0.0
    %10732 = vmatprep.subr.mxu0 0.0
    %10733 = vmatpush2.msra.mxu0 0.0
    %10734 = vmatprep.subr.mxu0 0.0
    %10735 = vmatpush2.msra.mxu0 0.0
    %10736 = vmatprep.subr.mxu0 0.0
    %10737 = vmatpush2.msra.mxu0 0.0
    %10738 = vmatprep.mubr.f32.mxu0 0.0
    %10739 = vmatmul.mubr.f32.gmra.mxu0 %v10601
    %v10740 = vpop.f32.mrf.mxu0
    %v10741 = vadd.f32 0.0, %v10740
    %v10742 = vpop.f32.mrf.mxu0
    %v10743 = vadd.f32 0.0, %v10742
    %10744 = vdwg.mxu0
    %10745 = vmatprep.subr.mxu0 0.0
    %10746 = vmatpush1.msra.mxu0 0.0
    %10747 = vmatprep.subr.mxu0 0.0
    %10748 = vmatpush1.msra.mxu0 0.0
    %10749 = vmatprep.subr.mxu0 0.0
    %10750 = vmatpush1.msra.mxu0 0.0
    %10751 = vmatprep.subr.mxu0 0.0
    %10752 = vmatpush1.msra.mxu0 0.0
    %10753 = vmatprep.subr.mxu0 0.0
    %10754 = vmatpush1.msra.mxu0 0.0
    %10755 = vmatprep.subr.mxu0 0.0
    %10756 = vmatpush1.msra.mxu0 0.0
    %10757 = vmatprep.subr.mxu0 0.0
    %10758 = vmatpush1.msra.mxu0 0.0
    %10759 = vmatprep.subr.mxu0 0.0
    %10760 = vmatpush1.msra.mxu0 0.0
    %10761 = vmatprep.subr.mxu0 0.0
    %10762 = vmatpush1.msra.mxu0 0.0
    %10763 = vmatprep.subr.mxu0 0.0
    %10764 = vmatpush1.msra.mxu0 0.0
    %10765 = vmatprep.subr.mxu0 0.0
    %10766 = vmatpush1.msra.mxu0 0.0
    %10767 = vmatprep.subr.mxu0 0.0
    %10768 = vmatpush1.msra.mxu0 0.0
    %10769 = vmatprep.subr.mxu0 0.0
    %10770 = vmatpush1.msra.mxu0 0.0
    %10771 = vmatprep.subr.mxu0 0.0
    %10772 = vmatpush1.msra.mxu0 0.0
    %10773 = vmatprep.subr.mxu0 0.0
    %10774 = vmatpush1.msra.mxu0 0.0
    %10775 = vmatprep.subr.mxu0 %v10597
    %10776 = vmatpush1.msra.mxu0 %v10596
    %10777 = vmatprep.subr.mxu0 0.0
    %10778 = vmatpush2.msra.mxu0 0.0
    %10779 = vmatprep.subr.mxu0 0.0
    %10780 = vmatpush2.msra.mxu0 0.0
    %10781 = vmatprep.subr.mxu0 0.0
    %10782 = vmatpush2.msra.mxu0 0.0
    %10783 = vmatprep.subr.mxu0 0.0
    %10784 = vmatpush2.msra.mxu0 0.0
    %10785 = vmatprep.subr.mxu0 0.0
    %10786 = vmatpush2.msra.mxu0 0.0
    %10787 = vmatprep.subr.mxu0 0.0
    %10788 = vmatpush2.msra.mxu0 0.0
    %10789 = vmatprep.subr.mxu0 0.0
    %10790 = vmatpush2.msra.mxu0 0.0
    %10791 = vmatprep.subr.mxu0 0.0
    %10792 = vmatpush2.msra.mxu0 0.0
    %10793 = vmatprep.subr.mxu0 0.0
    %10794 = vmatpush2.msra.mxu0 0.0
    %10795 = vmatprep.subr.mxu0 0.0
    %10796 = vmatpush2.msra.mxu0 0.0
    %10797 = vmatprep.subr.mxu0 0.0
    %10798 = vmatpush2.msra.mxu0 0.0
    %10799 = vmatprep.subr.mxu0 0.0
    %10800 = vmatpush2.msra.mxu0 0.0
    %10801 = vmatprep.subr.mxu0 0.0
    %10802 = vmatpush2.msra.mxu0 0.0
    %10803 = vmatprep.subr.mxu0 0.0
    %10804 = vmatpush2.msra.mxu0 0.0
    %10805 = vmatprep.subr.mxu0 0.0
    %10806 = vmatpush2.msra.mxu0 0.0
    %10807 = vmatprep.subr.mxu0 0.0
    %10808 = vmatpush2.msra.mxu0 0.0
    %10809 = vmatprep.mubr.f32.mxu0 0.0
    %10810 = vmatmul.mubr.f32.gmra.mxu0 %v10601
    %v10811 = vpop.f32.mrf.mxu0
    %v10812 = vadd.f32 0.0, %v10811
    %v10813 = vpop.f32.mrf.mxu0
    %v10814 = vadd.f32 0.0, %v10813
    %10815 = vdwg.mxu0
    %10816 = vmatprep.subr.mxu0 0.0
    %10817 = vmatpush1.msra.mxu0 0.0
    %10818 = vmatprep.subr.mxu0 0.0
    %10819 = vmatpush1.msra.mxu0 0.0
    %10820 = vmatprep.subr.mxu0 0.0
    %10821 = vmatpush1.msra.mxu0 0.0
    %10822 = vmatprep.subr.mxu0 0.0
    %10823 = vmatpush1.msra.mxu0 0.0
    %10824 = vmatprep.subr.mxu0 0.0
    %10825 = vmatpush1.msra.mxu0 0.0
    %10826 = vmatprep.subr.mxu0 0.0
    %10827 = vmatpush1.msra.mxu0 0.0
    %10828 = vmatprep.subr.mxu0 0.0
    %10829 = vmatpush1.msra.mxu0 0.0
    %10830 = vmatprep.subr.mxu0 0.0
    %10831 = vmatpush1.msra.mxu0 0.0
    %10832 = vmatprep.subr.mxu0 0.0
    %10833 = vmatpush1.msra.mxu0 0.0
    %10834 = vmatprep.subr.mxu0 0.0
    %10835 = vmatpush1.msra.mxu0 0.0
    %10836 = vmatprep.subr.mxu0 0.0
    %10837 = vmatpush1.msra.mxu0 0.0
    %10838 = vmatprep.subr.mxu0 0.0
    %10839 = vmatpush1.msra.mxu0 0.0
    %10840 = vmatprep.subr.mxu0 0.0
    %10841 = vmatpush1.msra.mxu0 0.0
    %10842 = vmatprep.subr.mxu0 0.0
    %10843 = vmatpush1.msra.mxu0 0.0
    %10844 = vmatprep.subr.mxu0 0.0
    %10845 = vmatpush1.msra.mxu0 0.0
    %10846 = vmatprep.subr.mxu0 %v10599
    %10847 = vmatpush1.msra.mxu0 %v10598
    %10848 = vmatprep.subr.mxu0 0.0
    %10849 = vmatpush2.msra.mxu0 0.0
    %10850 = vmatprep.subr.mxu0 0.0
    %10851 = vmatpush2.msra.mxu0 0.0
    %10852 = vmatprep.subr.mxu0 0.0
    %10853 = vmatpush2.msra.mxu0 0.0
    %10854 = vmatprep.subr.mxu0 0.0
    %10855 = vmatpush2.msra.mxu0 0.0
    %10856 = vmatprep.subr.mxu0 0.0
    %10857 = vmatpush2.msra.mxu0 0.0
    %10858 = vmatprep.subr.mxu0 0.0
    %10859 = vmatpush2.msra.mxu0 0.0
    %10860 = vmatprep.subr.mxu0 0.0
    %10861 = vmatpush2.msra.mxu0 0.0
    %10862 = vmatprep.subr.mxu0 0.0
    %10863 = vmatpush2.msra.mxu0 0.0
    %10864 = vmatprep.subr.mxu0 0.0
    %10865 = vmatpush2.msra.mxu0 0.0
    %10866 = vmatprep.subr.mxu0 0.0
    %10867 = vmatpush2.msra.mxu0 0.0
    %10868 = vmatprep.subr.mxu0 0.0
    %10869 = vmatpush2.msra.mxu0 0.0
    %10870 = vmatprep.subr.mxu0 0.0
    %10871 = vmatpush2.msra.mxu0 0.0
    %10872 = vmatprep.subr.mxu0 0.0
    %10873 = vmatpush2.msra.mxu0 0.0
    %10874 = vmatprep.subr.mxu0 0.0
    %10875 = vmatpush2.msra.mxu0 0.0
    %10876 = vmatprep.subr.mxu0 0.0
    %10877 = vmatpush2.msra.mxu0 0.0
    %10878 = vmatprep.subr.mxu0 0.0
    %10879 = vmatpush2.msra.mxu0 0.0
    %10880 = vmatprep.mubr.f32.mxu0 0.0
    %10881 = vmatmul.mubr.f32.gmra.mxu0 %v10601
    %v10882 = vpop.f32.mrf.mxu0
    %v10883 = vadd.f32 0.0, %v10882
    %v10884 = vpop.f32.mrf.mxu0
    %v10885 = vadd.f32 0.0, %v10884
    %10886 = vdwg.mxu0
    %v10887 = vadd.f32 %v10584, %v10670
    %v10888 = vadd.f32 %v10585, %v10672
    %v10889 = vadd.f32 %v10586, %v10741
    %v10890 = vadd.f32 %v10587, %v10743
    %v10891 = vadd.f32 %v10588, %v10812
    %v10892 = vadd.f32 %v10589, %v10814
    %v10893 = vadd.f32 %v10590, %v10883
    %v10894 = vadd.f32 %v10591, %v10885
    %v10895 = vadd.f32 %v10887, %v5496
    %v10896 = vadd.f32 %v10888, %v5500
    %v10897 = vadd.f32 %v10889, %v5504
    %v10898 = vadd.f32 %v10890, %v5508
    %v10899 = vadd.f32 %v10891, %v5512
    %v10900 = vadd.f32 %v10892, %v5516
    %v10901 = vadd.f32 %v10893, %v5520
    %v10902 = vadd.f32 %v10894, %v5524
    %vm10903 = vcmp.ge.f32.partialorder %v10895, 0.0
    %vm10904 = vcmp.ge.f32.partialorder %v10896, 0.0
    %vm10905 = vcmp.ge.f32.partialorder %v10897, 0.0
    %vm10906 = vcmp.ge.f32.partialorder %v10898, 0.0
    %vm10907 = vcmp.ge.f32.partialorder %v10899, 0.0
    %vm10908 = vcmp.ge.f32.partialorder %v10900, 0.0
    %vm10909 = vcmp.ge.f32.partialorder %v10901, 0.0
    %vm10910 = vcmp.ge.f32.partialorder %v10902, 0.0
    %v10911 = vmul.f32 %v10895, 0.2
    %v10912 = vmul.f32 %v10896, 0.2
    %v10913 = vmul.f32 %v10897, 0.2
    %v10914 = vmul.f32 %v10898, 0.2
    %v10915 = vmul.f32 %v10899, 0.2
    %v10916 = vmul.f32 %v10900, 0.2
    %v10917 = vmul.f32 %v10901, 0.2
    %v10918 = vmul.f32 %v10902, 0.2
    %v10919 = vsel %vm10903, %v10895, %v10911
    %v10920 = vsel %vm10904, %v10896, %v10912
    %v10921 = vsel %vm10905, %v10897, %v10913
    %v10922 = vsel %vm10906, %v10898, %v10914
    %v10923 = vsel %vm10907, %v10899, %v10915
    %v10924 = vsel %vm10908, %v10900, %v10916
    %v10925 = vsel %vm10909, %v10901, %v10917
    %v10926 = vsel %vm10910, %v10902, %v10918
    %v10927 = vmul.f32 %v10919, %v5569
    %v10928 = vmul.f32 %v10920, %v5573
    %v10929 = vmul.f32 %v10921, %v5577
    %v10930 = vmul.f32 %v10922, %v5581
    %v10931 = vmul.f32 %v10923, %v5585
    %v10932 = vmul.f32 %v10924, %v5589
    %v10933 = vmul.f32 %v10925, %v5593
    %v10934 = vmul.f32 %v10926, %v5597
    %v10935 = vsel %vm5614, %v10927, 0.0
    %v10936 = vsel %vm5614, %v10928, 0.0
    %v10937 = vadd.f32 %v10935, %v10936
    %v10938 = vsel %vm5614, %v10929, 0.0
    %v10939 = vadd.f32 %v10937, %v10938
    %v10940 = vsel %vm5614, %v10930, 0.0
    %v10941 = vadd.f32 %v10939, %v10940
    %v10942 = vsel %vm5614, %v10931, 0.0
    %v10943 = vadd.f32 %v10941, %v10942
    %v10944 = vsel %vm5614, %v10932, 0.0
    %v10945 = vadd.f32 %v10943, %v10944
    %v10946 = vsel %vm5614, %v10933, 0.0
    %v10947 = vadd.f32 %v10945, %v10946
    %v10948 = vsel %vm5614, %v10934, 0.0
    %v10949 = vadd.f32 %v10947, %v10948
    %10950 = vadd.xlane.f32.xlu0 %v10949
    %v10951 = vpop.xlane.xlu0 %10950
    %v10952 = vadd.f32 %v10951, %v160
    %v10953 = vsub.f32 0.0, %v10952
    %v10954 = vmul.f32 %v10953, 1.442695
    %v10955 = vpow.pop %v10954
    %v10956 = vadd.f32 %v10955, 1.0
    %v10957 = vrcp.pop %v10956
    %v10958 = vmul.f32 1.0, %v10957
    %10959 = vst.msk [vmem:[%s19 + $0x1] sm:$0x1] %vm5639, %v10958
    // Predicated region
    $region106: #{tpu_custom_call.1} parent=1 // pred_check
      _
    $region107: #{tpu_custom_call.1} parent=1 // pred_check_branch
      %10961 = sbr.rel (0) target = $region109
    $region108: #{tpu_custom_call.1} parent=1 // pred_region
      _
    $region109: #{tpu_custom_call.1} parent=1 // pred_fallthru
      _
    // Predicated region
    $region110: #{tpu_custom_call.1} parent=1 // pred_check
      _
    $region111: #{tpu_custom_call.1} parent=1 // pred_check_branch
      %10963 = sbr.rel (0) target = $region113
    $region112: #{tpu_custom_call.1} parent=1 // pred_region
      _
    $region113: #{tpu_custom_call.1} parent=1 // pred_fallthru
      _
    %10964 = vsyncpa [#allocation4], 1
    %10965 = vsyncpa [#allocation6], 1
    %10966 = vsyncpa [#allocation9], 1
    %10967 = vsyncpa [#allocation12], 1

</llo_original>
